<compile_context>
chip_gen: v7x
topology: tpu7x:2x2x1
jax: 0.10.0
libtpu: 0.0.40
codegen_flags: <defaults>
</compile_context>

<pallas_src>
import functools

import jax
import jax.numpy as jnp
from jax.experimental import pallas as pl
from jax.experimental.pallas import tpu as pltpu


# ----------------------------------------------------------------------------
# small helpers
# ----------------------------------------------------------------------------
def _round_up(x, m):
    return (x + m - 1) // m * m


def _cdiv(a, b):
    return -(-a // b)


def _pad_to(a, shape):
    pads = [(0, t - s) for s, t in zip(a.shape, shape)]
    if not any(p for _, p in pads):
        return a
    return jnp.pad(a, pads)


# Explicit scoped-VMEM budget: per-call footprint here is <2 MiB incl. double
# buffering, but set it so future tile growth is budgeted against v7x (64 MiB
# physical) as well as v5e/v6e (128 MiB).
_VMEM_LIMIT_BYTES = 32 * 1024 * 1024
_MAX_ROWS_PER_TILE = 2048       # VMEM guard if M ever grows large


@functools.lru_cache(maxsize=None)
def _tensorcores_per_chip():
    """Generation-aware: v7x exposes 2 TensorCores/chip; v5e/v6e are single-TC."""
    try:
        kind = (jax.devices()[0].device_kind or "").lower()
    except Exception:
        return 1
    return 2 if "v7" in kind else 1


def _m_tiling(M):
    """Pick (tm, Mp).

    Default: one full-dim block (no padding; full-extent block is legal even when
    M % 8 != 0).  Split into 2 balanced 'parallel' tiles only when the chip has 2
    TensorCores and M is big enough to be worth sharding (v7x chain3 GEMM), with
    <=1% pad instead of the old 33%.
    """
    n_split = 2 if (_tensorcores_per_chip() >= 2 and M >= 512) else 1
    n_split = max(n_split, _cdiv(M, _MAX_ROWS_PER_TILE))
    if n_split <= 1:
        return M, M
    tm = _round_up(_cdiv(M, n_split), 8)
    return tm, _round_up(M, tm)


# ----------------------------------------------------------------------------
# Pallas kernels
# ----------------------------------------------------------------------------
def _gemm_bias_act_kernel(x_ref, w_ref, b_ref, o_ref, *, act):
    # bf16 operands, f32 accumulate, f32 epilogue (BN scale folded into w, shift in b).
    acc = jnp.dot(x_ref[...], w_ref[...], preferred_element_type=jnp.float32)
    acc = acc + b_ref[...]
    if act == "leaky":
        acc = jnp.where(acc >= 0.0, acc, 0.1 * acc)     # LeakyReLU(0.1)
    elif act == "tanh":
        acc = jnp.tanh(acc)
    o_ref[...] = acc.astype(o_ref.dtype)


def _gemm_chain3_kernel(x_ref, w3_ref, b3_ref, w4_ref, b4_ref, w5_ref, o_ref):
    # Fused decoder layers 3+4+5: three chained GEMMs on the VMEM-resident tile.
    a = jnp.dot(x_ref[...], w3_ref[...], preferred_element_type=jnp.float32)
    a = a + b3_ref[...]
    a = jnp.where(a >= 0.0, a, 0.1 * a)                 # BN3 folded + LeakyReLU(0.1)
    a = jnp.dot(a.astype(jnp.bfloat16), w4_ref[...], preferred_element_type=jnp.float32)
    a = a + b4_ref[...]
    a = jnp.where(a >= 0.0, a, 0.1 * a)                 # BN4 folded + LeakyReLU(0.1)
    a = jnp.dot(a.astype(jnp.bfloat16), w5_ref[...], preferred_element_type=jnp.float32)
    o_ref[...] = jnp.tanh(a).astype(o_ref.dtype)        # final Tanh (bf16 store)


# ----------------------------------------------------------------------------
# Pallas wrappers
# ----------------------------------------------------------------------------
def gemm_bias_act(x, w, b, act="none", out_dtype=jnp.bfloat16):
    """x:(M,K) bf16, w:(K,F) bf16, b:(1,F) f32 -> act(x@w + b):(M,F)."""
    M, K = x.shape
    Kw, F = w.shape
    assert K == Kw
    tm, Mp = _m_tiling(M)
    xp = x if Mp == M else jnp.pad(x, ((0, Mp - M), (0, 0)))
    out_itemsize = jnp.dtype(out_dtype).itemsize
    cost = pl.CostEstimate(
        flops=2 * Mp * K * F,
        transcendentals=(Mp * F if act == "tanh" else 0),
        bytes_accessed=(Mp * K + K * F) * 2 + F * 4 + Mp * F * out_itemsize,
    )
    out = pl.pallas_call(
        functools.partial(_gemm_bias_act_kernel, act=act),
        out_shape=jax.ShapeDtypeStruct((Mp, F), out_dtype),
        grid_spec=pltpu.PrefetchScalarGridSpec(
            num_scalar_prefetch=0,
            grid=(Mp // tm,),
            in_specs=[
                pl.BlockSpec((tm, K), lambda i: (i, 0)),
                # constant block index -> weight/bias stay VMEM-resident across M tiles
                pl.BlockSpec((K, F), lambda i: (0, 0)),
                pl.BlockSpec((1, F), lambda i: (0, 0)),
            ],
            out_specs=pl.BlockSpec((tm, F), lambda i: (i, 0)),
        ),
        compiler_params=pltpu.CompilerParams(
            dimension_semantics=("parallel",),
            vmem_limit_bytes=_VMEM_LIMIT_BYTES),
        cost_estimate=cost,
    )(xp, w, b)
    return out if Mp == M else out[:M]


def gemm_chain3(x, w3, b3, w4, b4, w5, out_dtype=jnp.bfloat16):
    """Fused x -> leaky(x@w3+b3) -> leaky(.@w4+b4) -> tanh(.@w5), all lane-padded."""
    M, K = x.shape
    Wc = w3.shape[1]
    tm, Mp = _m_tiling(M)
    xp = x if Mp == M else jnp.pad(x, ((0, Mp - M), (0, 0)))
    out_itemsize = jnp.dtype(out_dtype).itemsize
    cost = pl.CostEstimate(
        flops=2 * Mp * (K * Wc + Wc * Wc + Wc * Wc),
        transcendentals=Mp * Wc,
        bytes_accessed=(Mp * K + K * Wc + 2 * Wc * Wc) * 2 + 2 * Wc * 4
                       + Mp * Wc * out_itemsize,
    )
    out = pl.pallas_call(
        _gemm_chain3_kernel,
        out_shape=jax.ShapeDtypeStruct((Mp, Wc), out_dtype),
        grid_spec=pltpu.PrefetchScalarGridSpec(
            num_scalar_prefetch=0,
            grid=(Mp // tm,),
            in_specs=[
                pl.BlockSpec((tm, K), lambda i: (i, 0)),
                pl.BlockSpec((K, Wc), lambda i: (0, 0)),
                pl.BlockSpec((1, Wc), lambda i: (0, 0)),
                pl.BlockSpec((Wc, Wc), lambda i: (0, 0)),
                pl.BlockSpec((1, Wc), lambda i: (0, 0)),
                pl.BlockSpec((Wc, Wc), lambda i: (0, 0)),
            ],
            out_specs=pl.BlockSpec((tm, Wc), lambda i: (i, 0)),
        ),
        compiler_params=pltpu.CompilerParams(
            dimension_semantics=("parallel",),
            vmem_limit_bytes=_VMEM_LIMIT_BYTES),
        cost_estimate=cost,
    )(xp, w3, b3, w4, b4, w5)
    return out if Mp == M else out[:M]


# ----------------------------------------------------------------------------
# Sub-pixel (pixel-shuffle) ConvTranspose3d lowering helpers (NDHWC layout)
# ----------------------------------------------------------------------------
def _deconv_gemm_weight(w_t, stride):
    """PyTorch ConvTranspose3d weight (Cin,Cout,kd,kh,kw) -> sub-pixel GEMM matrix.

    Rows:  (jd, jh, jw, cin)  tap-major, cin-minor   (matches _subpixel_patches)
    Cols:  (rd, rh, rw, cout) phase-major, cout-minor (matches _pixel_shuffle_crop)
    Requires kernel divisible by stride (true for every Decoder layer).
    """
    cin, cout, kd, kh, kw = w_t.shape
    sd, sh, sw = stride
    assert kd % sd == 0 and kh % sh == 0 and kw % sw == 0
    md, mh, mw = kd // sd, kh // sh, kw // sw
    wr = w_t.reshape(cin, cout, md, sd, mh, sh, mw, sw)
    wr = jnp.flip(wr, axis=(2, 4, 6))
    wmat = wr.transpose(2, 4, 6, 0, 3, 5, 7, 1)
    wmat = wmat.reshape(md * mh * mw * cin, sd * sh * sw * cout)
    return wmat, (md, mh, mw)


def _subpixel_patches(x, taps):
    """Stride-1 'full' conv patches for the sub-pixel deconv form. x: NDHWC."""
    N, D, H, W, C = x.shape
    md, mh, mw = taps
    xp = jnp.pad(x, ((0, 0), (md - 1, md - 1), (mh - 1, mh - 1),
                     (mw - 1, mw - 1), (0, 0)))
    Dq, Hq, Wq = D + md - 1, H + mh - 1, W + mw - 1
    cols = []
    for jd in range(md):
        for jh in range(mh):
            for jw in range(mw):
                cols.append(xp[:, jd:jd + Dq, jh:jh + Hq, jw:jw + Wq, :])
    patches = cols[0] if len(cols) == 1 else jnp.concatenate(cols, axis=-1)
    return patches.reshape(N * Dq * Hq * Wq, md * mh * mw * C), (N, Dq, Hq, Wq)


def _pixel_shuffle_crop(y, dims, stride, padding, cout):
    """Interleave sub-pixel phases into full resolution and crop deconv padding."""
    N, Dq, Hq, Wq = dims
    sd, sh, sw = stride
    pd, ph, pw = padding
    y = y.reshape(N, Dq, Hq, Wq, sd, sh, sw, cout)
    y = y.transpose(0, 1, 4, 2, 5, 3, 6, 7)
    y = y.reshape(N, Dq * sd, Hq * sh, Wq * sw, cout)
    return y[:, pd:Dq * sd - pd, ph:Hq * sh - ph, pw:Wq * sw - pw, :]


def _subpixel_deconv_gemm(x, wmat, bias, *, stride, padding, taps, act, out_dtype):
    """ConvTranspose3d(bias=False) [+ folded BN] + activation via one fused GEMM."""
    patches, dims = _subpixel_patches(x, taps)
    sd, sh, sw = stride
    cout = wmat.shape[1] // (sd * sh * sw)
    y = gemm_bias_act(patches, wmat, bias, act=act, out_dtype=out_dtype)
    return _pixel_shuffle_crop(y, dims, stride, padding, cout)


def _bn_fold(gamma, beta, rmean, rvar, eps=1e-5):
    scale = gamma / jnp.sqrt(rvar + eps)
    shift = beta - rmean * scale
    return scale, shift


# ----------------------------------------------------------------------------
# Parameters: raw init (PyTorch layouts) + one-time GEMM preparation
# ----------------------------------------------------------------------------
_ENC_KERNEL = (2, 8, 8)   # simplified I3D stem: Conv3d k=(2,8,8), s=(2,8,8), p=0


def init_params(key, n_channels=3, nch=8, i3d_nch=16):
    ks = jax.random.split(key, 6)

    def w(k, shape, fan_in):
        return jax.random.normal(k, shape, jnp.float32) / jnp.sqrt(fan_in)

    def bn(c):
        z = jnp.zeros((c,), jnp.float32)
        o = jnp.ones((c,), jnp.float32)
        return (o, z, z, o)   # gamma, beta, running_mean, running_var

    kd, kh, kw = _ENC_KERNEL
    return {
        # Encoder stem (simplified InceptionI3d replacement), regular-conv layout.
        "enc_w": w(ks[0], (i3d_nch, n_channels, kd, kh, kw), n_channels * kd * kh * kw),
        # Decoder ConvTranspose3d weights, PyTorch layout (Cin, Cout, kd, kh, kw).
        "d_w1": w(ks[1], (i3d_nch, nch * 8, 4, 4, 4), i3d_nch * 64),
        "d_w2": w(ks[2], (nch * 8, nch * 4, 1, 4, 4), nch * 8 * 16),
        "d_w3": w(ks[3], (nch * 4, nch * 2, 1, 4, 4), nch * 4 * 16),
        "d_w4": w(ks[4], (nch * 2, nch * 1, 1, 1, 1), nch * 2),
        "d_w5": w(ks[5], (nch * 1, n_channels, 1, 1, 1), nch),
        "d_bn1": bn(nch * 8),
        "d_bn2": bn(nch * 4),
        "d_bn3": bn(nch * 2),
        "d_bn4": bn(nch * 1),
    }


def prepare_params(params):
    """One-time weight prep: BN folding, sub-pixel deconv rewrite, GEMM reshape,
    lane padding and bf16 cast.  Runs once outside the jitted forward so no
    per-call weight re-materialization remains."""
    f32, bf16 = jnp.float32, jnp.bfloat16
    prep = {}

    # Encoder stem: regular conv (Cout,Cin,kd,kh,kw) -> (kd*kh*kw*Cin, Cout), lane-pad cols.
    we = params["enc_w"].astype(f32)
    cout = we.shape[0]
    wmat = we.transpose(2, 3, 4, 1, 0).reshape(-1, cout)
    Fp = _round_up(cout, 128)
    prep["enc_w"] = _pad_to(wmat, (wmat.shape[0], Fp)).astype(bf16)
    prep["enc_b"] = jnp.zeros((1, Fp), f32)

    def deconv_folded(w_t, bn, stride):
        wm, _ = _deconv_gemm_weight(w_t.astype(f32), stride)
        nph = stride[0] * stride[1] * stride[2]
        scale, shift = _bn_fold(*bn)
        wm = wm * jnp.tile(scale, nph)[None, :]
        bias = jnp.tile(shift, nph)[None, :]
        return wm.astype(bf16), bias.astype(f32)

    # Decoder layers 1 / 2: standalone sub-pixel deconv GEMMs (BN folded).
    prep["d_w1"], prep["d_b1"] = deconv_folded(params["d_w1"], params["d_bn1"], (2, 2, 2))
    prep["d_w2"], prep["d_b2"] = deconv_folded(params["d_w2"], params["d_bn2"], (1, 2, 2))

    # Decoder layers 3+4+5 fused chain; 1x1x1 convs become per-phase block diagonals.
    w3, _ = _deconv_gemm_weight(params["d_w3"].astype(f32), (1, 2, 2))
    s3, sh3 = _bn_fold(*params["d_bn3"])
    w3 = w3 * jnp.tile(s3, 4)[None, :]
    b3 = jnp.tile(sh3, 4)[None, :]

    w4 = params["d_w4"].astype(f32)[:, :, 0, 0, 0]          # (2*nch, nch)
    w4 = jnp.kron(jnp.eye(4, dtype=f32), w4)                 # block-diag over 4 phases
    s4, sh4 = _bn_fold(*params["d_bn4"])
    w4 = w4 * jnp.tile(s4, 4)[None, :]
    b4 = jnp.tile(sh4, 4)[None, :]

    w5 = params["d_w5"].astype(f32)[:, :, 0, 0, 0]          # (nch, n_channels)
    w5 = jnp.kron(jnp.eye(4, dtype=f32), w5)

    # NOTE: Wc=128 half-fills the 256-wide MXU on v6e/v7x, but the natural channel
    # counts here are small; padding to 256 would only add zero work.
    Wc = _round_up(max(w3.shape[1], w4.shape[1], w5.shape[1]), 128)
    prep["d_w3"] = _pad_to(w3, (w3.shape[0], Wc)).astype(bf16)
    prep["d_b3"] = _pad_to(b3, (1, Wc)).astype(f32)
    prep["d_w4"] = _pad_to(w4, (Wc, Wc)).astype(bf16)
    prep["d_b4"] = _pad_to(b4, (1, Wc)).astype(f32)
    prep["d_w5"] = _pad_to(w5, (Wc, Wc)).astype(bf16)
    return prep


# ----------------------------------------------------------------------------
# Forward passes (activations stay NDHWC / bf16 inside the decoder)
# ----------------------------------------------------------------------------
def encoder_forward(prep, imgs_ndhwc, i3d_nch):
    # TODO(synk): full InceptionI3d backbone is an external model not provided;
    # replaced by a single strided conv stem producing the latent the Decoder expects.
    N, D, H, W, C = imgs_ndhwc.shape
    kd, kh, kw = _ENC_KERNEL
    assert D % kd == 0 and H % kh == 0 and W % kw == 0
    Do, Ho, Wo = D // kd, H // kh, W // kw
    # stride == kernel, p=0 -> im2col is a pure reshape/transpose (no overlap).
    p = imgs_ndhwc.reshape(N, Do, kd, Ho, kh, Wo, kw, C)
    p = p.transpose(0, 1, 3, 5, 2, 4, 6, 7)
    patches = p.reshape(N * Do * Ho * Wo, kd * kh * kw * C).astype(jnp.bfloat16)
    # Emit bf16 directly: the decoder consumes bf16, so no separate f32
    # writeback + recast on this latency-bound path.
    z = gemm_bias_act(patches, prep["enc_w"], prep["enc_b"], act="none",
                      out_dtype=jnp.bfloat16)
    return z[:, :i3d_nch].reshape(N, Do, Ho, Wo, i3d_nch)


def decoder_forward(prep, z_ndhwc, n_channels):
    x = z_ndhwc.astype(jnp.bfloat16)
    # L1: ConvTranspose3d(i3d_nch, 8*nch, 4, 2, 1) + BN + LeakyReLU(0.1)
    x = _subpixel_deconv_gemm(x, prep["d_w1"], prep["d_b1"],
                              stride=(2, 2, 2), padding=(1, 1, 1), taps=(2, 2, 2),
                              act="leaky", out_dtype=jnp.bfloat16)
    # L2: ConvTranspose3d(8*nch, 4*nch, (1,4,4), (1,2,2), (0,1,1)) + BN + LeakyReLU(0.1)
    x = _subpixel_deconv_gemm(x, prep["d_w2"], prep["d_b2"],
                              stride=(1, 2, 2), padding=(0, 1, 1), taps=(1, 2, 2),
                              act="leaky", out_dtype=jnp.bfloat16)
    # L3+L4+L5 fused: ConvTranspose3d(4*nch,2*nch,(1,4,4),(1,2,2),(0,1,1))+BN+LeakyReLU
    # then the two 1x1x1 ConvTranspose3d layers (+BN+LeakyReLU / +Tanh) applied on the
    # phase-packed sub-pixel GEMM output inside one Pallas kernel. Output stays bf16
    # (only 4*n_channels of the 128 lanes are useful; f32 storeback would be ~2x bytes).
    patches, dims = _subpixel_patches(x, (1, 2, 2))
    y = gemm_chain3(patches, prep["d_w3"], prep["d_b3"],
                    prep["d_w4"], prep["d_b4"], prep["d_w5"],
                    out_dtype=jnp.bfloat16)
    y = y[:, :4 * n_channels]
    return _pixel_shuffle_crop(y, dims, (1, 2, 2), (0, 1, 1), n_channels)


def autoencoder_forward(prep, imgs, n_channels=3, i3d_nch=16):
    x = jnp.transpose(imgs, (0, 2, 3, 4, 1))          # NCDHW -> NDHWC (boundary only)
    z_ndhwc = encoder_forward(prep, x, i3d_nch)
    img_ndhwc = decoder_forward(prep, z_ndhwc, n_channels)
    # Back to NCDHW / f32 only at the module boundary (tiny tensors).
    z = jnp.transpose(z_ndhwc, (0, 4, 1, 2, 3)).astype(jnp.float32)
    fake_imgs = jnp.transpose(img_ndhwc, (0, 4, 1, 2, 3)).astype(jnp.float32)
    return z, fake_imgs


# ----------------------------------------------------------------------------
# main
# ----------------------------------------------------------------------------
if __name__ == "__main__":
    key = jax.random.PRNGKey(0)
    k_param, k_data = jax.random.split(key)

    # Small config: seq_len=4, img 32x32, n_channels=3, nch=8, i3d_nch=16
    N, C, D, H, W = 1, 3, 4, 32, 32
    nch, i3d_nch = 8, 16

    params = init_params(k_param, n_channels=C, nch=nch, i3d_nch=i3d_nch)
    prep = prepare_params(params)     # one-time: BN fold + GEMM reshape + pad + bf16
    imgs = jax.random.normal(k_data, (N, C, D, H, W), jnp.float32)

    fwd = jax.jit(functools.partial(autoencoder_forward, n_channels=C, i3d_nch=i3d_nch))
    z, fake_imgs = fwd(prep, imgs)
    jax.block_until_ready((z, fake_imgs))

    assert z.shape == (N, i3d_nch, D // 2, H // 8, W // 8), z.shape
    assert fake_imgs.shape == (N, C, D, H, W), fake_imgs.shape
    assert bool(jnp.all(jnp.abs(fake_imgs) <= 1.0)), "tanh range violated"
    print("KERNEL_OK")
</pallas_src>

<mosaic_0001>
module attributes {stable_mosaic.version = 11 : i64} {
  func.func @_gemm_bias_act_kernel(%arg0: i32, %arg1: memref<32x384xbf16, #tpu.memory_space<vmem>>, %arg2: memref<384x128xbf16, #tpu.memory_space<vmem>>, %arg3: memref<1x128xf32, #tpu.memory_space<vmem>>, %arg4: memref<32x128xbf16, #tpu.memory_space<vmem>>) attributes {dimension_semantics = [#tpu.dimension_semantics<parallel>], iteration_bounds = array<i64: 1>, scalar_prefetch = 0 : i64, scratch_operands = 0 : i64, tpu.core_type = #tpu.core_type<tc>, window_params = [{transform_indices = @transform_0, window_bounds = array<i64: 32, 384>}, {pipeline_mode = #tpu.pipeline_mode<synchronous>, transform_indices = @transform_1, window_bounds = array<i64: 384, 128>}, {pipeline_mode = #tpu.pipeline_mode<synchronous>, transform_indices = @transform_2, window_bounds = array<i64: 1, 128>}, {transform_indices = @transform_3, window_bounds = array<i64: 32, 128>}]} {
    %c0 = arith.constant 0 : index
    %c0_0 = arith.constant 0 : index
    %0 = vector.load %arg1[%c0, %c0_0] : memref<32x384xbf16, #tpu.memory_space<vmem>>, vector<32x384xbf16>
    %c0_1 = arith.constant 0 : index
    %c0_2 = arith.constant 0 : index
    %1 = vector.load %arg2[%c0_1, %c0_2] : memref<384x128xbf16, #tpu.memory_space<vmem>>, vector<384x128xbf16>
    %cst = arith.constant dense<0.000000e+00> : vector<32x128xf32>
    %2 = tpu.matmul %0, %1, %cst {dimension_numbers = #tpu.dot_dimension_numbers<[1], [0], [0], [1], [0, 0, 1, 1], [], []>} : vector<32x384xbf16>, vector<384x128xbf16>, vector<32x128xf32> -> vector<32x128xf32>
    %c0_3 = arith.constant 0 : index
    %c0_4 = arith.constant 0 : index
    %3 = vector.load %arg3[%c0_3, %c0_4] : memref<1x128xf32, #tpu.memory_space<vmem>>, vector<1x128xf32>
    %4 = vector.broadcast %3 : vector<1x128xf32> to vector<32x128xf32>
    %5 = arith.addf %2, %4 : vector<32x128xf32>
    %6 = arith.truncf %5 : vector<32x128xf32> to vector<32x128xbf16>
    %c0_5 = arith.constant 0 : index
    %c0_6 = arith.constant 0 : index
    %7 = vector.load %arg4[%c0_5, %c0_6] : memref<32x128xbf16, #tpu.memory_space<vmem>>, vector<32x128xbf16>
    tpu.vector_store %arg4[%c0_5, %c0_6], %6 {strides = array<i32>} : memref<32x128xbf16, #tpu.memory_space<vmem>>, vector<32x128xbf16>,
    return
  }
  func.func @transform_0(%arg0: i32) -> (i32, i32) {
    %c0_i32 = arith.constant 0 : i32
    %c0_i32_0 = arith.constant 0 : i32
    return %arg0, %c0_i32 : i32, i32
  }
  func.func @transform_1(%arg0: i32) -> (i32, i32) {
    %c0_i32 = arith.constant 0 : i32
    %c0_i32_0 = arith.constant 0 : i32
    %c0_i32_1 = arith.constant 0 : i32
    return %c0_i32, %c0_i32_0 : i32, i32
  }
  func.func @transform_2(%arg0: i32) -> (i32, i32) {
    %c0_i32 = arith.constant 0 : i32
    %c0_i32_0 = arith.constant 0 : i32
    %c0_i32_1 = arith.constant 0 : i32
    return %c0_i32, %c0_i32_0 : i32, i32
  }
  func.func @transform_3(%arg0: i32) -> (i32, i32) {
    %c0_i32 = arith.constant 0 : i32
    %c0_i32_0 = arith.constant 0 : i32
    return %arg0, %c0_i32 : i32, i32
  }
}

module attributes {stable_mosaic.version = 11 : i64} {
  func.func @_gemm_bias_act_kernel(%arg0: i32, %arg1: memref<75x128xbf16, #tpu.memory_space<vmem>>, %arg2: memref<128x512xbf16, #tpu.memory_space<vmem>>, %arg3: memref<1x512xf32, #tpu.memory_space<vmem>>, %arg4: memref<75x512xbf16, #tpu.memory_space<vmem>>) attributes {dimension_semantics = [#tpu.dimension_semantics<parallel>], iteration_bounds = array<i64: 1>, scalar_prefetch = 0 : i64, scratch_operands = 0 : i64, tpu.core_type = #tpu.core_type<tc>, window_params = [{transform_indices = @transform_0, window_bounds = array<i64: 75, 128>}, {pipeline_mode = #tpu.pipeline_mode<synchronous>, transform_indices = @transform_1, window_bounds = array<i64: 128, 512>}, {pipeline_mode = #tpu.pipeline_mode<synchronous>, transform_indices = @transform_2, window_bounds = array<i64: 1, 512>}, {transform_indices = @transform_3, window_bounds = array<i64: 75, 512>}]} {
    %c0 = arith.constant 0 : index
    %c0_0 = arith.constant 0 : index
    %0 = vector.load %arg1[%c0, %c0_0] : memref<75x128xbf16, #tpu.memory_space<vmem>>, vector<75x128xbf16>
    %c0_1 = arith.constant 0 : index
    %c0_2 = arith.constant 0 : index
    %1 = vector.load %arg2[%c0_1, %c0_2] : memref<128x512xbf16, #tpu.memory_space<vmem>>, vector<128x512xbf16>
    %cst = arith.constant dense<0.000000e+00> : vector<75x512xf32>
    %2 = tpu.matmul %0, %1, %cst {dimension_numbers = #tpu.dot_dimension_numbers<[1], [0], [0], [1], [0, 0, 1, 1], [], []>} : vector<75x128xbf16>, vector<128x512xbf16>, vector<75x512xf32> -> vector<75x512xf32>
    %c0_3 = arith.constant 0 : index
    %c0_4 = arith.constant 0 : index
    %3 = vector.load %arg3[%c0_3, %c0_4] : memref<1x512xf32, #tpu.memory_space<vmem>>, vector<1x512xf32>
    %4 = vector.broadcast %3 : vector<1x512xf32> to vector<75x512xf32>
    %5 = arith.addf %2, %4 : vector<75x512xf32>
    %cst_5 = arith.constant 0.000000e+00 : f32
    %6 = vector.broadcast %cst_5 : f32 to vector<75x512xf32>
    %7 = arith.cmpf oge, %5, %6 : vector<75x512xf32>
    %cst_6 = arith.constant 1.000000e-01 : f32
    %8 = vector.broadcast %cst_6 : f32 to vector<75x512xf32>
    %9 = arith.mulf %8, %5 : vector<75x512xf32>
    %10 = arith.select %7, %5, %9 : vector<75x512xi1>, vector<75x512xf32>
    %11 = arith.truncf %10 : vector<75x512xf32> to vector<75x512xbf16>
    %c0_7 = arith.constant 0 : index
    %c0_8 = arith.constant 0 : index
    %12 = vector.load %arg4[%c0_7, %c0_8] : memref<75x512xbf16, #tpu.memory_space<vmem>>, vector<75x512xbf16>
    tpu.vector_store %arg4[%c0_7, %c0_8], %11 {strides = array<i32>} : memref<75x512xbf16, #tpu.memory_space<vmem>>, vector<75x512xbf16>,
    return
  }
  func.func @transform_0(%arg0: i32) -> (i32, i32) {
    %c0_i32 = arith.constant 0 : i32
    %c0_i32_0 = arith.constant 0 : i32
    return %arg0, %c0_i32 : i32, i32
  }
  func.func @transform_1(%arg0: i32) -> (i32, i32) {
    %c0_i32 = arith.constant 0 : i32
    %c0_i32_0 = arith.constant 0 : i32
    %c0_i32_1 = arith.constant 0 : i32
    return %c0_i32, %c0_i32_0 : i32, i32
  }
  func.func @transform_2(%arg0: i32) -> (i32, i32) {
    %c0_i32 = arith.constant 0 : i32
    %c0_i32_0 = arith.constant 0 : i32
    %c0_i32_1 = arith.constant 0 : i32
    return %c0_i32, %c0_i32_0 : i32, i32
  }
  func.func @transform_3(%arg0: i32) -> (i32, i32) {
    %c0_i32 = arith.constant 0 : i32
    %c0_i32_0 = arith.constant 0 : i32
    return %arg0, %c0_i32 : i32, i32
  }
}

module attributes {stable_mosaic.version = 11 : i64} {
  func.func @_gemm_bias_act_kernel(%arg0: i32, %arg1: memref<324x256xbf16, #tpu.memory_space<vmem>>, %arg2: memref<256x128xbf16, #tpu.memory_space<vmem>>, %arg3: memref<1x128xf32, #tpu.memory_space<vmem>>, %arg4: memref<324x128xbf16, #tpu.memory_space<vmem>>) attributes {dimension_semantics = [#tpu.dimension_semantics<parallel>], iteration_bounds = array<i64: 1>, scalar_prefetch = 0 : i64, scratch_operands = 0 : i64, tpu.core_type = #tpu.core_type<tc>, window_params = [{transform_indices = @transform_0, window_bounds = array<i64: 324, 256>}, {pipeline_mode = #tpu.pipeline_mode<synchronous>, transform_indices = @transform_1, window_bounds = array<i64: 256, 128>}, {pipeline_mode = #tpu.pipeline_mode<synchronous>, transform_indices = @transform_2, window_bounds = array<i64: 1, 128>}, {transform_indices = @transform_3, window_bounds = array<i64: 324, 128>}]} {
    %c0 = arith.constant 0 : index
    %c0_0 = arith.constant 0 : index
    %0 = vector.load %arg1[%c0, %c0_0] : memref<324x256xbf16, #tpu.memory_space<vmem>>, vector<324x256xbf16>
    %c0_1 = arith.constant 0 : index
    %c0_2 = arith.constant 0 : index
    %1 = vector.load %arg2[%c0_1, %c0_2] : memref<256x128xbf16, #tpu.memory_space<vmem>>, vector<256x128xbf16>
    %cst = arith.constant dense<0.000000e+00> : vector<324x128xf32>
    %2 = tpu.matmul %0, %1, %cst {dimension_numbers = #tpu.dot_dimension_numbers<[1], [0], [0], [1], [0, 0, 1, 1], [], []>} : vector<324x256xbf16>, vector<256x128xbf16>, vector<324x128xf32> -> vector<324x128xf32>
    %c0_3 = arith.constant 0 : index
    %c0_4 = arith.constant 0 : index
    %3 = vector.load %arg3[%c0_3, %c0_4] : memref<1x128xf32, #tpu.memory_space<vmem>>, vector<1x128xf32>
    %4 = vector.broadcast %3 : vector<1x128xf32> to vector<324x128xf32>
    %5 = arith.addf %2, %4 : vector<324x128xf32>
    %cst_5 = arith.constant 0.000000e+00 : f32
    %6 = vector.broadcast %cst_5 : f32 to vector<324x128xf32>
    %7 = arith.cmpf oge, %5, %6 : vector<324x128xf32>
    %cst_6 = arith.constant 1.000000e-01 : f32
    %8 = vector.broadcast %cst_6 : f32 to vector<324x128xf32>
    %9 = arith.mulf %8, %5 : vector<324x128xf32>
    %10 = arith.select %7, %5, %9 : vector<324x128xi1>, vector<324x128xf32>
    %11 = arith.truncf %10 : vector<324x128xf32> to vector<324x128xbf16>
    %c0_7 = arith.constant 0 : index
    %c0_8 = arith.constant 0 : index
    %12 = vector.load %arg4[%c0_7, %c0_8] : memref<324x128xbf16, #tpu.memory_space<vmem>>, vector<324x128xbf16>
    tpu.vector_store %arg4[%c0_7, %c0_8], %11 {strides = array<i32>} : memref<324x128xbf16, #tpu.memory_space<vmem>>, vector<324x128xbf16>,
    return
  }
  func.func @transform_0(%arg0: i32) -> (i32, i32) {
    %c0_i32 = arith.constant 0 : i32
    %c0_i32_0 = arith.constant 0 : i32
    return %arg0, %c0_i32 : i32, i32
  }
  func.func @transform_1(%arg0: i32) -> (i32, i32) {
    %c0_i32 = arith.constant 0 : i32
    %c0_i32_0 = arith.constant 0 : i32
    %c0_i32_1 = arith.constant 0 : i32
    return %c0_i32, %c0_i32_0 : i32, i32
  }
  func.func @transform_2(%arg0: i32) -> (i32, i32) {
    %c0_i32 = arith.constant 0 : i32
    %c0_i32_0 = arith.constant 0 : i32
    %c0_i32_1 = arith.constant 0 : i32
    return %c0_i32, %c0_i32_0 : i32, i32
  }
  func.func @transform_3(%arg0: i32) -> (i32, i32) {
    %c0_i32 = arith.constant 0 : i32
    %c0_i32_0 = arith.constant 0 : i32
    return %arg0, %c0_i32 : i32, i32
  }
}

module attributes {stable_mosaic.version = 11 : i64} {
  func.func @_gemm_chain3_kernel(%arg0: i32, %arg1: memref<1156x128xbf16, #tpu.memory_space<vmem>>, %arg2: memref<128x128xbf16, #tpu.memory_space<vmem>>, %arg3: memref<1x128xf32, #tpu.memory_space<vmem>>, %arg4: memref<128x128xbf16, #tpu.memory_space<vmem>>, %arg5: memref<1x128xf32, #tpu.memory_space<vmem>>, %arg6: memref<128x128xbf16, #tpu.memory_space<vmem>>, %arg7: memref<1156x128xbf16, #tpu.memory_space<vmem>>) attributes {dimension_semantics = [#tpu.dimension_semantics<parallel>], iteration_bounds = array<i64: 1>, scalar_prefetch = 0 : i64, scratch_operands = 0 : i64, tpu.core_type = #tpu.core_type<tc>, window_params = [{transform_indices = @transform_0, window_bounds = array<i64: 1156, 128>}, {pipeline_mode = #tpu.pipeline_mode<synchronous>, transform_indices = @transform_1, window_bounds = array<i64: 128, 128>}, {pipeline_mode = #tpu.pipeline_mode<synchronous>, transform_indices = @transform_2, window_bounds = array<i64: 1, 128>}, {pipeline_mode = #tpu.pipeline_mode<synchronous>, transform_indices = @transform_3, window_bounds = array<i64: 128, 128>}, {pipeline_mode = #tpu.pipeline_mode<synchronous>, transform_indices = @transform_4, window_bounds = array<i64: 1, 128>}, {pipeline_mode = #tpu.pipeline_mode<synchronous>, transform_indices = @transform_5, window_bounds = array<i64: 128, 128>}, {transform_indices = @transform_6, window_bounds = array<i64: 1156, 128>}]} {
    %c0 = arith.constant 0 : index
    %c0_0 = arith.constant 0 : index
    %0 = vector.load %arg1[%c0, %c0_0] : memref<1156x128xbf16, #tpu.memory_space<vmem>>, vector<1156x128xbf16>
    %c0_1 = arith.constant 0 : index
    %c0_2 = arith.constant 0 : index
    %1 = vector.load %arg2[%c0_1, %c0_2] : memref<128x128xbf16, #tpu.memory_space<vmem>>, vector<128x128xbf16>
    %cst = arith.constant dense<0.000000e+00> : vector<1156x128xf32>
    %2 = tpu.matmul %0, %1, %cst {dimension_numbers = #tpu.dot_dimension_numbers<[1], [0], [0], [1], [0, 0, 1, 1], [], []>} : vector<1156x128xbf16>, vector<128x128xbf16>, vector<1156x128xf32> -> vector<1156x128xf32>
    %c0_3 = arith.constant 0 : index
    %c0_4 = arith.constant 0 : index
    %3 = vector.load %arg3[%c0_3, %c0_4] : memref<1x128xf32, #tpu.memory_space<vmem>>, vector<1x128xf32>
    %4 = vector.broadcast %3 : vector<1x128xf32> to vector<1156x128xf32>
    %5 = arith.addf %2, %4 : vector<1156x128xf32>
    %cst_5 = arith.constant 0.000000e+00 : f32
    %6 = vector.broadcast %cst_5 : f32 to vector<1156x128xf32>
    %7 = arith.cmpf oge, %5, %6 : vector<1156x128xf32>
    %cst_6 = arith.constant 1.000000e-01 : f32
    %8 = vector.broadcast %cst_6 : f32 to vector<1156x128xf32>
    %9 = arith.mulf %8, %5 : vector<1156x128xf32>
    %10 = arith.select %7, %5, %9 : vector<1156x128xi1>, vector<1156x128xf32>
    %11 = arith.truncf %10 : vector<1156x128xf32> to vector<1156x128xbf16>
    %c0_7 = arith.constant 0 : index
    %c0_8 = arith.constant 0 : index
    %12 = vector.load %arg4[%c0_7, %c0_8] : memref<128x128xbf16, #tpu.memory_space<vmem>>, vector<128x128xbf16>
    %cst_9 = arith.constant dense<0.000000e+00> : vector<1156x128xf32>
    %13 = tpu.matmul %11, %12, %cst_9 {dimension_numbers = #tpu.dot_dimension_numbers<[1], [0], [0], [1], [0, 0, 1, 1], [], []>} : vector<1156x128xbf16>, vector<128x128xbf16>, vector<1156x128xf32> -> vector<1156x128xf32>
    %c0_10 = arith.constant 0 : index
    %c0_11 = arith.constant 0 : index
    %14 = vector.load %arg5[%c0_10, %c0_11] : memref<1x128xf32, #tpu.memory_space<vmem>>, vector<1x128xf32>
    %15 = vector.broadcast %14 : vector<1x128xf32> to vector<1156x128xf32>
    %16 = arith.addf %13, %15 : vector<1156x128xf32>
    %cst_12 = arith.constant 0.000000e+00 : f32
    %17 = vector.broadcast %cst_12 : f32 to vector<1156x128xf32>
    %18 = arith.cmpf oge, %16, %17 : vector<1156x128xf32>
    %cst_13 = arith.constant 1.000000e-01 : f32
    %19 = vector.broadcast %cst_13 : f32 to vector<1156x128xf32>
    %20 = arith.mulf %19, %16 : vector<1156x128xf32>
    %21 = arith.select %18, %16, %20 : vector<1156x128xi1>, vector<1156x128xf32>
    %22 = arith.truncf %21 : vector<1156x128xf32> to vector<1156x128xbf16>
    %c0_14 = arith.constant 0 : index
    %c0_15 = arith.constant 0 : index
    %23 = vector.load %arg6[%c0_14, %c0_15] : memref<128x128xbf16, #tpu.memory_space<vmem>>, vector<128x128xbf16>
    %cst_16 = arith.constant dense<0.000000e+00> : vector<1156x128xf32>
    %24 = tpu.matmul %22, %23, %cst_16 {dimension_numbers = #tpu.dot_dimension_numbers<[1], [0], [0], [1], [0, 0, 1, 1], [], []>} : vector<1156x128xbf16>, vector<128x128xbf16>, vector<1156x128xf32> -> vector<1156x128xf32>
    %25 = math.tanh %24 : vector<1156x128xf32>
    %26 = arith.truncf %25 : vector<1156x128xf32> to vector<1156x128xbf16>
    %c0_17 = arith.constant 0 : index
    %c0_18 = arith.constant 0 : index
    %27 = vector.load %arg7[%c0_17, %c0_18] : memref<1156x128xbf16, #tpu.memory_space<vmem>>, vector<1156x128xbf16>
    tpu.vector_store %arg7[%c0_17, %c0_18], %26 {strides = array<i32>} : memref<1156x128xbf16, #tpu.memory_space<vmem>>, vector<1156x128xbf16>,
    return
  }
  func.func @transform_0(%arg0: i32) -> (i32, i32) {
    %c0_i32 = arith.constant 0 : i32
    %c0_i32_0 = arith.constant 0 : i32
    return %arg0, %c0_i32 : i32, i32
  }
  func.func @transform_1(%arg0: i32) -> (i32, i32) {
    %c0_i32 = arith.constant 0 : i32
    %c0_i32_0 = arith.constant 0 : i32
    %c0_i32_1 = arith.constant 0 : i32
    return %c0_i32, %c0_i32_0 : i32, i32
  }
  func.func @transform_2(%arg0: i32) -> (i32, i32) {
    %c0_i32 = arith.constant 0 : i32
    %c0_i32_0 = arith.constant 0 : i32
    %c0_i32_1 = arith.constant 0 : i32
    return %c0_i32, %c0_i32_0 : i32, i32
  }
  func.func @transform_3(%arg0: i32) -> (i32, i32) {
    %c0_i32 = arith.constant 0 : i32
    %c0_i32_0 = arith.constant 0 : i32
    %c0_i32_1 = arith.constant 0 : i32
    return %c0_i32, %c0_i32_0 : i32, i32
  }
  func.func @transform_4(%arg0: i32) -> (i32, i32) {
    %c0_i32 = arith.constant 0 : i32
    %c0_i32_0 = arith.constant 0 : i32
    %c0_i32_1 = arith.constant 0 : i32
    return %c0_i32, %c0_i32_0 : i32, i32
  }
  func.func @transform_5(%arg0: i32) -> (i32, i32) {
    %c0_i32 = arith.constant 0 : i32
    %c0_i32_0 = arith.constant 0 : i32
    %c0_i32_1 = arith.constant 0 : i32
    return %c0_i32, %c0_i32_0 : i32, i32
  }
  func.func @transform_6(%arg0: i32) -> (i32, i32) {
    %c0_i32 = arith.constant 0 : i32
    %c0_i32_0 = arith.constant 0 : i32
    return %arg0, %c0_i32 : i32, i32
  }
}

</mosaic_0001>

<llo_original>
// kernel: autoencoder_forward.4
$region0: #{autoencoder_forward.4}
  #allocation0 [shape = 'u32[]', space=smem, size = 0x4, offset = 0x4, fixed_abs, tag = 'smem constant byte address 0x4 - core index']
  #allocation1 [shape = 'u32[144,128]{1,0:T(1,128)}', space=vmem, size = 0x12000, scoped, tag = 'internal scratch']
  %s0 = inlined_call_operand.vmem [shape: bf16[32,384], index: 0, kind: input, shape index: {}]
  %s1 = inlined_call_operand.vmem [shape: bf16[384,128], index: 1, kind: input, shape index: {}]
  %s2 = inlined_call_operand.vmem [shape: f32[1,128], index: 2, kind: input, shape index: {}]
  %s3 = inlined_call_operand.vmem [shape: bf16[32,128], index: 3, kind: output, shape index: {}]
  %s4 = sld [smem:[#allocation0]]
  $region22: #{autoencoder_forward.4} parent=0
    _
  %s6 = ssub.s32 1, %s4
  %s7 = scalar_select 0, %s6, %s4
  // Predicated region
  $region2: #{autoencoder_forward.4} parent=0 // pred_check
    _
  $region3: #{autoencoder_forward.4} parent=0 // pred_check_branch
    %9 = sbr.rel (0) target = $region5
  $region4: #{autoencoder_forward.4} parent=0 // pred_region
    _
  $region5: #{autoencoder_forward.4} parent=0 // pred_fallthru
    _
  // Predicated region
  $region6: #{autoencoder_forward.4} parent=0 // pred_check
    _
  $region7: #{autoencoder_forward.4} parent=0 // pred_check_branch
    %11 = sbr.rel (0) target = $region9
  $region8: #{autoencoder_forward.4} parent=0 // pred_region
    _
  $region9: #{autoencoder_forward.4} parent=0 // pred_fallthru
    _
  // Predicated region
  $region10: #{autoencoder_forward.4} parent=0 // pred_check
    _
  $region11: #{autoencoder_forward.4} parent=0 // pred_check_branch
    %13 = sbr.rel (0) target = $region13
  $region12: #{autoencoder_forward.4} parent=0 // pred_region
    _
  $region13: #{autoencoder_forward.4} parent=0 // pred_fallthru
    _
  %v15 = vld [vmem:[%s0] sm:$0xff]
  %v16 = vld [vmem:[%s0 + $0x8] sm:$0xf]
  %v17 = vld [vmem:[%s0 + $0xc] sm:$0xff]
  %v18 = vld [vmem:[%s0 + $0x14] sm:$0xf]
  %v19 = vld [vmem:[%s0 + $0x18] sm:$0xff]
  %v20 = vld [vmem:[%s0 + $0x20] sm:$0xf]
  %v21 = vld [vmem:[%s0 + $0x24] sm:$0xff]
  %v22 = vld [vmem:[%s0 + $0x2c] sm:$0xf]
  %v23 = vld [vmem:[%s1] sm:$0xf]
  %v24 = vld [vmem:[%s1 + $0x4] sm:$0xf]
  %v25 = vld [vmem:[%s1 + $0x8] sm:$0xf]
  %v26 = vld [vmem:[%s1 + $0xc] sm:$0xf]
  %v27 = vld [vmem:[%s1 + $0x10] sm:$0xf]
  %v28 = vld [vmem:[%s1 + $0x14] sm:$0xf]
  %v29 = vld [vmem:[%s1 + $0x18] sm:$0xf]
  %v30 = vld [vmem:[%s1 + $0x1c] sm:$0xf]
  %v31 = vld [vmem:[%s1 + $0x20] sm:$0xf]
  %v32 = vld [vmem:[%s1 + $0x24] sm:$0xf]
  %v33 = vld [vmem:[%s1 + $0x28] sm:$0xf]
  %v34 = vld [vmem:[%s1 + $0x2c] sm:$0xf]
  %v35 = vld [vmem:[%s1 + $0x30] sm:$0xf]
  %v36 = vld [vmem:[%s1 + $0x34] sm:$0xf]
  %v37 = vld [vmem:[%s1 + $0x38] sm:$0xf]
  %v38 = vld [vmem:[%s1 + $0x3c] sm:$0xf]
  %v39 = vld [vmem:[%s1 + $0x40] sm:$0xf]
  %v40 = vld [vmem:[%s1 + $0x44] sm:$0xf]
  %v41 = vld [vmem:[%s1 + $0x48] sm:$0xf]
  %v42 = vld [vmem:[%s1 + $0x4c] sm:$0xf]
  %v43 = vld [vmem:[%s1 + $0x50] sm:$0xf]
  %v44 = vld [vmem:[%s1 + $0x54] sm:$0xf]
  %v45 = vld [vmem:[%s1 + $0x58] sm:$0xf]
  %v46 = vld [vmem:[%s1 + $0x5c] sm:$0xf]
  %v47 = vld [vmem:[%s1 + $0x60] sm:$0xf]
  %v48 = vld [vmem:[%s1 + $0x64] sm:$0xf]
  %v49 = vld [vmem:[%s1 + $0x68] sm:$0xf]
  %v50 = vld [vmem:[%s1 + $0x6c] sm:$0xf]
  %v51 = vld [vmem:[%s1 + $0x70] sm:$0xf]
  %v52 = vld [vmem:[%s1 + $0x74] sm:$0xf]
  %v53 = vld [vmem:[%s1 + $0x78] sm:$0xf]
  %v54 = vld [vmem:[%s1 + $0x7c] sm:$0xf]
  %v55 = vld [vmem:[%s1 + $0x80] sm:$0xf]
  %v56 = vld [vmem:[%s1 + $0x84] sm:$0xf]
  %v57 = vld [vmem:[%s1 + $0x88] sm:$0xf]
  %v58 = vld [vmem:[%s1 + $0x8c] sm:$0xf]
  %v59 = vld [vmem:[%s1 + $0x90] sm:$0xf]
  %v60 = vld [vmem:[%s1 + $0x94] sm:$0xf]
  %v61 = vld [vmem:[%s1 + $0x98] sm:$0xf]
  %v62 = vld [vmem:[%s1 + $0x9c] sm:$0xf]
  %v63 = vld [vmem:[%s1 + $0xa0] sm:$0xf]
  %v64 = vld [vmem:[%s1 + $0xa4] sm:$0xf]
  %v65 = vld [vmem:[%s1 + $0xa8] sm:$0xf]
  %v66 = vld [vmem:[%s1 + $0xac] sm:$0xf]
  %v67 = vld [vmem:[%s1 + $0xb0] sm:$0xf]
  %v68 = vld [vmem:[%s1 + $0xb4] sm:$0xf]
  %v69 = vld [vmem:[%s1 + $0xb8] sm:$0xf]
  %v70 = vld [vmem:[%s1 + $0xbc] sm:$0xf]
  %v71 = vld [vmem:[%s2] sm:$0x1]
  %v73 = vlaneseq
  %v74 = vshrl.u32 %v73, 7
  %v75 = vsub.s32 0, %v74
  %v76 = vrot.slane %v71, %v75
  %v86 = vunpack.c.l.b16 %v15
  %v87 = vunpack.c.h.b16 %v15
  %v88 = vunpack.c.l.b16 %v16
  %v89 = vunpack.c.l.b16 %v17
  %v90 = vunpack.c.h.b16 %v17
  %v91 = vunpack.c.l.b16 %v18
  %v92 = vunpack.c.l.b16 %v19
  %v93 = vunpack.c.h.b16 %v19
  %v94 = vunpack.c.l.b16 %v20
  %v95 = vunpack.c.l.b16 %v21
  %v96 = vunpack.c.h.b16 %v21
  %v97 = vunpack.c.l.b16 %v22
  %v98 = vpack.c.b16 %v89, %v86
  %v99 = vpack.c.b16 %v90, %v87
  %v100 = vpack.c.b16 %v91, %v88
  %v101 = vpack.c.b16 %v95, %v92
  %v102 = vpack.c.b16 %v96, %v93
  %v103 = vpack.c.b16 %v97, %v94
  %v158 = vunpack.c.l.b16 %v23
  %v159 = vunpack.c.l.b16 %v24
  %v160 = vunpack.c.l.b16 %v25
  %v161 = vunpack.c.l.b16 %v26
  %v162 = vunpack.c.l.b16 %v27
  %v163 = vunpack.c.l.b16 %v28
  %v164 = vunpack.c.l.b16 %v29
  %v165 = vunpack.c.l.b16 %v30
  %v166 = vunpack.c.l.b16 %v31
  %v167 = vunpack.c.l.b16 %v32
  %v168 = vunpack.c.l.b16 %v33
  %v169 = vunpack.c.l.b16 %v34
  %v170 = vunpack.c.l.b16 %v35
  %v171 = vunpack.c.l.b16 %v36
  %v172 = vunpack.c.l.b16 %v37
  %v173 = vunpack.c.l.b16 %v38
  %v174 = vunpack.c.l.b16 %v39
  %v175 = vunpack.c.l.b16 %v40
  %v176 = vunpack.c.l.b16 %v41
  %v177 = vunpack.c.l.b16 %v42
  %v178 = vunpack.c.l.b16 %v43
  %v179 = vunpack.c.l.b16 %v44
  %v180 = vunpack.c.l.b16 %v45
  %v181 = vunpack.c.l.b16 %v46
  %v182 = vunpack.c.l.b16 %v47
  %v183 = vunpack.c.l.b16 %v48
  %v184 = vunpack.c.l.b16 %v49
  %v185 = vunpack.c.l.b16 %v50
  %v186 = vunpack.c.l.b16 %v51
  %v187 = vunpack.c.l.b16 %v52
  %v188 = vunpack.c.l.b16 %v53
  %v189 = vunpack.c.l.b16 %v54
  %v190 = vunpack.c.l.b16 %v55
  %v191 = vunpack.c.l.b16 %v56
  %v192 = vunpack.c.l.b16 %v57
  %v193 = vunpack.c.l.b16 %v58
  %v194 = vunpack.c.l.b16 %v59
  %v195 = vunpack.c.l.b16 %v60
  %v196 = vunpack.c.l.b16 %v61
  %v197 = vunpack.c.l.b16 %v62
  %v198 = vunpack.c.l.b16 %v63
  %v199 = vunpack.c.l.b16 %v64
  %v200 = vunpack.c.l.b16 %v65
  %v201 = vunpack.c.l.b16 %v66
  %v202 = vunpack.c.l.b16 %v67
  %v203 = vunpack.c.l.b16 %v68
  %v204 = vunpack.c.l.b16 %v69
  %v205 = vunpack.c.l.b16 %v70
  %v206 = vpack.c.b16 %v159, %v158
  %v207 = vpack.c.b16 %v161, %v160
  %v208 = vpack.c.b16 %v163, %v162
  %v209 = vpack.c.b16 %v165, %v164
  %v210 = vpack.c.b16 %v167, %v166
  %v211 = vpack.c.b16 %v169, %v168
  %v212 = vpack.c.b16 %v171, %v170
  %v213 = vpack.c.b16 %v173, %v172
  %v214 = vpack.c.b16 %v175, %v174
  %v215 = vpack.c.b16 %v177, %v176
  %v216 = vpack.c.b16 %v179, %v178
  %v217 = vpack.c.b16 %v181, %v180
  %v218 = vpack.c.b16 %v183, %v182
  %v219 = vpack.c.b16 %v185, %v184
  %v220 = vpack.c.b16 %v187, %v186
  %v221 = vpack.c.b16 %v189, %v188
  %v222 = vpack.c.b16 %v191, %v190
  %v223 = vpack.c.b16 %v193, %v192
  %v224 = vpack.c.b16 %v195, %v194
  %v225 = vpack.c.b16 %v197, %v196
  %v226 = vpack.c.b16 %v199, %v198
  %v227 = vpack.c.b16 %v201, %v200
  %v228 = vpack.c.b16 %v203, %v202
  %v229 = vpack.c.b16 %v205, %v204
  %254 = vmatprep.subr.bf16.mxu0 0
  %255 = vmatpush1.bf16.msra.mxu0 %v206
  %256 = vmatprep.subr.bf16.mxu0 0
  %257 = vmatpush1.bf16.msra.mxu0 %v207
  %258 = vmatprep.subr.bf16.mxu0 0
  %259 = vmatpush1.bf16.msra.mxu0 %v208
  %260 = vmatprep.subr.bf16.mxu0 0
  %261 = vmatpush1.bf16.msra.mxu0 %v209
  %262 = vmatprep.subr.bf16.mxu0 0
  %263 = vmatpush1.bf16.msra.mxu0 %v210
  %264 = vmatprep.subr.bf16.mxu0 0
  %265 = vmatpush1.bf16.msra.mxu0 %v211
  %266 = vmatprep.subr.bf16.mxu0 0
  %267 = vmatpush1.bf16.msra.mxu0 %v212
  %268 = vmatprep.subr.bf16.mxu0 0
  %269 = vmatpush1.bf16.msra.mxu0 %v213
  %270 = vmatprep.subr.bf16.mxu0 0
  %271 = vmatpush1.bf16.msra.mxu0 %v214
  %272 = vmatprep.subr.bf16.mxu0 0
  %273 = vmatpush1.bf16.msra.mxu0 %v215
  %274 = vmatprep.subr.bf16.mxu0 0
  %275 = vmatpush1.bf16.msra.mxu0 %v216
  %276 = vmatprep.subr.bf16.mxu0 0
  %277 = vmatpush1.bf16.msra.mxu0 %v217
  %278 = vmatprep.subr.bf16.mxu0 0
  %279 = vmatpush1.bf16.msra.mxu0 %v218
  %280 = vmatprep.subr.bf16.mxu0 0
  %281 = vmatpush1.bf16.msra.mxu0 %v219
  %282 = vmatprep.subr.bf16.mxu0 0
  %283 = vmatpush1.bf16.msra.mxu0 %v220
  %284 = vmatprep.subr.bf16.mxu0 0
  %285 = vmatpush1.bf16.msra.mxu0 %v221
  %286 = vmatprep.mubr.bf16.mxu0 %v99
  %287 = vmatmul.mubr.bf16.gmra.mrb[0].mxu0 %v98
  %v288 = vpop.f32.mrb[0].mxu0
  %v289 = vadd.f32 %v76, %v288
  %v290 = vpop.f32.mrb[0].mxu0
  %v291 = vpop.f32.mrb[0].mxu0
  %v292 = vadd.f32 %v76, %v291
  %v293 = vpop.f32.mrb[0].mxu0
  %294 = vmatprep.mubr.bf16.mxu0 %v102
  %295 = vmatmul.mubr.bf16.gmra.mrb[0].mxu0 %v101
  %v296 = vpop.f32.mrb[0].mxu0
  %v297 = vadd.f32 %v76, %v296
  %v298 = vpop.f32.mrb[0].mxu0
  %v299 = vpop.f32.mrb[0].mxu0
  %v300 = vadd.f32 %v76, %v299
  %v301 = vpop.f32.mrb[0].mxu0
  %302 = vdwg.mxu0
  %303 = vmatprep.subr.bf16.mxu0 0
  %304 = vmatpush1.bf16.msra.mxu0 %v222
  %305 = vmatprep.subr.bf16.mxu0 0
  %306 = vmatpush1.bf16.msra.mxu0 %v223
  %307 = vmatprep.subr.bf16.mxu0 0
  %308 = vmatpush1.bf16.msra.mxu0 %v224
  %309 = vmatprep.subr.bf16.mxu0 0
  %310 = vmatpush1.bf16.msra.mxu0 %v225
  %311 = vmatprep.subr.bf16.mxu0 0
  %312 = vmatpush1.bf16.msra.mxu0 %v226
  %313 = vmatprep.subr.bf16.mxu0 0
  %314 = vmatpush1.bf16.msra.mxu0 %v227
  %315 = vmatprep.subr.bf16.mxu0 0
  %316 = vmatpush1.bf16.msra.mxu0 %v228
  %317 = vmatprep.subr.bf16.mxu0 0
  %318 = vmatpush1.bf16.msra.mxu0 %v229
  %319 = vmatprep.subr.bf16.mxu0 0
  %320 = vmatpush1.bf16.msra.mxu0 0
  %321 = vmatprep.subr.bf16.mxu0 0
  %322 = vmatpush1.bf16.msra.mxu0 0
  %323 = vmatprep.subr.bf16.mxu0 0
  %324 = vmatpush1.bf16.msra.mxu0 0
  %325 = vmatprep.subr.bf16.mxu0 0
  %326 = vmatpush1.bf16.msra.mxu0 0
  %327 = vmatprep.subr.bf16.mxu0 0
  %328 = vmatpush1.bf16.msra.mxu0 0
  %329 = vmatprep.subr.bf16.mxu0 0
  %330 = vmatpush1.bf16.msra.mxu0 0
  %331 = vmatprep.subr.bf16.mxu0 0
  %332 = vmatpush1.bf16.msra.mxu0 0
  %333 = vmatprep.subr.bf16.mxu0 0
  %334 = vmatpush1.bf16.msra.mxu0 0
  %335 = vmatprep.mubr.bf16.mxu0 0
  %336 = vmatmul.mubr.bf16.gmra.mrb[0].mxu0 %v100
  %v337 = vpop.f32.mrb[0].mxu0
  %v338 = vadd.f32 %v289, %v337
  %v339 = vpop.f32.mrb[0].mxu0
  %v340 = vpop.f32.mrb[0].mxu0
  %v341 = vadd.f32 %v292, %v340
  %v342 = vpop.f32.mrb[0].mxu0
  %343 = vmatprep.mubr.bf16.mxu0 0
  %344 = vmatmul.mubr.bf16.gmra.mrb[0].mxu0 %v103
  %v345 = vpop.f32.mrb[0].mxu0
  %v346 = vadd.f32 %v297, %v345
  %v347 = vpop.f32.mrb[0].mxu0
  %v348 = vpop.f32.mrb[0].mxu0
  %v349 = vadd.f32 %v300, %v348
  %v350 = vpop.f32.mrb[0].mxu0
  %351 = vdwg.mxu0
  %v352 = vpack.c.bf16 %v341, %v338
  %v353 = vpack.c.bf16 %v349, %v346
  %v356 = vunpack.c.l.b16 %v352
  %v357 = vunpack.c.h.b16 %v352
  %v358 = vunpack.c.l.b16 %v353
  %v359 = vunpack.c.h.b16 %v353
  %v360 = vpack.c.b16 %v356, %v356
  %v361 = vpack.c.b16 %v357, %v357
  %v362 = vpack.c.b16 %v358, %v358
  %v363 = vpack.c.b16 %v359, %v359
  %368 = vst [vmem:[%s3] sm:$0xf] %v360
  %369 = vst [vmem:[%s3 + $0x4] sm:$0xf] %v361
  %370 = vst [vmem:[%s3 + $0x8] sm:$0xf] %v362
  %371 = vst [vmem:[%s3 + $0xc] sm:$0xf] %v363
  // Predicated region
  $region14: #{autoencoder_forward.4} parent=0 // pred_check
    _
  $region15: #{autoencoder_forward.4} parent=0 // pred_check_branch
    %373 = sbr.rel (0) target = $region17
  $region16: #{autoencoder_forward.4} parent=0 // pred_region
    _
  $region17: #{autoencoder_forward.4} parent=0 // pred_fallthru
    _
  // Predicated region
  $region18: #{autoencoder_forward.4} parent=0 // pred_check
    _
  $region19: #{autoencoder_forward.4} parent=0 // pred_check_branch
    %375 = sbr.rel (0) target = $region21
  $region20: #{autoencoder_forward.4} parent=0 // pred_region
    _
  $region21: #{autoencoder_forward.4} parent=0 // pred_fallthru
    _

// kernel: autoencoder_forward.5
$region0: #{autoencoder_forward.5}
  #allocation0 [shape = 'u32[]', space=smem, size = 0x4, offset = 0x4, fixed_abs, tag = 'smem constant byte address 0x4 - core index']
  #allocation1 [shape = 'u32[144,128]{1,0:T(1,128)}', space=vmem, size = 0x12000, scoped, tag = 'internal scratch']
  %s0 = inlined_call_operand.vmem [shape: bf16[75,128], index: 0, kind: input, shape index: {}]
  %s1 = inlined_call_operand.vmem [shape: bf16[128,512], index: 1, kind: input, shape index: {}]
  %s2 = inlined_call_operand.vmem [shape: f32[1,512], index: 2, kind: input, shape index: {}]
  %s3 = inlined_call_operand.vmem [shape: bf16[75,512], index: 3, kind: output, shape index: {}]
  %s4 = sld [smem:[#allocation0]]
  $region22: #{autoencoder_forward.5} parent=0
    _
  %s6 = ssub.s32 1, %s4
  %s7 = scalar_select 0, %s6, %s4
  // Predicated region
  $region2: #{autoencoder_forward.5} parent=0 // pred_check
    _
  $region3: #{autoencoder_forward.5} parent=0 // pred_check_branch
    %9 = sbr.rel (0) target = $region5
  $region4: #{autoencoder_forward.5} parent=0 // pred_region
    _
  $region5: #{autoencoder_forward.5} parent=0 // pred_fallthru
    _
  // Predicated region
  $region6: #{autoencoder_forward.5} parent=0 // pred_check
    _
  $region7: #{autoencoder_forward.5} parent=0 // pred_check_branch
    %11 = sbr.rel (0) target = $region9
  $region8: #{autoencoder_forward.5} parent=0 // pred_region
    _
  $region9: #{autoencoder_forward.5} parent=0 // pred_fallthru
    _
  // Predicated region
  $region10: #{autoencoder_forward.5} parent=0 // pred_check
    _
  $region11: #{autoencoder_forward.5} parent=0 // pred_check_branch
    %13 = sbr.rel (0) target = $region13
  $region12: #{autoencoder_forward.5} parent=0 // pred_region
    _
  $region13: #{autoencoder_forward.5} parent=0 // pred_fallthru
    _
  %v15 = vld [vmem:[%s0] sm:$0xf]
  %v16 = vld [vmem:[%s0 + $0x4] sm:$0xf]
  %v17 = vld [vmem:[%s0 + $0x8] sm:$0xf]
  %v18 = vld [vmem:[%s0 + $0xc] sm:$0xf]
  %v19 = vld [vmem:[%s0 + $0x10] sm:$0xf]
  %v20 = vld [vmem:[%s0 + $0x14] sm:$0xf]
  %v21 = vld [vmem:[%s0 + $0x18] sm:$0xf]
  %v22 = vld [vmem:[%s0 + $0x1c] sm:$0xf]
  %v23 = vld [vmem:[%s0 + $0x20] sm:$0xf]
  %v24 = vld [vmem:[%s0 + $0x24] sm:$0x3]
  %v25 = vld [vmem:[%s1] sm:$0xff]
  %v26 = vld [vmem:[%s1 + $0x8] sm:$0xff]
  %v27 = vld [vmem:[%s1 + $0x10] sm:$0xff]
  %v28 = vld [vmem:[%s1 + $0x18] sm:$0xff]
  %v29 = vld [vmem:[%s1 + $0x20] sm:$0xff]
  %v30 = vld [vmem:[%s1 + $0x28] sm:$0xff]
  %v31 = vld [vmem:[%s1 + $0x30] sm:$0xff]
  %v32 = vld [vmem:[%s1 + $0x38] sm:$0xff]
  %v33 = vld [vmem:[%s1 + $0x40] sm:$0xff]
  %v34 = vld [vmem:[%s1 + $0x48] sm:$0xff]
  %v35 = vld [vmem:[%s1 + $0x50] sm:$0xff]
  %v36 = vld [vmem:[%s1 + $0x58] sm:$0xff]
  %v37 = vld [vmem:[%s1 + $0x60] sm:$0xff]
  %v38 = vld [vmem:[%s1 + $0x68] sm:$0xff]
  %v39 = vld [vmem:[%s1 + $0x70] sm:$0xff]
  %v40 = vld [vmem:[%s1 + $0x78] sm:$0xff]
  %v41 = vld [vmem:[%s1 + $0x80] sm:$0xff]
  %v42 = vld [vmem:[%s1 + $0x88] sm:$0xff]
  %v43 = vld [vmem:[%s1 + $0x90] sm:$0xff]
  %v44 = vld [vmem:[%s1 + $0x98] sm:$0xff]
  %v45 = vld [vmem:[%s1 + $0xa0] sm:$0xff]
  %v46 = vld [vmem:[%s1 + $0xa8] sm:$0xff]
  %v47 = vld [vmem:[%s1 + $0xb0] sm:$0xff]
  %v48 = vld [vmem:[%s1 + $0xb8] sm:$0xff]
  %v49 = vld [vmem:[%s1 + $0xc0] sm:$0xff]
  %v50 = vld [vmem:[%s1 + $0xc8] sm:$0xff]
  %v51 = vld [vmem:[%s1 + $0xd0] sm:$0xff]
  %v52 = vld [vmem:[%s1 + $0xd8] sm:$0xff]
  %v53 = vld [vmem:[%s1 + $0xe0] sm:$0xff]
  %v54 = vld [vmem:[%s1 + $0xe8] sm:$0xff]
  %v55 = vld [vmem:[%s1 + $0xf0] sm:$0xff]
  %v56 = vld [vmem:[%s1 + $0xf8] sm:$0xff]
  %v57 = vld [vmem:[%s2] sm:$0xf]
  %v59 = vlaneseq
  %v60 = vshrl.u32 %v59, 7
  %v61 = vsub.s32 0, %v60
  %v62 = vrot.slane %v57, %v61
  %v63 = vlaneseq
  %v64 = vshrl.u32 %v63, 7
  %v65 = vsub.s32 1, %v64
  %v66 = vrot.slane %v57, %v65
  %v67 = vlaneseq
  %v68 = vshrl.u32 %v67, 7
  %v69 = vsub.s32 2, %v68
  %v70 = vrot.slane %v57, %v69
  %v71 = vlaneseq
  %v72 = vshrl.u32 %v71, 7
  %v73 = vsub.s32 3, %v72
  %v74 = vrot.slane %v57, %v73
  %v89 = vunpack.c.l.b16 %v15
  %v90 = vunpack.c.l.b16 %v16
  %v91 = vunpack.c.l.b16 %v17
  %v92 = vunpack.c.l.b16 %v18
  %v93 = vunpack.c.l.b16 %v19
  %v94 = vunpack.c.l.b16 %v20
  %v95 = vunpack.c.l.b16 %v21
  %v96 = vunpack.c.l.b16 %v22
  %v97 = vunpack.c.l.b16 %v23
  %v98 = vunpack.c.l.b16 %v24
  %v99 = vpack.c.b16 %v90, %v89
  %v100 = vpack.c.b16 %v92, %v91
  %v101 = vpack.c.b16 %v94, %v93
  %v102 = vpack.c.b16 %v96, %v95
  %v103 = vpack.c.b16 %v98, %v97
  %v141 = vunpack.c.l.b16 %v25
  %v142 = vunpack.c.h.b16 %v25
  %v143 = vunpack.c.l.b16 %v26
  %v144 = vunpack.c.h.b16 %v26
  %v145 = vunpack.c.l.b16 %v27
  %v146 = vunpack.c.h.b16 %v27
  %v147 = vunpack.c.l.b16 %v28
  %v148 = vunpack.c.h.b16 %v28
  %v149 = vunpack.c.l.b16 %v29
  %v150 = vunpack.c.h.b16 %v29
  %v151 = vunpack.c.l.b16 %v30
  %v152 = vunpack.c.h.b16 %v30
  %v153 = vunpack.c.l.b16 %v31
  %v154 = vunpack.c.h.b16 %v31
  %v155 = vunpack.c.l.b16 %v32
  %v156 = vunpack.c.h.b16 %v32
  %v157 = vunpack.c.l.b16 %v33
  %v158 = vunpack.c.h.b16 %v33
  %v159 = vunpack.c.l.b16 %v34
  %v160 = vunpack.c.h.b16 %v34
  %v161 = vunpack.c.l.b16 %v35
  %v162 = vunpack.c.h.b16 %v35
  %v163 = vunpack.c.l.b16 %v36
  %v164 = vunpack.c.h.b16 %v36
  %v165 = vunpack.c.l.b16 %v37
  %v166 = vunpack.c.h.b16 %v37
  %v167 = vunpack.c.l.b16 %v38
  %v168 = vunpack.c.h.b16 %v38
  %v169 = vunpack.c.l.b16 %v39
  %v170 = vunpack.c.h.b16 %v39
  %v171 = vunpack.c.l.b16 %v40
  %v172 = vunpack.c.h.b16 %v40
  %v173 = vunpack.c.l.b16 %v41
  %v174 = vunpack.c.h.b16 %v41
  %v175 = vunpack.c.l.b16 %v42
  %v176 = vunpack.c.h.b16 %v42
  %v177 = vunpack.c.l.b16 %v43
  %v178 = vunpack.c.h.b16 %v43
  %v179 = vunpack.c.l.b16 %v44
  %v180 = vunpack.c.h.b16 %v44
  %v181 = vunpack.c.l.b16 %v45
  %v182 = vunpack.c.h.b16 %v45
  %v183 = vunpack.c.l.b16 %v46
  %v184 = vunpack.c.h.b16 %v46
  %v185 = vunpack.c.l.b16 %v47
  %v186 = vunpack.c.h.b16 %v47
  %v187 = vunpack.c.l.b16 %v48
  %v188 = vunpack.c.h.b16 %v48
  %v189 = vunpack.c.l.b16 %v49
  %v190 = vunpack.c.h.b16 %v49
  %v191 = vunpack.c.l.b16 %v50
  %v192 = vunpack.c.h.b16 %v50
  %v193 = vunpack.c.l.b16 %v51
  %v194 = vunpack.c.h.b16 %v51
  %v195 = vunpack.c.l.b16 %v52
  %v196 = vunpack.c.h.b16 %v52
  %v197 = vunpack.c.l.b16 %v53
  %v198 = vunpack.c.h.b16 %v53
  %v199 = vunpack.c.l.b16 %v54
  %v200 = vunpack.c.h.b16 %v54
  %v201 = vunpack.c.l.b16 %v55
  %v202 = vunpack.c.h.b16 %v55
  %v203 = vunpack.c.l.b16 %v56
  %v204 = vunpack.c.h.b16 %v56
  %v205 = vpack.c.b16 %v145, %v141
  %v206 = vpack.c.b16 %v146, %v142
  %v207 = vpack.c.b16 %v147, %v143
  %v208 = vpack.c.b16 %v148, %v144
  %v209 = vpack.c.b16 %v153, %v149
  %v210 = vpack.c.b16 %v154, %v150
  %v211 = vpack.c.b16 %v155, %v151
  %v212 = vpack.c.b16 %v156, %v152
  %v213 = vpack.c.b16 %v161, %v157
  %v214 = vpack.c.b16 %v162, %v158
  %v215 = vpack.c.b16 %v163, %v159
  %v216 = vpack.c.b16 %v164, %v160
  %v217 = vpack.c.b16 %v169, %v165
  %v218 = vpack.c.b16 %v170, %v166
  %v219 = vpack.c.b16 %v171, %v167
  %v220 = vpack.c.b16 %v172, %v168
  %v221 = vpack.c.b16 %v177, %v173
  %v222 = vpack.c.b16 %v178, %v174
  %v223 = vpack.c.b16 %v179, %v175
  %v224 = vpack.c.b16 %v180, %v176
  %v225 = vpack.c.b16 %v185, %v181
  %v226 = vpack.c.b16 %v186, %v182
  %v227 = vpack.c.b16 %v187, %v183
  %v228 = vpack.c.b16 %v188, %v184
  %v229 = vpack.c.b16 %v193, %v189
  %v230 = vpack.c.b16 %v194, %v190
  %v231 = vpack.c.b16 %v195, %v191
  %v232 = vpack.c.b16 %v196, %v192
  %v233 = vpack.c.b16 %v201, %v197
  %v234 = vpack.c.b16 %v202, %v198
  %v235 = vpack.c.b16 %v203, %v199
  %v236 = vpack.c.b16 %v204, %v200
  %269 = vmatprep.subr.bf16.mxu0 %v206
  %270 = vmatpush1.bf16.msra.mxu0 %v205
  %271 = vmatprep.subr.bf16.mxu0 %v210
  %272 = vmatpush1.bf16.msra.mxu0 %v209
  %273 = vmatprep.subr.bf16.mxu0 %v214
  %274 = vmatpush1.bf16.msra.mxu0 %v213
  %275 = vmatprep.subr.bf16.mxu0 %v218
  %276 = vmatpush1.bf16.msra.mxu0 %v217
  %277 = vmatprep.subr.bf16.mxu0 %v222
  %278 = vmatpush1.bf16.msra.mxu0 %v221
  %279 = vmatprep.subr.bf16.mxu0 %v226
  %280 = vmatpush1.bf16.msra.mxu0 %v225
  %281 = vmatprep.subr.bf16.mxu0 %v230
  %282 = vmatpush1.bf16.msra.mxu0 %v229
  %283 = vmatprep.subr.bf16.mxu0 %v234
  %284 = vmatpush1.bf16.msra.mxu0 %v233
  %285 = vmatprep.subr.bf16.mxu0 0
  %286 = vmatpush1.bf16.msra.mxu0 0
  %287 = vmatprep.subr.bf16.mxu0 0
  %288 = vmatpush1.bf16.msra.mxu0 0
  %289 = vmatprep.subr.bf16.mxu0 0
  %290 = vmatpush1.bf16.msra.mxu0 0
  %291 = vmatprep.subr.bf16.mxu0 0
  %292 = vmatpush1.bf16.msra.mxu0 0
  %293 = vmatprep.subr.bf16.mxu0 0
  %294 = vmatpush1.bf16.msra.mxu0 0
  %295 = vmatprep.subr.bf16.mxu0 0
  %296 = vmatpush1.bf16.msra.mxu0 0
  %297 = vmatprep.subr.bf16.mxu0 0
  %298 = vmatpush1.bf16.msra.mxu0 0
  %299 = vmatprep.subr.bf16.mxu0 0
  %300 = vmatpush1.bf16.msra.mxu0 0
  %301 = vmatprep.mubr.bf16.mxu0 0
  %302 = vmatmul.mubr.bf16.gmra.mrb[0].mxu0 %v99
  %v303 = vpop.f32.mrb[0].mxu0
  %v304 = vadd.f32 %v62, %v303
  %v305 = vpop.f32.mrb[0].mxu0
  %v306 = vadd.f32 %v66, %v305
  %v307 = vpop.f32.mrb[0].mxu0
  %v308 = vadd.f32 %v62, %v307
  %v309 = vpop.f32.mrb[0].mxu0
  %v310 = vadd.f32 %v66, %v309
  %311 = vmatprep.mubr.bf16.mxu0 0
  %312 = vmatmul.mubr.bf16.gmra.mrb[0].mxu0 %v100
  %v313 = vpop.f32.mrb[0].mxu0
  %v314 = vadd.f32 %v62, %v313
  %v315 = vpop.f32.mrb[0].mxu0
  %v316 = vadd.f32 %v66, %v315
  %v317 = vpop.f32.mrb[0].mxu0
  %v318 = vadd.f32 %v62, %v317
  %v319 = vpop.f32.mrb[0].mxu0
  %v320 = vadd.f32 %v66, %v319
  %321 = vmatprep.mubr.bf16.mxu0 0
  %322 = vmatmul.mubr.bf16.gmra.mrb[0].mxu0 %v101
  %v323 = vpop.f32.mrb[0].mxu0
  %v324 = vadd.f32 %v62, %v323
  %v325 = vpop.f32.mrb[0].mxu0
  %v326 = vadd.f32 %v66, %v325
  %v327 = vpop.f32.mrb[0].mxu0
  %v328 = vadd.f32 %v62, %v327
  %v329 = vpop.f32.mrb[0].mxu0
  %v330 = vadd.f32 %v66, %v329
  %331 = vmatprep.mubr.bf16.mxu0 0
  %332 = vmatmul.mubr.bf16.gmra.mrb[0].mxu0 %v102
  %v333 = vpop.f32.mrb[0].mxu0
  %v334 = vadd.f32 %v62, %v333
  %v335 = vpop.f32.mrb[0].mxu0
  %v336 = vadd.f32 %v66, %v335
  %v337 = vpop.f32.mrb[0].mxu0
  %v338 = vadd.f32 %v62, %v337
  %v339 = vpop.f32.mrb[0].mxu0
  %v340 = vadd.f32 %v66, %v339
  %341 = vmatprep.mubr.bf16.mxu0 0
  %342 = vmatmul.mubr.bf16.gmra.mrb[0].mxu0 %v103
  %v343 = vpop.f32.mrb[0].mxu0
  %v344 = vadd.f32 %v62, %v343
  %v345 = vpop.f32.mrb[0].mxu0
  %v346 = vadd.f32 %v66, %v345
  %v347 = vpop.f32.mrb[0].mxu0
  %v348 = vadd.f32 %v62, %v347
  %v349 = vpop.f32.mrb[0].mxu0
  %v350 = vadd.f32 %v66, %v349
  %351 = vdwg.mxu0
  %352 = vmatprep.subr.bf16.mxu0 %v208
  %353 = vmatpush1.bf16.msra.mxu0 %v207
  %354 = vmatprep.subr.bf16.mxu0 %v212
  %355 = vmatpush1.bf16.msra.mxu0 %v211
  %356 = vmatprep.subr.bf16.mxu0 %v216
  %357 = vmatpush1.bf16.msra.mxu0 %v215
  %358 = vmatprep.subr.bf16.mxu0 %v220
  %359 = vmatpush1.bf16.msra.mxu0 %v219
  %360 = vmatprep.subr.bf16.mxu0 %v224
  %361 = vmatpush1.bf16.msra.mxu0 %v223
  %362 = vmatprep.subr.bf16.mxu0 %v228
  %363 = vmatpush1.bf16.msra.mxu0 %v227
  %364 = vmatprep.subr.bf16.mxu0 %v232
  %365 = vmatpush1.bf16.msra.mxu0 %v231
  %366 = vmatprep.subr.bf16.mxu0 %v236
  %367 = vmatpush1.bf16.msra.mxu0 %v235
  %368 = vmatprep.subr.bf16.mxu0 0
  %369 = vmatpush1.bf16.msra.mxu0 0
  %370 = vmatprep.subr.bf16.mxu0 0
  %371 = vmatpush1.bf16.msra.mxu0 0
  %372 = vmatprep.subr.bf16.mxu0 0
  %373 = vmatpush1.bf16.msra.mxu0 0
  %374 = vmatprep.subr.bf16.mxu0 0
  %375 = vmatpush1.bf16.msra.mxu0 0
  %376 = vmatprep.subr.bf16.mxu0 0
  %377 = vmatpush1.bf16.msra.mxu0 0
  %378 = vmatprep.subr.bf16.mxu0 0
  %379 = vmatpush1.bf16.msra.mxu0 0
  %380 = vmatprep.subr.bf16.mxu0 0
  %381 = vmatpush1.bf16.msra.mxu0 0
  %382 = vmatprep.subr.bf16.mxu0 0
  %383 = vmatpush1.bf16.msra.mxu0 0
  %384 = vmatprep.mubr.bf16.mxu0 0
  %385 = vmatmul.mubr.bf16.gmra.mrb[0].mxu0 %v99
  %v386 = vpop.f32.mrb[0].mxu0
  %v387 = vadd.f32 %v70, %v386
  %v388 = vpop.f32.mrb[0].mxu0
  %v389 = vadd.f32 %v74, %v388
  %v390 = vpop.f32.mrb[0].mxu0
  %v391 = vadd.f32 %v70, %v390
  %v392 = vpop.f32.mrb[0].mxu0
  %v393 = vadd.f32 %v74, %v392
  %394 = vmatprep.mubr.bf16.mxu0 0
  %395 = vmatmul.mubr.bf16.gmra.mrb[0].mxu0 %v100
  %v396 = vpop.f32.mrb[0].mxu0
  %v397 = vadd.f32 %v70, %v396
  %v398 = vpop.f32.mrb[0].mxu0
  %v399 = vadd.f32 %v74, %v398
  %v400 = vpop.f32.mrb[0].mxu0
  %v401 = vadd.f32 %v70, %v400
  %v402 = vpop.f32.mrb[0].mxu0
  %v403 = vadd.f32 %v74, %v402
  %404 = vmatprep.mubr.bf16.mxu0 0
  %405 = vmatmul.mubr.bf16.gmra.mrb[0].mxu0 %v101
  %v406 = vpop.f32.mrb[0].mxu0
  %v407 = vadd.f32 %v70, %v406
  %v408 = vpop.f32.mrb[0].mxu0
  %v409 = vadd.f32 %v74, %v408
  %v410 = vpop.f32.mrb[0].mxu0
  %v411 = vadd.f32 %v70, %v410
  %v412 = vpop.f32.mrb[0].mxu0
  %v413 = vadd.f32 %v74, %v412
  %414 = vmatprep.mubr.bf16.mxu0 0
  %415 = vmatmul.mubr.bf16.gmra.mrb[0].mxu0 %v102
  %v416 = vpop.f32.mrb[0].mxu0
  %v417 = vadd.f32 %v70, %v416
  %v418 = vpop.f32.mrb[0].mxu0
  %v419 = vadd.f32 %v74, %v418
  %v420 = vpop.f32.mrb[0].mxu0
  %v421 = vadd.f32 %v70, %v420
  %v422 = vpop.f32.mrb[0].mxu0
  %v423 = vadd.f32 %v74, %v422
  %424 = vmatprep.mubr.bf16.mxu0 0
  %425 = vmatmul.mubr.bf16.gmra.mrb[0].mxu0 %v103
  %v426 = vpop.f32.mrb[0].mxu0
  %v427 = vadd.f32 %v70, %v426
  %v428 = vpop.f32.mrb[0].mxu0
  %v429 = vadd.f32 %v74, %v428
  %v430 = vpop.f32.mrb[0].mxu0
  %v431 = vadd.f32 %v70, %v430
  %v432 = vpop.f32.mrb[0].mxu0
  %v433 = vadd.f32 %v74, %v432
  %434 = vdwg.mxu0
  %vm435 = vcmp.ge.f32.partialorder %v304, 0.0
  %vm436 = vcmp.ge.f32.partialorder %v306, 0.0
  %vm437 = vcmp.ge.f32.partialorder %v387, 0.0
  %vm438 = vcmp.ge.f32.partialorder %v389, 0.0
  %vm439 = vcmp.ge.f32.partialorder %v308, 0.0
  %vm440 = vcmp.ge.f32.partialorder %v310, 0.0
  %vm441 = vcmp.ge.f32.partialorder %v391, 0.0
  %vm442 = vcmp.ge.f32.partialorder %v393, 0.0
  %vm443 = vcmp.ge.f32.partialorder %v314, 0.0
  %vm444 = vcmp.ge.f32.partialorder %v316, 0.0
  %vm445 = vcmp.ge.f32.partialorder %v397, 0.0
  %vm446 = vcmp.ge.f32.partialorder %v399, 0.0
  %vm447 = vcmp.ge.f32.partialorder %v318, 0.0
  %vm448 = vcmp.ge.f32.partialorder %v320, 0.0
  %vm449 = vcmp.ge.f32.partialorder %v401, 0.0
  %vm450 = vcmp.ge.f32.partialorder %v403, 0.0
  %vm451 = vcmp.ge.f32.partialorder %v324, 0.0
  %vm452 = vcmp.ge.f32.partialorder %v326, 0.0
  %vm453 = vcmp.ge.f32.partialorder %v407, 0.0
  %vm454 = vcmp.ge.f32.partialorder %v409, 0.0
  %vm455 = vcmp.ge.f32.partialorder %v328, 0.0
  %vm456 = vcmp.ge.f32.partialorder %v330, 0.0
  %vm457 = vcmp.ge.f32.partialorder %v411, 0.0
  %vm458 = vcmp.ge.f32.partialorder %v413, 0.0
  %vm459 = vcmp.ge.f32.partialorder %v334, 0.0
  %vm460 = vcmp.ge.f32.partialorder %v336, 0.0
  %vm461 = vcmp.ge.f32.partialorder %v417, 0.0
  %vm462 = vcmp.ge.f32.partialorder %v419, 0.0
  %vm463 = vcmp.ge.f32.partialorder %v338, 0.0
  %vm464 = vcmp.ge.f32.partialorder %v340, 0.0
  %vm465 = vcmp.ge.f32.partialorder %v421, 0.0
  %vm466 = vcmp.ge.f32.partialorder %v423, 0.0
  %vm467 = vcmp.ge.f32.partialorder %v344, 0.0
  %vm468 = vcmp.ge.f32.partialorder %v346, 0.0
  %vm469 = vcmp.ge.f32.partialorder %v427, 0.0
  %vm470 = vcmp.ge.f32.partialorder %v429, 0.0
  %vm471 = vcmp.ge.f32.partialorder %v348, 0.0
  %vm472 = vcmp.ge.f32.partialorder %v350, 0.0
  %vm473 = vcmp.ge.f32.partialorder %v431, 0.0
  %vm474 = vcmp.ge.f32.partialorder %v433, 0.0
  %v475 = vmul.f32 %v304, 0.1
  %v476 = vmul.f32 %v306, 0.1
  %v477 = vmul.f32 %v387, 0.1
  %v478 = vmul.f32 %v389, 0.1
  %v479 = vmul.f32 %v308, 0.1
  %v480 = vmul.f32 %v310, 0.1
  %v481 = vmul.f32 %v391, 0.1
  %v482 = vmul.f32 %v393, 0.1
  %v483 = vmul.f32 %v314, 0.1
  %v484 = vmul.f32 %v316, 0.1
  %v485 = vmul.f32 %v397, 0.1
  %v486 = vmul.f32 %v399, 0.1
  %v487 = vmul.f32 %v318, 0.1
  %v488 = vmul.f32 %v320, 0.1
  %v489 = vmul.f32 %v401, 0.1
  %v490 = vmul.f32 %v403, 0.1
  %v491 = vmul.f32 %v324, 0.1
  %v492 = vmul.f32 %v326, 0.1
  %v493 = vmul.f32 %v407, 0.1
  %v494 = vmul.f32 %v409, 0.1
  %v495 = vmul.f32 %v328, 0.1
  %v496 = vmul.f32 %v330, 0.1
  %v497 = vmul.f32 %v411, 0.1
  %v498 = vmul.f32 %v413, 0.1
  %v499 = vmul.f32 %v334, 0.1
  %v500 = vmul.f32 %v336, 0.1
  %v501 = vmul.f32 %v417, 0.1
  %v502 = vmul.f32 %v419, 0.1
  %v503 = vmul.f32 %v338, 0.1
  %v504 = vmul.f32 %v340, 0.1
  %v505 = vmul.f32 %v421, 0.1
  %v506 = vmul.f32 %v423, 0.1
  %v507 = vmul.f32 %v344, 0.1
  %v508 = vmul.f32 %v346, 0.1
  %v509 = vmul.f32 %v427, 0.1
  %v510 = vmul.f32 %v429, 0.1
  %v511 = vmul.f32 %v348, 0.1
  %v512 = vmul.f32 %v350, 0.1
  %v513 = vmul.f32 %v431, 0.1
  %v514 = vmul.f32 %v433, 0.1
  %v515 = vsel %vm435, %v304, %v475
  %v516 = vsel %vm436, %v306, %v476
  %v517 = vsel %vm437, %v387, %v477
  %v518 = vsel %vm438, %v389, %v478
  %v519 = vsel %vm439, %v308, %v479
  %v520 = vsel %vm440, %v310, %v480
  %v521 = vsel %vm441, %v391, %v481
  %v522 = vsel %vm442, %v393, %v482
  %v523 = vsel %vm443, %v314, %v483
  %v524 = vsel %vm444, %v316, %v484
  %v525 = vsel %vm445, %v397, %v485
  %v526 = vsel %vm446, %v399, %v486
  %v527 = vsel %vm447, %v318, %v487
  %v528 = vsel %vm448, %v320, %v488
  %v529 = vsel %vm449, %v401, %v489
  %v530 = vsel %vm450, %v403, %v490
  %v531 = vsel %vm451, %v324, %v491
  %v532 = vsel %vm452, %v326, %v492
  %v533 = vsel %vm453, %v407, %v493
  %v534 = vsel %vm454, %v409, %v494
  %v535 = vsel %vm455, %v328, %v495
  %v536 = vsel %vm456, %v330, %v496
  %v537 = vsel %vm457, %v411, %v497
  %v538 = vsel %vm458, %v413, %v498
  %v539 = vsel %vm459, %v334, %v499
  %v540 = vsel %vm460, %v336, %v500
  %v541 = vsel %vm461, %v417, %v501
  %v542 = vsel %vm462, %v419, %v502
  %v543 = vsel %vm463, %v338, %v503
  %v544 = vsel %vm464, %v340, %v504
  %v545 = vsel %vm465, %v421, %v505
  %v546 = vsel %vm466, %v423, %v506
  %v547 = vsel %vm467, %v344, %v507
  %v548 = vsel %vm468, %v346, %v508
  %v549 = vsel %vm469, %v427, %v509
  %v550 = vsel %vm470, %v429, %v510
  %v551 = vsel %vm471, %v348, %v511
  %v552 = vsel %vm472, %v350, %v512
  %v553 = vsel %vm473, %v431, %v513
  %v554 = vsel %vm474, %v433, %v514
  %v555 = vpack.c.bf16 %v519, %v515
  %v556 = vpack.c.bf16 %v520, %v516
  %v557 = vpack.c.bf16 %v521, %v517
  %v558 = vpack.c.bf16 %v522, %v518
  %v559 = vpack.c.bf16 %v527, %v523
  %v560 = vpack.c.bf16 %v528, %v524
  %v561 = vpack.c.bf16 %v529, %v525
  %v562 = vpack.c.bf16 %v530, %v526
  %v563 = vpack.c.bf16 %v535, %v531
  %v564 = vpack.c.bf16 %v536, %v532
  %v565 = vpack.c.bf16 %v537, %v533
  %v566 = vpack.c.bf16 %v538, %v534
  %v567 = vpack.c.bf16 %v543, %v539
  %v568 = vpack.c.bf16 %v544, %v540
  %v569 = vpack.c.bf16 %v545, %v541
  %v570 = vpack.c.bf16 %v546, %v542
  %v571 = vpack.c.bf16 %v551, %v547
  %v572 = vpack.c.bf16 %v552, %v548
  %v573 = vpack.c.bf16 %v553, %v549
  %v574 = vpack.c.bf16 %v554, %v550
  %v595 = vunpack.c.l.b16 %v555
  %v596 = vunpack.c.l.b16 %v556
  %v597 = vunpack.c.l.b16 %v557
  %v598 = vunpack.c.l.b16 %v558
  %v599 = vunpack.c.h.b16 %v555
  %v600 = vunpack.c.h.b16 %v556
  %v601 = vunpack.c.h.b16 %v557
  %v602 = vunpack.c.h.b16 %v558
  %v603 = vunpack.c.l.b16 %v559
  %v604 = vunpack.c.l.b16 %v560
  %v605 = vunpack.c.l.b16 %v561
  %v606 = vunpack.c.l.b16 %v562
  %v607 = vunpack.c.h.b16 %v559
  %v608 = vunpack.c.h.b16 %v560
  %v609 = vunpack.c.h.b16 %v561
  %v610 = vunpack.c.h.b16 %v562
  %v611 = vunpack.c.l.b16 %v563
  %v612 = vunpack.c.l.b16 %v564
  %v613 = vunpack.c.l.b16 %v565
  %v614 = vunpack.c.l.b16 %v566
  %v615 = vunpack.c.h.b16 %v563
  %v616 = vunpack.c.h.b16 %v564
  %v617 = vunpack.c.h.b16 %v565
  %v618 = vunpack.c.h.b16 %v566
  %v619 = vunpack.c.l.b16 %v567
  %v620 = vunpack.c.l.b16 %v568
  %v621 = vunpack.c.l.b16 %v569
  %v622 = vunpack.c.l.b16 %v570
  %v623 = vunpack.c.h.b16 %v567
  %v624 = vunpack.c.h.b16 %v568
  %v625 = vunpack.c.h.b16 %v569
  %v626 = vunpack.c.h.b16 %v570
  %v627 = vunpack.c.l.b16 %v571
  %v628 = vunpack.c.l.b16 %v572
  %v629 = vunpack.c.l.b16 %v573
  %v630 = vunpack.c.l.b16 %v574
  %v631 = vunpack.c.h.b16 %v571
  %v632 = vunpack.c.h.b16 %v572
  %v633 = vunpack.c.h.b16 %v573
  %v634 = vunpack.c.h.b16 %v574
  %v635 = vpack.c.b16 %v596, %v595
  %v636 = vpack.c.b16 %v598, %v597
  %v637 = vpack.c.b16 %v600, %v599
  %v638 = vpack.c.b16 %v602, %v601
  %v639 = vpack.c.b16 %v604, %v603
  %v640 = vpack.c.b16 %v606, %v605
  %v641 = vpack.c.b16 %v608, %v607
  %v642 = vpack.c.b16 %v610, %v609
  %v643 = vpack.c.b16 %v612, %v611
  %v644 = vpack.c.b16 %v614, %v613
  %v645 = vpack.c.b16 %v616, %v615
  %v646 = vpack.c.b16 %v618, %v617
  %v647 = vpack.c.b16 %v620, %v619
  %v648 = vpack.c.b16 %v622, %v621
  %v649 = vpack.c.b16 %v624, %v623
  %v650 = vpack.c.b16 %v626, %v625
  %v651 = vpack.c.b16 %v628, %v627
  %v652 = vpack.c.b16 %v630, %v629
  %v653 = vpack.c.b16 %v632, %v631
  %v654 = vpack.c.b16 %v634, %v633
  %675 = vst [vmem:[%s3] sm:$0xff] %v635
  %676 = vst [vmem:[%s3 + $0x8] sm:$0xff] %v636
  %677 = vst [vmem:[%s3 + $0x10] sm:$0xff] %v637
  %678 = vst [vmem:[%s3 + $0x18] sm:$0xff] %v638
  %679 = vst [vmem:[%s3 + $0x20] sm:$0xff] %v639
  %680 = vst [vmem:[%s3 + $0x28] sm:$0xff] %v640
  %681 = vst [vmem:[%s3 + $0x30] sm:$0xff] %v641
  %682 = vst [vmem:[%s3 + $0x38] sm:$0xff] %v642
  %683 = vst [vmem:[%s3 + $0x40] sm:$0xff] %v643
  %684 = vst [vmem:[%s3 + $0x48] sm:$0xff] %v644
  %685 = vst [vmem:[%s3 + $0x50] sm:$0xff] %v645
  %686 = vst [vmem:[%s3 + $0x58] sm:$0xff] %v646
  %687 = vst [vmem:[%s3 + $0x60] sm:$0xff] %v647
  %688 = vst [vmem:[%s3 + $0x68] sm:$0xff] %v648
  %689 = vst [vmem:[%s3 + $0x70] sm:$0xff] %v649
  %690 = vst [vmem:[%s3 + $0x78] sm:$0xff] %v650
  %691 = vst [vmem:[%s3 + $0x80] sm:$0xff] %v651
  %692 = vst [vmem:[%s3 + $0x88] sm:$0xff] %v652
  %vm693 = vcmask 1041408
  %vm694 = vsmask.f32 1280
  %vm695 = vmand %vm693, %vm694
  %vm696 = vcmask 1045508
  %vm697 = vsmask.f32 5376
  %vm698 = vmand %vm696, %vm697
  %vm699 = vmor %vm698, %vm695
  %v700 = vld [vmem:[%s3 + $0x90] sm:$0x33]
  %v701 = vsel %vm699, %v653, %v700
  %702 = vst [vmem:[%s3 + $0x90] sm:$0x33] %v701
  %v703 = vld [vmem:[%s3 + $0x98] sm:$0x33]
  %v704 = vsel %vm699, %v654, %v703
  %705 = vst [vmem:[%s3 + $0x98] sm:$0x33] %v704
  // Predicated region
  $region14: #{autoencoder_forward.5} parent=0 // pred_check
    _
  $region15: #{autoencoder_forward.5} parent=0 // pred_check_branch
    %707 = sbr.rel (0) target = $region17
  $region16: #{autoencoder_forward.5} parent=0 // pred_region
    _
  $region17: #{autoencoder_forward.5} parent=0 // pred_fallthru
    _
  // Predicated region
  $region18: #{autoencoder_forward.5} parent=0 // pred_check
    _
  $region19: #{autoencoder_forward.5} parent=0 // pred_check_branch
    %709 = sbr.rel (0) target = $region21
  $region20: #{autoencoder_forward.5} parent=0 // pred_region
    _
  $region21: #{autoencoder_forward.5} parent=0 // pred_fallthru
    _

// kernel: autoencoder_forward.6
$region0: #{autoencoder_forward.6}
  #allocation0 [shape = 'u32[]', space=smem, size = 0x4, offset = 0x4, fixed_abs, tag = 'smem constant byte address 0x4 - core index']
  #allocation1 [shape = 'u32[144,128]{1,0:T(1,128)}', space=vmem, size = 0x12000, scoped, tag = 'internal scratch']
  %s0 = inlined_call_operand.vmem [shape: bf16[324,256], index: 0, kind: input, shape index: {}]
  %s1 = inlined_call_operand.vmem [shape: bf16[256,128], index: 1, kind: input, shape index: {}]
  %s2 = inlined_call_operand.vmem [shape: f32[1,128], index: 2, kind: input, shape index: {}]
  %s3 = inlined_call_operand.vmem [shape: bf16[324,128], index: 3, kind: output, shape index: {}]
  %s4 = sld [smem:[#allocation0]]
  $region22: #{autoencoder_forward.6} parent=0
    _
  %s6 = ssub.s32 1, %s4
  %s7 = scalar_select 0, %s6, %s4
  // Predicated region
  $region2: #{autoencoder_forward.6} parent=0 // pred_check
    _
  $region3: #{autoencoder_forward.6} parent=0 // pred_check_branch
    %9 = sbr.rel (0) target = $region5
  $region4: #{autoencoder_forward.6} parent=0 // pred_region
    _
  $region5: #{autoencoder_forward.6} parent=0 // pred_fallthru
    _
  // Predicated region
  $region6: #{autoencoder_forward.6} parent=0 // pred_check
    _
  $region7: #{autoencoder_forward.6} parent=0 // pred_check_branch
    %11 = sbr.rel (0) target = $region9
  $region8: #{autoencoder_forward.6} parent=0 // pred_region
    _
  $region9: #{autoencoder_forward.6} parent=0 // pred_fallthru
    _
  // Predicated region
  $region10: #{autoencoder_forward.6} parent=0 // pred_check
    _
  $region11: #{autoencoder_forward.6} parent=0 // pred_check_branch
    %13 = sbr.rel (0) target = $region13
  $region12: #{autoencoder_forward.6} parent=0 // pred_region
    _
  $region13: #{autoencoder_forward.6} parent=0 // pred_fallthru
    _
  %v15 = vld [vmem:[%s0] sm:$0xff]
  %v16 = vld [vmem:[%s0 + $0x8] sm:$0xff]
  %v17 = vld [vmem:[%s0 + $0x10] sm:$0xff]
  %v18 = vld [vmem:[%s0 + $0x18] sm:$0xff]
  %v19 = vld [vmem:[%s0 + $0x20] sm:$0xff]
  %v20 = vld [vmem:[%s0 + $0x28] sm:$0xff]
  %v21 = vld [vmem:[%s0 + $0x30] sm:$0xff]
  %v22 = vld [vmem:[%s0 + $0x38] sm:$0xff]
  %v23 = vld [vmem:[%s0 + $0x40] sm:$0xff]
  %v24 = vld [vmem:[%s0 + $0x48] sm:$0xff]
  %v25 = vld [vmem:[%s0 + $0x50] sm:$0xff]
  %v26 = vld [vmem:[%s0 + $0x58] sm:$0xff]
  %v27 = vld [vmem:[%s0 + $0x60] sm:$0xff]
  %v28 = vld [vmem:[%s0 + $0x68] sm:$0xff]
  %v29 = vld [vmem:[%s0 + $0x70] sm:$0xff]
  %v30 = vld [vmem:[%s0 + $0x78] sm:$0xff]
  %v31 = vld [vmem:[%s0 + $0x80] sm:$0xff]
  %v32 = vld [vmem:[%s0 + $0x88] sm:$0xff]
  %v33 = vld [vmem:[%s0 + $0x90] sm:$0xff]
  %v34 = vld [vmem:[%s0 + $0x98] sm:$0xff]
  %v35 = vld [vmem:[%s0 + $0xa0] sm:$0xff]
  %v36 = vld [vmem:[%s0 + $0xa8] sm:$0xff]
  %v37 = vld [vmem:[%s0 + $0xb0] sm:$0xff]
  %v38 = vld [vmem:[%s0 + $0xb8] sm:$0xff]
  %v39 = vld [vmem:[%s0 + $0xc0] sm:$0xff]
  %v40 = vld [vmem:[%s0 + $0xc8] sm:$0xff]
  %v41 = vld [vmem:[%s0 + $0xd0] sm:$0xff]
  %v42 = vld [vmem:[%s0 + $0xd8] sm:$0xff]
  %v43 = vld [vmem:[%s0 + $0xe0] sm:$0xff]
  %v44 = vld [vmem:[%s0 + $0xe8] sm:$0xff]
  %v45 = vld [vmem:[%s0 + $0xf0] sm:$0xff]
  %v46 = vld [vmem:[%s0 + $0xf8] sm:$0xff]
  %v47 = vld [vmem:[%s0 + $0x100] sm:$0xff]
  %v48 = vld [vmem:[%s0 + $0x108] sm:$0xff]
  %v49 = vld [vmem:[%s0 + $0x110] sm:$0xff]
  %v50 = vld [vmem:[%s0 + $0x118] sm:$0xff]
  %v51 = vld [vmem:[%s0 + $0x120] sm:$0xff]
  %v52 = vld [vmem:[%s0 + $0x128] sm:$0xff]
  %v53 = vld [vmem:[%s0 + $0x130] sm:$0xff]
  %v54 = vld [vmem:[%s0 + $0x138] sm:$0xff]
  %v55 = vld [vmem:[%s0 + $0x140] sm:$0x33]
  %v56 = vld [vmem:[%s1] sm:$0xf]
  %v57 = vld [vmem:[%s1 + $0x4] sm:$0xf]
  %v58 = vld [vmem:[%s1 + $0x8] sm:$0xf]
  %v59 = vld [vmem:[%s1 + $0xc] sm:$0xf]
  %v60 = vld [vmem:[%s1 + $0x10] sm:$0xf]
  %v61 = vld [vmem:[%s1 + $0x14] sm:$0xf]
  %v62 = vld [vmem:[%s1 + $0x18] sm:$0xf]
  %v63 = vld [vmem:[%s1 + $0x1c] sm:$0xf]
  %v64 = vld [vmem:[%s1 + $0x20] sm:$0xf]
  %v65 = vld [vmem:[%s1 + $0x24] sm:$0xf]
  %v66 = vld [vmem:[%s1 + $0x28] sm:$0xf]
  %v67 = vld [vmem:[%s1 + $0x2c] sm:$0xf]
  %v68 = vld [vmem:[%s1 + $0x30] sm:$0xf]
  %v69 = vld [vmem:[%s1 + $0x34] sm:$0xf]
  %v70 = vld [vmem:[%s1 + $0x38] sm:$0xf]
  %v71 = vld [vmem:[%s1 + $0x3c] sm:$0xf]
  %v72 = vld [vmem:[%s1 + $0x40] sm:$0xf]
  %v73 = vld [vmem:[%s1 + $0x44] sm:$0xf]
  %v74 = vld [vmem:[%s1 + $0x48] sm:$0xf]
  %v75 = vld [vmem:[%s1 + $0x4c] sm:$0xf]
  %v76 = vld [vmem:[%s1 + $0x50] sm:$0xf]
  %v77 = vld [vmem:[%s1 + $0x54] sm:$0xf]
  %v78 = vld [vmem:[%s1 + $0x58] sm:$0xf]
  %v79 = vld [vmem:[%s1 + $0x5c] sm:$0xf]
  %v80 = vld [vmem:[%s1 + $0x60] sm:$0xf]
  %v81 = vld [vmem:[%s1 + $0x64] sm:$0xf]
  %v82 = vld [vmem:[%s1 + $0x68] sm:$0xf]
  %v83 = vld [vmem:[%s1 + $0x6c] sm:$0xf]
  %v84 = vld [vmem:[%s1 + $0x70] sm:$0xf]
  %v85 = vld [vmem:[%s1 + $0x74] sm:$0xf]
  %v86 = vld [vmem:[%s1 + $0x78] sm:$0xf]
  %v87 = vld [vmem:[%s1 + $0x7c] sm:$0xf]
  %v88 = vld [vmem:[%s2] sm:$0x1]
  %v90 = vlaneseq
  %v91 = vshrl.u32 %v90, 7
  %v92 = vsub.s32 0, %v91
  %v93 = vrot.slane %v88, %v92
  %v136 = vunpack.c.l.b16 %v15
  %v137 = vunpack.c.h.b16 %v15
  %v138 = vunpack.c.l.b16 %v16
  %v139 = vunpack.c.h.b16 %v16
  %v140 = vunpack.c.l.b16 %v17
  %v141 = vunpack.c.h.b16 %v17
  %v142 = vunpack.c.l.b16 %v18
  %v143 = vunpack.c.h.b16 %v18
  %v144 = vunpack.c.l.b16 %v19
  %v145 = vunpack.c.h.b16 %v19
  %v146 = vunpack.c.l.b16 %v20
  %v147 = vunpack.c.h.b16 %v20
  %v148 = vunpack.c.l.b16 %v21
  %v149 = vunpack.c.h.b16 %v21
  %v150 = vunpack.c.l.b16 %v22
  %v151 = vunpack.c.h.b16 %v22
  %v152 = vunpack.c.l.b16 %v23
  %v153 = vunpack.c.h.b16 %v23
  %v154 = vunpack.c.l.b16 %v24
  %v155 = vunpack.c.h.b16 %v24
  %v156 = vunpack.c.l.b16 %v25
  %v157 = vunpack.c.h.b16 %v25
  %v158 = vunpack.c.l.b16 %v26
  %v159 = vunpack.c.h.b16 %v26
  %v160 = vunpack.c.l.b16 %v27
  %v161 = vunpack.c.h.b16 %v27
  %v162 = vunpack.c.l.b16 %v28
  %v163 = vunpack.c.h.b16 %v28
  %v164 = vunpack.c.l.b16 %v29
  %v165 = vunpack.c.h.b16 %v29
  %v166 = vunpack.c.l.b16 %v30
  %v167 = vunpack.c.h.b16 %v30
  %v168 = vunpack.c.l.b16 %v31
  %v169 = vunpack.c.h.b16 %v31
  %v170 = vunpack.c.l.b16 %v32
  %v171 = vunpack.c.h.b16 %v32
  %v172 = vunpack.c.l.b16 %v33
  %v173 = vunpack.c.h.b16 %v33
  %v174 = vunpack.c.l.b16 %v34
  %v175 = vunpack.c.h.b16 %v34
  %v176 = vunpack.c.l.b16 %v35
  %v177 = vunpack.c.h.b16 %v35
  %v178 = vunpack.c.l.b16 %v36
  %v179 = vunpack.c.h.b16 %v36
  %v180 = vunpack.c.l.b16 %v37
  %v181 = vunpack.c.h.b16 %v37
  %v182 = vunpack.c.l.b16 %v38
  %v183 = vunpack.c.h.b16 %v38
  %v184 = vunpack.c.l.b16 %v39
  %v185 = vunpack.c.h.b16 %v39
  %v186 = vunpack.c.l.b16 %v40
  %v187 = vunpack.c.h.b16 %v40
  %v188 = vunpack.c.l.b16 %v41
  %v189 = vunpack.c.h.b16 %v41
  %v190 = vunpack.c.l.b16 %v42
  %v191 = vunpack.c.h.b16 %v42
  %v192 = vunpack.c.l.b16 %v43
  %v193 = vunpack.c.h.b16 %v43
  %v194 = vunpack.c.l.b16 %v44
  %v195 = vunpack.c.h.b16 %v44
  %v196 = vunpack.c.l.b16 %v45
  %v197 = vunpack.c.h.b16 %v45
  %v198 = vunpack.c.l.b16 %v46
  %v199 = vunpack.c.h.b16 %v46
  %v200 = vunpack.c.l.b16 %v47
  %v201 = vunpack.c.h.b16 %v47
  %v202 = vunpack.c.l.b16 %v48
  %v203 = vunpack.c.h.b16 %v48
  %v204 = vunpack.c.l.b16 %v49
  %v205 = vunpack.c.h.b16 %v49
  %v206 = vunpack.c.l.b16 %v50
  %v207 = vunpack.c.h.b16 %v50
  %v208 = vunpack.c.l.b16 %v51
  %v209 = vunpack.c.h.b16 %v51
  %v210 = vunpack.c.l.b16 %v52
  %v211 = vunpack.c.h.b16 %v52
  %v212 = vunpack.c.l.b16 %v53
  %v213 = vunpack.c.h.b16 %v53
  %v214 = vunpack.c.l.b16 %v54
  %v215 = vunpack.c.h.b16 %v54
  %v216 = vunpack.c.l.b16 %v55
  %v217 = vunpack.c.h.b16 %v55
  %v218 = vpack.c.b16 %v138, %v136
  %v219 = vpack.c.b16 %v139, %v137
  %v220 = vpack.c.b16 %v142, %v140
  %v221 = vpack.c.b16 %v143, %v141
  %v222 = vpack.c.b16 %v146, %v144
  %v223 = vpack.c.b16 %v147, %v145
  %v224 = vpack.c.b16 %v150, %v148
  %v225 = vpack.c.b16 %v151, %v149
  %v226 = vpack.c.b16 %v154, %v152
  %v227 = vpack.c.b16 %v155, %v153
  %v228 = vpack.c.b16 %v158, %v156
  %v229 = vpack.c.b16 %v159, %v157
  %v230 = vpack.c.b16 %v162, %v160
  %v231 = vpack.c.b16 %v163, %v161
  %v232 = vpack.c.b16 %v166, %v164
  %v233 = vpack.c.b16 %v167, %v165
  %v234 = vpack.c.b16 %v170, %v168
  %v235 = vpack.c.b16 %v171, %v169
  %v236 = vpack.c.b16 %v174, %v172
  %v237 = vpack.c.b16 %v175, %v173
  %v238 = vpack.c.b16 %v178, %v176
  %v239 = vpack.c.b16 %v179, %v177
  %v240 = vpack.c.b16 %v182, %v180
  %v241 = vpack.c.b16 %v183, %v181
  %v242 = vpack.c.b16 %v186, %v184
  %v243 = vpack.c.b16 %v187, %v185
  %v244 = vpack.c.b16 %v190, %v188
  %v245 = vpack.c.b16 %v191, %v189
  %v246 = vpack.c.b16 %v194, %v192
  %v247 = vpack.c.b16 %v195, %v193
  %v248 = vpack.c.b16 %v198, %v196
  %v249 = vpack.c.b16 %v199, %v197
  %v250 = vpack.c.b16 %v202, %v200
  %v251 = vpack.c.b16 %v203, %v201
  %v252 = vpack.c.b16 %v206, %v204
  %v253 = vpack.c.b16 %v207, %v205
  %v254 = vpack.c.b16 %v210, %v208
  %v255 = vpack.c.b16 %v211, %v209
  %v256 = vpack.c.b16 %v214, %v212
  %v257 = vpack.c.b16 %v215, %v213
  %v258 = vpack.c.b16 %v216, %v216
  %v259 = vpack.c.b16 %v217, %v217
  %v334 = vunpack.c.l.b16 %v56
  %v335 = vunpack.c.l.b16 %v57
  %v336 = vunpack.c.l.b16 %v58
  %v337 = vunpack.c.l.b16 %v59
  %v338 = vunpack.c.l.b16 %v60
  %v339 = vunpack.c.l.b16 %v61
  %v340 = vunpack.c.l.b16 %v62
  %v341 = vunpack.c.l.b16 %v63
  %v342 = vunpack.c.l.b16 %v64
  %v343 = vunpack.c.l.b16 %v65
  %v344 = vunpack.c.l.b16 %v66
  %v345 = vunpack.c.l.b16 %v67
  %v346 = vunpack.c.l.b16 %v68
  %v347 = vunpack.c.l.b16 %v69
  %v348 = vunpack.c.l.b16 %v70
  %v349 = vunpack.c.l.b16 %v71
  %v350 = vunpack.c.l.b16 %v72
  %v351 = vunpack.c.l.b16 %v73
  %v352 = vunpack.c.l.b16 %v74
  %v353 = vunpack.c.l.b16 %v75
  %v354 = vunpack.c.l.b16 %v76
  %v355 = vunpack.c.l.b16 %v77
  %v356 = vunpack.c.l.b16 %v78
  %v357 = vunpack.c.l.b16 %v79
  %v358 = vunpack.c.l.b16 %v80
  %v359 = vunpack.c.l.b16 %v81
  %v360 = vunpack.c.l.b16 %v82
  %v361 = vunpack.c.l.b16 %v83
  %v362 = vunpack.c.l.b16 %v84
  %v363 = vunpack.c.l.b16 %v85
  %v364 = vunpack.c.l.b16 %v86
  %v365 = vunpack.c.l.b16 %v87
  %v366 = vpack.c.b16 %v335, %v334
  %v367 = vpack.c.b16 %v337, %v336
  %v368 = vpack.c.b16 %v339, %v338
  %v369 = vpack.c.b16 %v341, %v340
  %v370 = vpack.c.b16 %v343, %v342
  %v371 = vpack.c.b16 %v345, %v344
  %v372 = vpack.c.b16 %v347, %v346
  %v373 = vpack.c.b16 %v349, %v348
  %v374 = vpack.c.b16 %v351, %v350
  %v375 = vpack.c.b16 %v353, %v352
  %v376 = vpack.c.b16 %v355, %v354
  %v377 = vpack.c.b16 %v357, %v356
  %v378 = vpack.c.b16 %v359, %v358
  %v379 = vpack.c.b16 %v361, %v360
  %v380 = vpack.c.b16 %v363, %v362
  %v381 = vpack.c.b16 %v365, %v364
  %398 = vmatprep.subr.bf16.mxu0 0
  %399 = vmatpush1.bf16.msra.mxu0 %v366
  %400 = vmatprep.subr.bf16.mxu0 0
  %401 = vmatpush1.bf16.msra.mxu0 %v367
  %402 = vmatprep.subr.bf16.mxu0 0
  %403 = vmatpush1.bf16.msra.mxu0 %v368
  %404 = vmatprep.subr.bf16.mxu0 0
  %405 = vmatpush1.bf16.msra.mxu0 %v369
  %406 = vmatprep.subr.bf16.mxu0 0
  %407 = vmatpush1.bf16.msra.mxu0 %v370
  %408 = vmatprep.subr.bf16.mxu0 0
  %409 = vmatpush1.bf16.msra.mxu0 %v371
  %410 = vmatprep.subr.bf16.mxu0 0
  %411 = vmatpush1.bf16.msra.mxu0 %v372
  %412 = vmatprep.subr.bf16.mxu0 0
  %413 = vmatpush1.bf16.msra.mxu0 %v373
  %414 = vmatprep.subr.bf16.mxu0 0
  %415 = vmatpush1.bf16.msra.mxu0 %v374
  %416 = vmatprep.subr.bf16.mxu0 0
  %417 = vmatpush1.bf16.msra.mxu0 %v375
  %418 = vmatprep.subr.bf16.mxu0 0
  %419 = vmatpush1.bf16.msra.mxu0 %v376
  %420 = vmatprep.subr.bf16.mxu0 0
  %421 = vmatpush1.bf16.msra.mxu0 %v377
  %422 = vmatprep.subr.bf16.mxu0 0
  %423 = vmatpush1.bf16.msra.mxu0 %v378
  %424 = vmatprep.subr.bf16.mxu0 0
  %425 = vmatpush1.bf16.msra.mxu0 %v379
  %426 = vmatprep.subr.bf16.mxu0 0
  %427 = vmatpush1.bf16.msra.mxu0 %v380
  %428 = vmatprep.subr.bf16.mxu0 0
  %429 = vmatpush1.bf16.msra.mxu0 %v381
  %430 = vmatprep.mubr.bf16.mxu0 %v219
  %431 = vmatmul.mubr.bf16.gmra.mrb[0].mxu0 %v218
  %v432 = vpop.f32.mrb[0].mxu0
  %v433 = vadd.f32 %v93, %v432
  %v434 = vpop.f32.mrb[0].mxu0
  %v435 = vpop.f32.mrb[0].mxu0
  %v436 = vadd.f32 %v93, %v435
  %v437 = vpop.f32.mrb[0].mxu0
  %438 = vmatprep.mubr.bf16.mxu0 %v221
  %439 = vmatmul.mubr.bf16.gmra.mrb[0].mxu0 %v220
  %v440 = vpop.f32.mrb[0].mxu0
  %v441 = vadd.f32 %v93, %v440
  %v442 = vpop.f32.mrb[0].mxu0
  %v443 = vpop.f32.mrb[0].mxu0
  %v444 = vadd.f32 %v93, %v443
  %v445 = vpop.f32.mrb[0].mxu0
  %446 = vmatprep.mubr.bf16.mxu0 %v223
  %447 = vmatmul.mubr.bf16.gmra.mrb[0].mxu0 %v222
  %v448 = vpop.f32.mrb[0].mxu0
  %v449 = vadd.f32 %v93, %v448
  %v450 = vpop.f32.mrb[0].mxu0
  %v451 = vpop.f32.mrb[0].mxu0
  %v452 = vadd.f32 %v93, %v451
  %v453 = vpop.f32.mrb[0].mxu0
  %454 = vmatprep.mubr.bf16.mxu0 %v225
  %455 = vmatmul.mubr.bf16.gmra.mrb[0].mxu0 %v224
  %v456 = vpop.f32.mrb[0].mxu0
  %v457 = vadd.f32 %v93, %v456
  %v458 = vpop.f32.mrb[0].mxu0
  %v459 = vpop.f32.mrb[0].mxu0
  %v460 = vadd.f32 %v93, %v459
  %v461 = vpop.f32.mrb[0].mxu0
  %462 = vmatprep.mubr.bf16.mxu0 %v227
  %463 = vmatmul.mubr.bf16.gmra.mrb[0].mxu0 %v226
  %v464 = vpop.f32.mrb[0].mxu0
  %v465 = vadd.f32 %v93, %v464
  %v466 = vpop.f32.mrb[0].mxu0
  %v467 = vpop.f32.mrb[0].mxu0
  %v468 = vadd.f32 %v93, %v467
  %v469 = vpop.f32.mrb[0].mxu0
  %470 = vmatprep.mubr.bf16.mxu0 %v229
  %471 = vmatmul.mubr.bf16.gmra.mrb[0].mxu0 %v228
  %v472 = vpop.f32.mrb[0].mxu0
  %v473 = vadd.f32 %v93, %v472
  %v474 = vpop.f32.mrb[0].mxu0
  %v475 = vpop.f32.mrb[0].mxu0
  %v476 = vadd.f32 %v93, %v475
  %v477 = vpop.f32.mrb[0].mxu0
  %478 = vmatprep.mubr.bf16.mxu0 %v231
  %479 = vmatmul.mubr.bf16.gmra.mrb[0].mxu0 %v230
  %v480 = vpop.f32.mrb[0].mxu0
  %v481 = vadd.f32 %v93, %v480
  %v482 = vpop.f32.mrb[0].mxu0
  %v483 = vpop.f32.mrb[0].mxu0
  %v484 = vadd.f32 %v93, %v483
  %v485 = vpop.f32.mrb[0].mxu0
  %486 = vmatprep.mubr.bf16.mxu0 %v233
  %487 = vmatmul.mubr.bf16.gmra.mrb[0].mxu0 %v232
  %v488 = vpop.f32.mrb[0].mxu0
  %v489 = vadd.f32 %v93, %v488
  %v490 = vpop.f32.mrb[0].mxu0
  %v491 = vpop.f32.mrb[0].mxu0
  %v492 = vadd.f32 %v93, %v491
  %v493 = vpop.f32.mrb[0].mxu0
  %494 = vmatprep.mubr.bf16.mxu0 %v235
  %495 = vmatmul.mubr.bf16.gmra.mrb[0].mxu0 %v234
  %v496 = vpop.f32.mrb[0].mxu0
  %v497 = vadd.f32 %v93, %v496
  %v498 = vpop.f32.mrb[0].mxu0
  %v499 = vpop.f32.mrb[0].mxu0
  %v500 = vadd.f32 %v93, %v499
  %v501 = vpop.f32.mrb[0].mxu0
  %502 = vmatprep.mubr.bf16.mxu0 %v237
  %503 = vmatmul.mubr.bf16.gmra.mrb[0].mxu0 %v236
  %v504 = vpop.f32.mrb[0].mxu0
  %v505 = vadd.f32 %v93, %v504
  %v506 = vpop.f32.mrb[0].mxu0
  %v507 = vpop.f32.mrb[0].mxu0
  %v508 = vadd.f32 %v93, %v507
  %v509 = vpop.f32.mrb[0].mxu0
  %510 = vmatprep.mubr.bf16.mxu0 %v239
  %511 = vmatmul.mubr.bf16.gmra.mrb[0].mxu0 %v238
  %v512 = vpop.f32.mrb[0].mxu0
  %v513 = vadd.f32 %v93, %v512
  %v514 = vpop.f32.mrb[0].mxu0
  %v515 = vpop.f32.mrb[0].mxu0
  %v516 = vadd.f32 %v93, %v515
  %v517 = vpop.f32.mrb[0].mxu0
  %518 = vmatprep.mubr.bf16.mxu0 %v241
  %519 = vmatmul.mubr.bf16.gmra.mrb[0].mxu0 %v240
  %v520 = vpop.f32.mrb[0].mxu0
  %v521 = vadd.f32 %v93, %v520
  %v522 = vpop.f32.mrb[0].mxu0
  %v523 = vpop.f32.mrb[0].mxu0
  %v524 = vadd.f32 %v93, %v523
  %v525 = vpop.f32.mrb[0].mxu0
  %526 = vmatprep.mubr.bf16.mxu0 %v243
  %527 = vmatmul.mubr.bf16.gmra.mrb[0].mxu0 %v242
  %v528 = vpop.f32.mrb[0].mxu0
  %v529 = vadd.f32 %v93, %v528
  %v530 = vpop.f32.mrb[0].mxu0
  %v531 = vpop.f32.mrb[0].mxu0
  %v532 = vadd.f32 %v93, %v531
  %v533 = vpop.f32.mrb[0].mxu0
  %534 = vmatprep.mubr.bf16.mxu0 %v245
  %535 = vmatmul.mubr.bf16.gmra.mrb[0].mxu0 %v244
  %v536 = vpop.f32.mrb[0].mxu0
  %v537 = vadd.f32 %v93, %v536
  %v538 = vpop.f32.mrb[0].mxu0
  %v539 = vpop.f32.mrb[0].mxu0
  %v540 = vadd.f32 %v93, %v539
  %v541 = vpop.f32.mrb[0].mxu0
  %542 = vmatprep.mubr.bf16.mxu0 %v247
  %543 = vmatmul.mubr.bf16.gmra.mrb[0].mxu0 %v246
  %v544 = vpop.f32.mrb[0].mxu0
  %v545 = vadd.f32 %v93, %v544
  %v546 = vpop.f32.mrb[0].mxu0
  %v547 = vpop.f32.mrb[0].mxu0
  %v548 = vadd.f32 %v93, %v547
  %v549 = vpop.f32.mrb[0].mxu0
  %550 = vmatprep.mubr.bf16.mxu0 %v249
  %551 = vmatmul.mubr.bf16.gmra.mrb[0].mxu0 %v248
  %v552 = vpop.f32.mrb[0].mxu0
  %v553 = vadd.f32 %v93, %v552
  %v554 = vpop.f32.mrb[0].mxu0
  %v555 = vpop.f32.mrb[0].mxu0
  %v556 = vadd.f32 %v93, %v555
  %v557 = vpop.f32.mrb[0].mxu0
  %558 = vmatprep.mubr.bf16.mxu0 %v251
  %559 = vmatmul.mubr.bf16.gmra.mrb[0].mxu0 %v250
  %v560 = vpop.f32.mrb[0].mxu0
  %v561 = vadd.f32 %v93, %v560
  %v562 = vpop.f32.mrb[0].mxu0
  %v563 = vpop.f32.mrb[0].mxu0
  %v564 = vadd.f32 %v93, %v563
  %v565 = vpop.f32.mrb[0].mxu0
  %566 = vmatprep.mubr.bf16.mxu0 %v253
  %567 = vmatmul.mubr.bf16.gmra.mrb[0].mxu0 %v252
  %v568 = vpop.f32.mrb[0].mxu0
  %v569 = vadd.f32 %v93, %v568
  %v570 = vpop.f32.mrb[0].mxu0
  %v571 = vpop.f32.mrb[0].mxu0
  %v572 = vadd.f32 %v93, %v571
  %v573 = vpop.f32.mrb[0].mxu0
  %574 = vmatprep.mubr.bf16.mxu0 %v255
  %575 = vmatmul.mubr.bf16.gmra.mrb[0].mxu0 %v254
  %v576 = vpop.f32.mrb[0].mxu0
  %v577 = vadd.f32 %v93, %v576
  %v578 = vpop.f32.mrb[0].mxu0
  %v579 = vpop.f32.mrb[0].mxu0
  %v580 = vadd.f32 %v93, %v579
  %v581 = vpop.f32.mrb[0].mxu0
  %582 = vmatprep.mubr.bf16.mxu0 %v257
  %583 = vmatmul.mubr.bf16.gmra.mrb[0].mxu0 %v256
  %v584 = vpop.f32.mrb[0].mxu0
  %v585 = vadd.f32 %v93, %v584
  %v586 = vpop.f32.mrb[0].mxu0
  %v587 = vpop.f32.mrb[0].mxu0
  %v588 = vadd.f32 %v93, %v587
  %v589 = vpop.f32.mrb[0].mxu0
  %590 = vmatprep.mubr.bf16.mxu0 %v259
  %591 = vmatmul.mubr.bf16.gmra.mrb[0].mxu0 %v258
  %v592 = vpop.f32.mrb[0].mxu0
  %v593 = vadd.f32 %v93, %v592
  %v594 = vpop.f32.mrb[0].mxu0
  %v595 = vpop.f32.mrb[0].mxu0
  %v596 = vpop.f32.mrb[0].mxu0
  %597 = vdwg.mxu0
  %vm598 = vcmp.ge.f32.partialorder %v433, 0.0
  %vm599 = vcmp.ge.f32.partialorder %v436, 0.0
  %vm600 = vcmp.ge.f32.partialorder %v441, 0.0
  %vm601 = vcmp.ge.f32.partialorder %v444, 0.0
  %vm602 = vcmp.ge.f32.partialorder %v449, 0.0
  %vm603 = vcmp.ge.f32.partialorder %v452, 0.0
  %vm604 = vcmp.ge.f32.partialorder %v457, 0.0
  %vm605 = vcmp.ge.f32.partialorder %v460, 0.0
  %vm606 = vcmp.ge.f32.partialorder %v465, 0.0
  %vm607 = vcmp.ge.f32.partialorder %v468, 0.0
  %vm608 = vcmp.ge.f32.partialorder %v473, 0.0
  %vm609 = vcmp.ge.f32.partialorder %v476, 0.0
  %vm610 = vcmp.ge.f32.partialorder %v481, 0.0
  %vm611 = vcmp.ge.f32.partialorder %v484, 0.0
  %vm612 = vcmp.ge.f32.partialorder %v489, 0.0
  %vm613 = vcmp.ge.f32.partialorder %v492, 0.0
  %vm614 = vcmp.ge.f32.partialorder %v497, 0.0
  %vm615 = vcmp.ge.f32.partialorder %v500, 0.0
  %vm616 = vcmp.ge.f32.partialorder %v505, 0.0
  %vm617 = vcmp.ge.f32.partialorder %v508, 0.0
  %vm618 = vcmp.ge.f32.partialorder %v513, 0.0
  %vm619 = vcmp.ge.f32.partialorder %v516, 0.0
  %vm620 = vcmp.ge.f32.partialorder %v521, 0.0
  %vm621 = vcmp.ge.f32.partialorder %v524, 0.0
  %vm622 = vcmp.ge.f32.partialorder %v529, 0.0
  %vm623 = vcmp.ge.f32.partialorder %v532, 0.0
  %vm624 = vcmp.ge.f32.partialorder %v537, 0.0
  %vm625 = vcmp.ge.f32.partialorder %v540, 0.0
  %vm626 = vcmp.ge.f32.partialorder %v545, 0.0
  %vm627 = vcmp.ge.f32.partialorder %v548, 0.0
  %vm628 = vcmp.ge.f32.partialorder %v553, 0.0
  %vm629 = vcmp.ge.f32.partialorder %v556, 0.0
  %vm630 = vcmp.ge.f32.partialorder %v561, 0.0
  %vm631 = vcmp.ge.f32.partialorder %v564, 0.0
  %vm632 = vcmp.ge.f32.partialorder %v569, 0.0
  %vm633 = vcmp.ge.f32.partialorder %v572, 0.0
  %vm634 = vcmp.ge.f32.partialorder %v577, 0.0
  %vm635 = vcmp.ge.f32.partialorder %v580, 0.0
  %vm636 = vcmp.ge.f32.partialorder %v585, 0.0
  %vm637 = vcmp.ge.f32.partialorder %v588, 0.0
  %vm638 = vcmp.ge.f32.partialorder %v593, 0.0
  %v639 = vmul.f32 %v433, 0.1
  %v640 = vmul.f32 %v436, 0.1
  %v641 = vmul.f32 %v441, 0.1
  %v642 = vmul.f32 %v444, 0.1
  %v643 = vmul.f32 %v449, 0.1
  %v644 = vmul.f32 %v452, 0.1
  %v645 = vmul.f32 %v457, 0.1
  %v646 = vmul.f32 %v460, 0.1
  %v647 = vmul.f32 %v465, 0.1
  %v648 = vmul.f32 %v468, 0.1
  %v649 = vmul.f32 %v473, 0.1
  %v650 = vmul.f32 %v476, 0.1
  %v651 = vmul.f32 %v481, 0.1
  %v652 = vmul.f32 %v484, 0.1
  %v653 = vmul.f32 %v489, 0.1
  %v654 = vmul.f32 %v492, 0.1
  %v655 = vmul.f32 %v497, 0.1
  %v656 = vmul.f32 %v500, 0.1
  %v657 = vmul.f32 %v505, 0.1
  %v658 = vmul.f32 %v508, 0.1
  %v659 = vmul.f32 %v513, 0.1
  %v660 = vmul.f32 %v516, 0.1
  %v661 = vmul.f32 %v521, 0.1
  %v662 = vmul.f32 %v524, 0.1
  %v663 = vmul.f32 %v529, 0.1
  %v664 = vmul.f32 %v532, 0.1
  %v665 = vmul.f32 %v537, 0.1
  %v666 = vmul.f32 %v540, 0.1
  %v667 = vmul.f32 %v545, 0.1
  %v668 = vmul.f32 %v548, 0.1
  %v669 = vmul.f32 %v553, 0.1
  %v670 = vmul.f32 %v556, 0.1
  %v671 = vmul.f32 %v561, 0.1
  %v672 = vmul.f32 %v564, 0.1
  %v673 = vmul.f32 %v569, 0.1
  %v674 = vmul.f32 %v572, 0.1
  %v675 = vmul.f32 %v577, 0.1
  %v676 = vmul.f32 %v580, 0.1
  %v677 = vmul.f32 %v585, 0.1
  %v678 = vmul.f32 %v588, 0.1
  %v679 = vmul.f32 %v593, 0.1
  %v680 = vsel %vm598, %v433, %v639
  %v681 = vsel %vm599, %v436, %v640
  %v682 = vsel %vm600, %v441, %v641
  %v683 = vsel %vm601, %v444, %v642
  %v684 = vsel %vm602, %v449, %v643
  %v685 = vsel %vm603, %v452, %v644
  %v686 = vsel %vm604, %v457, %v645
  %v687 = vsel %vm605, %v460, %v646
  %v688 = vsel %vm606, %v465, %v647
  %v689 = vsel %vm607, %v468, %v648
  %v690 = vsel %vm608, %v473, %v649
  %v691 = vsel %vm609, %v476, %v650
  %v692 = vsel %vm610, %v481, %v651
  %v693 = vsel %vm611, %v484, %v652
  %v694 = vsel %vm612, %v489, %v653
  %v695 = vsel %vm613, %v492, %v654
  %v696 = vsel %vm614, %v497, %v655
  %v697 = vsel %vm615, %v500, %v656
  %v698 = vsel %vm616, %v505, %v657
  %v699 = vsel %vm617, %v508, %v658
  %v700 = vsel %vm618, %v513, %v659
  %v701 = vsel %vm619, %v516, %v660
  %v702 = vsel %vm620, %v521, %v661
  %v703 = vsel %vm621, %v524, %v662
  %v704 = vsel %vm622, %v529, %v663
  %v705 = vsel %vm623, %v532, %v664
  %v706 = vsel %vm624, %v537, %v665
  %v707 = vsel %vm625, %v540, %v666
  %v708 = vsel %vm626, %v545, %v667
  %v709 = vsel %vm627, %v548, %v668
  %v710 = vsel %vm628, %v553, %v669
  %v711 = vsel %vm629, %v556, %v670
  %v712 = vsel %vm630, %v561, %v671
  %v713 = vsel %vm631, %v564, %v672
  %v714 = vsel %vm632, %v569, %v673
  %v715 = vsel %vm633, %v572, %v674
  %v716 = vsel %vm634, %v577, %v675
  %v717 = vsel %vm635, %v580, %v676
  %v718 = vsel %vm636, %v585, %v677
  %v719 = vsel %vm637, %v588, %v678
  %v720 = vsel %vm638, %v593, %v679
  %v721 = vpack.c.bf16 %v681, %v680
  %v722 = vpack.c.bf16 %v683, %v682
  %v723 = vpack.c.bf16 %v685, %v684
  %v724 = vpack.c.bf16 %v687, %v686
  %v725 = vpack.c.bf16 %v689, %v688
  %v726 = vpack.c.bf16 %v691, %v690
  %v727 = vpack.c.bf16 %v693, %v692
  %v728 = vpack.c.bf16 %v695, %v694
  %v729 = vpack.c.bf16 %v697, %v696
  %v730 = vpack.c.bf16 %v699, %v698
  %v731 = vpack.c.bf16 %v701, %v700
  %v732 = vpack.c.bf16 %v703, %v702
  %v733 = vpack.c.bf16 %v705, %v704
  %v734 = vpack.c.bf16 %v707, %v706
  %v735 = vpack.c.bf16 %v709, %v708
  %v736 = vpack.c.bf16 %v711, %v710
  %v737 = vpack.c.bf16 %v713, %v712
  %v738 = vpack.c.bf16 %v715, %v714
  %v739 = vpack.c.bf16 %v717, %v716
  %v740 = vpack.c.bf16 %v719, %v718
  %v741 = vpack.c.bf16 %v720, %v720
  %v763 = vunpack.c.l.b16 %v721
  %v764 = vunpack.c.h.b16 %v721
  %v765 = vunpack.c.l.b16 %v722
  %v766 = vunpack.c.h.b16 %v722
  %v767 = vunpack.c.l.b16 %v723
  %v768 = vunpack.c.h.b16 %v723
  %v769 = vunpack.c.l.b16 %v724
  %v770 = vunpack.c.h.b16 %v724
  %v771 = vunpack.c.l.b16 %v725
  %v772 = vunpack.c.h.b16 %v725
  %v773 = vunpack.c.l.b16 %v726
  %v774 = vunpack.c.h.b16 %v726
  %v775 = vunpack.c.l.b16 %v727
  %v776 = vunpack.c.h.b16 %v727
  %v777 = vunpack.c.l.b16 %v728
  %v778 = vunpack.c.h.b16 %v728
  %v779 = vunpack.c.l.b16 %v729
  %v780 = vunpack.c.h.b16 %v729
  %v781 = vunpack.c.l.b16 %v730
  %v782 = vunpack.c.h.b16 %v730
  %v783 = vunpack.c.l.b16 %v731
  %v784 = vunpack.c.h.b16 %v731
  %v785 = vunpack.c.l.b16 %v732
  %v786 = vunpack.c.h.b16 %v732
  %v787 = vunpack.c.l.b16 %v733
  %v788 = vunpack.c.h.b16 %v733
  %v789 = vunpack.c.l.b16 %v734
  %v790 = vunpack.c.h.b16 %v734
  %v791 = vunpack.c.l.b16 %v735
  %v792 = vunpack.c.h.b16 %v735
  %v793 = vunpack.c.l.b16 %v736
  %v794 = vunpack.c.h.b16 %v736
  %v795 = vunpack.c.l.b16 %v737
  %v796 = vunpack.c.h.b16 %v737
  %v797 = vunpack.c.l.b16 %v738
  %v798 = vunpack.c.h.b16 %v738
  %v799 = vunpack.c.l.b16 %v739
  %v800 = vunpack.c.h.b16 %v739
  %v801 = vunpack.c.l.b16 %v740
  %v802 = vunpack.c.h.b16 %v740
  %v803 = vunpack.c.l.b16 %v741
  %v804 = vpack.c.b16 %v763, %v763
  %v805 = vpack.c.b16 %v764, %v764
  %v806 = vpack.c.b16 %v765, %v765
  %v807 = vpack.c.b16 %v766, %v766
  %v808 = vpack.c.b16 %v767, %v767
  %v809 = vpack.c.b16 %v768, %v768
  %v810 = vpack.c.b16 %v769, %v769
  %v811 = vpack.c.b16 %v770, %v770
  %v812 = vpack.c.b16 %v771, %v771
  %v813 = vpack.c.b16 %v772, %v772
  %v814 = vpack.c.b16 %v773, %v773
  %v815 = vpack.c.b16 %v774, %v774
  %v816 = vpack.c.b16 %v775, %v775
  %v817 = vpack.c.b16 %v776, %v776
  %v818 = vpack.c.b16 %v777, %v777
  %v819 = vpack.c.b16 %v778, %v778
  %v820 = vpack.c.b16 %v779, %v779
  %v821 = vpack.c.b16 %v780, %v780
  %v822 = vpack.c.b16 %v781, %v781
  %v823 = vpack.c.b16 %v782, %v782
  %v824 = vpack.c.b16 %v783, %v783
  %v825 = vpack.c.b16 %v784, %v784
  %v826 = vpack.c.b16 %v785, %v785
  %v827 = vpack.c.b16 %v786, %v786
  %v828 = vpack.c.b16 %v787, %v787
  %v829 = vpack.c.b16 %v788, %v788
  %v830 = vpack.c.b16 %v789, %v789
  %v831 = vpack.c.b16 %v790, %v790
  %v832 = vpack.c.b16 %v791, %v791
  %v833 = vpack.c.b16 %v792, %v792
  %v834 = vpack.c.b16 %v793, %v793
  %v835 = vpack.c.b16 %v794, %v794
  %v836 = vpack.c.b16 %v795, %v795
  %v837 = vpack.c.b16 %v796, %v796
  %v838 = vpack.c.b16 %v797, %v797
  %v839 = vpack.c.b16 %v798, %v798
  %v840 = vpack.c.b16 %v799, %v799
  %v841 = vpack.c.b16 %v800, %v800
  %v842 = vpack.c.b16 %v801, %v801
  %v843 = vpack.c.b16 %v802, %v802
  %v844 = vpack.c.b16 %v803, %v803
  %886 = vst [vmem:[%s3] sm:$0xf] %v804
  %887 = vst [vmem:[%s3 + $0x4] sm:$0xf] %v805
  %888 = vst [vmem:[%s3 + $0x8] sm:$0xf] %v806
  %889 = vst [vmem:[%s3 + $0xc] sm:$0xf] %v807
  %890 = vst [vmem:[%s3 + $0x10] sm:$0xf] %v808
  %891 = vst [vmem:[%s3 + $0x14] sm:$0xf] %v809
  %892 = vst [vmem:[%s3 + $0x18] sm:$0xf] %v810
  %893 = vst [vmem:[%s3 + $0x1c] sm:$0xf] %v811
  %894 = vst [vmem:[%s3 + $0x20] sm:$0xf] %v812
  %895 = vst [vmem:[%s3 + $0x24] sm:$0xf] %v813
  %896 = vst [vmem:[%s3 + $0x28] sm:$0xf] %v814
  %897 = vst [vmem:[%s3 + $0x2c] sm:$0xf] %v815
  %898 = vst [vmem:[%s3 + $0x30] sm:$0xf] %v816
  %899 = vst [vmem:[%s3 + $0x34] sm:$0xf] %v817
  %900 = vst [vmem:[%s3 + $0x38] sm:$0xf] %v818
  %901 = vst [vmem:[%s3 + $0x3c] sm:$0xf] %v819
  %902 = vst [vmem:[%s3 + $0x40] sm:$0xf] %v820
  %903 = vst [vmem:[%s3 + $0x44] sm:$0xf] %v821
  %904 = vst [vmem:[%s3 + $0x48] sm:$0xf] %v822
  %905 = vst [vmem:[%s3 + $0x4c] sm:$0xf] %v823
  %906 = vst [vmem:[%s3 + $0x50] sm:$0xf] %v824
  %907 = vst [vmem:[%s3 + $0x54] sm:$0xf] %v825
  %908 = vst [vmem:[%s3 + $0x58] sm:$0xf] %v826
  %909 = vst [vmem:[%s3 + $0x5c] sm:$0xf] %v827
  %910 = vst [vmem:[%s3 + $0x60] sm:$0xf] %v828
  %911 = vst [vmem:[%s3 + $0x64] sm:$0xf] %v829
  %912 = vst [vmem:[%s3 + $0x68] sm:$0xf] %v830
  %913 = vst [vmem:[%s3 + $0x6c] sm:$0xf] %v831
  %914 = vst [vmem:[%s3 + $0x70] sm:$0xf] %v832
  %915 = vst [vmem:[%s3 + $0x74] sm:$0xf] %v833
  %916 = vst [vmem:[%s3 + $0x78] sm:$0xf] %v834
  %917 = vst [vmem:[%s3 + $0x7c] sm:$0xf] %v835
  %918 = vst [vmem:[%s3 + $0x80] sm:$0xf] %v836
  %919 = vst [vmem:[%s3 + $0x84] sm:$0xf] %v837
  %920 = vst [vmem:[%s3 + $0x88] sm:$0xf] %v838
  %921 = vst [vmem:[%s3 + $0x8c] sm:$0xf] %v839
  %922 = vst [vmem:[%s3 + $0x90] sm:$0xf] %v840
  %923 = vst [vmem:[%s3 + $0x94] sm:$0xf] %v841
  %924 = vst [vmem:[%s3 + $0x98] sm:$0xf] %v842
  %925 = vst [vmem:[%s3 + $0x9c] sm:$0xf] %v843
  %926 = vst [vmem:[%s3 + $0xa0] sm:$0x3] %v844
  // Predicated region
  $region14: #{autoencoder_forward.6} parent=0 // pred_check
    _
  $region15: #{autoencoder_forward.6} parent=0 // pred_check_branch
    %928 = sbr.rel (0) target = $region17
  $region16: #{autoencoder_forward.6} parent=0 // pred_region
    _
  $region17: #{autoencoder_forward.6} parent=0 // pred_fallthru
    _
  // Predicated region
  $region18: #{autoencoder_forward.6} parent=0 // pred_check
    _
  $region19: #{autoencoder_forward.6} parent=0 // pred_check_branch
    %930 = sbr.rel (0) target = $region21
  $region20: #{autoencoder_forward.6} parent=0 // pred_region
    _
  $region21: #{autoencoder_forward.6} parent=0 // pred_fallthru
    _

// kernel: autoencoder_forward.7
$region0: #{autoencoder_forward.7}
  #allocation0 [shape = 'u32[]', space=smem, size = 0x4, offset = 0x4, fixed_abs, tag = 'smem constant byte address 0x4 - core index']
  #allocation1 [shape = 'u32[144,128]{1,0:T(1,128)}', space=vmem, size = 0x12000, scoped, tag = 'internal scratch']
  %s0 = inlined_call_operand.vmem [shape: bf16[1156,128], index: 0, kind: input, shape index: {}]
  %s1 = inlined_call_operand.vmem [shape: bf16[128,128], index: 1, kind: input, shape index: {}]
  %s2 = inlined_call_operand.vmem [shape: f32[1,128], index: 2, kind: input, shape index: {}]
  %s3 = inlined_call_operand.vmem [shape: bf16[128,128], index: 3, kind: input, shape index: {}]
  %s4 = inlined_call_operand.vmem [shape: f32[1,128], index: 4, kind: input, shape index: {}]
  %s5 = inlined_call_operand.vmem [shape: bf16[128,128], index: 5, kind: input, shape index: {}]
  %s6 = inlined_call_operand.vmem [shape: bf16[1156,128], index: 6, kind: output, shape index: {}]
  %s7 = sld [smem:[#allocation0]]
  $region34: #{autoencoder_forward.7} parent=0
    _
  %s9 = ssub.s32 1, %s7
  %s10 = scalar_select 0, %s9, %s7
  // Predicated region
  $region2: #{autoencoder_forward.7} parent=0 // pred_check
    _
  $region3: #{autoencoder_forward.7} parent=0 // pred_check_branch
    %12 = sbr.rel (0) target = $region5
  $region4: #{autoencoder_forward.7} parent=0 // pred_region
    _
  $region5: #{autoencoder_forward.7} parent=0 // pred_fallthru
    _
  // Predicated region
  $region6: #{autoencoder_forward.7} parent=0 // pred_check
    _
  $region7: #{autoencoder_forward.7} parent=0 // pred_check_branch
    %14 = sbr.rel (0) target = $region9
  $region8: #{autoencoder_forward.7} parent=0 // pred_region
    _
  $region9: #{autoencoder_forward.7} parent=0 // pred_fallthru
    _
  // Predicated region
  $region10: #{autoencoder_forward.7} parent=0 // pred_check
    _
  $region11: #{autoencoder_forward.7} parent=0 // pred_check_branch
    %16 = sbr.rel (0) target = $region13
  $region12: #{autoencoder_forward.7} parent=0 // pred_region
    _
  $region13: #{autoencoder_forward.7} parent=0 // pred_fallthru
    _
  // Predicated region
  $region14: #{autoencoder_forward.7} parent=0 // pred_check
    _
  $region15: #{autoencoder_forward.7} parent=0 // pred_check_branch
    %18 = sbr.rel (0) target = $region17
  $region16: #{autoencoder_forward.7} parent=0 // pred_region
    _
  $region17: #{autoencoder_forward.7} parent=0 // pred_fallthru
    _
  // Predicated region
  $region18: #{autoencoder_forward.7} parent=0 // pred_check
    _
  $region19: #{autoencoder_forward.7} parent=0 // pred_check_branch
    %20 = sbr.rel (0) target = $region21
  $region20: #{autoencoder_forward.7} parent=0 // pred_region
    _
  $region21: #{autoencoder_forward.7} parent=0 // pred_fallthru
    _
  // Predicated region
  $region22: #{autoencoder_forward.7} parent=0 // pred_check
    _
  $region23: #{autoencoder_forward.7} parent=0 // pred_check_branch
    %22 = sbr.rel (0) target = $region25
  $region24: #{autoencoder_forward.7} parent=0 // pred_region
    _
  $region25: #{autoencoder_forward.7} parent=0 // pred_fallthru
    _
  %v24 = vld [vmem:[%s0] sm:$0xf]
  %v25 = vld [vmem:[%s0 + $0x4] sm:$0xf]
  %v26 = vld [vmem:[%s0 + $0x8] sm:$0xf]
  %v27 = vld [vmem:[%s0 + $0xc] sm:$0xf]
  %v28 = vld [vmem:[%s0 + $0x10] sm:$0xf]
  %v29 = vld [vmem:[%s0 + $0x14] sm:$0xf]
  %v30 = vld [vmem:[%s0 + $0x18] sm:$0xf]
  %v31 = vld [vmem:[%s0 + $0x1c] sm:$0xf]
  %v32 = vld [vmem:[%s0 + $0x20] sm:$0xf]
  %v33 = vld [vmem:[%s0 + $0x24] sm:$0xf]
  %v34 = vld [vmem:[%s0 + $0x28] sm:$0xf]
  %v35 = vld [vmem:[%s0 + $0x2c] sm:$0xf]
  %v36 = vld [vmem:[%s0 + $0x30] sm:$0xf]
  %v37 = vld [vmem:[%s0 + $0x34] sm:$0xf]
  %v38 = vld [vmem:[%s0 + $0x38] sm:$0xf]
  %v39 = vld [vmem:[%s0 + $0x3c] sm:$0xf]
  %v40 = vld [vmem:[%s0 + $0x40] sm:$0xf]
  %v41 = vld [vmem:[%s0 + $0x44] sm:$0xf]
  %v42 = vld [vmem:[%s0 + $0x48] sm:$0xf]
  %v43 = vld [vmem:[%s0 + $0x4c] sm:$0xf]
  %v44 = vld [vmem:[%s0 + $0x50] sm:$0xf]
  %v45 = vld [vmem:[%s0 + $0x54] sm:$0xf]
  %v46 = vld [vmem:[%s0 + $0x58] sm:$0xf]
  %v47 = vld [vmem:[%s0 + $0x5c] sm:$0xf]
  %v48 = vld [vmem:[%s0 + $0x60] sm:$0xf]
  %v49 = vld [vmem:[%s0 + $0x64] sm:$0xf]
  %v50 = vld [vmem:[%s0 + $0x68] sm:$0xf]
  %v51 = vld [vmem:[%s0 + $0x6c] sm:$0xf]
  %v52 = vld [vmem:[%s0 + $0x70] sm:$0xf]
  %v53 = vld [vmem:[%s0 + $0x74] sm:$0xf]
  %v54 = vld [vmem:[%s0 + $0x78] sm:$0xf]
  %v55 = vld [vmem:[%s0 + $0x7c] sm:$0xf]
  %v56 = vld [vmem:[%s0 + $0x80] sm:$0xf]
  %v57 = vld [vmem:[%s0 + $0x84] sm:$0xf]
  %v58 = vld [vmem:[%s0 + $0x88] sm:$0xf]
  %v59 = vld [vmem:[%s0 + $0x8c] sm:$0xf]
  %v60 = vld [vmem:[%s0 + $0x90] sm:$0xf]
  %v61 = vld [vmem:[%s0 + $0x94] sm:$0xf]
  %v62 = vld [vmem:[%s0 + $0x98] sm:$0xf]
  %v63 = vld [vmem:[%s0 + $0x9c] sm:$0xf]
  %v64 = vld [vmem:[%s0 + $0xa0] sm:$0xf]
  %v65 = vld [vmem:[%s0 + $0xa4] sm:$0xf]
  %v66 = vld [vmem:[%s0 + $0xa8] sm:$0xf]
  %v67 = vld [vmem:[%s0 + $0xac] sm:$0xf]
  %v68 = vld [vmem:[%s0 + $0xb0] sm:$0xf]
  %v69 = vld [vmem:[%s0 + $0xb4] sm:$0xf]
  %v70 = vld [vmem:[%s0 + $0xb8] sm:$0xf]
  %v71 = vld [vmem:[%s0 + $0xbc] sm:$0xf]
  %v72 = vld [vmem:[%s0 + $0xc0] sm:$0xf]
  %v73 = vld [vmem:[%s0 + $0xc4] sm:$0xf]
  %v74 = vld [vmem:[%s0 + $0xc8] sm:$0xf]
  %v75 = vld [vmem:[%s0 + $0xcc] sm:$0xf]
  %v76 = vld [vmem:[%s0 + $0xd0] sm:$0xf]
  %v77 = vld [vmem:[%s0 + $0xd4] sm:$0xf]
  %v78 = vld [vmem:[%s0 + $0xd8] sm:$0xf]
  %v79 = vld [vmem:[%s0 + $0xdc] sm:$0xf]
  %v80 = vld [vmem:[%s0 + $0xe0] sm:$0xf]
  %v81 = vld [vmem:[%s0 + $0xe4] sm:$0xf]
  %v82 = vld [vmem:[%s0 + $0xe8] sm:$0xf]
  %v83 = vld [vmem:[%s0 + $0xec] sm:$0xf]
  %v84 = vld [vmem:[%s0 + $0xf0] sm:$0xf]
  %v85 = vld [vmem:[%s0 + $0xf4] sm:$0xf]
  %v86 = vld [vmem:[%s0 + $0xf8] sm:$0xf]
  %v87 = vld [vmem:[%s0 + $0xfc] sm:$0xf]
  %v88 = vld [vmem:[%s0 + $0x100] sm:$0xf]
  %v89 = vld [vmem:[%s0 + $0x104] sm:$0xf]
  %v90 = vld [vmem:[%s0 + $0x108] sm:$0xf]
  %v91 = vld [vmem:[%s0 + $0x10c] sm:$0xf]
  %v92 = vld [vmem:[%s0 + $0x110] sm:$0xf]
  %v93 = vld [vmem:[%s0 + $0x114] sm:$0xf]
  %v94 = vld [vmem:[%s0 + $0x118] sm:$0xf]
  %v95 = vld [vmem:[%s0 + $0x11c] sm:$0xf]
  %v96 = vld [vmem:[%s0 + $0x120] sm:$0xf]
  %v97 = vld [vmem:[%s0 + $0x124] sm:$0xf]
  %v98 = vld [vmem:[%s0 + $0x128] sm:$0xf]
  %v99 = vld [vmem:[%s0 + $0x12c] sm:$0xf]
  %v100 = vld [vmem:[%s0 + $0x130] sm:$0xf]
  %v101 = vld [vmem:[%s0 + $0x134] sm:$0xf]
  %v102 = vld [vmem:[%s0 + $0x138] sm:$0xf]
  %v103 = vld [vmem:[%s0 + $0x13c] sm:$0xf]
  %v104 = vld [vmem:[%s0 + $0x140] sm:$0xf]
  %v105 = vld [vmem:[%s0 + $0x144] sm:$0xf]
  %v106 = vld [vmem:[%s0 + $0x148] sm:$0xf]
  %v107 = vld [vmem:[%s0 + $0x14c] sm:$0xf]
  %v108 = vld [vmem:[%s0 + $0x150] sm:$0xf]
  %v109 = vld [vmem:[%s0 + $0x154] sm:$0xf]
  %v110 = vld [vmem:[%s0 + $0x158] sm:$0xf]
  %v111 = vld [vmem:[%s0 + $0x15c] sm:$0xf]
  %v112 = vld [vmem:[%s0 + $0x160] sm:$0xf]
  %v113 = vld [vmem:[%s0 + $0x164] sm:$0xf]
  %v114 = vld [vmem:[%s0 + $0x168] sm:$0xf]
  %v115 = vld [vmem:[%s0 + $0x16c] sm:$0xf]
  %v116 = vld [vmem:[%s0 + $0x170] sm:$0xf]
  %v117 = vld [vmem:[%s0 + $0x174] sm:$0xf]
  %v118 = vld [vmem:[%s0 + $0x178] sm:$0xf]
  %v119 = vld [vmem:[%s0 + $0x17c] sm:$0xf]
  %v120 = vld [vmem:[%s0 + $0x180] sm:$0xf]
  %v121 = vld [vmem:[%s0 + $0x184] sm:$0xf]
  %v122 = vld [vmem:[%s0 + $0x188] sm:$0xf]
  %v123 = vld [vmem:[%s0 + $0x18c] sm:$0xf]
  %v124 = vld [vmem:[%s0 + $0x190] sm:$0xf]
  %v125 = vld [vmem:[%s0 + $0x194] sm:$0xf]
  %v126 = vld [vmem:[%s0 + $0x198] sm:$0xf]
  %v127 = vld [vmem:[%s0 + $0x19c] sm:$0xf]
  %v128 = vld [vmem:[%s0 + $0x1a0] sm:$0xf]
  %v129 = vld [vmem:[%s0 + $0x1a4] sm:$0xf]
  %v130 = vld [vmem:[%s0 + $0x1a8] sm:$0xf]
  %v131 = vld [vmem:[%s0 + $0x1ac] sm:$0xf]
  %v132 = vld [vmem:[%s0 + $0x1b0] sm:$0xf]
  %v133 = vld [vmem:[%s0 + $0x1b4] sm:$0xf]
  %v134 = vld [vmem:[%s0 + $0x1b8] sm:$0xf]
  %v135 = vld [vmem:[%s0 + $0x1bc] sm:$0xf]
  %v136 = vld [vmem:[%s0 + $0x1c0] sm:$0xf]
  %v137 = vld [vmem:[%s0 + $0x1c4] sm:$0xf]
  %v138 = vld [vmem:[%s0 + $0x1c8] sm:$0xf]
  %v139 = vld [vmem:[%s0 + $0x1cc] sm:$0xf]
  %v140 = vld [vmem:[%s0 + $0x1d0] sm:$0xf]
  %v141 = vld [vmem:[%s0 + $0x1d4] sm:$0xf]
  %v142 = vld [vmem:[%s0 + $0x1d8] sm:$0xf]
  %v143 = vld [vmem:[%s0 + $0x1dc] sm:$0xf]
  %v144 = vld [vmem:[%s0 + $0x1e0] sm:$0xf]
  %v145 = vld [vmem:[%s0 + $0x1e4] sm:$0xf]
  %v146 = vld [vmem:[%s0 + $0x1e8] sm:$0xf]
  %v147 = vld [vmem:[%s0 + $0x1ec] sm:$0xf]
  %v148 = vld [vmem:[%s0 + $0x1f0] sm:$0xf]
  %v149 = vld [vmem:[%s0 + $0x1f4] sm:$0xf]
  %v150 = vld [vmem:[%s0 + $0x1f8] sm:$0xf]
  %v151 = vld [vmem:[%s0 + $0x1fc] sm:$0xf]
  %v152 = vld [vmem:[%s0 + $0x200] sm:$0xf]
  %v153 = vld [vmem:[%s0 + $0x204] sm:$0xf]
  %v154 = vld [vmem:[%s0 + $0x208] sm:$0xf]
  %v155 = vld [vmem:[%s0 + $0x20c] sm:$0xf]
  %v156 = vld [vmem:[%s0 + $0x210] sm:$0xf]
  %v157 = vld [vmem:[%s0 + $0x214] sm:$0xf]
  %v158 = vld [vmem:[%s0 + $0x218] sm:$0xf]
  %v159 = vld [vmem:[%s0 + $0x21c] sm:$0xf]
  %v160 = vld [vmem:[%s0 + $0x220] sm:$0xf]
  %v161 = vld [vmem:[%s0 + $0x224] sm:$0xf]
  %v162 = vld [vmem:[%s0 + $0x228] sm:$0xf]
  %v163 = vld [vmem:[%s0 + $0x22c] sm:$0xf]
  %v164 = vld [vmem:[%s0 + $0x230] sm:$0xf]
  %v165 = vld [vmem:[%s0 + $0x234] sm:$0xf]
  %v166 = vld [vmem:[%s0 + $0x238] sm:$0xf]
  %v167 = vld [vmem:[%s0 + $0x23c] sm:$0xf]
  %v168 = vld [vmem:[%s0 + $0x240] sm:$0x3]
  %v169 = vld [vmem:[%s1] sm:$0xf]
  %v170 = vld [vmem:[%s1 + $0x4] sm:$0xf]
  %v171 = vld [vmem:[%s1 + $0x8] sm:$0xf]
  %v172 = vld [vmem:[%s1 + $0xc] sm:$0xf]
  %v173 = vld [vmem:[%s1 + $0x10] sm:$0xf]
  %v174 = vld [vmem:[%s1 + $0x14] sm:$0xf]
  %v175 = vld [vmem:[%s1 + $0x18] sm:$0xf]
  %v176 = vld [vmem:[%s1 + $0x1c] sm:$0xf]
  %v177 = vld [vmem:[%s1 + $0x20] sm:$0xf]
  %v178 = vld [vmem:[%s1 + $0x24] sm:$0xf]
  %v179 = vld [vmem:[%s1 + $0x28] sm:$0xf]
  %v180 = vld [vmem:[%s1 + $0x2c] sm:$0xf]
  %v181 = vld [vmem:[%s1 + $0x30] sm:$0xf]
  %v182 = vld [vmem:[%s1 + $0x34] sm:$0xf]
  %v183 = vld [vmem:[%s1 + $0x38] sm:$0xf]
  %v184 = vld [vmem:[%s1 + $0x3c] sm:$0xf]
  %v185 = vld [vmem:[%s2] sm:$0x1]
  %v187 = vlaneseq
  %v188 = vshrl.u32 %v187, 7
  %v189 = vsub.s32 0, %v188
  %v190 = vrot.slane %v185, %v189
  %v337 = vunpack.c.l.b16 %v24
  %v338 = vunpack.c.l.b16 %v25
  %v339 = vunpack.c.l.b16 %v26
  %v340 = vunpack.c.l.b16 %v27
  %v341 = vunpack.c.l.b16 %v28
  %v342 = vunpack.c.l.b16 %v29
  %v343 = vunpack.c.l.b16 %v30
  %v344 = vunpack.c.l.b16 %v31
  %v345 = vunpack.c.l.b16 %v32
  %v346 = vunpack.c.l.b16 %v33
  %v347 = vunpack.c.l.b16 %v34
  %v348 = vunpack.c.l.b16 %v35
  %v349 = vunpack.c.l.b16 %v36
  %v350 = vunpack.c.l.b16 %v37
  %v351 = vunpack.c.l.b16 %v38
  %v352 = vunpack.c.l.b16 %v39
  %v353 = vunpack.c.l.b16 %v40
  %v354 = vunpack.c.l.b16 %v41
  %v355 = vunpack.c.l.b16 %v42
  %v356 = vunpack.c.l.b16 %v43
  %v357 = vunpack.c.l.b16 %v44
  %v358 = vunpack.c.l.b16 %v45
  %v359 = vunpack.c.l.b16 %v46
  %v360 = vunpack.c.l.b16 %v47
  %v361 = vunpack.c.l.b16 %v48
  %v362 = vunpack.c.l.b16 %v49
  %v363 = vunpack.c.l.b16 %v50
  %v364 = vunpack.c.l.b16 %v51
  %v365 = vunpack.c.l.b16 %v52
  %v366 = vunpack.c.l.b16 %v53
  %v367 = vunpack.c.l.b16 %v54
  %v368 = vunpack.c.l.b16 %v55
  %v369 = vunpack.c.l.b16 %v56
  %v370 = vunpack.c.l.b16 %v57
  %v371 = vunpack.c.l.b16 %v58
  %v372 = vunpack.c.l.b16 %v59
  %v373 = vunpack.c.l.b16 %v60
  %v374 = vunpack.c.l.b16 %v61
  %v375 = vunpack.c.l.b16 %v62
  %v376 = vunpack.c.l.b16 %v63
  %v377 = vunpack.c.l.b16 %v64
  %v378 = vunpack.c.l.b16 %v65
  %v379 = vunpack.c.l.b16 %v66
  %v380 = vunpack.c.l.b16 %v67
  %v381 = vunpack.c.l.b16 %v68
  %v382 = vunpack.c.l.b16 %v69
  %v383 = vunpack.c.l.b16 %v70
  %v384 = vunpack.c.l.b16 %v71
  %v385 = vunpack.c.l.b16 %v72
  %v386 = vunpack.c.l.b16 %v73
  %v387 = vunpack.c.l.b16 %v74
  %v388 = vunpack.c.l.b16 %v75
  %v389 = vunpack.c.l.b16 %v76
  %v390 = vunpack.c.l.b16 %v77
  %v391 = vunpack.c.l.b16 %v78
  %v392 = vunpack.c.l.b16 %v79
  %v393 = vunpack.c.l.b16 %v80
  %v394 = vunpack.c.l.b16 %v81
  %v395 = vunpack.c.l.b16 %v82
  %v396 = vunpack.c.l.b16 %v83
  %v397 = vunpack.c.l.b16 %v84
  %v398 = vunpack.c.l.b16 %v85
  %v399 = vunpack.c.l.b16 %v86
  %v400 = vunpack.c.l.b16 %v87
  %v401 = vunpack.c.l.b16 %v88
  %v402 = vunpack.c.l.b16 %v89
  %v403 = vunpack.c.l.b16 %v90
  %v404 = vunpack.c.l.b16 %v91
  %v405 = vunpack.c.l.b16 %v92
  %v406 = vunpack.c.l.b16 %v93
  %v407 = vunpack.c.l.b16 %v94
  %v408 = vunpack.c.l.b16 %v95
  %v409 = vunpack.c.l.b16 %v96
  %v410 = vunpack.c.l.b16 %v97
  %v411 = vunpack.c.l.b16 %v98
  %v412 = vunpack.c.l.b16 %v99
  %v413 = vunpack.c.l.b16 %v100
  %v414 = vunpack.c.l.b16 %v101
  %v415 = vunpack.c.l.b16 %v102
  %v416 = vunpack.c.l.b16 %v103
  %v417 = vunpack.c.l.b16 %v104
  %v418 = vunpack.c.l.b16 %v105
  %v419 = vunpack.c.l.b16 %v106
  %v420 = vunpack.c.l.b16 %v107
  %v421 = vunpack.c.l.b16 %v108
  %v422 = vunpack.c.l.b16 %v109
  %v423 = vunpack.c.l.b16 %v110
  %v424 = vunpack.c.l.b16 %v111
  %v425 = vunpack.c.l.b16 %v112
  %v426 = vunpack.c.l.b16 %v113
  %v427 = vunpack.c.l.b16 %v114
  %v428 = vunpack.c.l.b16 %v115
  %v429 = vunpack.c.l.b16 %v116
  %v430 = vunpack.c.l.b16 %v117
  %v431 = vunpack.c.l.b16 %v118
  %v432 = vunpack.c.l.b16 %v119
  %v433 = vunpack.c.l.b16 %v120
  %v434 = vunpack.c.l.b16 %v121
  %v435 = vunpack.c.l.b16 %v122
  %v436 = vunpack.c.l.b16 %v123
  %v437 = vunpack.c.l.b16 %v124
  %v438 = vunpack.c.l.b16 %v125
  %v439 = vunpack.c.l.b16 %v126
  %v440 = vunpack.c.l.b16 %v127
  %v441 = vunpack.c.l.b16 %v128
  %v442 = vunpack.c.l.b16 %v129
  %v443 = vunpack.c.l.b16 %v130
  %v444 = vunpack.c.l.b16 %v131
  %v445 = vunpack.c.l.b16 %v132
  %v446 = vunpack.c.l.b16 %v133
  %v447 = vunpack.c.l.b16 %v134
  %v448 = vunpack.c.l.b16 %v135
  %v449 = vunpack.c.l.b16 %v136
  %v450 = vunpack.c.l.b16 %v137
  %v451 = vunpack.c.l.b16 %v138
  %v452 = vunpack.c.l.b16 %v139
  %v453 = vunpack.c.l.b16 %v140
  %v454 = vunpack.c.l.b16 %v141
  %v455 = vunpack.c.l.b16 %v142
  %v456 = vunpack.c.l.b16 %v143
  %v457 = vunpack.c.l.b16 %v144
  %v458 = vunpack.c.l.b16 %v145
  %v459 = vunpack.c.l.b16 %v146
  %v460 = vunpack.c.l.b16 %v147
  %v461 = vunpack.c.l.b16 %v148
  %v462 = vunpack.c.l.b16 %v149
  %v463 = vunpack.c.l.b16 %v150
  %v464 = vunpack.c.l.b16 %v151
  %v465 = vunpack.c.l.b16 %v152
  %v466 = vunpack.c.l.b16 %v153
  %v467 = vunpack.c.l.b16 %v154
  %v468 = vunpack.c.l.b16 %v155
  %v469 = vunpack.c.l.b16 %v156
  %v470 = vunpack.c.l.b16 %v157
  %v471 = vunpack.c.l.b16 %v158
  %v472 = vunpack.c.l.b16 %v159
  %v473 = vunpack.c.l.b16 %v160
  %v474 = vunpack.c.l.b16 %v161
  %v475 = vunpack.c.l.b16 %v162
  %v476 = vunpack.c.l.b16 %v163
  %v477 = vunpack.c.l.b16 %v164
  %v478 = vunpack.c.l.b16 %v165
  %v479 = vunpack.c.l.b16 %v166
  %v480 = vunpack.c.l.b16 %v167
  %v481 = vunpack.c.l.b16 %v168
  %v482 = vpack.c.b16 %v338, %v337
  %v483 = vpack.c.b16 %v340, %v339
  %v484 = vpack.c.b16 %v342, %v341
  %v485 = vpack.c.b16 %v344, %v343
  %v486 = vpack.c.b16 %v346, %v345
  %v487 = vpack.c.b16 %v348, %v347
  %v488 = vpack.c.b16 %v350, %v349
  %v489 = vpack.c.b16 %v352, %v351
  %v490 = vpack.c.b16 %v354, %v353
  %v491 = vpack.c.b16 %v356, %v355
  %v492 = vpack.c.b16 %v358, %v357
  %v493 = vpack.c.b16 %v360, %v359
  %v494 = vpack.c.b16 %v362, %v361
  %v495 = vpack.c.b16 %v364, %v363
  %v496 = vpack.c.b16 %v366, %v365
  %v497 = vpack.c.b16 %v368, %v367
  %v498 = vpack.c.b16 %v370, %v369
  %v499 = vpack.c.b16 %v372, %v371
  %v500 = vpack.c.b16 %v374, %v373
  %v501 = vpack.c.b16 %v376, %v375
  %v502 = vpack.c.b16 %v378, %v377
  %v503 = vpack.c.b16 %v380, %v379
  %v504 = vpack.c.b16 %v382, %v381
  %v505 = vpack.c.b16 %v384, %v383
  %v506 = vpack.c.b16 %v386, %v385
  %v507 = vpack.c.b16 %v388, %v387
  %v508 = vpack.c.b16 %v390, %v389
  %v509 = vpack.c.b16 %v392, %v391
  %v510 = vpack.c.b16 %v394, %v393
  %v511 = vpack.c.b16 %v396, %v395
  %v512 = vpack.c.b16 %v398, %v397
  %v513 = vpack.c.b16 %v400, %v399
  %v514 = vpack.c.b16 %v402, %v401
  %v515 = vpack.c.b16 %v404, %v403
  %v516 = vpack.c.b16 %v406, %v405
  %v517 = vpack.c.b16 %v408, %v407
  %v518 = vpack.c.b16 %v410, %v409
  %v519 = vpack.c.b16 %v412, %v411
  %v520 = vpack.c.b16 %v414, %v413
  %v521 = vpack.c.b16 %v416, %v415
  %v522 = vpack.c.b16 %v418, %v417
  %v523 = vpack.c.b16 %v420, %v419
  %v524 = vpack.c.b16 %v422, %v421
  %v525 = vpack.c.b16 %v424, %v423
  %v526 = vpack.c.b16 %v426, %v425
  %v527 = vpack.c.b16 %v428, %v427
  %v528 = vpack.c.b16 %v430, %v429
  %v529 = vpack.c.b16 %v432, %v431
  %v530 = vpack.c.b16 %v434, %v433
  %v531 = vpack.c.b16 %v436, %v435
  %v532 = vpack.c.b16 %v438, %v437
  %v533 = vpack.c.b16 %v440, %v439
  %v534 = vpack.c.b16 %v442, %v441
  %v535 = vpack.c.b16 %v444, %v443
  %v536 = vpack.c.b16 %v446, %v445
  %v537 = vpack.c.b16 %v448, %v447
  %v538 = vpack.c.b16 %v450, %v449
  %v539 = vpack.c.b16 %v452, %v451
  %v540 = vpack.c.b16 %v454, %v453
  %v541 = vpack.c.b16 %v456, %v455
  %v542 = vpack.c.b16 %v458, %v457
  %v543 = vpack.c.b16 %v460, %v459
  %v544 = vpack.c.b16 %v462, %v461
  %v545 = vpack.c.b16 %v464, %v463
  %v546 = vpack.c.b16 %v466, %v465
  %v547 = vpack.c.b16 %v468, %v467
  %v548 = vpack.c.b16 %v470, %v469
  %v549 = vpack.c.b16 %v472, %v471
  %v550 = vpack.c.b16 %v474, %v473
  %v551 = vpack.c.b16 %v476, %v475
  %v552 = vpack.c.b16 %v478, %v477
  %v553 = vpack.c.b16 %v480, %v479
  %v554 = vpack.c.b16 %v481, %v481
  %v644 = vunpack.c.l.b16 %v169
  %v645 = vunpack.c.l.b16 %v170
  %v646 = vunpack.c.l.b16 %v171
  %v647 = vunpack.c.l.b16 %v172
  %v648 = vunpack.c.l.b16 %v173
  %v649 = vunpack.c.l.b16 %v174
  %v650 = vunpack.c.l.b16 %v175
  %v651 = vunpack.c.l.b16 %v176
  %v652 = vunpack.c.l.b16 %v177
  %v653 = vunpack.c.l.b16 %v178
  %v654 = vunpack.c.l.b16 %v179
  %v655 = vunpack.c.l.b16 %v180
  %v656 = vunpack.c.l.b16 %v181
  %v657 = vunpack.c.l.b16 %v182
  %v658 = vunpack.c.l.b16 %v183
  %v659 = vunpack.c.l.b16 %v184
  %v660 = vpack.c.b16 %v645, %v644
  %v661 = vpack.c.b16 %v647, %v646
  %v662 = vpack.c.b16 %v649, %v648
  %v663 = vpack.c.b16 %v651, %v650
  %v664 = vpack.c.b16 %v653, %v652
  %v665 = vpack.c.b16 %v655, %v654
  %v666 = vpack.c.b16 %v657, %v656
  %v667 = vpack.c.b16 %v659, %v658
  %676 = vmatprep.subr.bf16.mxu0 0
  %677 = vmatpush1.bf16.msra.mxu0 %v660
  %678 = vmatprep.subr.bf16.mxu0 0
  %679 = vmatpush1.bf16.msra.mxu0 %v661
  %680 = vmatprep.subr.bf16.mxu0 0
  %681 = vmatpush1.bf16.msra.mxu0 %v662
  %682 = vmatprep.subr.bf16.mxu0 0
  %683 = vmatpush1.bf16.msra.mxu0 %v663
  %684 = vmatprep.subr.bf16.mxu0 0
  %685 = vmatpush1.bf16.msra.mxu0 %v664
  %686 = vmatprep.subr.bf16.mxu0 0
  %687 = vmatpush1.bf16.msra.mxu0 %v665
  %688 = vmatprep.subr.bf16.mxu0 0
  %689 = vmatpush1.bf16.msra.mxu0 %v666
  %690 = vmatprep.subr.bf16.mxu0 0
  %691 = vmatpush1.bf16.msra.mxu0 %v667
  %692 = vmatprep.subr.bf16.mxu0 0
  %693 = vmatpush1.bf16.msra.mxu0 0
  %694 = vmatprep.subr.bf16.mxu0 0
  %695 = vmatpush1.bf16.msra.mxu0 0
  %696 = vmatprep.subr.bf16.mxu0 0
  %697 = vmatpush1.bf16.msra.mxu0 0
  %698 = vmatprep.subr.bf16.mxu0 0
  %699 = vmatpush1.bf16.msra.mxu0 0
  %700 = vmatprep.subr.bf16.mxu0 0
  %701 = vmatpush1.bf16.msra.mxu0 0
  %702 = vmatprep.subr.bf16.mxu0 0
  %703 = vmatpush1.bf16.msra.mxu0 0
  %704 = vmatprep.subr.bf16.mxu0 0
  %705 = vmatpush1.bf16.msra.mxu0 0
  %706 = vmatprep.subr.bf16.mxu0 0
  %707 = vmatpush1.bf16.msra.mxu0 0
  %708 = vmatprep.mubr.bf16.mxu0 0
  %709 = vmatmul.mubr.bf16.gmra.mrb[0].mxu0 %v482
  %v710 = vpop.f32.mrb[0].mxu0
  %v711 = vadd.f32 %v190, %v710
  %v712 = vpop.f32.mrb[0].mxu0
  %v713 = vpop.f32.mrb[0].mxu0
  %v714 = vadd.f32 %v190, %v713
  %v715 = vpop.f32.mrb[0].mxu0
  %716 = vmatprep.mubr.bf16.mxu0 0
  %717 = vmatmul.mubr.bf16.gmra.mrb[0].mxu0 %v483
  %v718 = vpop.f32.mrb[0].mxu0
  %v719 = vadd.f32 %v190, %v718
  %v720 = vpop.f32.mrb[0].mxu0
  %v721 = vpop.f32.mrb[0].mxu0
  %v722 = vadd.f32 %v190, %v721
  %v723 = vpop.f32.mrb[0].mxu0
  %724 = vmatprep.mubr.bf16.mxu0 0
  %725 = vmatmul.mubr.bf16.gmra.mrb[0].mxu0 %v484
  %v726 = vpop.f32.mrb[0].mxu0
  %v727 = vadd.f32 %v190, %v726
  %v728 = vpop.f32.mrb[0].mxu0
  %v729 = vpop.f32.mrb[0].mxu0
  %v730 = vadd.f32 %v190, %v729
  %v731 = vpop.f32.mrb[0].mxu0
  %732 = vmatprep.mubr.bf16.mxu0 0
  %733 = vmatmul.mubr.bf16.gmra.mrb[0].mxu0 %v485
  %v734 = vpop.f32.mrb[0].mxu0
  %v735 = vadd.f32 %v190, %v734
  %v736 = vpop.f32.mrb[0].mxu0
  %v737 = vpop.f32.mrb[0].mxu0
  %v738 = vadd.f32 %v190, %v737
  %v739 = vpop.f32.mrb[0].mxu0
  %740 = vmatprep.mubr.bf16.mxu0 0
  %741 = vmatmul.mubr.bf16.gmra.mrb[0].mxu0 %v486
  %v742 = vpop.f32.mrb[0].mxu0
  %v743 = vadd.f32 %v190, %v742
  %v744 = vpop.f32.mrb[0].mxu0
  %v745 = vpop.f32.mrb[0].mxu0
  %v746 = vadd.f32 %v190, %v745
  %v747 = vpop.f32.mrb[0].mxu0
  %748 = vmatprep.mubr.bf16.mxu0 0
  %749 = vmatmul.mubr.bf16.gmra.mrb[0].mxu0 %v487
  %v750 = vpop.f32.mrb[0].mxu0
  %v751 = vadd.f32 %v190, %v750
  %v752 = vpop.f32.mrb[0].mxu0
  %v753 = vpop.f32.mrb[0].mxu0
  %v754 = vadd.f32 %v190, %v753
  %v755 = vpop.f32.mrb[0].mxu0
  %756 = vmatprep.mubr.bf16.mxu0 0
  %757 = vmatmul.mubr.bf16.gmra.mrb[0].mxu0 %v488
  %v758 = vpop.f32.mrb[0].mxu0
  %v759 = vadd.f32 %v190, %v758
  %v760 = vpop.f32.mrb[0].mxu0
  %v761 = vpop.f32.mrb[0].mxu0
  %v762 = vadd.f32 %v190, %v761
  %v763 = vpop.f32.mrb[0].mxu0
  %764 = vmatprep.mubr.bf16.mxu0 0
  %765 = vmatmul.mubr.bf16.gmra.mrb[0].mxu0 %v489
  %v766 = vpop.f32.mrb[0].mxu0
  %v767 = vadd.f32 %v190, %v766
  %v768 = vpop.f32.mrb[0].mxu0
  %v769 = vpop.f32.mrb[0].mxu0
  %v770 = vadd.f32 %v190, %v769
  %v771 = vpop.f32.mrb[0].mxu0
  %772 = vmatprep.mubr.bf16.mxu0 0
  %773 = vmatmul.mubr.bf16.gmra.mrb[0].mxu0 %v490
  %v774 = vpop.f32.mrb[0].mxu0
  %v775 = vadd.f32 %v190, %v774
  %v776 = vpop.f32.mrb[0].mxu0
  %v777 = vpop.f32.mrb[0].mxu0
  %v778 = vadd.f32 %v190, %v777
  %v779 = vpop.f32.mrb[0].mxu0
  %780 = vmatprep.mubr.bf16.mxu0 0
  %781 = vmatmul.mubr.bf16.gmra.mrb[0].mxu0 %v491
  %v782 = vpop.f32.mrb[0].mxu0
  %v783 = vadd.f32 %v190, %v782
  %v784 = vpop.f32.mrb[0].mxu0
  %v785 = vpop.f32.mrb[0].mxu0
  %v786 = vadd.f32 %v190, %v785
  %v787 = vpop.f32.mrb[0].mxu0
  %788 = vmatprep.mubr.bf16.mxu0 0
  %789 = vmatmul.mubr.bf16.gmra.mrb[0].mxu0 %v492
  %v790 = vpop.f32.mrb[0].mxu0
  %v791 = vadd.f32 %v190, %v790
  %v792 = vpop.f32.mrb[0].mxu0
  %v793 = vpop.f32.mrb[0].mxu0
  %v794 = vadd.f32 %v190, %v793
  %v795 = vpop.f32.mrb[0].mxu0
  %796 = vmatprep.mubr.bf16.mxu0 0
  %797 = vmatmul.mubr.bf16.gmra.mrb[0].mxu0 %v493
  %v798 = vpop.f32.mrb[0].mxu0
  %v799 = vadd.f32 %v190, %v798
  %v800 = vpop.f32.mrb[0].mxu0
  %v801 = vpop.f32.mrb[0].mxu0
  %v802 = vadd.f32 %v190, %v801
  %v803 = vpop.f32.mrb[0].mxu0
  %804 = vmatprep.mubr.bf16.mxu0 0
  %805 = vmatmul.mubr.bf16.gmra.mrb[0].mxu0 %v494
  %v806 = vpop.f32.mrb[0].mxu0
  %v807 = vadd.f32 %v190, %v806
  %v808 = vpop.f32.mrb[0].mxu0
  %v809 = vpop.f32.mrb[0].mxu0
  %v810 = vadd.f32 %v190, %v809
  %v811 = vpop.f32.mrb[0].mxu0
  %812 = vmatprep.mubr.bf16.mxu0 0
  %813 = vmatmul.mubr.bf16.gmra.mrb[0].mxu0 %v495
  %v814 = vpop.f32.mrb[0].mxu0
  %v815 = vadd.f32 %v190, %v814
  %v816 = vpop.f32.mrb[0].mxu0
  %v817 = vpop.f32.mrb[0].mxu0
  %v818 = vadd.f32 %v190, %v817
  %v819 = vpop.f32.mrb[0].mxu0
  %820 = vmatprep.mubr.bf16.mxu0 0
  %821 = vmatmul.mubr.bf16.gmra.mrb[0].mxu0 %v496
  %v822 = vpop.f32.mrb[0].mxu0
  %v823 = vadd.f32 %v190, %v822
  %v824 = vpop.f32.mrb[0].mxu0
  %v825 = vpop.f32.mrb[0].mxu0
  %v826 = vadd.f32 %v190, %v825
  %v827 = vpop.f32.mrb[0].mxu0
  %828 = vmatprep.mubr.bf16.mxu0 0
  %829 = vmatmul.mubr.bf16.gmra.mrb[0].mxu0 %v497
  %v830 = vpop.f32.mrb[0].mxu0
  %v831 = vadd.f32 %v190, %v830
  %v832 = vpop.f32.mrb[0].mxu0
  %v833 = vpop.f32.mrb[0].mxu0
  %v834 = vadd.f32 %v190, %v833
  %v835 = vpop.f32.mrb[0].mxu0
  %836 = vmatprep.mubr.bf16.mxu0 0
  %837 = vmatmul.mubr.bf16.gmra.mrb[0].mxu0 %v498
  %v838 = vpop.f32.mrb[0].mxu0
  %v839 = vadd.f32 %v190, %v838
  %v840 = vpop.f32.mrb[0].mxu0
  %v841 = vpop.f32.mrb[0].mxu0
  %v842 = vadd.f32 %v190, %v841
  %v843 = vpop.f32.mrb[0].mxu0
  %844 = vmatprep.mubr.bf16.mxu0 0
  %845 = vmatmul.mubr.bf16.gmra.mrb[0].mxu0 %v499
  %v846 = vpop.f32.mrb[0].mxu0
  %v847 = vadd.f32 %v190, %v846
  %v848 = vpop.f32.mrb[0].mxu0
  %v849 = vpop.f32.mrb[0].mxu0
  %v850 = vadd.f32 %v190, %v849
  %v851 = vpop.f32.mrb[0].mxu0
  %852 = vmatprep.mubr.bf16.mxu0 0
  %853 = vmatmul.mubr.bf16.gmra.mrb[0].mxu0 %v500
  %v854 = vpop.f32.mrb[0].mxu0
  %v855 = vadd.f32 %v190, %v854
  %v856 = vpop.f32.mrb[0].mxu0
  %v857 = vpop.f32.mrb[0].mxu0
  %v858 = vadd.f32 %v190, %v857
  %v859 = vpop.f32.mrb[0].mxu0
  %860 = vmatprep.mubr.bf16.mxu0 0
  %861 = vmatmul.mubr.bf16.gmra.mrb[0].mxu0 %v501
  %v862 = vpop.f32.mrb[0].mxu0
  %v863 = vadd.f32 %v190, %v862
  %v864 = vpop.f32.mrb[0].mxu0
  %v865 = vpop.f32.mrb[0].mxu0
  %v866 = vadd.f32 %v190, %v865
  %v867 = vpop.f32.mrb[0].mxu0
  %868 = vmatprep.mubr.bf16.mxu0 0
  %869 = vmatmul.mubr.bf16.gmra.mrb[0].mxu0 %v502
  %v870 = vpop.f32.mrb[0].mxu0
  %v871 = vadd.f32 %v190, %v870
  %v872 = vpop.f32.mrb[0].mxu0
  %v873 = vpop.f32.mrb[0].mxu0
  %v874 = vadd.f32 %v190, %v873
  %v875 = vpop.f32.mrb[0].mxu0
  %876 = vmatprep.mubr.bf16.mxu0 0
  %877 = vmatmul.mubr.bf16.gmra.mrb[0].mxu0 %v503
  %v878 = vpop.f32.mrb[0].mxu0
  %v879 = vadd.f32 %v190, %v878
  %v880 = vpop.f32.mrb[0].mxu0
  %v881 = vpop.f32.mrb[0].mxu0
  %v882 = vadd.f32 %v190, %v881
  %v883 = vpop.f32.mrb[0].mxu0
  %884 = vmatprep.mubr.bf16.mxu0 0
  %885 = vmatmul.mubr.bf16.gmra.mrb[0].mxu0 %v504
  %v886 = vpop.f32.mrb[0].mxu0
  %v887 = vadd.f32 %v190, %v886
  %v888 = vpop.f32.mrb[0].mxu0
  %v889 = vpop.f32.mrb[0].mxu0
  %v890 = vadd.f32 %v190, %v889
  %v891 = vpop.f32.mrb[0].mxu0
  %892 = vmatprep.mubr.bf16.mxu0 0
  %893 = vmatmul.mubr.bf16.gmra.mrb[0].mxu0 %v505
  %v894 = vpop.f32.mrb[0].mxu0
  %v895 = vadd.f32 %v190, %v894
  %v896 = vpop.f32.mrb[0].mxu0
  %v897 = vpop.f32.mrb[0].mxu0
  %v898 = vadd.f32 %v190, %v897
  %v899 = vpop.f32.mrb[0].mxu0
  %900 = vmatprep.mubr.bf16.mxu0 0
  %901 = vmatmul.mubr.bf16.gmra.mrb[0].mxu0 %v506
  %v902 = vpop.f32.mrb[0].mxu0
  %v903 = vadd.f32 %v190, %v902
  %v904 = vpop.f32.mrb[0].mxu0
  %v905 = vpop.f32.mrb[0].mxu0
  %v906 = vadd.f32 %v190, %v905
  %v907 = vpop.f32.mrb[0].mxu0
  %908 = vmatprep.mubr.bf16.mxu0 0
  %909 = vmatmul.mubr.bf16.gmra.mrb[0].mxu0 %v507
  %v910 = vpop.f32.mrb[0].mxu0
  %v911 = vadd.f32 %v190, %v910
  %v912 = vpop.f32.mrb[0].mxu0
  %v913 = vpop.f32.mrb[0].mxu0
  %v914 = vadd.f32 %v190, %v913
  %v915 = vpop.f32.mrb[0].mxu0
  %916 = vmatprep.mubr.bf16.mxu0 0
  %917 = vmatmul.mubr.bf16.gmra.mrb[0].mxu0 %v508
  %v918 = vpop.f32.mrb[0].mxu0
  %v919 = vadd.f32 %v190, %v918
  %v920 = vpop.f32.mrb[0].mxu0
  %v921 = vpop.f32.mrb[0].mxu0
  %v922 = vadd.f32 %v190, %v921
  %v923 = vpop.f32.mrb[0].mxu0
  %924 = vmatprep.mubr.bf16.mxu0 0
  %925 = vmatmul.mubr.bf16.gmra.mrb[0].mxu0 %v509
  %v926 = vpop.f32.mrb[0].mxu0
  %v927 = vadd.f32 %v190, %v926
  %v928 = vpop.f32.mrb[0].mxu0
  %v929 = vpop.f32.mrb[0].mxu0
  %v930 = vadd.f32 %v190, %v929
  %v931 = vpop.f32.mrb[0].mxu0
  %932 = vmatprep.mubr.bf16.mxu0 0
  %933 = vmatmul.mubr.bf16.gmra.mrb[0].mxu0 %v510
  %v934 = vpop.f32.mrb[0].mxu0
  %v935 = vadd.f32 %v190, %v934
  %v936 = vpop.f32.mrb[0].mxu0
  %v937 = vpop.f32.mrb[0].mxu0
  %v938 = vadd.f32 %v190, %v937
  %v939 = vpop.f32.mrb[0].mxu0
  %940 = vmatprep.mubr.bf16.mxu0 0
  %941 = vmatmul.mubr.bf16.gmra.mrb[0].mxu0 %v511
  %v942 = vpop.f32.mrb[0].mxu0
  %v943 = vadd.f32 %v190, %v942
  %v944 = vpop.f32.mrb[0].mxu0
  %v945 = vpop.f32.mrb[0].mxu0
  %v946 = vadd.f32 %v190, %v945
  %v947 = vpop.f32.mrb[0].mxu0
  %948 = vmatprep.mubr.bf16.mxu0 0
  %949 = vmatmul.mubr.bf16.gmra.mrb[0].mxu0 %v512
  %v950 = vpop.f32.mrb[0].mxu0
  %v951 = vadd.f32 %v190, %v950
  %v952 = vpop.f32.mrb[0].mxu0
  %v953 = vpop.f32.mrb[0].mxu0
  %v954 = vadd.f32 %v190, %v953
  %v955 = vpop.f32.mrb[0].mxu0
  %956 = vmatprep.mubr.bf16.mxu0 0
  %957 = vmatmul.mubr.bf16.gmra.mrb[0].mxu0 %v513
  %v958 = vpop.f32.mrb[0].mxu0
  %v959 = vadd.f32 %v190, %v958
  %v960 = vpop.f32.mrb[0].mxu0
  %v961 = vpop.f32.mrb[0].mxu0
  %v962 = vadd.f32 %v190, %v961
  %v963 = vpop.f32.mrb[0].mxu0
  %964 = vmatprep.mubr.bf16.mxu0 0
  %965 = vmatmul.mubr.bf16.gmra.mrb[0].mxu0 %v514
  %v966 = vpop.f32.mrb[0].mxu0
  %v967 = vadd.f32 %v190, %v966
  %v968 = vpop.f32.mrb[0].mxu0
  %v969 = vpop.f32.mrb[0].mxu0
  %v970 = vadd.f32 %v190, %v969
  %v971 = vpop.f32.mrb[0].mxu0
  %972 = vmatprep.mubr.bf16.mxu0 0
  %973 = vmatmul.mubr.bf16.gmra.mrb[0].mxu0 %v515
  %v974 = vpop.f32.mrb[0].mxu0
  %v975 = vadd.f32 %v190, %v974
  %v976 = vpop.f32.mrb[0].mxu0
  %v977 = vpop.f32.mrb[0].mxu0
  %v978 = vadd.f32 %v190, %v977
  %v979 = vpop.f32.mrb[0].mxu0
  %980 = vmatprep.mubr.bf16.mxu0 0
  %981 = vmatmul.mubr.bf16.gmra.mrb[0].mxu0 %v516
  %v982 = vpop.f32.mrb[0].mxu0
  %v983 = vadd.f32 %v190, %v982
  %v984 = vpop.f32.mrb[0].mxu0
  %v985 = vpop.f32.mrb[0].mxu0
  %v986 = vadd.f32 %v190, %v985
  %v987 = vpop.f32.mrb[0].mxu0
  %988 = vmatprep.mubr.bf16.mxu0 0
  %989 = vmatmul.mubr.bf16.gmra.mrb[0].mxu0 %v517
  %v990 = vpop.f32.mrb[0].mxu0
  %v991 = vadd.f32 %v190, %v990
  %v992 = vpop.f32.mrb[0].mxu0
  %v993 = vpop.f32.mrb[0].mxu0
  %v994 = vadd.f32 %v190, %v993
  %v995 = vpop.f32.mrb[0].mxu0
  %996 = vmatprep.mubr.bf16.mxu0 0
  %997 = vmatmul.mubr.bf16.gmra.mrb[0].mxu0 %v518
  %v998 = vpop.f32.mrb[0].mxu0
  %v999 = vadd.f32 %v190, %v998
  %v1000 = vpop.f32.mrb[0].mxu0
  %v1001 = vpop.f32.mrb[0].mxu0
  %v1002 = vadd.f32 %v190, %v1001
  %v1003 = vpop.f32.mrb[0].mxu0
  %1004 = vmatprep.mubr.bf16.mxu0 0
  %1005 = vmatmul.mubr.bf16.gmra.mrb[0].mxu0 %v519
  %v1006 = vpop.f32.mrb[0].mxu0
  %v1007 = vadd.f32 %v190, %v1006
  %v1008 = vpop.f32.mrb[0].mxu0
  %v1009 = vpop.f32.mrb[0].mxu0
  %v1010 = vadd.f32 %v190, %v1009
  %v1011 = vpop.f32.mrb[0].mxu0
  %1012 = vmatprep.mubr.bf16.mxu0 0
  %1013 = vmatmul.mubr.bf16.gmra.mrb[0].mxu0 %v520
  %v1014 = vpop.f32.mrb[0].mxu0
  %v1015 = vadd.f32 %v190, %v1014
  %v1016 = vpop.f32.mrb[0].mxu0
  %v1017 = vpop.f32.mrb[0].mxu0
  %v1018 = vadd.f32 %v190, %v1017
  %v1019 = vpop.f32.mrb[0].mxu0
  %1020 = vmatprep.mubr.bf16.mxu0 0
  %1021 = vmatmul.mubr.bf16.gmra.mrb[0].mxu0 %v521
  %v1022 = vpop.f32.mrb[0].mxu0
  %v1023 = vadd.f32 %v190, %v1022
  %v1024 = vpop.f32.mrb[0].mxu0
  %v1025 = vpop.f32.mrb[0].mxu0
  %v1026 = vadd.f32 %v190, %v1025
  %v1027 = vpop.f32.mrb[0].mxu0
  %1028 = vmatprep.mubr.bf16.mxu0 0
  %1029 = vmatmul.mubr.bf16.gmra.mrb[0].mxu0 %v522
  %v1030 = vpop.f32.mrb[0].mxu0
  %v1031 = vadd.f32 %v190, %v1030
  %v1032 = vpop.f32.mrb[0].mxu0
  %v1033 = vpop.f32.mrb[0].mxu0
  %v1034 = vadd.f32 %v190, %v1033
  %v1035 = vpop.f32.mrb[0].mxu0
  %1036 = vmatprep.mubr.bf16.mxu0 0
  %1037 = vmatmul.mubr.bf16.gmra.mrb[0].mxu0 %v523
  %v1038 = vpop.f32.mrb[0].mxu0
  %v1039 = vadd.f32 %v190, %v1038
  %v1040 = vpop.f32.mrb[0].mxu0
  %v1041 = vpop.f32.mrb[0].mxu0
  %v1042 = vadd.f32 %v190, %v1041
  %v1043 = vpop.f32.mrb[0].mxu0
  %1044 = vmatprep.mubr.bf16.mxu0 0
  %1045 = vmatmul.mubr.bf16.gmra.mrb[0].mxu0 %v524
  %v1046 = vpop.f32.mrb[0].mxu0
  %v1047 = vadd.f32 %v190, %v1046
  %v1048 = vpop.f32.mrb[0].mxu0
  %v1049 = vpop.f32.mrb[0].mxu0
  %v1050 = vadd.f32 %v190, %v1049
  %v1051 = vpop.f32.mrb[0].mxu0
  %1052 = vmatprep.mubr.bf16.mxu0 0
  %1053 = vmatmul.mubr.bf16.gmra.mrb[0].mxu0 %v525
  %v1054 = vpop.f32.mrb[0].mxu0
  %v1055 = vadd.f32 %v190, %v1054
  %v1056 = vpop.f32.mrb[0].mxu0
  %v1057 = vpop.f32.mrb[0].mxu0
  %v1058 = vadd.f32 %v190, %v1057
  %v1059 = vpop.f32.mrb[0].mxu0
  %1060 = vmatprep.mubr.bf16.mxu0 0
  %1061 = vmatmul.mubr.bf16.gmra.mrb[0].mxu0 %v526
  %v1062 = vpop.f32.mrb[0].mxu0
  %v1063 = vadd.f32 %v190, %v1062
  %v1064 = vpop.f32.mrb[0].mxu0
  %v1065 = vpop.f32.mrb[0].mxu0
  %v1066 = vadd.f32 %v190, %v1065
  %v1067 = vpop.f32.mrb[0].mxu0
  %1068 = vmatprep.mubr.bf16.mxu0 0
  %1069 = vmatmul.mubr.bf16.gmra.mrb[0].mxu0 %v527
  %v1070 = vpop.f32.mrb[0].mxu0
  %v1071 = vadd.f32 %v190, %v1070
  %v1072 = vpop.f32.mrb[0].mxu0
  %v1073 = vpop.f32.mrb[0].mxu0
  %v1074 = vadd.f32 %v190, %v1073
  %v1075 = vpop.f32.mrb[0].mxu0
  %1076 = vmatprep.mubr.bf16.mxu0 0
  %1077 = vmatmul.mubr.bf16.gmra.mrb[0].mxu0 %v528
  %v1078 = vpop.f32.mrb[0].mxu0
  %v1079 = vadd.f32 %v190, %v1078
  %v1080 = vpop.f32.mrb[0].mxu0
  %v1081 = vpop.f32.mrb[0].mxu0
  %v1082 = vadd.f32 %v190, %v1081
  %v1083 = vpop.f32.mrb[0].mxu0
  %1084 = vmatprep.mubr.bf16.mxu0 0
  %1085 = vmatmul.mubr.bf16.gmra.mrb[0].mxu0 %v529
  %v1086 = vpop.f32.mrb[0].mxu0
  %v1087 = vadd.f32 %v190, %v1086
  %v1088 = vpop.f32.mrb[0].mxu0
  %v1089 = vpop.f32.mrb[0].mxu0
  %v1090 = vadd.f32 %v190, %v1089
  %v1091 = vpop.f32.mrb[0].mxu0
  %1092 = vmatprep.mubr.bf16.mxu0 0
  %1093 = vmatmul.mubr.bf16.gmra.mrb[0].mxu0 %v530
  %v1094 = vpop.f32.mrb[0].mxu0
  %v1095 = vadd.f32 %v190, %v1094
  %v1096 = vpop.f32.mrb[0].mxu0
  %v1097 = vpop.f32.mrb[0].mxu0
  %v1098 = vadd.f32 %v190, %v1097
  %v1099 = vpop.f32.mrb[0].mxu0
  %1100 = vmatprep.mubr.bf16.mxu0 0
  %1101 = vmatmul.mubr.bf16.gmra.mrb[0].mxu0 %v531
  %v1102 = vpop.f32.mrb[0].mxu0
  %v1103 = vadd.f32 %v190, %v1102
  %v1104 = vpop.f32.mrb[0].mxu0
  %v1105 = vpop.f32.mrb[0].mxu0
  %v1106 = vadd.f32 %v190, %v1105
  %v1107 = vpop.f32.mrb[0].mxu0
  %1108 = vmatprep.mubr.bf16.mxu0 0
  %1109 = vmatmul.mubr.bf16.gmra.mrb[0].mxu0 %v532
  %v1110 = vpop.f32.mrb[0].mxu0
  %v1111 = vadd.f32 %v190, %v1110
  %v1112 = vpop.f32.mrb[0].mxu0
  %v1113 = vpop.f32.mrb[0].mxu0
  %v1114 = vadd.f32 %v190, %v1113
  %v1115 = vpop.f32.mrb[0].mxu0
  %1116 = vmatprep.mubr.bf16.mxu0 0
  %1117 = vmatmul.mubr.bf16.gmra.mrb[0].mxu0 %v533
  %v1118 = vpop.f32.mrb[0].mxu0
  %v1119 = vadd.f32 %v190, %v1118
  %v1120 = vpop.f32.mrb[0].mxu0
  %v1121 = vpop.f32.mrb[0].mxu0
  %v1122 = vadd.f32 %v190, %v1121
  %v1123 = vpop.f32.mrb[0].mxu0
  %1124 = vmatprep.mubr.bf16.mxu0 0
  %1125 = vmatmul.mubr.bf16.gmra.mrb[0].mxu0 %v534
  %v1126 = vpop.f32.mrb[0].mxu0
  %v1127 = vadd.f32 %v190, %v1126
  %v1128 = vpop.f32.mrb[0].mxu0
  %v1129 = vpop.f32.mrb[0].mxu0
  %v1130 = vadd.f32 %v190, %v1129
  %v1131 = vpop.f32.mrb[0].mxu0
  %1132 = vmatprep.mubr.bf16.mxu0 0
  %1133 = vmatmul.mubr.bf16.gmra.mrb[0].mxu0 %v535
  %v1134 = vpop.f32.mrb[0].mxu0
  %v1135 = vadd.f32 %v190, %v1134
  %v1136 = vpop.f32.mrb[0].mxu0
  %v1137 = vpop.f32.mrb[0].mxu0
  %v1138 = vadd.f32 %v190, %v1137
  %v1139 = vpop.f32.mrb[0].mxu0
  %1140 = vmatprep.mubr.bf16.mxu0 0
  %1141 = vmatmul.mubr.bf16.gmra.mrb[0].mxu0 %v536
  %v1142 = vpop.f32.mrb[0].mxu0
  %v1143 = vadd.f32 %v190, %v1142
  %v1144 = vpop.f32.mrb[0].mxu0
  %v1145 = vpop.f32.mrb[0].mxu0
  %v1146 = vadd.f32 %v190, %v1145
  %v1147 = vpop.f32.mrb[0].mxu0
  %1148 = vmatprep.mubr.bf16.mxu0 0
  %1149 = vmatmul.mubr.bf16.gmra.mrb[0].mxu0 %v537
  %v1150 = vpop.f32.mrb[0].mxu0
  %v1151 = vadd.f32 %v190, %v1150
  %v1152 = vpop.f32.mrb[0].mxu0
  %v1153 = vpop.f32.mrb[0].mxu0
  %v1154 = vadd.f32 %v190, %v1153
  %v1155 = vpop.f32.mrb[0].mxu0
  %1156 = vmatprep.mubr.bf16.mxu0 0
  %1157 = vmatmul.mubr.bf16.gmra.mrb[0].mxu0 %v538
  %v1158 = vpop.f32.mrb[0].mxu0
  %v1159 = vadd.f32 %v190, %v1158
  %v1160 = vpop.f32.mrb[0].mxu0
  %v1161 = vpop.f32.mrb[0].mxu0
  %v1162 = vadd.f32 %v190, %v1161
  %v1163 = vpop.f32.mrb[0].mxu0
  %1164 = vmatprep.mubr.bf16.mxu0 0
  %1165 = vmatmul.mubr.bf16.gmra.mrb[0].mxu0 %v539
  %v1166 = vpop.f32.mrb[0].mxu0
  %v1167 = vadd.f32 %v190, %v1166
  %v1168 = vpop.f32.mrb[0].mxu0
  %v1169 = vpop.f32.mrb[0].mxu0
  %v1170 = vadd.f32 %v190, %v1169
  %v1171 = vpop.f32.mrb[0].mxu0
  %1172 = vmatprep.mubr.bf16.mxu0 0
  %1173 = vmatmul.mubr.bf16.gmra.mrb[0].mxu0 %v540
  %v1174 = vpop.f32.mrb[0].mxu0
  %v1175 = vadd.f32 %v190, %v1174
  %v1176 = vpop.f32.mrb[0].mxu0
  %v1177 = vpop.f32.mrb[0].mxu0
  %v1178 = vadd.f32 %v190, %v1177
  %v1179 = vpop.f32.mrb[0].mxu0
  %1180 = vmatprep.mubr.bf16.mxu0 0
  %1181 = vmatmul.mubr.bf16.gmra.mrb[0].mxu0 %v541
  %v1182 = vpop.f32.mrb[0].mxu0
  %v1183 = vadd.f32 %v190, %v1182
  %v1184 = vpop.f32.mrb[0].mxu0
  %v1185 = vpop.f32.mrb[0].mxu0
  %v1186 = vadd.f32 %v190, %v1185
  %v1187 = vpop.f32.mrb[0].mxu0
  %1188 = vmatprep.mubr.bf16.mxu0 0
  %1189 = vmatmul.mubr.bf16.gmra.mrb[0].mxu0 %v542
  %v1190 = vpop.f32.mrb[0].mxu0
  %v1191 = vadd.f32 %v190, %v1190
  %v1192 = vpop.f32.mrb[0].mxu0
  %v1193 = vpop.f32.mrb[0].mxu0
  %v1194 = vadd.f32 %v190, %v1193
  %v1195 = vpop.f32.mrb[0].mxu0
  %1196 = vmatprep.mubr.bf16.mxu0 0
  %1197 = vmatmul.mubr.bf16.gmra.mrb[0].mxu0 %v543
  %v1198 = vpop.f32.mrb[0].mxu0
  %v1199 = vadd.f32 %v190, %v1198
  %v1200 = vpop.f32.mrb[0].mxu0
  %v1201 = vpop.f32.mrb[0].mxu0
  %v1202 = vadd.f32 %v190, %v1201
  %v1203 = vpop.f32.mrb[0].mxu0
  %1204 = vmatprep.mubr.bf16.mxu0 0
  %1205 = vmatmul.mubr.bf16.gmra.mrb[0].mxu0 %v544
  %v1206 = vpop.f32.mrb[0].mxu0
  %v1207 = vadd.f32 %v190, %v1206
  %v1208 = vpop.f32.mrb[0].mxu0
  %v1209 = vpop.f32.mrb[0].mxu0
  %v1210 = vadd.f32 %v190, %v1209
  %v1211 = vpop.f32.mrb[0].mxu0
  %1212 = vmatprep.mubr.bf16.mxu0 0
  %1213 = vmatmul.mubr.bf16.gmra.mrb[0].mxu0 %v545
  %v1214 = vpop.f32.mrb[0].mxu0
  %v1215 = vadd.f32 %v190, %v1214
  %v1216 = vpop.f32.mrb[0].mxu0
  %v1217 = vpop.f32.mrb[0].mxu0
  %v1218 = vadd.f32 %v190, %v1217
  %v1219 = vpop.f32.mrb[0].mxu0
  %1220 = vmatprep.mubr.bf16.mxu0 0
  %1221 = vmatmul.mubr.bf16.gmra.mrb[0].mxu0 %v546
  %v1222 = vpop.f32.mrb[0].mxu0
  %v1223 = vadd.f32 %v190, %v1222
  %v1224 = vpop.f32.mrb[0].mxu0
  %v1225 = vpop.f32.mrb[0].mxu0
  %v1226 = vadd.f32 %v190, %v1225
  %v1227 = vpop.f32.mrb[0].mxu0
  %1228 = vmatprep.mubr.bf16.mxu0 0
  %1229 = vmatmul.mubr.bf16.gmra.mrb[0].mxu0 %v547
  %v1230 = vpop.f32.mrb[0].mxu0
  %v1231 = vadd.f32 %v190, %v1230
  %v1232 = vpop.f32.mrb[0].mxu0
  %v1233 = vpop.f32.mrb[0].mxu0
  %v1234 = vadd.f32 %v190, %v1233
  %v1235 = vpop.f32.mrb[0].mxu0
  %1236 = vmatprep.mubr.bf16.mxu0 0
  %1237 = vmatmul.mubr.bf16.gmra.mrb[0].mxu0 %v548
  %v1238 = vpop.f32.mrb[0].mxu0
  %v1239 = vadd.f32 %v190, %v1238
  %v1240 = vpop.f32.mrb[0].mxu0
  %v1241 = vpop.f32.mrb[0].mxu0
  %v1242 = vadd.f32 %v190, %v1241
  %v1243 = vpop.f32.mrb[0].mxu0
  %1244 = vmatprep.mubr.bf16.mxu0 0
  %1245 = vmatmul.mubr.bf16.gmra.mrb[0].mxu0 %v549
  %v1246 = vpop.f32.mrb[0].mxu0
  %v1247 = vadd.f32 %v190, %v1246
  %v1248 = vpop.f32.mrb[0].mxu0
  %v1249 = vpop.f32.mrb[0].mxu0
  %v1250 = vadd.f32 %v190, %v1249
  %v1251 = vpop.f32.mrb[0].mxu0
  %1252 = vmatprep.mubr.bf16.mxu0 0
  %1253 = vmatmul.mubr.bf16.gmra.mrb[0].mxu0 %v550
  %v1254 = vpop.f32.mrb[0].mxu0
  %v1255 = vadd.f32 %v190, %v1254
  %v1256 = vpop.f32.mrb[0].mxu0
  %v1257 = vpop.f32.mrb[0].mxu0
  %v1258 = vadd.f32 %v190, %v1257
  %v1259 = vpop.f32.mrb[0].mxu0
  %1260 = vmatprep.mubr.bf16.mxu0 0
  %1261 = vmatmul.mubr.bf16.gmra.mrb[0].mxu0 %v551
  %v1262 = vpop.f32.mrb[0].mxu0
  %v1263 = vadd.f32 %v190, %v1262
  %v1264 = vpop.f32.mrb[0].mxu0
  %v1265 = vpop.f32.mrb[0].mxu0
  %v1266 = vadd.f32 %v190, %v1265
  %v1267 = vpop.f32.mrb[0].mxu0
  %1268 = vmatprep.mubr.bf16.mxu0 0
  %1269 = vmatmul.mubr.bf16.gmra.mrb[0].mxu0 %v552
  %v1270 = vpop.f32.mrb[0].mxu0
  %v1271 = vadd.f32 %v190, %v1270
  %v1272 = vpop.f32.mrb[0].mxu0
  %v1273 = vpop.f32.mrb[0].mxu0
  %v1274 = vadd.f32 %v190, %v1273
  %v1275 = vpop.f32.mrb[0].mxu0
  %1276 = vmatprep.mubr.bf16.mxu0 0
  %1277 = vmatmul.mubr.bf16.gmra.mrb[0].mxu0 %v553
  %v1278 = vpop.f32.mrb[0].mxu0
  %v1279 = vadd.f32 %v190, %v1278
  %v1280 = vpop.f32.mrb[0].mxu0
  %v1281 = vpop.f32.mrb[0].mxu0
  %v1282 = vadd.f32 %v190, %v1281
  %v1283 = vpop.f32.mrb[0].mxu0
  %1284 = vmatprep.mubr.bf16.mxu0 0
  %1285 = vmatmul.mubr.bf16.gmra.mrb[0].mxu0 %v554
  %v1286 = vpop.f32.mrb[0].mxu0
  %v1287 = vadd.f32 %v190, %v1286
  %v1288 = vpop.f32.mrb[0].mxu0
  %v1289 = vpop.f32.mrb[0].mxu0
  %v1290 = vpop.f32.mrb[0].mxu0
  %1291 = vdwg.mxu0
  %vm1292 = vcmp.ge.f32.partialorder %v711, 0.0
  %vm1293 = vcmp.ge.f32.partialorder %v714, 0.0
  %vm1294 = vcmp.ge.f32.partialorder %v719, 0.0
  %vm1295 = vcmp.ge.f32.partialorder %v722, 0.0
  %vm1296 = vcmp.ge.f32.partialorder %v727, 0.0
  %vm1297 = vcmp.ge.f32.partialorder %v730, 0.0
  %vm1298 = vcmp.ge.f32.partialorder %v735, 0.0
  %vm1299 = vcmp.ge.f32.partialorder %v738, 0.0
  %vm1300 = vcmp.ge.f32.partialorder %v743, 0.0
  %vm1301 = vcmp.ge.f32.partialorder %v746, 0.0
  %vm1302 = vcmp.ge.f32.partialorder %v751, 0.0
  %vm1303 = vcmp.ge.f32.partialorder %v754, 0.0
  %vm1304 = vcmp.ge.f32.partialorder %v759, 0.0
  %vm1305 = vcmp.ge.f32.partialorder %v762, 0.0
  %vm1306 = vcmp.ge.f32.partialorder %v767, 0.0
  %vm1307 = vcmp.ge.f32.partialorder %v770, 0.0
  %vm1308 = vcmp.ge.f32.partialorder %v775, 0.0
  %vm1309 = vcmp.ge.f32.partialorder %v778, 0.0
  %vm1310 = vcmp.ge.f32.partialorder %v783, 0.0
  %vm1311 = vcmp.ge.f32.partialorder %v786, 0.0
  %vm1312 = vcmp.ge.f32.partialorder %v791, 0.0
  %vm1313 = vcmp.ge.f32.partialorder %v794, 0.0
  %vm1314 = vcmp.ge.f32.partialorder %v799, 0.0
  %vm1315 = vcmp.ge.f32.partialorder %v802, 0.0
  %vm1316 = vcmp.ge.f32.partialorder %v807, 0.0
  %vm1317 = vcmp.ge.f32.partialorder %v810, 0.0
  %vm1318 = vcmp.ge.f32.partialorder %v815, 0.0
  %vm1319 = vcmp.ge.f32.partialorder %v818, 0.0
  %vm1320 = vcmp.ge.f32.partialorder %v823, 0.0
  %vm1321 = vcmp.ge.f32.partialorder %v826, 0.0
  %vm1322 = vcmp.ge.f32.partialorder %v831, 0.0
  %vm1323 = vcmp.ge.f32.partialorder %v834, 0.0
  %vm1324 = vcmp.ge.f32.partialorder %v839, 0.0
  %vm1325 = vcmp.ge.f32.partialorder %v842, 0.0
  %vm1326 = vcmp.ge.f32.partialorder %v847, 0.0
  %vm1327 = vcmp.ge.f32.partialorder %v850, 0.0
  %vm1328 = vcmp.ge.f32.partialorder %v855, 0.0
  %vm1329 = vcmp.ge.f32.partialorder %v858, 0.0
  %vm1330 = vcmp.ge.f32.partialorder %v863, 0.0
  %vm1331 = vcmp.ge.f32.partialorder %v866, 0.0
  %vm1332 = vcmp.ge.f32.partialorder %v871, 0.0
  %vm1333 = vcmp.ge.f32.partialorder %v874, 0.0
  %vm1334 = vcmp.ge.f32.partialorder %v879, 0.0
  %vm1335 = vcmp.ge.f32.partialorder %v882, 0.0
  %vm1336 = vcmp.ge.f32.partialorder %v887, 0.0
  %vm1337 = vcmp.ge.f32.partialorder %v890, 0.0
  %vm1338 = vcmp.ge.f32.partialorder %v895, 0.0
  %vm1339 = vcmp.ge.f32.partialorder %v898, 0.0
  %vm1340 = vcmp.ge.f32.partialorder %v903, 0.0
  %vm1341 = vcmp.ge.f32.partialorder %v906, 0.0
  %vm1342 = vcmp.ge.f32.partialorder %v911, 0.0
  %vm1343 = vcmp.ge.f32.partialorder %v914, 0.0
  %vm1344 = vcmp.ge.f32.partialorder %v919, 0.0
  %vm1345 = vcmp.ge.f32.partialorder %v922, 0.0
  %vm1346 = vcmp.ge.f32.partialorder %v927, 0.0
  %vm1347 = vcmp.ge.f32.partialorder %v930, 0.0
  %vm1348 = vcmp.ge.f32.partialorder %v935, 0.0
  %vm1349 = vcmp.ge.f32.partialorder %v938, 0.0
  %vm1350 = vcmp.ge.f32.partialorder %v943, 0.0
  %vm1351 = vcmp.ge.f32.partialorder %v946, 0.0
  %vm1352 = vcmp.ge.f32.partialorder %v951, 0.0
  %vm1353 = vcmp.ge.f32.partialorder %v954, 0.0
  %vm1354 = vcmp.ge.f32.partialorder %v959, 0.0
  %vm1355 = vcmp.ge.f32.partialorder %v962, 0.0
  %vm1356 = vcmp.ge.f32.partialorder %v967, 0.0
  %vm1357 = vcmp.ge.f32.partialorder %v970, 0.0
  %vm1358 = vcmp.ge.f32.partialorder %v975, 0.0
  %vm1359 = vcmp.ge.f32.partialorder %v978, 0.0
  %vm1360 = vcmp.ge.f32.partialorder %v983, 0.0
  %vm1361 = vcmp.ge.f32.partialorder %v986, 0.0
  %vm1362 = vcmp.ge.f32.partialorder %v991, 0.0
  %vm1363 = vcmp.ge.f32.partialorder %v994, 0.0
  %vm1364 = vcmp.ge.f32.partialorder %v999, 0.0
  %vm1365 = vcmp.ge.f32.partialorder %v1002, 0.0
  %vm1366 = vcmp.ge.f32.partialorder %v1007, 0.0
  %vm1367 = vcmp.ge.f32.partialorder %v1010, 0.0
  %vm1368 = vcmp.ge.f32.partialorder %v1015, 0.0
  %vm1369 = vcmp.ge.f32.partialorder %v1018, 0.0
  %vm1370 = vcmp.ge.f32.partialorder %v1023, 0.0
  %vm1371 = vcmp.ge.f32.partialorder %v1026, 0.0
  %vm1372 = vcmp.ge.f32.partialorder %v1031, 0.0
  %vm1373 = vcmp.ge.f32.partialorder %v1034, 0.0
  %vm1374 = vcmp.ge.f32.partialorder %v1039, 0.0
  %vm1375 = vcmp.ge.f32.partialorder %v1042, 0.0
  %vm1376 = vcmp.ge.f32.partialorder %v1047, 0.0
  %vm1377 = vcmp.ge.f32.partialorder %v1050, 0.0
  %vm1378 = vcmp.ge.f32.partialorder %v1055, 0.0
  %vm1379 = vcmp.ge.f32.partialorder %v1058, 0.0
  %vm1380 = vcmp.ge.f32.partialorder %v1063, 0.0
  %vm1381 = vcmp.ge.f32.partialorder %v1066, 0.0
  %vm1382 = vcmp.ge.f32.partialorder %v1071, 0.0
  %vm1383 = vcmp.ge.f32.partialorder %v1074, 0.0
  %vm1384 = vcmp.ge.f32.partialorder %v1079, 0.0
  %vm1385 = vcmp.ge.f32.partialorder %v1082, 0.0
  %vm1386 = vcmp.ge.f32.partialorder %v1087, 0.0
  %vm1387 = vcmp.ge.f32.partialorder %v1090, 0.0
  %vm1388 = vcmp.ge.f32.partialorder %v1095, 0.0
  %vm1389 = vcmp.ge.f32.partialorder %v1098, 0.0
  %vm1390 = vcmp.ge.f32.partialorder %v1103, 0.0
  %vm1391 = vcmp.ge.f32.partialorder %v1106, 0.0
  %vm1392 = vcmp.ge.f32.partialorder %v1111, 0.0
  %vm1393 = vcmp.ge.f32.partialorder %v1114, 0.0
  %vm1394 = vcmp.ge.f32.partialorder %v1119, 0.0
  %vm1395 = vcmp.ge.f32.partialorder %v1122, 0.0
  %vm1396 = vcmp.ge.f32.partialorder %v1127, 0.0
  %vm1397 = vcmp.ge.f32.partialorder %v1130, 0.0
  %vm1398 = vcmp.ge.f32.partialorder %v1135, 0.0
  %vm1399 = vcmp.ge.f32.partialorder %v1138, 0.0
  %vm1400 = vcmp.ge.f32.partialorder %v1143, 0.0
  %vm1401 = vcmp.ge.f32.partialorder %v1146, 0.0
  %vm1402 = vcmp.ge.f32.partialorder %v1151, 0.0
  %vm1403 = vcmp.ge.f32.partialorder %v1154, 0.0
  %vm1404 = vcmp.ge.f32.partialorder %v1159, 0.0
  %vm1405 = vcmp.ge.f32.partialorder %v1162, 0.0
  %vm1406 = vcmp.ge.f32.partialorder %v1167, 0.0
  %vm1407 = vcmp.ge.f32.partialorder %v1170, 0.0
  %vm1408 = vcmp.ge.f32.partialorder %v1175, 0.0
  %vm1409 = vcmp.ge.f32.partialorder %v1178, 0.0
  %vm1410 = vcmp.ge.f32.partialorder %v1183, 0.0
  %vm1411 = vcmp.ge.f32.partialorder %v1186, 0.0
  %vm1412 = vcmp.ge.f32.partialorder %v1191, 0.0
  %vm1413 = vcmp.ge.f32.partialorder %v1194, 0.0
  %vm1414 = vcmp.ge.f32.partialorder %v1199, 0.0
  %vm1415 = vcmp.ge.f32.partialorder %v1202, 0.0
  %vm1416 = vcmp.ge.f32.partialorder %v1207, 0.0
  %vm1417 = vcmp.ge.f32.partialorder %v1210, 0.0
  %vm1418 = vcmp.ge.f32.partialorder %v1215, 0.0
  %vm1419 = vcmp.ge.f32.partialorder %v1218, 0.0
  %vm1420 = vcmp.ge.f32.partialorder %v1223, 0.0
  %vm1421 = vcmp.ge.f32.partialorder %v1226, 0.0
  %vm1422 = vcmp.ge.f32.partialorder %v1231, 0.0
  %vm1423 = vcmp.ge.f32.partialorder %v1234, 0.0
  %vm1424 = vcmp.ge.f32.partialorder %v1239, 0.0
  %vm1425 = vcmp.ge.f32.partialorder %v1242, 0.0
  %vm1426 = vcmp.ge.f32.partialorder %v1247, 0.0
  %vm1427 = vcmp.ge.f32.partialorder %v1250, 0.0
  %vm1428 = vcmp.ge.f32.partialorder %v1255, 0.0
  %vm1429 = vcmp.ge.f32.partialorder %v1258, 0.0
  %vm1430 = vcmp.ge.f32.partialorder %v1263, 0.0
  %vm1431 = vcmp.ge.f32.partialorder %v1266, 0.0
  %vm1432 = vcmp.ge.f32.partialorder %v1271, 0.0
  %vm1433 = vcmp.ge.f32.partialorder %v1274, 0.0
  %vm1434 = vcmp.ge.f32.partialorder %v1279, 0.0
  %vm1435 = vcmp.ge.f32.partialorder %v1282, 0.0
  %vm1436 = vcmp.ge.f32.partialorder %v1287, 0.0
  %v1437 = vmul.f32 %v711, 0.1
  %v1438 = vmul.f32 %v714, 0.1
  %v1439 = vmul.f32 %v719, 0.1
  %v1440 = vmul.f32 %v722, 0.1
  %v1441 = vmul.f32 %v727, 0.1
  %v1442 = vmul.f32 %v730, 0.1
  %v1443 = vmul.f32 %v735, 0.1
  %v1444 = vmul.f32 %v738, 0.1
  %v1445 = vmul.f32 %v743, 0.1
  %v1446 = vmul.f32 %v746, 0.1
  %v1447 = vmul.f32 %v751, 0.1
  %v1448 = vmul.f32 %v754, 0.1
  %v1449 = vmul.f32 %v759, 0.1
  %v1450 = vmul.f32 %v762, 0.1
  %v1451 = vmul.f32 %v767, 0.1
  %v1452 = vmul.f32 %v770, 0.1
  %v1453 = vmul.f32 %v775, 0.1
  %v1454 = vmul.f32 %v778, 0.1
  %v1455 = vmul.f32 %v783, 0.1
  %v1456 = vmul.f32 %v786, 0.1
  %v1457 = vmul.f32 %v791, 0.1
  %v1458 = vmul.f32 %v794, 0.1
  %v1459 = vmul.f32 %v799, 0.1
  %v1460 = vmul.f32 %v802, 0.1
  %v1461 = vmul.f32 %v807, 0.1
  %v1462 = vmul.f32 %v810, 0.1
  %v1463 = vmul.f32 %v815, 0.1
  %v1464 = vmul.f32 %v818, 0.1
  %v1465 = vmul.f32 %v823, 0.1
  %v1466 = vmul.f32 %v826, 0.1
  %v1467 = vmul.f32 %v831, 0.1
  %v1468 = vmul.f32 %v834, 0.1
  %v1469 = vmul.f32 %v839, 0.1
  %v1470 = vmul.f32 %v842, 0.1
  %v1471 = vmul.f32 %v847, 0.1
  %v1472 = vmul.f32 %v850, 0.1
  %v1473 = vmul.f32 %v855, 0.1
  %v1474 = vmul.f32 %v858, 0.1
  %v1475 = vmul.f32 %v863, 0.1
  %v1476 = vmul.f32 %v866, 0.1
  %v1477 = vmul.f32 %v871, 0.1
  %v1478 = vmul.f32 %v874, 0.1
  %v1479 = vmul.f32 %v879, 0.1
  %v1480 = vmul.f32 %v882, 0.1
  %v1481 = vmul.f32 %v887, 0.1
  %v1482 = vmul.f32 %v890, 0.1
  %v1483 = vmul.f32 %v895, 0.1
  %v1484 = vmul.f32 %v898, 0.1
  %v1485 = vmul.f32 %v903, 0.1
  %v1486 = vmul.f32 %v906, 0.1
  %v1487 = vmul.f32 %v911, 0.1
  %v1488 = vmul.f32 %v914, 0.1
  %v1489 = vmul.f32 %v919, 0.1
  %v1490 = vmul.f32 %v922, 0.1
  %v1491 = vmul.f32 %v927, 0.1
  %v1492 = vmul.f32 %v930, 0.1
  %v1493 = vmul.f32 %v935, 0.1
  %v1494 = vmul.f32 %v938, 0.1
  %v1495 = vmul.f32 %v943, 0.1
  %v1496 = vmul.f32 %v946, 0.1
  %v1497 = vmul.f32 %v951, 0.1
  %v1498 = vmul.f32 %v954, 0.1
  %v1499 = vmul.f32 %v959, 0.1
  %v1500 = vmul.f32 %v962, 0.1
  %v1501 = vmul.f32 %v967, 0.1
  %v1502 = vmul.f32 %v970, 0.1
  %v1503 = vmul.f32 %v975, 0.1
  %v1504 = vmul.f32 %v978, 0.1
  %v1505 = vmul.f32 %v983, 0.1
  %v1506 = vmul.f32 %v986, 0.1
  %v1507 = vmul.f32 %v991, 0.1
  %v1508 = vmul.f32 %v994, 0.1
  %v1509 = vmul.f32 %v999, 0.1
  %v1510 = vmul.f32 %v1002, 0.1
  %v1511 = vmul.f32 %v1007, 0.1
  %v1512 = vmul.f32 %v1010, 0.1
  %v1513 = vmul.f32 %v1015, 0.1
  %v1514 = vmul.f32 %v1018, 0.1
  %v1515 = vmul.f32 %v1023, 0.1
  %v1516 = vmul.f32 %v1026, 0.1
  %v1517 = vmul.f32 %v1031, 0.1
  %v1518 = vmul.f32 %v1034, 0.1
  %v1519 = vmul.f32 %v1039, 0.1
  %v1520 = vmul.f32 %v1042, 0.1
  %v1521 = vmul.f32 %v1047, 0.1
  %v1522 = vmul.f32 %v1050, 0.1
  %v1523 = vmul.f32 %v1055, 0.1
  %v1524 = vmul.f32 %v1058, 0.1
  %v1525 = vmul.f32 %v1063, 0.1
  %v1526 = vmul.f32 %v1066, 0.1
  %v1527 = vmul.f32 %v1071, 0.1
  %v1528 = vmul.f32 %v1074, 0.1
  %v1529 = vmul.f32 %v1079, 0.1
  %v1530 = vmul.f32 %v1082, 0.1
  %v1531 = vmul.f32 %v1087, 0.1
  %v1532 = vmul.f32 %v1090, 0.1
  %v1533 = vmul.f32 %v1095, 0.1
  %v1534 = vmul.f32 %v1098, 0.1
  %v1535 = vmul.f32 %v1103, 0.1
  %v1536 = vmul.f32 %v1106, 0.1
  %v1537 = vmul.f32 %v1111, 0.1
  %v1538 = vmul.f32 %v1114, 0.1
  %v1539 = vmul.f32 %v1119, 0.1
  %v1540 = vmul.f32 %v1122, 0.1
  %v1541 = vmul.f32 %v1127, 0.1
  %v1542 = vmul.f32 %v1130, 0.1
  %v1543 = vmul.f32 %v1135, 0.1
  %v1544 = vmul.f32 %v1138, 0.1
  %v1545 = vmul.f32 %v1143, 0.1
  %v1546 = vmul.f32 %v1146, 0.1
  %v1547 = vmul.f32 %v1151, 0.1
  %v1548 = vmul.f32 %v1154, 0.1
  %v1549 = vmul.f32 %v1159, 0.1
  %v1550 = vmul.f32 %v1162, 0.1
  %v1551 = vmul.f32 %v1167, 0.1
  %v1552 = vmul.f32 %v1170, 0.1
  %v1553 = vmul.f32 %v1175, 0.1
  %v1554 = vmul.f32 %v1178, 0.1
  %v1555 = vmul.f32 %v1183, 0.1
  %v1556 = vmul.f32 %v1186, 0.1
  %v1557 = vmul.f32 %v1191, 0.1
  %v1558 = vmul.f32 %v1194, 0.1
  %v1559 = vmul.f32 %v1199, 0.1
  %v1560 = vmul.f32 %v1202, 0.1
  %v1561 = vmul.f32 %v1207, 0.1
  %v1562 = vmul.f32 %v1210, 0.1
  %v1563 = vmul.f32 %v1215, 0.1
  %v1564 = vmul.f32 %v1218, 0.1
  %v1565 = vmul.f32 %v1223, 0.1
  %v1566 = vmul.f32 %v1226, 0.1
  %v1567 = vmul.f32 %v1231, 0.1
  %v1568 = vmul.f32 %v1234, 0.1
  %v1569 = vmul.f32 %v1239, 0.1
  %v1570 = vmul.f32 %v1242, 0.1
  %v1571 = vmul.f32 %v1247, 0.1
  %v1572 = vmul.f32 %v1250, 0.1
  %v1573 = vmul.f32 %v1255, 0.1
  %v1574 = vmul.f32 %v1258, 0.1
  %v1575 = vmul.f32 %v1263, 0.1
  %v1576 = vmul.f32 %v1266, 0.1
  %v1577 = vmul.f32 %v1271, 0.1
  %v1578 = vmul.f32 %v1274, 0.1
  %v1579 = vmul.f32 %v1279, 0.1
  %v1580 = vmul.f32 %v1282, 0.1
  %v1581 = vmul.f32 %v1287, 0.1
  %v1582 = vsel %vm1292, %v711, %v1437
  %v1583 = vsel %vm1293, %v714, %v1438
  %v1584 = vsel %vm1294, %v719, %v1439
  %v1585 = vsel %vm1295, %v722, %v1440
  %v1586 = vsel %vm1296, %v727, %v1441
  %v1587 = vsel %vm1297, %v730, %v1442
  %v1588 = vsel %vm1298, %v735, %v1443
  %v1589 = vsel %vm1299, %v738, %v1444
  %v1590 = vsel %vm1300, %v743, %v1445
  %v1591 = vsel %vm1301, %v746, %v1446
  %v1592 = vsel %vm1302, %v751, %v1447
  %v1593 = vsel %vm1303, %v754, %v1448
  %v1594 = vsel %vm1304, %v759, %v1449
  %v1595 = vsel %vm1305, %v762, %v1450
  %v1596 = vsel %vm1306, %v767, %v1451
  %v1597 = vsel %vm1307, %v770, %v1452
  %v1598 = vsel %vm1308, %v775, %v1453
  %v1599 = vsel %vm1309, %v778, %v1454
  %v1600 = vsel %vm1310, %v783, %v1455
  %v1601 = vsel %vm1311, %v786, %v1456
  %v1602 = vsel %vm1312, %v791, %v1457
  %v1603 = vsel %vm1313, %v794, %v1458
  %v1604 = vsel %vm1314, %v799, %v1459
  %v1605 = vsel %vm1315, %v802, %v1460
  %v1606 = vsel %vm1316, %v807, %v1461
  %v1607 = vsel %vm1317, %v810, %v1462
  %v1608 = vsel %vm1318, %v815, %v1463
  %v1609 = vsel %vm1319, %v818, %v1464
  %v1610 = vsel %vm1320, %v823, %v1465
  %v1611 = vsel %vm1321, %v826, %v1466
  %v1612 = vsel %vm1322, %v831, %v1467
  %v1613 = vsel %vm1323, %v834, %v1468
  %v1614 = vsel %vm1324, %v839, %v1469
  %v1615 = vsel %vm1325, %v842, %v1470
  %v1616 = vsel %vm1326, %v847, %v1471
  %v1617 = vsel %vm1327, %v850, %v1472
  %v1618 = vsel %vm1328, %v855, %v1473
  %v1619 = vsel %vm1329, %v858, %v1474
  %v1620 = vsel %vm1330, %v863, %v1475
  %v1621 = vsel %vm1331, %v866, %v1476
  %v1622 = vsel %vm1332, %v871, %v1477
  %v1623 = vsel %vm1333, %v874, %v1478
  %v1624 = vsel %vm1334, %v879, %v1479
  %v1625 = vsel %vm1335, %v882, %v1480
  %v1626 = vsel %vm1336, %v887, %v1481
  %v1627 = vsel %vm1337, %v890, %v1482
  %v1628 = vsel %vm1338, %v895, %v1483
  %v1629 = vsel %vm1339, %v898, %v1484
  %v1630 = vsel %vm1340, %v903, %v1485
  %v1631 = vsel %vm1341, %v906, %v1486
  %v1632 = vsel %vm1342, %v911, %v1487
  %v1633 = vsel %vm1343, %v914, %v1488
  %v1634 = vsel %vm1344, %v919, %v1489
  %v1635 = vsel %vm1345, %v922, %v1490
  %v1636 = vsel %vm1346, %v927, %v1491
  %v1637 = vsel %vm1347, %v930, %v1492
  %v1638 = vsel %vm1348, %v935, %v1493
  %v1639 = vsel %vm1349, %v938, %v1494
  %v1640 = vsel %vm1350, %v943, %v1495
  %v1641 = vsel %vm1351, %v946, %v1496
  %v1642 = vsel %vm1352, %v951, %v1497
  %v1643 = vsel %vm1353, %v954, %v1498
  %v1644 = vsel %vm1354, %v959, %v1499
  %v1645 = vsel %vm1355, %v962, %v1500
  %v1646 = vsel %vm1356, %v967, %v1501
  %v1647 = vsel %vm1357, %v970, %v1502
  %v1648 = vsel %vm1358, %v975, %v1503
  %v1649 = vsel %vm1359, %v978, %v1504
  %v1650 = vsel %vm1360, %v983, %v1505
  %v1651 = vsel %vm1361, %v986, %v1506
  %v1652 = vsel %vm1362, %v991, %v1507
  %v1653 = vsel %vm1363, %v994, %v1508
  %v1654 = vsel %vm1364, %v999, %v1509
  %v1655 = vsel %vm1365, %v1002, %v1510
  %v1656 = vsel %vm1366, %v1007, %v1511
  %v1657 = vsel %vm1367, %v1010, %v1512
  %v1658 = vsel %vm1368, %v1015, %v1513
  %v1659 = vsel %vm1369, %v1018, %v1514
  %v1660 = vsel %vm1370, %v1023, %v1515
  %v1661 = vsel %vm1371, %v1026, %v1516
  %v1662 = vsel %vm1372, %v1031, %v1517
  %v1663 = vsel %vm1373, %v1034, %v1518
  %v1664 = vsel %vm1374, %v1039, %v1519
  %v1665 = vsel %vm1375, %v1042, %v1520
  %v1666 = vsel %vm1376, %v1047, %v1521
  %v1667 = vsel %vm1377, %v1050, %v1522
  %v1668 = vsel %vm1378, %v1055, %v1523
  %v1669 = vsel %vm1379, %v1058, %v1524
  %v1670 = vsel %vm1380, %v1063, %v1525
  %v1671 = vsel %vm1381, %v1066, %v1526
  %v1672 = vsel %vm1382, %v1071, %v1527
  %v1673 = vsel %vm1383, %v1074, %v1528
  %v1674 = vsel %vm1384, %v1079, %v1529
  %v1675 = vsel %vm1385, %v1082, %v1530
  %v1676 = vsel %vm1386, %v1087, %v1531
  %v1677 = vsel %vm1387, %v1090, %v1532
  %v1678 = vsel %vm1388, %v1095, %v1533
  %v1679 = vsel %vm1389, %v1098, %v1534
  %v1680 = vsel %vm1390, %v1103, %v1535
  %v1681 = vsel %vm1391, %v1106, %v1536
  %v1682 = vsel %vm1392, %v1111, %v1537
  %v1683 = vsel %vm1393, %v1114, %v1538
  %v1684 = vsel %vm1394, %v1119, %v1539
  %v1685 = vsel %vm1395, %v1122, %v1540
  %v1686 = vsel %vm1396, %v1127, %v1541
  %v1687 = vsel %vm1397, %v1130, %v1542
  %v1688 = vsel %vm1398, %v1135, %v1543
  %v1689 = vsel %vm1399, %v1138, %v1544
  %v1690 = vsel %vm1400, %v1143, %v1545
  %v1691 = vsel %vm1401, %v1146, %v1546
  %v1692 = vsel %vm1402, %v1151, %v1547
  %v1693 = vsel %vm1403, %v1154, %v1548
  %v1694 = vsel %vm1404, %v1159, %v1549
  %v1695 = vsel %vm1405, %v1162, %v1550
  %v1696 = vsel %vm1406, %v1167, %v1551
  %v1697 = vsel %vm1407, %v1170, %v1552
  %v1698 = vsel %vm1408, %v1175, %v1553
  %v1699 = vsel %vm1409, %v1178, %v1554
  %v1700 = vsel %vm1410, %v1183, %v1555
  %v1701 = vsel %vm1411, %v1186, %v1556
  %v1702 = vsel %vm1412, %v1191, %v1557
  %v1703 = vsel %vm1413, %v1194, %v1558
  %v1704 = vsel %vm1414, %v1199, %v1559
  %v1705 = vsel %vm1415, %v1202, %v1560
  %v1706 = vsel %vm1416, %v1207, %v1561
  %v1707 = vsel %vm1417, %v1210, %v1562
  %v1708 = vsel %vm1418, %v1215, %v1563
  %v1709 = vsel %vm1419, %v1218, %v1564
  %v1710 = vsel %vm1420, %v1223, %v1565
  %v1711 = vsel %vm1421, %v1226, %v1566
  %v1712 = vsel %vm1422, %v1231, %v1567
  %v1713 = vsel %vm1423, %v1234, %v1568
  %v1714 = vsel %vm1424, %v1239, %v1569
  %v1715 = vsel %vm1425, %v1242, %v1570
  %v1716 = vsel %vm1426, %v1247, %v1571
  %v1717 = vsel %vm1427, %v1250, %v1572
  %v1718 = vsel %vm1428, %v1255, %v1573
  %v1719 = vsel %vm1429, %v1258, %v1574
  %v1720 = vsel %vm1430, %v1263, %v1575
  %v1721 = vsel %vm1431, %v1266, %v1576
  %v1722 = vsel %vm1432, %v1271, %v1577
  %v1723 = vsel %vm1433, %v1274, %v1578
  %v1724 = vsel %vm1434, %v1279, %v1579
  %v1725 = vsel %vm1435, %v1282, %v1580
  %v1726 = vsel %vm1436, %v1287, %v1581
  %v1727 = vpack.c.bf16 %v1583, %v1582
  %v1728 = vpack.c.bf16 %v1585, %v1584
  %v1729 = vpack.c.bf16 %v1587, %v1586
  %v1730 = vpack.c.bf16 %v1589, %v1588
  %v1731 = vpack.c.bf16 %v1591, %v1590
  %v1732 = vpack.c.bf16 %v1593, %v1592
  %v1733 = vpack.c.bf16 %v1595, %v1594
  %v1734 = vpack.c.bf16 %v1597, %v1596
  %v1735 = vpack.c.bf16 %v1599, %v1598
  %v1736 = vpack.c.bf16 %v1601, %v1600
  %v1737 = vpack.c.bf16 %v1603, %v1602
  %v1738 = vpack.c.bf16 %v1605, %v1604
  %v1739 = vpack.c.bf16 %v1607, %v1606
  %v1740 = vpack.c.bf16 %v1609, %v1608
  %v1741 = vpack.c.bf16 %v1611, %v1610
  %v1742 = vpack.c.bf16 %v1613, %v1612
  %v1743 = vpack.c.bf16 %v1615, %v1614
  %v1744 = vpack.c.bf16 %v1617, %v1616
  %v1745 = vpack.c.bf16 %v1619, %v1618
  %v1746 = vpack.c.bf16 %v1621, %v1620
  %v1747 = vpack.c.bf16 %v1623, %v1622
  %v1748 = vpack.c.bf16 %v1625, %v1624
  %v1749 = vpack.c.bf16 %v1627, %v1626
  %v1750 = vpack.c.bf16 %v1629, %v1628
  %v1751 = vpack.c.bf16 %v1631, %v1630
  %v1752 = vpack.c.bf16 %v1633, %v1632
  %v1753 = vpack.c.bf16 %v1635, %v1634
  %v1754 = vpack.c.bf16 %v1637, %v1636
  %v1755 = vpack.c.bf16 %v1639, %v1638
  %v1756 = vpack.c.bf16 %v1641, %v1640
  %v1757 = vpack.c.bf16 %v1643, %v1642
  %v1758 = vpack.c.bf16 %v1645, %v1644
  %v1759 = vpack.c.bf16 %v1647, %v1646
  %v1760 = vpack.c.bf16 %v1649, %v1648
  %v1761 = vpack.c.bf16 %v1651, %v1650
  %v1762 = vpack.c.bf16 %v1653, %v1652
  %v1763 = vpack.c.bf16 %v1655, %v1654
  %v1764 = vpack.c.bf16 %v1657, %v1656
  %v1765 = vpack.c.bf16 %v1659, %v1658
  %v1766 = vpack.c.bf16 %v1661, %v1660
  %v1767 = vpack.c.bf16 %v1663, %v1662
  %v1768 = vpack.c.bf16 %v1665, %v1664
  %v1769 = vpack.c.bf16 %v1667, %v1666
  %v1770 = vpack.c.bf16 %v1669, %v1668
  %v1771 = vpack.c.bf16 %v1671, %v1670
  %v1772 = vpack.c.bf16 %v1673, %v1672
  %v1773 = vpack.c.bf16 %v1675, %v1674
  %v1774 = vpack.c.bf16 %v1677, %v1676
  %v1775 = vpack.c.bf16 %v1679, %v1678
  %v1776 = vpack.c.bf16 %v1681, %v1680
  %v1777 = vpack.c.bf16 %v1683, %v1682
  %v1778 = vpack.c.bf16 %v1685, %v1684
  %v1779 = vpack.c.bf16 %v1687, %v1686
  %v1780 = vpack.c.bf16 %v1689, %v1688
  %v1781 = vpack.c.bf16 %v1691, %v1690
  %v1782 = vpack.c.bf16 %v1693, %v1692
  %v1783 = vpack.c.bf16 %v1695, %v1694
  %v1784 = vpack.c.bf16 %v1697, %v1696
  %v1785 = vpack.c.bf16 %v1699, %v1698
  %v1786 = vpack.c.bf16 %v1701, %v1700
  %v1787 = vpack.c.bf16 %v1703, %v1702
  %v1788 = vpack.c.bf16 %v1705, %v1704
  %v1789 = vpack.c.bf16 %v1707, %v1706
  %v1790 = vpack.c.bf16 %v1709, %v1708
  %v1791 = vpack.c.bf16 %v1711, %v1710
  %v1792 = vpack.c.bf16 %v1713, %v1712
  %v1793 = vpack.c.bf16 %v1715, %v1714
  %v1794 = vpack.c.bf16 %v1717, %v1716
  %v1795 = vpack.c.bf16 %v1719, %v1718
  %v1796 = vpack.c.bf16 %v1721, %v1720
  %v1797 = vpack.c.bf16 %v1723, %v1722
  %v1798 = vpack.c.bf16 %v1725, %v1724
  %v1799 = vpack.c.bf16 %v1726, %v1726
  %v1800 = vld [vmem:[%s3] sm:$0xf]
  %v1801 = vld [vmem:[%s3 + $0x4] sm:$0xf]
  %v1802 = vld [vmem:[%s3 + $0x8] sm:$0xf]
  %v1803 = vld [vmem:[%s3 + $0xc] sm:$0xf]
  %v1804 = vld [vmem:[%s3 + $0x10] sm:$0xf]
  %v1805 = vld [vmem:[%s3 + $0x14] sm:$0xf]
  %v1806 = vld [vmem:[%s3 + $0x18] sm:$0xf]
  %v1807 = vld [vmem:[%s3 + $0x1c] sm:$0xf]
  %v1808 = vld [vmem:[%s3 + $0x20] sm:$0xf]
  %v1809 = vld [vmem:[%s3 + $0x24] sm:$0xf]
  %v1810 = vld [vmem:[%s3 + $0x28] sm:$0xf]
  %v1811 = vld [vmem:[%s3 + $0x2c] sm:$0xf]
  %v1812 = vld [vmem:[%s3 + $0x30] sm:$0xf]
  %v1813 = vld [vmem:[%s3 + $0x34] sm:$0xf]
  %v1814 = vld [vmem:[%s3 + $0x38] sm:$0xf]
  %v1815 = vld [vmem:[%s3 + $0x3c] sm:$0xf]
  %v1816 = vld [vmem:[%s4] sm:$0x1]
  %v1818 = vlaneseq
  %v1819 = vshrl.u32 %v1818, 7
  %v1820 = vsub.s32 0, %v1819
  %v1821 = vrot.slane %v1816, %v1820
  %v1839 = vunpack.c.l.b16 %v1800
  %v1840 = vunpack.c.l.b16 %v1801
  %v1841 = vunpack.c.l.b16 %v1802
  %v1842 = vunpack.c.l.b16 %v1803
  %v1843 = vunpack.c.l.b16 %v1804
  %v1844 = vunpack.c.l.b16 %v1805
  %v1845 = vunpack.c.l.b16 %v1806
  %v1846 = vunpack.c.l.b16 %v1807
  %v1847 = vunpack.c.l.b16 %v1808
  %v1848 = vunpack.c.l.b16 %v1809
  %v1849 = vunpack.c.l.b16 %v1810
  %v1850 = vunpack.c.l.b16 %v1811
  %v1851 = vunpack.c.l.b16 %v1812
  %v1852 = vunpack.c.l.b16 %v1813
  %v1853 = vunpack.c.l.b16 %v1814
  %v1854 = vunpack.c.l.b16 %v1815
  %v1855 = vpack.c.b16 %v1840, %v1839
  %v1856 = vpack.c.b16 %v1842, %v1841
  %v1857 = vpack.c.b16 %v1844, %v1843
  %v1858 = vpack.c.b16 %v1846, %v1845
  %v1859 = vpack.c.b16 %v1848, %v1847
  %v1860 = vpack.c.b16 %v1850, %v1849
  %v1861 = vpack.c.b16 %v1852, %v1851
  %v1862 = vpack.c.b16 %v1854, %v1853
  %1871 = vmatprep.subr.bf16.mxu0 0
  %1872 = vmatpush1.bf16.msra.mxu0 %v1855
  %1873 = vmatprep.subr.bf16.mxu0 0
  %1874 = vmatpush1.bf16.msra.mxu0 %v1856
  %1875 = vmatprep.subr.bf16.mxu0 0
  %1876 = vmatpush1.bf16.msra.mxu0 %v1857
  %1877 = vmatprep.subr.bf16.mxu0 0
  %1878 = vmatpush1.bf16.msra.mxu0 %v1858
  %1879 = vmatprep.subr.bf16.mxu0 0
  %1880 = vmatpush1.bf16.msra.mxu0 %v1859
  %1881 = vmatprep.subr.bf16.mxu0 0
  %1882 = vmatpush1.bf16.msra.mxu0 %v1860
  %1883 = vmatprep.subr.bf16.mxu0 0
  %1884 = vmatpush1.bf16.msra.mxu0 %v1861
  %1885 = vmatprep.subr.bf16.mxu0 0
  %1886 = vmatpush1.bf16.msra.mxu0 %v1862
  %1887 = vmatprep.subr.bf16.mxu0 0
  %1888 = vmatpush1.bf16.msra.mxu0 0
  %1889 = vmatprep.subr.bf16.mxu0 0
  %1890 = vmatpush1.bf16.msra.mxu0 0
  %1891 = vmatprep.subr.bf16.mxu0 0
  %1892 = vmatpush1.bf16.msra.mxu0 0
  %1893 = vmatprep.subr.bf16.mxu0 0
  %1894 = vmatpush1.bf16.msra.mxu0 0
  %1895 = vmatprep.subr.bf16.mxu0 0
  %1896 = vmatpush1.bf16.msra.mxu0 0
  %1897 = vmatprep.subr.bf16.mxu0 0
  %1898 = vmatpush1.bf16.msra.mxu0 0
  %1899 = vmatprep.subr.bf16.mxu0 0
  %1900 = vmatpush1.bf16.msra.mxu0 0
  %1901 = vmatprep.subr.bf16.mxu0 0
  %1902 = vmatpush1.bf16.msra.mxu0 0
  %1903 = vmatprep.mubr.bf16.mxu0 0
  %1904 = vmatmul.mubr.bf16.gmra.mrb[0].mxu0 %v1727
  %v1905 = vpop.f32.mrb[0].mxu0
  %v1906 = vadd.f32 %v1821, %v1905
  %v1907 = vpop.f32.mrb[0].mxu0
  %v1908 = vpop.f32.mrb[0].mxu0
  %v1909 = vadd.f32 %v1821, %v1908
  %v1910 = vpop.f32.mrb[0].mxu0
  %1911 = vmatprep.mubr.bf16.mxu0 0
  %1912 = vmatmul.mubr.bf16.gmra.mrb[0].mxu0 %v1728
  %v1913 = vpop.f32.mrb[0].mxu0
  %v1914 = vadd.f32 %v1821, %v1913
  %v1915 = vpop.f32.mrb[0].mxu0
  %v1916 = vpop.f32.mrb[0].mxu0
  %v1917 = vadd.f32 %v1821, %v1916
  %v1918 = vpop.f32.mrb[0].mxu0
  %1919 = vmatprep.mubr.bf16.mxu0 0
  %1920 = vmatmul.mubr.bf16.gmra.mrb[0].mxu0 %v1729
  %v1921 = vpop.f32.mrb[0].mxu0
  %v1922 = vadd.f32 %v1821, %v1921
  %v1923 = vpop.f32.mrb[0].mxu0
  %v1924 = vpop.f32.mrb[0].mxu0
  %v1925 = vadd.f32 %v1821, %v1924
  %v1926 = vpop.f32.mrb[0].mxu0
  %1927 = vmatprep.mubr.bf16.mxu0 0
  %1928 = vmatmul.mubr.bf16.gmra.mrb[0].mxu0 %v1730
  %v1929 = vpop.f32.mrb[0].mxu0
  %v1930 = vadd.f32 %v1821, %v1929
  %v1931 = vpop.f32.mrb[0].mxu0
  %v1932 = vpop.f32.mrb[0].mxu0
  %v1933 = vadd.f32 %v1821, %v1932
  %v1934 = vpop.f32.mrb[0].mxu0
  %1935 = vmatprep.mubr.bf16.mxu0 0
  %1936 = vmatmul.mubr.bf16.gmra.mrb[0].mxu0 %v1731
  %v1937 = vpop.f32.mrb[0].mxu0
  %v1938 = vadd.f32 %v1821, %v1937
  %v1939 = vpop.f32.mrb[0].mxu0
  %v1940 = vpop.f32.mrb[0].mxu0
  %v1941 = vadd.f32 %v1821, %v1940
  %v1942 = vpop.f32.mrb[0].mxu0
  %1943 = vmatprep.mubr.bf16.mxu0 0
  %1944 = vmatmul.mubr.bf16.gmra.mrb[0].mxu0 %v1732
  %v1945 = vpop.f32.mrb[0].mxu0
  %v1946 = vadd.f32 %v1821, %v1945
  %v1947 = vpop.f32.mrb[0].mxu0
  %v1948 = vpop.f32.mrb[0].mxu0
  %v1949 = vadd.f32 %v1821, %v1948
  %v1950 = vpop.f32.mrb[0].mxu0
  %1951 = vmatprep.mubr.bf16.mxu0 0
  %1952 = vmatmul.mubr.bf16.gmra.mrb[0].mxu0 %v1733
  %v1953 = vpop.f32.mrb[0].mxu0
  %v1954 = vadd.f32 %v1821, %v1953
  %v1955 = vpop.f32.mrb[0].mxu0
  %v1956 = vpop.f32.mrb[0].mxu0
  %v1957 = vadd.f32 %v1821, %v1956
  %v1958 = vpop.f32.mrb[0].mxu0
  %1959 = vmatprep.mubr.bf16.mxu0 0
  %1960 = vmatmul.mubr.bf16.gmra.mrb[0].mxu0 %v1734
  %v1961 = vpop.f32.mrb[0].mxu0
  %v1962 = vadd.f32 %v1821, %v1961
  %v1963 = vpop.f32.mrb[0].mxu0
  %v1964 = vpop.f32.mrb[0].mxu0
  %v1965 = vadd.f32 %v1821, %v1964
  %v1966 = vpop.f32.mrb[0].mxu0
  %1967 = vmatprep.mubr.bf16.mxu0 0
  %1968 = vmatmul.mubr.bf16.gmra.mrb[0].mxu0 %v1735
  %v1969 = vpop.f32.mrb[0].mxu0
  %v1970 = vadd.f32 %v1821, %v1969
  %v1971 = vpop.f32.mrb[0].mxu0
  %v1972 = vpop.f32.mrb[0].mxu0
  %v1973 = vadd.f32 %v1821, %v1972
  %v1974 = vpop.f32.mrb[0].mxu0
  %1975 = vmatprep.mubr.bf16.mxu0 0
  %1976 = vmatmul.mubr.bf16.gmra.mrb[0].mxu0 %v1736
  %v1977 = vpop.f32.mrb[0].mxu0
  %v1978 = vadd.f32 %v1821, %v1977
  %v1979 = vpop.f32.mrb[0].mxu0
  %v1980 = vpop.f32.mrb[0].mxu0
  %v1981 = vadd.f32 %v1821, %v1980
  %v1982 = vpop.f32.mrb[0].mxu0
  %1983 = vmatprep.mubr.bf16.mxu0 0
  %1984 = vmatmul.mubr.bf16.gmra.mrb[0].mxu0 %v1737
  %v1985 = vpop.f32.mrb[0].mxu0
  %v1986 = vadd.f32 %v1821, %v1985
  %v1987 = vpop.f32.mrb[0].mxu0
  %v1988 = vpop.f32.mrb[0].mxu0
  %v1989 = vadd.f32 %v1821, %v1988
  %v1990 = vpop.f32.mrb[0].mxu0
  %1991 = vmatprep.mubr.bf16.mxu0 0
  %1992 = vmatmul.mubr.bf16.gmra.mrb[0].mxu0 %v1738
  %v1993 = vpop.f32.mrb[0].mxu0
  %v1994 = vadd.f32 %v1821, %v1993
  %v1995 = vpop.f32.mrb[0].mxu0
  %v1996 = vpop.f32.mrb[0].mxu0
  %v1997 = vadd.f32 %v1821, %v1996
  %v1998 = vpop.f32.mrb[0].mxu0
  %1999 = vmatprep.mubr.bf16.mxu0 0
  %2000 = vmatmul.mubr.bf16.gmra.mrb[0].mxu0 %v1739
  %v2001 = vpop.f32.mrb[0].mxu0
  %v2002 = vadd.f32 %v1821, %v2001
  %v2003 = vpop.f32.mrb[0].mxu0
  %v2004 = vpop.f32.mrb[0].mxu0
  %v2005 = vadd.f32 %v1821, %v2004
  %v2006 = vpop.f32.mrb[0].mxu0
  %2007 = vmatprep.mubr.bf16.mxu0 0
  %2008 = vmatmul.mubr.bf16.gmra.mrb[0].mxu0 %v1740
  %v2009 = vpop.f32.mrb[0].mxu0
  %v2010 = vadd.f32 %v1821, %v2009
  %v2011 = vpop.f32.mrb[0].mxu0
  %v2012 = vpop.f32.mrb[0].mxu0
  %v2013 = vadd.f32 %v1821, %v2012
  %v2014 = vpop.f32.mrb[0].mxu0
  %2015 = vmatprep.mubr.bf16.mxu0 0
  %2016 = vmatmul.mubr.bf16.gmra.mrb[0].mxu0 %v1741
  %v2017 = vpop.f32.mrb[0].mxu0
  %v2018 = vadd.f32 %v1821, %v2017
  %v2019 = vpop.f32.mrb[0].mxu0
  %v2020 = vpop.f32.mrb[0].mxu0
  %v2021 = vadd.f32 %v1821, %v2020
  %v2022 = vpop.f32.mrb[0].mxu0
  %2023 = vmatprep.mubr.bf16.mxu0 0
  %2024 = vmatmul.mubr.bf16.gmra.mrb[0].mxu0 %v1742
  %v2025 = vpop.f32.mrb[0].mxu0
  %v2026 = vadd.f32 %v1821, %v2025
  %v2027 = vpop.f32.mrb[0].mxu0
  %v2028 = vpop.f32.mrb[0].mxu0
  %v2029 = vadd.f32 %v1821, %v2028
  %v2030 = vpop.f32.mrb[0].mxu0
  %2031 = vmatprep.mubr.bf16.mxu0 0
  %2032 = vmatmul.mubr.bf16.gmra.mrb[0].mxu0 %v1743
  %v2033 = vpop.f32.mrb[0].mxu0
  %v2034 = vadd.f32 %v1821, %v2033
  %v2035 = vpop.f32.mrb[0].mxu0
  %v2036 = vpop.f32.mrb[0].mxu0
  %v2037 = vadd.f32 %v1821, %v2036
  %v2038 = vpop.f32.mrb[0].mxu0
  %2039 = vmatprep.mubr.bf16.mxu0 0
  %2040 = vmatmul.mubr.bf16.gmra.mrb[0].mxu0 %v1744
  %v2041 = vpop.f32.mrb[0].mxu0
  %v2042 = vadd.f32 %v1821, %v2041
  %v2043 = vpop.f32.mrb[0].mxu0
  %v2044 = vpop.f32.mrb[0].mxu0
  %v2045 = vadd.f32 %v1821, %v2044
  %v2046 = vpop.f32.mrb[0].mxu0
  %2047 = vmatprep.mubr.bf16.mxu0 0
  %2048 = vmatmul.mubr.bf16.gmra.mrb[0].mxu0 %v1745
  %v2049 = vpop.f32.mrb[0].mxu0
  %v2050 = vadd.f32 %v1821, %v2049
  %v2051 = vpop.f32.mrb[0].mxu0
  %v2052 = vpop.f32.mrb[0].mxu0
  %v2053 = vadd.f32 %v1821, %v2052
  %v2054 = vpop.f32.mrb[0].mxu0
  %2055 = vmatprep.mubr.bf16.mxu0 0
  %2056 = vmatmul.mubr.bf16.gmra.mrb[0].mxu0 %v1746
  %v2057 = vpop.f32.mrb[0].mxu0
  %v2058 = vadd.f32 %v1821, %v2057
  %v2059 = vpop.f32.mrb[0].mxu0
  %v2060 = vpop.f32.mrb[0].mxu0
  %v2061 = vadd.f32 %v1821, %v2060
  %v2062 = vpop.f32.mrb[0].mxu0
  %2063 = vmatprep.mubr.bf16.mxu0 0
  %2064 = vmatmul.mubr.bf16.gmra.mrb[0].mxu0 %v1747
  %v2065 = vpop.f32.mrb[0].mxu0
  %v2066 = vadd.f32 %v1821, %v2065
  %v2067 = vpop.f32.mrb[0].mxu0
  %v2068 = vpop.f32.mrb[0].mxu0
  %v2069 = vadd.f32 %v1821, %v2068
  %v2070 = vpop.f32.mrb[0].mxu0
  %2071 = vmatprep.mubr.bf16.mxu0 0
  %2072 = vmatmul.mubr.bf16.gmra.mrb[0].mxu0 %v1748
  %v2073 = vpop.f32.mrb[0].mxu0
  %v2074 = vadd.f32 %v1821, %v2073
  %v2075 = vpop.f32.mrb[0].mxu0
  %v2076 = vpop.f32.mrb[0].mxu0
  %v2077 = vadd.f32 %v1821, %v2076
  %v2078 = vpop.f32.mrb[0].mxu0
  %2079 = vmatprep.mubr.bf16.mxu0 0
  %2080 = vmatmul.mubr.bf16.gmra.mrb[0].mxu0 %v1749
  %v2081 = vpop.f32.mrb[0].mxu0
  %v2082 = vadd.f32 %v1821, %v2081
  %v2083 = vpop.f32.mrb[0].mxu0
  %v2084 = vpop.f32.mrb[0].mxu0
  %v2085 = vadd.f32 %v1821, %v2084
  %v2086 = vpop.f32.mrb[0].mxu0
  %2087 = vmatprep.mubr.bf16.mxu0 0
  %2088 = vmatmul.mubr.bf16.gmra.mrb[0].mxu0 %v1750
  %v2089 = vpop.f32.mrb[0].mxu0
  %v2090 = vadd.f32 %v1821, %v2089
  %v2091 = vpop.f32.mrb[0].mxu0
  %v2092 = vpop.f32.mrb[0].mxu0
  %v2093 = vadd.f32 %v1821, %v2092
  %v2094 = vpop.f32.mrb[0].mxu0
  %2095 = vmatprep.mubr.bf16.mxu0 0
  %2096 = vmatmul.mubr.bf16.gmra.mrb[0].mxu0 %v1751
  %v2097 = vpop.f32.mrb[0].mxu0
  %v2098 = vadd.f32 %v1821, %v2097
  %v2099 = vpop.f32.mrb[0].mxu0
  %v2100 = vpop.f32.mrb[0].mxu0
  %v2101 = vadd.f32 %v1821, %v2100
  %v2102 = vpop.f32.mrb[0].mxu0
  %2103 = vmatprep.mubr.bf16.mxu0 0
  %2104 = vmatmul.mubr.bf16.gmra.mrb[0].mxu0 %v1752
  %v2105 = vpop.f32.mrb[0].mxu0
  %v2106 = vadd.f32 %v1821, %v2105
  %v2107 = vpop.f32.mrb[0].mxu0
  %v2108 = vpop.f32.mrb[0].mxu0
  %v2109 = vadd.f32 %v1821, %v2108
  %v2110 = vpop.f32.mrb[0].mxu0
  %2111 = vmatprep.mubr.bf16.mxu0 0
  %2112 = vmatmul.mubr.bf16.gmra.mrb[0].mxu0 %v1753
  %v2113 = vpop.f32.mrb[0].mxu0
  %v2114 = vadd.f32 %v1821, %v2113
  %v2115 = vpop.f32.mrb[0].mxu0
  %v2116 = vpop.f32.mrb[0].mxu0
  %v2117 = vadd.f32 %v1821, %v2116
  %v2118 = vpop.f32.mrb[0].mxu0
  %2119 = vmatprep.mubr.bf16.mxu0 0
  %2120 = vmatmul.mubr.bf16.gmra.mrb[0].mxu0 %v1754
  %v2121 = vpop.f32.mrb[0].mxu0
  %v2122 = vadd.f32 %v1821, %v2121
  %v2123 = vpop.f32.mrb[0].mxu0
  %v2124 = vpop.f32.mrb[0].mxu0
  %v2125 = vadd.f32 %v1821, %v2124
  %v2126 = vpop.f32.mrb[0].mxu0
  %2127 = vmatprep.mubr.bf16.mxu0 0
  %2128 = vmatmul.mubr.bf16.gmra.mrb[0].mxu0 %v1755
  %v2129 = vpop.f32.mrb[0].mxu0
  %v2130 = vadd.f32 %v1821, %v2129
  %v2131 = vpop.f32.mrb[0].mxu0
  %v2132 = vpop.f32.mrb[0].mxu0
  %v2133 = vadd.f32 %v1821, %v2132
  %v2134 = vpop.f32.mrb[0].mxu0
  %2135 = vmatprep.mubr.bf16.mxu0 0
  %2136 = vmatmul.mubr.bf16.gmra.mrb[0].mxu0 %v1756
  %v2137 = vpop.f32.mrb[0].mxu0
  %v2138 = vadd.f32 %v1821, %v2137
  %v2139 = vpop.f32.mrb[0].mxu0
  %v2140 = vpop.f32.mrb[0].mxu0
  %v2141 = vadd.f32 %v1821, %v2140
  %v2142 = vpop.f32.mrb[0].mxu0
  %2143 = vmatprep.mubr.bf16.mxu0 0
  %2144 = vmatmul.mubr.bf16.gmra.mrb[0].mxu0 %v1757
  %v2145 = vpop.f32.mrb[0].mxu0
  %v2146 = vadd.f32 %v1821, %v2145
  %v2147 = vpop.f32.mrb[0].mxu0
  %v2148 = vpop.f32.mrb[0].mxu0
  %v2149 = vadd.f32 %v1821, %v2148
  %v2150 = vpop.f32.mrb[0].mxu0
  %2151 = vmatprep.mubr.bf16.mxu0 0
  %2152 = vmatmul.mubr.bf16.gmra.mrb[0].mxu0 %v1758
  %v2153 = vpop.f32.mrb[0].mxu0
  %v2154 = vadd.f32 %v1821, %v2153
  %v2155 = vpop.f32.mrb[0].mxu0
  %v2156 = vpop.f32.mrb[0].mxu0
  %v2157 = vadd.f32 %v1821, %v2156
  %v2158 = vpop.f32.mrb[0].mxu0
  %2159 = vmatprep.mubr.bf16.mxu0 0
  %2160 = vmatmul.mubr.bf16.gmra.mrb[0].mxu0 %v1759
  %v2161 = vpop.f32.mrb[0].mxu0
  %v2162 = vadd.f32 %v1821, %v2161
  %v2163 = vpop.f32.mrb[0].mxu0
  %v2164 = vpop.f32.mrb[0].mxu0
  %v2165 = vadd.f32 %v1821, %v2164
  %v2166 = vpop.f32.mrb[0].mxu0
  %2167 = vmatprep.mubr.bf16.mxu0 0
  %2168 = vmatmul.mubr.bf16.gmra.mrb[0].mxu0 %v1760
  %v2169 = vpop.f32.mrb[0].mxu0
  %v2170 = vadd.f32 %v1821, %v2169
  %v2171 = vpop.f32.mrb[0].mxu0
  %v2172 = vpop.f32.mrb[0].mxu0
  %v2173 = vadd.f32 %v1821, %v2172
  %v2174 = vpop.f32.mrb[0].mxu0
  %2175 = vmatprep.mubr.bf16.mxu0 0
  %2176 = vmatmul.mubr.bf16.gmra.mrb[0].mxu0 %v1761
  %v2177 = vpop.f32.mrb[0].mxu0
  %v2178 = vadd.f32 %v1821, %v2177
  %v2179 = vpop.f32.mrb[0].mxu0
  %v2180 = vpop.f32.mrb[0].mxu0
  %v2181 = vadd.f32 %v1821, %v2180
  %v2182 = vpop.f32.mrb[0].mxu0
  %2183 = vmatprep.mubr.bf16.mxu0 0
  %2184 = vmatmul.mubr.bf16.gmra.mrb[0].mxu0 %v1762
  %v2185 = vpop.f32.mrb[0].mxu0
  %v2186 = vadd.f32 %v1821, %v2185
  %v2187 = vpop.f32.mrb[0].mxu0
  %v2188 = vpop.f32.mrb[0].mxu0
  %v2189 = vadd.f32 %v1821, %v2188
  %v2190 = vpop.f32.mrb[0].mxu0
  %2191 = vmatprep.mubr.bf16.mxu0 0
  %2192 = vmatmul.mubr.bf16.gmra.mrb[0].mxu0 %v1763
  %v2193 = vpop.f32.mrb[0].mxu0
  %v2194 = vadd.f32 %v1821, %v2193
  %v2195 = vpop.f32.mrb[0].mxu0
  %v2196 = vpop.f32.mrb[0].mxu0
  %v2197 = vadd.f32 %v1821, %v2196
  %v2198 = vpop.f32.mrb[0].mxu0
  %2199 = vmatprep.mubr.bf16.mxu0 0
  %2200 = vmatmul.mubr.bf16.gmra.mrb[0].mxu0 %v1764
  %v2201 = vpop.f32.mrb[0].mxu0
  %v2202 = vadd.f32 %v1821, %v2201
  %v2203 = vpop.f32.mrb[0].mxu0
  %v2204 = vpop.f32.mrb[0].mxu0
  %v2205 = vadd.f32 %v1821, %v2204
  %v2206 = vpop.f32.mrb[0].mxu0
  %2207 = vmatprep.mubr.bf16.mxu0 0
  %2208 = vmatmul.mubr.bf16.gmra.mrb[0].mxu0 %v1765
  %v2209 = vpop.f32.mrb[0].mxu0
  %v2210 = vadd.f32 %v1821, %v2209
  %v2211 = vpop.f32.mrb[0].mxu0
  %v2212 = vpop.f32.mrb[0].mxu0
  %v2213 = vadd.f32 %v1821, %v2212
  %v2214 = vpop.f32.mrb[0].mxu0
  %2215 = vmatprep.mubr.bf16.mxu0 0
  %2216 = vmatmul.mubr.bf16.gmra.mrb[0].mxu0 %v1766
  %v2217 = vpop.f32.mrb[0].mxu0
  %v2218 = vadd.f32 %v1821, %v2217
  %v2219 = vpop.f32.mrb[0].mxu0
  %v2220 = vpop.f32.mrb[0].mxu0
  %v2221 = vadd.f32 %v1821, %v2220
  %v2222 = vpop.f32.mrb[0].mxu0
  %2223 = vmatprep.mubr.bf16.mxu0 0
  %2224 = vmatmul.mubr.bf16.gmra.mrb[0].mxu0 %v1767
  %v2225 = vpop.f32.mrb[0].mxu0
  %v2226 = vadd.f32 %v1821, %v2225
  %v2227 = vpop.f32.mrb[0].mxu0
  %v2228 = vpop.f32.mrb[0].mxu0
  %v2229 = vadd.f32 %v1821, %v2228
  %v2230 = vpop.f32.mrb[0].mxu0
  %2231 = vmatprep.mubr.bf16.mxu0 0
  %2232 = vmatmul.mubr.bf16.gmra.mrb[0].mxu0 %v1768
  %v2233 = vpop.f32.mrb[0].mxu0
  %v2234 = vadd.f32 %v1821, %v2233
  %v2235 = vpop.f32.mrb[0].mxu0
  %v2236 = vpop.f32.mrb[0].mxu0
  %v2237 = vadd.f32 %v1821, %v2236
  %v2238 = vpop.f32.mrb[0].mxu0
  %2239 = vmatprep.mubr.bf16.mxu0 0
  %2240 = vmatmul.mubr.bf16.gmra.mrb[0].mxu0 %v1769
  %v2241 = vpop.f32.mrb[0].mxu0
  %v2242 = vadd.f32 %v1821, %v2241
  %v2243 = vpop.f32.mrb[0].mxu0
  %v2244 = vpop.f32.mrb[0].mxu0
  %v2245 = vadd.f32 %v1821, %v2244
  %v2246 = vpop.f32.mrb[0].mxu0
  %2247 = vmatprep.mubr.bf16.mxu0 0
  %2248 = vmatmul.mubr.bf16.gmra.mrb[0].mxu0 %v1770
  %v2249 = vpop.f32.mrb[0].mxu0
  %v2250 = vadd.f32 %v1821, %v2249
  %v2251 = vpop.f32.mrb[0].mxu0
  %v2252 = vpop.f32.mrb[0].mxu0
  %v2253 = vadd.f32 %v1821, %v2252
  %v2254 = vpop.f32.mrb[0].mxu0
  %2255 = vmatprep.mubr.bf16.mxu0 0
  %2256 = vmatmul.mubr.bf16.gmra.mrb[0].mxu0 %v1771
  %v2257 = vpop.f32.mrb[0].mxu0
  %v2258 = vadd.f32 %v1821, %v2257
  %v2259 = vpop.f32.mrb[0].mxu0
  %v2260 = vpop.f32.mrb[0].mxu0
  %v2261 = vadd.f32 %v1821, %v2260
  %v2262 = vpop.f32.mrb[0].mxu0
  %2263 = vmatprep.mubr.bf16.mxu0 0
  %2264 = vmatmul.mubr.bf16.gmra.mrb[0].mxu0 %v1772
  %v2265 = vpop.f32.mrb[0].mxu0
  %v2266 = vadd.f32 %v1821, %v2265
  %v2267 = vpop.f32.mrb[0].mxu0
  %v2268 = vpop.f32.mrb[0].mxu0
  %v2269 = vadd.f32 %v1821, %v2268
  %v2270 = vpop.f32.mrb[0].mxu0
  %2271 = vmatprep.mubr.bf16.mxu0 0
  %2272 = vmatmul.mubr.bf16.gmra.mrb[0].mxu0 %v1773
  %v2273 = vpop.f32.mrb[0].mxu0
  %v2274 = vadd.f32 %v1821, %v2273
  %v2275 = vpop.f32.mrb[0].mxu0
  %v2276 = vpop.f32.mrb[0].mxu0
  %v2277 = vadd.f32 %v1821, %v2276
  %v2278 = vpop.f32.mrb[0].mxu0
  %2279 = vmatprep.mubr.bf16.mxu0 0
  %2280 = vmatmul.mubr.bf16.gmra.mrb[0].mxu0 %v1774
  %v2281 = vpop.f32.mrb[0].mxu0
  %v2282 = vadd.f32 %v1821, %v2281
  %v2283 = vpop.f32.mrb[0].mxu0
  %v2284 = vpop.f32.mrb[0].mxu0
  %v2285 = vadd.f32 %v1821, %v2284
  %v2286 = vpop.f32.mrb[0].mxu0
  %2287 = vmatprep.mubr.bf16.mxu0 0
  %2288 = vmatmul.mubr.bf16.gmra.mrb[0].mxu0 %v1775
  %v2289 = vpop.f32.mrb[0].mxu0
  %v2290 = vadd.f32 %v1821, %v2289
  %v2291 = vpop.f32.mrb[0].mxu0
  %v2292 = vpop.f32.mrb[0].mxu0
  %v2293 = vadd.f32 %v1821, %v2292
  %v2294 = vpop.f32.mrb[0].mxu0
  %2295 = vmatprep.mubr.bf16.mxu0 0
  %2296 = vmatmul.mubr.bf16.gmra.mrb[0].mxu0 %v1776
  %v2297 = vpop.f32.mrb[0].mxu0
  %v2298 = vadd.f32 %v1821, %v2297
  %v2299 = vpop.f32.mrb[0].mxu0
  %v2300 = vpop.f32.mrb[0].mxu0
  %v2301 = vadd.f32 %v1821, %v2300
  %v2302 = vpop.f32.mrb[0].mxu0
  %2303 = vmatprep.mubr.bf16.mxu0 0
  %2304 = vmatmul.mubr.bf16.gmra.mrb[0].mxu0 %v1777
  %v2305 = vpop.f32.mrb[0].mxu0
  %v2306 = vadd.f32 %v1821, %v2305
  %v2307 = vpop.f32.mrb[0].mxu0
  %v2308 = vpop.f32.mrb[0].mxu0
  %v2309 = vadd.f32 %v1821, %v2308
  %v2310 = vpop.f32.mrb[0].mxu0
  %2311 = vmatprep.mubr.bf16.mxu0 0
  %2312 = vmatmul.mubr.bf16.gmra.mrb[0].mxu0 %v1778
  %v2313 = vpop.f32.mrb[0].mxu0
  %v2314 = vadd.f32 %v1821, %v2313
  %v2315 = vpop.f32.mrb[0].mxu0
  %v2316 = vpop.f32.mrb[0].mxu0
  %v2317 = vadd.f32 %v1821, %v2316
  %v2318 = vpop.f32.mrb[0].mxu0
  %2319 = vmatprep.mubr.bf16.mxu0 0
  %2320 = vmatmul.mubr.bf16.gmra.mrb[0].mxu0 %v1779
  %v2321 = vpop.f32.mrb[0].mxu0
  %v2322 = vadd.f32 %v1821, %v2321
  %v2323 = vpop.f32.mrb[0].mxu0
  %v2324 = vpop.f32.mrb[0].mxu0
  %v2325 = vadd.f32 %v1821, %v2324
  %v2326 = vpop.f32.mrb[0].mxu0
  %2327 = vmatprep.mubr.bf16.mxu0 0
  %2328 = vmatmul.mubr.bf16.gmra.mrb[0].mxu0 %v1780
  %v2329 = vpop.f32.mrb[0].mxu0
  %v2330 = vadd.f32 %v1821, %v2329
  %v2331 = vpop.f32.mrb[0].mxu0
  %v2332 = vpop.f32.mrb[0].mxu0
  %v2333 = vadd.f32 %v1821, %v2332
  %v2334 = vpop.f32.mrb[0].mxu0
  %2335 = vmatprep.mubr.bf16.mxu0 0
  %2336 = vmatmul.mubr.bf16.gmra.mrb[0].mxu0 %v1781
  %v2337 = vpop.f32.mrb[0].mxu0
  %v2338 = vadd.f32 %v1821, %v2337
  %v2339 = vpop.f32.mrb[0].mxu0
  %v2340 = vpop.f32.mrb[0].mxu0
  %v2341 = vadd.f32 %v1821, %v2340
  %v2342 = vpop.f32.mrb[0].mxu0
  %2343 = vmatprep.mubr.bf16.mxu0 0
  %2344 = vmatmul.mubr.bf16.gmra.mrb[0].mxu0 %v1782
  %v2345 = vpop.f32.mrb[0].mxu0
  %v2346 = vadd.f32 %v1821, %v2345
  %v2347 = vpop.f32.mrb[0].mxu0
  %v2348 = vpop.f32.mrb[0].mxu0
  %v2349 = vadd.f32 %v1821, %v2348
  %v2350 = vpop.f32.mrb[0].mxu0
  %2351 = vmatprep.mubr.bf16.mxu0 0
  %2352 = vmatmul.mubr.bf16.gmra.mrb[0].mxu0 %v1783
  %v2353 = vpop.f32.mrb[0].mxu0
  %v2354 = vadd.f32 %v1821, %v2353
  %v2355 = vpop.f32.mrb[0].mxu0
  %v2356 = vpop.f32.mrb[0].mxu0
  %v2357 = vadd.f32 %v1821, %v2356
  %v2358 = vpop.f32.mrb[0].mxu0
  %2359 = vmatprep.mubr.bf16.mxu0 0
  %2360 = vmatmul.mubr.bf16.gmra.mrb[0].mxu0 %v1784
  %v2361 = vpop.f32.mrb[0].mxu0
  %v2362 = vadd.f32 %v1821, %v2361
  %v2363 = vpop.f32.mrb[0].mxu0
  %v2364 = vpop.f32.mrb[0].mxu0
  %v2365 = vadd.f32 %v1821, %v2364
  %v2366 = vpop.f32.mrb[0].mxu0
  %2367 = vmatprep.mubr.bf16.mxu0 0
  %2368 = vmatmul.mubr.bf16.gmra.mrb[0].mxu0 %v1785
  %v2369 = vpop.f32.mrb[0].mxu0
  %v2370 = vadd.f32 %v1821, %v2369
  %v2371 = vpop.f32.mrb[0].mxu0
  %v2372 = vpop.f32.mrb[0].mxu0
  %v2373 = vadd.f32 %v1821, %v2372
  %v2374 = vpop.f32.mrb[0].mxu0
  %2375 = vmatprep.mubr.bf16.mxu0 0
  %2376 = vmatmul.mubr.bf16.gmra.mrb[0].mxu0 %v1786
  %v2377 = vpop.f32.mrb[0].mxu0
  %v2378 = vadd.f32 %v1821, %v2377
  %v2379 = vpop.f32.mrb[0].mxu0
  %v2380 = vpop.f32.mrb[0].mxu0
  %v2381 = vadd.f32 %v1821, %v2380
  %v2382 = vpop.f32.mrb[0].mxu0
  %2383 = vmatprep.mubr.bf16.mxu0 0
  %2384 = vmatmul.mubr.bf16.gmra.mrb[0].mxu0 %v1787
  %v2385 = vpop.f32.mrb[0].mxu0
  %v2386 = vadd.f32 %v1821, %v2385
  %v2387 = vpop.f32.mrb[0].mxu0
  %v2388 = vpop.f32.mrb[0].mxu0
  %v2389 = vadd.f32 %v1821, %v2388
  %v2390 = vpop.f32.mrb[0].mxu0
  %2391 = vmatprep.mubr.bf16.mxu0 0
  %2392 = vmatmul.mubr.bf16.gmra.mrb[0].mxu0 %v1788
  %v2393 = vpop.f32.mrb[0].mxu0
  %v2394 = vadd.f32 %v1821, %v2393
  %v2395 = vpop.f32.mrb[0].mxu0
  %v2396 = vpop.f32.mrb[0].mxu0
  %v2397 = vadd.f32 %v1821, %v2396
  %v2398 = vpop.f32.mrb[0].mxu0
  %2399 = vmatprep.mubr.bf16.mxu0 0
  %2400 = vmatmul.mubr.bf16.gmra.mrb[0].mxu0 %v1789
  %v2401 = vpop.f32.mrb[0].mxu0
  %v2402 = vadd.f32 %v1821, %v2401
  %v2403 = vpop.f32.mrb[0].mxu0
  %v2404 = vpop.f32.mrb[0].mxu0
  %v2405 = vadd.f32 %v1821, %v2404
  %v2406 = vpop.f32.mrb[0].mxu0
  %2407 = vmatprep.mubr.bf16.mxu0 0
  %2408 = vmatmul.mubr.bf16.gmra.mrb[0].mxu0 %v1790
  %v2409 = vpop.f32.mrb[0].mxu0
  %v2410 = vadd.f32 %v1821, %v2409
  %v2411 = vpop.f32.mrb[0].mxu0
  %v2412 = vpop.f32.mrb[0].mxu0
  %v2413 = vadd.f32 %v1821, %v2412
  %v2414 = vpop.f32.mrb[0].mxu0
  %2415 = vmatprep.mubr.bf16.mxu0 0
  %2416 = vmatmul.mubr.bf16.gmra.mrb[0].mxu0 %v1791
  %v2417 = vpop.f32.mrb[0].mxu0
  %v2418 = vadd.f32 %v1821, %v2417
  %v2419 = vpop.f32.mrb[0].mxu0
  %v2420 = vpop.f32.mrb[0].mxu0
  %v2421 = vadd.f32 %v1821, %v2420
  %v2422 = vpop.f32.mrb[0].mxu0
  %2423 = vmatprep.mubr.bf16.mxu0 0
  %2424 = vmatmul.mubr.bf16.gmra.mrb[0].mxu0 %v1792
  %v2425 = vpop.f32.mrb[0].mxu0
  %v2426 = vadd.f32 %v1821, %v2425
  %v2427 = vpop.f32.mrb[0].mxu0
  %v2428 = vpop.f32.mrb[0].mxu0
  %v2429 = vadd.f32 %v1821, %v2428
  %v2430 = vpop.f32.mrb[0].mxu0
  %2431 = vmatprep.mubr.bf16.mxu0 0
  %2432 = vmatmul.mubr.bf16.gmra.mrb[0].mxu0 %v1793
  %v2433 = vpop.f32.mrb[0].mxu0
  %v2434 = vadd.f32 %v1821, %v2433
  %v2435 = vpop.f32.mrb[0].mxu0
  %v2436 = vpop.f32.mrb[0].mxu0
  %v2437 = vadd.f32 %v1821, %v2436
  %v2438 = vpop.f32.mrb[0].mxu0
  %2439 = vmatprep.mubr.bf16.mxu0 0
  %2440 = vmatmul.mubr.bf16.gmra.mrb[0].mxu0 %v1794
  %v2441 = vpop.f32.mrb[0].mxu0
  %v2442 = vadd.f32 %v1821, %v2441
  %v2443 = vpop.f32.mrb[0].mxu0
  %v2444 = vpop.f32.mrb[0].mxu0
  %v2445 = vadd.f32 %v1821, %v2444
  %v2446 = vpop.f32.mrb[0].mxu0
  %2447 = vmatprep.mubr.bf16.mxu0 0
  %2448 = vmatmul.mubr.bf16.gmra.mrb[0].mxu0 %v1795
  %v2449 = vpop.f32.mrb[0].mxu0
  %v2450 = vadd.f32 %v1821, %v2449
  %v2451 = vpop.f32.mrb[0].mxu0
  %v2452 = vpop.f32.mrb[0].mxu0
  %v2453 = vadd.f32 %v1821, %v2452
  %v2454 = vpop.f32.mrb[0].mxu0
  %2455 = vmatprep.mubr.bf16.mxu0 0
  %2456 = vmatmul.mubr.bf16.gmra.mrb[0].mxu0 %v1796
  %v2457 = vpop.f32.mrb[0].mxu0
  %v2458 = vadd.f32 %v1821, %v2457
  %v2459 = vpop.f32.mrb[0].mxu0
  %v2460 = vpop.f32.mrb[0].mxu0
  %v2461 = vadd.f32 %v1821, %v2460
  %v2462 = vpop.f32.mrb[0].mxu0
  %2463 = vmatprep.mubr.bf16.mxu0 0
  %2464 = vmatmul.mubr.bf16.gmra.mrb[0].mxu0 %v1797
  %v2465 = vpop.f32.mrb[0].mxu0
  %v2466 = vadd.f32 %v1821, %v2465
  %v2467 = vpop.f32.mrb[0].mxu0
  %v2468 = vpop.f32.mrb[0].mxu0
  %v2469 = vadd.f32 %v1821, %v2468
  %v2470 = vpop.f32.mrb[0].mxu0
  %2471 = vmatprep.mubr.bf16.mxu0 0
  %2472 = vmatmul.mubr.bf16.gmra.mrb[0].mxu0 %v1798
  %v2473 = vpop.f32.mrb[0].mxu0
  %v2474 = vadd.f32 %v1821, %v2473
  %v2475 = vpop.f32.mrb[0].mxu0
  %v2476 = vpop.f32.mrb[0].mxu0
  %v2477 = vadd.f32 %v1821, %v2476
  %v2478 = vpop.f32.mrb[0].mxu0
  %2479 = vmatprep.mubr.bf16.mxu0 0
  %2480 = vmatmul.mubr.bf16.gmra.mrb[0].mxu0 %v1799
  %v2481 = vpop.f32.mrb[0].mxu0
  %v2482 = vadd.f32 %v1821, %v2481
  %v2483 = vpop.f32.mrb[0].mxu0
  %v2484 = vpop.f32.mrb[0].mxu0
  %v2485 = vpop.f32.mrb[0].mxu0
  %2486 = vdwg.mxu0
  %vm2487 = vcmp.ge.f32.partialorder %v1906, 0.0
  %vm2488 = vcmp.ge.f32.partialorder %v1909, 0.0
  %vm2489 = vcmp.ge.f32.partialorder %v1914, 0.0
  %vm2490 = vcmp.ge.f32.partialorder %v1917, 0.0
  %vm2491 = vcmp.ge.f32.partialorder %v1922, 0.0
  %vm2492 = vcmp.ge.f32.partialorder %v1925, 0.0
  %vm2493 = vcmp.ge.f32.partialorder %v1930, 0.0
  %vm2494 = vcmp.ge.f32.partialorder %v1933, 0.0
  %vm2495 = vcmp.ge.f32.partialorder %v1938, 0.0
  %vm2496 = vcmp.ge.f32.partialorder %v1941, 0.0
  %vm2497 = vcmp.ge.f32.partialorder %v1946, 0.0
  %vm2498 = vcmp.ge.f32.partialorder %v1949, 0.0
  %vm2499 = vcmp.ge.f32.partialorder %v1954, 0.0
  %vm2500 = vcmp.ge.f32.partialorder %v1957, 0.0
  %vm2501 = vcmp.ge.f32.partialorder %v1962, 0.0
  %vm2502 = vcmp.ge.f32.partialorder %v1965, 0.0
  %vm2503 = vcmp.ge.f32.partialorder %v1970, 0.0
  %vm2504 = vcmp.ge.f32.partialorder %v1973, 0.0
  %vm2505 = vcmp.ge.f32.partialorder %v1978, 0.0
  %vm2506 = vcmp.ge.f32.partialorder %v1981, 0.0
  %vm2507 = vcmp.ge.f32.partialorder %v1986, 0.0
  %vm2508 = vcmp.ge.f32.partialorder %v1989, 0.0
  %vm2509 = vcmp.ge.f32.partialorder %v1994, 0.0
  %vm2510 = vcmp.ge.f32.partialorder %v1997, 0.0
  %vm2511 = vcmp.ge.f32.partialorder %v2002, 0.0
  %vm2512 = vcmp.ge.f32.partialorder %v2005, 0.0
  %vm2513 = vcmp.ge.f32.partialorder %v2010, 0.0
  %vm2514 = vcmp.ge.f32.partialorder %v2013, 0.0
  %vm2515 = vcmp.ge.f32.partialorder %v2018, 0.0
  %vm2516 = vcmp.ge.f32.partialorder %v2021, 0.0
  %vm2517 = vcmp.ge.f32.partialorder %v2026, 0.0
  %vm2518 = vcmp.ge.f32.partialorder %v2029, 0.0
  %vm2519 = vcmp.ge.f32.partialorder %v2034, 0.0
  %vm2520 = vcmp.ge.f32.partialorder %v2037, 0.0
  %vm2521 = vcmp.ge.f32.partialorder %v2042, 0.0
  %vm2522 = vcmp.ge.f32.partialorder %v2045, 0.0
  %vm2523 = vcmp.ge.f32.partialorder %v2050, 0.0
  %vm2524 = vcmp.ge.f32.partialorder %v2053, 0.0
  %vm2525 = vcmp.ge.f32.partialorder %v2058, 0.0
  %vm2526 = vcmp.ge.f32.partialorder %v2061, 0.0
  %vm2527 = vcmp.ge.f32.partialorder %v2066, 0.0
  %vm2528 = vcmp.ge.f32.partialorder %v2069, 0.0
  %vm2529 = vcmp.ge.f32.partialorder %v2074, 0.0
  %vm2530 = vcmp.ge.f32.partialorder %v2077, 0.0
  %vm2531 = vcmp.ge.f32.partialorder %v2082, 0.0
  %vm2532 = vcmp.ge.f32.partialorder %v2085, 0.0
  %vm2533 = vcmp.ge.f32.partialorder %v2090, 0.0
  %vm2534 = vcmp.ge.f32.partialorder %v2093, 0.0
  %vm2535 = vcmp.ge.f32.partialorder %v2098, 0.0
  %vm2536 = vcmp.ge.f32.partialorder %v2101, 0.0
  %vm2537 = vcmp.ge.f32.partialorder %v2106, 0.0
  %vm2538 = vcmp.ge.f32.partialorder %v2109, 0.0
  %vm2539 = vcmp.ge.f32.partialorder %v2114, 0.0
  %vm2540 = vcmp.ge.f32.partialorder %v2117, 0.0
  %vm2541 = vcmp.ge.f32.partialorder %v2122, 0.0
  %vm2542 = vcmp.ge.f32.partialorder %v2125, 0.0
  %vm2543 = vcmp.ge.f32.partialorder %v2130, 0.0
  %vm2544 = vcmp.ge.f32.partialorder %v2133, 0.0
  %vm2545 = vcmp.ge.f32.partialorder %v2138, 0.0
  %vm2546 = vcmp.ge.f32.partialorder %v2141, 0.0
  %vm2547 = vcmp.ge.f32.partialorder %v2146, 0.0
  %vm2548 = vcmp.ge.f32.partialorder %v2149, 0.0
  %vm2549 = vcmp.ge.f32.partialorder %v2154, 0.0
  %vm2550 = vcmp.ge.f32.partialorder %v2157, 0.0
  %vm2551 = vcmp.ge.f32.partialorder %v2162, 0.0
  %vm2552 = vcmp.ge.f32.partialorder %v2165, 0.0
  %vm2553 = vcmp.ge.f32.partialorder %v2170, 0.0
  %vm2554 = vcmp.ge.f32.partialorder %v2173, 0.0
  %vm2555 = vcmp.ge.f32.partialorder %v2178, 0.0
  %vm2556 = vcmp.ge.f32.partialorder %v2181, 0.0
  %vm2557 = vcmp.ge.f32.partialorder %v2186, 0.0
  %vm2558 = vcmp.ge.f32.partialorder %v2189, 0.0
  %vm2559 = vcmp.ge.f32.partialorder %v2194, 0.0
  %vm2560 = vcmp.ge.f32.partialorder %v2197, 0.0
  %vm2561 = vcmp.ge.f32.partialorder %v2202, 0.0
  %vm2562 = vcmp.ge.f32.partialorder %v2205, 0.0
  %vm2563 = vcmp.ge.f32.partialorder %v2210, 0.0
  %vm2564 = vcmp.ge.f32.partialorder %v2213, 0.0
  %vm2565 = vcmp.ge.f32.partialorder %v2218, 0.0
  %vm2566 = vcmp.ge.f32.partialorder %v2221, 0.0
  %vm2567 = vcmp.ge.f32.partialorder %v2226, 0.0
  %vm2568 = vcmp.ge.f32.partialorder %v2229, 0.0
  %vm2569 = vcmp.ge.f32.partialorder %v2234, 0.0
  %vm2570 = vcmp.ge.f32.partialorder %v2237, 0.0
  %vm2571 = vcmp.ge.f32.partialorder %v2242, 0.0
  %vm2572 = vcmp.ge.f32.partialorder %v2245, 0.0
  %vm2573 = vcmp.ge.f32.partialorder %v2250, 0.0
  %vm2574 = vcmp.ge.f32.partialorder %v2253, 0.0
  %vm2575 = vcmp.ge.f32.partialorder %v2258, 0.0
  %vm2576 = vcmp.ge.f32.partialorder %v2261, 0.0
  %vm2577 = vcmp.ge.f32.partialorder %v2266, 0.0
  %vm2578 = vcmp.ge.f32.partialorder %v2269, 0.0
  %vm2579 = vcmp.ge.f32.partialorder %v2274, 0.0
  %vm2580 = vcmp.ge.f32.partialorder %v2277, 0.0
  %vm2581 = vcmp.ge.f32.partialorder %v2282, 0.0
  %vm2582 = vcmp.ge.f32.partialorder %v2285, 0.0
  %vm2583 = vcmp.ge.f32.partialorder %v2290, 0.0
  %vm2584 = vcmp.ge.f32.partialorder %v2293, 0.0
  %vm2585 = vcmp.ge.f32.partialorder %v2298, 0.0
  %vm2586 = vcmp.ge.f32.partialorder %v2301, 0.0
  %vm2587 = vcmp.ge.f32.partialorder %v2306, 0.0
  %vm2588 = vcmp.ge.f32.partialorder %v2309, 0.0
  %vm2589 = vcmp.ge.f32.partialorder %v2314, 0.0
  %vm2590 = vcmp.ge.f32.partialorder %v2317, 0.0
  %vm2591 = vcmp.ge.f32.partialorder %v2322, 0.0
  %vm2592 = vcmp.ge.f32.partialorder %v2325, 0.0
  %vm2593 = vcmp.ge.f32.partialorder %v2330, 0.0
  %vm2594 = vcmp.ge.f32.partialorder %v2333, 0.0
  %vm2595 = vcmp.ge.f32.partialorder %v2338, 0.0
  %vm2596 = vcmp.ge.f32.partialorder %v2341, 0.0
  %vm2597 = vcmp.ge.f32.partialorder %v2346, 0.0
  %vm2598 = vcmp.ge.f32.partialorder %v2349, 0.0
  %vm2599 = vcmp.ge.f32.partialorder %v2354, 0.0
  %vm2600 = vcmp.ge.f32.partialorder %v2357, 0.0
  %vm2601 = vcmp.ge.f32.partialorder %v2362, 0.0
  %vm2602 = vcmp.ge.f32.partialorder %v2365, 0.0
  %vm2603 = vcmp.ge.f32.partialorder %v2370, 0.0
  %vm2604 = vcmp.ge.f32.partialorder %v2373, 0.0
  %vm2605 = vcmp.ge.f32.partialorder %v2378, 0.0
  %vm2606 = vcmp.ge.f32.partialorder %v2381, 0.0
  %vm2607 = vcmp.ge.f32.partialorder %v2386, 0.0
  %vm2608 = vcmp.ge.f32.partialorder %v2389, 0.0
  %vm2609 = vcmp.ge.f32.partialorder %v2394, 0.0
  %vm2610 = vcmp.ge.f32.partialorder %v2397, 0.0
  %vm2611 = vcmp.ge.f32.partialorder %v2402, 0.0
  %vm2612 = vcmp.ge.f32.partialorder %v2405, 0.0
  %vm2613 = vcmp.ge.f32.partialorder %v2410, 0.0
  %vm2614 = vcmp.ge.f32.partialorder %v2413, 0.0
  %vm2615 = vcmp.ge.f32.partialorder %v2418, 0.0
  %vm2616 = vcmp.ge.f32.partialorder %v2421, 0.0
  %vm2617 = vcmp.ge.f32.partialorder %v2426, 0.0
  %vm2618 = vcmp.ge.f32.partialorder %v2429, 0.0
  %vm2619 = vcmp.ge.f32.partialorder %v2434, 0.0
  %vm2620 = vcmp.ge.f32.partialorder %v2437, 0.0
  %vm2621 = vcmp.ge.f32.partialorder %v2442, 0.0
  %vm2622 = vcmp.ge.f32.partialorder %v2445, 0.0
  %vm2623 = vcmp.ge.f32.partialorder %v2450, 0.0
  %vm2624 = vcmp.ge.f32.partialorder %v2453, 0.0
  %vm2625 = vcmp.ge.f32.partialorder %v2458, 0.0
  %vm2626 = vcmp.ge.f32.partialorder %v2461, 0.0
  %vm2627 = vcmp.ge.f32.partialorder %v2466, 0.0
  %vm2628 = vcmp.ge.f32.partialorder %v2469, 0.0
  %vm2629 = vcmp.ge.f32.partialorder %v2474, 0.0
  %vm2630 = vcmp.ge.f32.partialorder %v2477, 0.0
  %vm2631 = vcmp.ge.f32.partialorder %v2482, 0.0
  %v2632 = vmul.f32 %v1906, 0.1
  %v2633 = vmul.f32 %v1909, 0.1
  %v2634 = vmul.f32 %v1914, 0.1
  %v2635 = vmul.f32 %v1917, 0.1
  %v2636 = vmul.f32 %v1922, 0.1
  %v2637 = vmul.f32 %v1925, 0.1
  %v2638 = vmul.f32 %v1930, 0.1
  %v2639 = vmul.f32 %v1933, 0.1
  %v2640 = vmul.f32 %v1938, 0.1
  %v2641 = vmul.f32 %v1941, 0.1
  %v2642 = vmul.f32 %v1946, 0.1
  %v2643 = vmul.f32 %v1949, 0.1
  %v2644 = vmul.f32 %v1954, 0.1
  %v2645 = vmul.f32 %v1957, 0.1
  %v2646 = vmul.f32 %v1962, 0.1
  %v2647 = vmul.f32 %v1965, 0.1
  %v2648 = vmul.f32 %v1970, 0.1
  %v2649 = vmul.f32 %v1973, 0.1
  %v2650 = vmul.f32 %v1978, 0.1
  %v2651 = vmul.f32 %v1981, 0.1
  %v2652 = vmul.f32 %v1986, 0.1
  %v2653 = vmul.f32 %v1989, 0.1
  %v2654 = vmul.f32 %v1994, 0.1
  %v2655 = vmul.f32 %v1997, 0.1
  %v2656 = vmul.f32 %v2002, 0.1
  %v2657 = vmul.f32 %v2005, 0.1
  %v2658 = vmul.f32 %v2010, 0.1
  %v2659 = vmul.f32 %v2013, 0.1
  %v2660 = vmul.f32 %v2018, 0.1
  %v2661 = vmul.f32 %v2021, 0.1
  %v2662 = vmul.f32 %v2026, 0.1
  %v2663 = vmul.f32 %v2029, 0.1
  %v2664 = vmul.f32 %v2034, 0.1
  %v2665 = vmul.f32 %v2037, 0.1
  %v2666 = vmul.f32 %v2042, 0.1
  %v2667 = vmul.f32 %v2045, 0.1
  %v2668 = vmul.f32 %v2050, 0.1
  %v2669 = vmul.f32 %v2053, 0.1
  %v2670 = vmul.f32 %v2058, 0.1
  %v2671 = vmul.f32 %v2061, 0.1
  %v2672 = vmul.f32 %v2066, 0.1
  %v2673 = vmul.f32 %v2069, 0.1
  %v2674 = vmul.f32 %v2074, 0.1
  %v2675 = vmul.f32 %v2077, 0.1
  %v2676 = vmul.f32 %v2082, 0.1
  %v2677 = vmul.f32 %v2085, 0.1
  %v2678 = vmul.f32 %v2090, 0.1
  %v2679 = vmul.f32 %v2093, 0.1
  %v2680 = vmul.f32 %v2098, 0.1
  %v2681 = vmul.f32 %v2101, 0.1
  %v2682 = vmul.f32 %v2106, 0.1
  %v2683 = vmul.f32 %v2109, 0.1
  %v2684 = vmul.f32 %v2114, 0.1
  %v2685 = vmul.f32 %v2117, 0.1
  %v2686 = vmul.f32 %v2122, 0.1
  %v2687 = vmul.f32 %v2125, 0.1
  %v2688 = vmul.f32 %v2130, 0.1
  %v2689 = vmul.f32 %v2133, 0.1
  %v2690 = vmul.f32 %v2138, 0.1
  %v2691 = vmul.f32 %v2141, 0.1
  %v2692 = vmul.f32 %v2146, 0.1
  %v2693 = vmul.f32 %v2149, 0.1
  %v2694 = vmul.f32 %v2154, 0.1
  %v2695 = vmul.f32 %v2157, 0.1
  %v2696 = vmul.f32 %v2162, 0.1
  %v2697 = vmul.f32 %v2165, 0.1
  %v2698 = vmul.f32 %v2170, 0.1
  %v2699 = vmul.f32 %v2173, 0.1
  %v2700 = vmul.f32 %v2178, 0.1
  %v2701 = vmul.f32 %v2181, 0.1
  %v2702 = vmul.f32 %v2186, 0.1
  %v2703 = vmul.f32 %v2189, 0.1
  %v2704 = vmul.f32 %v2194, 0.1
  %v2705 = vmul.f32 %v2197, 0.1
  %v2706 = vmul.f32 %v2202, 0.1
  %v2707 = vmul.f32 %v2205, 0.1
  %v2708 = vmul.f32 %v2210, 0.1
  %v2709 = vmul.f32 %v2213, 0.1
  %v2710 = vmul.f32 %v2218, 0.1
  %v2711 = vmul.f32 %v2221, 0.1
  %v2712 = vmul.f32 %v2226, 0.1
  %v2713 = vmul.f32 %v2229, 0.1
  %v2714 = vmul.f32 %v2234, 0.1
  %v2715 = vmul.f32 %v2237, 0.1
  %v2716 = vmul.f32 %v2242, 0.1
  %v2717 = vmul.f32 %v2245, 0.1
  %v2718 = vmul.f32 %v2250, 0.1
  %v2719 = vmul.f32 %v2253, 0.1
  %v2720 = vmul.f32 %v2258, 0.1
  %v2721 = vmul.f32 %v2261, 0.1
  %v2722 = vmul.f32 %v2266, 0.1
  %v2723 = vmul.f32 %v2269, 0.1
  %v2724 = vmul.f32 %v2274, 0.1
  %v2725 = vmul.f32 %v2277, 0.1
  %v2726 = vmul.f32 %v2282, 0.1
  %v2727 = vmul.f32 %v2285, 0.1
  %v2728 = vmul.f32 %v2290, 0.1
  %v2729 = vmul.f32 %v2293, 0.1
  %v2730 = vmul.f32 %v2298, 0.1
  %v2731 = vmul.f32 %v2301, 0.1
  %v2732 = vmul.f32 %v2306, 0.1
  %v2733 = vmul.f32 %v2309, 0.1
  %v2734 = vmul.f32 %v2314, 0.1
  %v2735 = vmul.f32 %v2317, 0.1
  %v2736 = vmul.f32 %v2322, 0.1
  %v2737 = vmul.f32 %v2325, 0.1
  %v2738 = vmul.f32 %v2330, 0.1
  %v2739 = vmul.f32 %v2333, 0.1
  %v2740 = vmul.f32 %v2338, 0.1
  %v2741 = vmul.f32 %v2341, 0.1
  %v2742 = vmul.f32 %v2346, 0.1
  %v2743 = vmul.f32 %v2349, 0.1
  %v2744 = vmul.f32 %v2354, 0.1
  %v2745 = vmul.f32 %v2357, 0.1
  %v2746 = vmul.f32 %v2362, 0.1
  %v2747 = vmul.f32 %v2365, 0.1
  %v2748 = vmul.f32 %v2370, 0.1
  %v2749 = vmul.f32 %v2373, 0.1
  %v2750 = vmul.f32 %v2378, 0.1
  %v2751 = vmul.f32 %v2381, 0.1
  %v2752 = vmul.f32 %v2386, 0.1
  %v2753 = vmul.f32 %v2389, 0.1
  %v2754 = vmul.f32 %v2394, 0.1
  %v2755 = vmul.f32 %v2397, 0.1
  %v2756 = vmul.f32 %v2402, 0.1
  %v2757 = vmul.f32 %v2405, 0.1
  %v2758 = vmul.f32 %v2410, 0.1
  %v2759 = vmul.f32 %v2413, 0.1
  %v2760 = vmul.f32 %v2418, 0.1
  %v2761 = vmul.f32 %v2421, 0.1
  %v2762 = vmul.f32 %v2426, 0.1
  %v2763 = vmul.f32 %v2429, 0.1
  %v2764 = vmul.f32 %v2434, 0.1
  %v2765 = vmul.f32 %v2437, 0.1
  %v2766 = vmul.f32 %v2442, 0.1
  %v2767 = vmul.f32 %v2445, 0.1
  %v2768 = vmul.f32 %v2450, 0.1
  %v2769 = vmul.f32 %v2453, 0.1
  %v2770 = vmul.f32 %v2458, 0.1
  %v2771 = vmul.f32 %v2461, 0.1
  %v2772 = vmul.f32 %v2466, 0.1
  %v2773 = vmul.f32 %v2469, 0.1
  %v2774 = vmul.f32 %v2474, 0.1
  %v2775 = vmul.f32 %v2477, 0.1
  %v2776 = vmul.f32 %v2482, 0.1
  %v2777 = vsel %vm2487, %v1906, %v2632
  %v2778 = vsel %vm2488, %v1909, %v2633
  %v2779 = vsel %vm2489, %v1914, %v2634
  %v2780 = vsel %vm2490, %v1917, %v2635
  %v2781 = vsel %vm2491, %v1922, %v2636
  %v2782 = vsel %vm2492, %v1925, %v2637
  %v2783 = vsel %vm2493, %v1930, %v2638
  %v2784 = vsel %vm2494, %v1933, %v2639
  %v2785 = vsel %vm2495, %v1938, %v2640
  %v2786 = vsel %vm2496, %v1941, %v2641
  %v2787 = vsel %vm2497, %v1946, %v2642
  %v2788 = vsel %vm2498, %v1949, %v2643
  %v2789 = vsel %vm2499, %v1954, %v2644
  %v2790 = vsel %vm2500, %v1957, %v2645
  %v2791 = vsel %vm2501, %v1962, %v2646
  %v2792 = vsel %vm2502, %v1965, %v2647
  %v2793 = vsel %vm2503, %v1970, %v2648
  %v2794 = vsel %vm2504, %v1973, %v2649
  %v2795 = vsel %vm2505, %v1978, %v2650
  %v2796 = vsel %vm2506, %v1981, %v2651
  %v2797 = vsel %vm2507, %v1986, %v2652
  %v2798 = vsel %vm2508, %v1989, %v2653
  %v2799 = vsel %vm2509, %v1994, %v2654
  %v2800 = vsel %vm2510, %v1997, %v2655
  %v2801 = vsel %vm2511, %v2002, %v2656
  %v2802 = vsel %vm2512, %v2005, %v2657
  %v2803 = vsel %vm2513, %v2010, %v2658
  %v2804 = vsel %vm2514, %v2013, %v2659
  %v2805 = vsel %vm2515, %v2018, %v2660
  %v2806 = vsel %vm2516, %v2021, %v2661
  %v2807 = vsel %vm2517, %v2026, %v2662
  %v2808 = vsel %vm2518, %v2029, %v2663
  %v2809 = vsel %vm2519, %v2034, %v2664
  %v2810 = vsel %vm2520, %v2037, %v2665
  %v2811 = vsel %vm2521, %v2042, %v2666
  %v2812 = vsel %vm2522, %v2045, %v2667
  %v2813 = vsel %vm2523, %v2050, %v2668
  %v2814 = vsel %vm2524, %v2053, %v2669
  %v2815 = vsel %vm2525, %v2058, %v2670
  %v2816 = vsel %vm2526, %v2061, %v2671
  %v2817 = vsel %vm2527, %v2066, %v2672
  %v2818 = vsel %vm2528, %v2069, %v2673
  %v2819 = vsel %vm2529, %v2074, %v2674
  %v2820 = vsel %vm2530, %v2077, %v2675
  %v2821 = vsel %vm2531, %v2082, %v2676
  %v2822 = vsel %vm2532, %v2085, %v2677
  %v2823 = vsel %vm2533, %v2090, %v2678
  %v2824 = vsel %vm2534, %v2093, %v2679
  %v2825 = vsel %vm2535, %v2098, %v2680
  %v2826 = vsel %vm2536, %v2101, %v2681
  %v2827 = vsel %vm2537, %v2106, %v2682
  %v2828 = vsel %vm2538, %v2109, %v2683
  %v2829 = vsel %vm2539, %v2114, %v2684
  %v2830 = vsel %vm2540, %v2117, %v2685
  %v2831 = vsel %vm2541, %v2122, %v2686
  %v2832 = vsel %vm2542, %v2125, %v2687
  %v2833 = vsel %vm2543, %v2130, %v2688
  %v2834 = vsel %vm2544, %v2133, %v2689
  %v2835 = vsel %vm2545, %v2138, %v2690
  %v2836 = vsel %vm2546, %v2141, %v2691
  %v2837 = vsel %vm2547, %v2146, %v2692
  %v2838 = vsel %vm2548, %v2149, %v2693
  %v2839 = vsel %vm2549, %v2154, %v2694
  %v2840 = vsel %vm2550, %v2157, %v2695
  %v2841 = vsel %vm2551, %v2162, %v2696
  %v2842 = vsel %vm2552, %v2165, %v2697
  %v2843 = vsel %vm2553, %v2170, %v2698
  %v2844 = vsel %vm2554, %v2173, %v2699
  %v2845 = vsel %vm2555, %v2178, %v2700
  %v2846 = vsel %vm2556, %v2181, %v2701
  %v2847 = vsel %vm2557, %v2186, %v2702
  %v2848 = vsel %vm2558, %v2189, %v2703
  %v2849 = vsel %vm2559, %v2194, %v2704
  %v2850 = vsel %vm2560, %v2197, %v2705
  %v2851 = vsel %vm2561, %v2202, %v2706
  %v2852 = vsel %vm2562, %v2205, %v2707
  %v2853 = vsel %vm2563, %v2210, %v2708
  %v2854 = vsel %vm2564, %v2213, %v2709
  %v2855 = vsel %vm2565, %v2218, %v2710
  %v2856 = vsel %vm2566, %v2221, %v2711
  %v2857 = vsel %vm2567, %v2226, %v2712
  %v2858 = vsel %vm2568, %v2229, %v2713
  %v2859 = vsel %vm2569, %v2234, %v2714
  %v2860 = vsel %vm2570, %v2237, %v2715
  %v2861 = vsel %vm2571, %v2242, %v2716
  %v2862 = vsel %vm2572, %v2245, %v2717
  %v2863 = vsel %vm2573, %v2250, %v2718
  %v2864 = vsel %vm2574, %v2253, %v2719
  %v2865 = vsel %vm2575, %v2258, %v2720
  %v2866 = vsel %vm2576, %v2261, %v2721
  %v2867 = vsel %vm2577, %v2266, %v2722
  %v2868 = vsel %vm2578, %v2269, %v2723
  %v2869 = vsel %vm2579, %v2274, %v2724
  %v2870 = vsel %vm2580, %v2277, %v2725
  %v2871 = vsel %vm2581, %v2282, %v2726
  %v2872 = vsel %vm2582, %v2285, %v2727
  %v2873 = vsel %vm2583, %v2290, %v2728
  %v2874 = vsel %vm2584, %v2293, %v2729
  %v2875 = vsel %vm2585, %v2298, %v2730
  %v2876 = vsel %vm2586, %v2301, %v2731
  %v2877 = vsel %vm2587, %v2306, %v2732
  %v2878 = vsel %vm2588, %v2309, %v2733
  %v2879 = vsel %vm2589, %v2314, %v2734
  %v2880 = vsel %vm2590, %v2317, %v2735
  %v2881 = vsel %vm2591, %v2322, %v2736
  %v2882 = vsel %vm2592, %v2325, %v2737
  %v2883 = vsel %vm2593, %v2330, %v2738
  %v2884 = vsel %vm2594, %v2333, %v2739
  %v2885 = vsel %vm2595, %v2338, %v2740
  %v2886 = vsel %vm2596, %v2341, %v2741
  %v2887 = vsel %vm2597, %v2346, %v2742
  %v2888 = vsel %vm2598, %v2349, %v2743
  %v2889 = vsel %vm2599, %v2354, %v2744
  %v2890 = vsel %vm2600, %v2357, %v2745
  %v2891 = vsel %vm2601, %v2362, %v2746
  %v2892 = vsel %vm2602, %v2365, %v2747
  %v2893 = vsel %vm2603, %v2370, %v2748
  %v2894 = vsel %vm2604, %v2373, %v2749
  %v2895 = vsel %vm2605, %v2378, %v2750
  %v2896 = vsel %vm2606, %v2381, %v2751
  %v2897 = vsel %vm2607, %v2386, %v2752
  %v2898 = vsel %vm2608, %v2389, %v2753
  %v2899 = vsel %vm2609, %v2394, %v2754
  %v2900 = vsel %vm2610, %v2397, %v2755
  %v2901 = vsel %vm2611, %v2402, %v2756
  %v2902 = vsel %vm2612, %v2405, %v2757
  %v2903 = vsel %vm2613, %v2410, %v2758
  %v2904 = vsel %vm2614, %v2413, %v2759
  %v2905 = vsel %vm2615, %v2418, %v2760
  %v2906 = vsel %vm2616, %v2421, %v2761
  %v2907 = vsel %vm2617, %v2426, %v2762
  %v2908 = vsel %vm2618, %v2429, %v2763
  %v2909 = vsel %vm2619, %v2434, %v2764
  %v2910 = vsel %vm2620, %v2437, %v2765
  %v2911 = vsel %vm2621, %v2442, %v2766
  %v2912 = vsel %vm2622, %v2445, %v2767
  %v2913 = vsel %vm2623, %v2450, %v2768
  %v2914 = vsel %vm2624, %v2453, %v2769
  %v2915 = vsel %vm2625, %v2458, %v2770
  %v2916 = vsel %vm2626, %v2461, %v2771
  %v2917 = vsel %vm2627, %v2466, %v2772
  %v2918 = vsel %vm2628, %v2469, %v2773
  %v2919 = vsel %vm2629, %v2474, %v2774
  %v2920 = vsel %vm2630, %v2477, %v2775
  %v2921 = vsel %vm2631, %v2482, %v2776
  %v2922 = vpack.c.bf16 %v2778, %v2777
  %v2923 = vpack.c.bf16 %v2780, %v2779
  %v2924 = vpack.c.bf16 %v2782, %v2781
  %v2925 = vpack.c.bf16 %v2784, %v2783
  %v2926 = vpack.c.bf16 %v2786, %v2785
  %v2927 = vpack.c.bf16 %v2788, %v2787
  %v2928 = vpack.c.bf16 %v2790, %v2789
  %v2929 = vpack.c.bf16 %v2792, %v2791
  %v2930 = vpack.c.bf16 %v2794, %v2793
  %v2931 = vpack.c.bf16 %v2796, %v2795
  %v2932 = vpack.c.bf16 %v2798, %v2797
  %v2933 = vpack.c.bf16 %v2800, %v2799
  %v2934 = vpack.c.bf16 %v2802, %v2801
  %v2935 = vpack.c.bf16 %v2804, %v2803
  %v2936 = vpack.c.bf16 %v2806, %v2805
  %v2937 = vpack.c.bf16 %v2808, %v2807
  %v2938 = vpack.c.bf16 %v2810, %v2809
  %v2939 = vpack.c.bf16 %v2812, %v2811
  %v2940 = vpack.c.bf16 %v2814, %v2813
  %v2941 = vpack.c.bf16 %v2816, %v2815
  %v2942 = vpack.c.bf16 %v2818, %v2817
  %v2943 = vpack.c.bf16 %v2820, %v2819
  %v2944 = vpack.c.bf16 %v2822, %v2821
  %v2945 = vpack.c.bf16 %v2824, %v2823
  %v2946 = vpack.c.bf16 %v2826, %v2825
  %v2947 = vpack.c.bf16 %v2828, %v2827
  %v2948 = vpack.c.bf16 %v2830, %v2829
  %v2949 = vpack.c.bf16 %v2832, %v2831
  %v2950 = vpack.c.bf16 %v2834, %v2833
  %v2951 = vpack.c.bf16 %v2836, %v2835
  %v2952 = vpack.c.bf16 %v2838, %v2837
  %v2953 = vpack.c.bf16 %v2840, %v2839
  %v2954 = vpack.c.bf16 %v2842, %v2841
  %v2955 = vpack.c.bf16 %v2844, %v2843
  %v2956 = vpack.c.bf16 %v2846, %v2845
  %v2957 = vpack.c.bf16 %v2848, %v2847
  %v2958 = vpack.c.bf16 %v2850, %v2849
  %v2959 = vpack.c.bf16 %v2852, %v2851
  %v2960 = vpack.c.bf16 %v2854, %v2853
  %v2961 = vpack.c.bf16 %v2856, %v2855
  %v2962 = vpack.c.bf16 %v2858, %v2857
  %v2963 = vpack.c.bf16 %v2860, %v2859
  %v2964 = vpack.c.bf16 %v2862, %v2861
  %v2965 = vpack.c.bf16 %v2864, %v2863
  %v2966 = vpack.c.bf16 %v2866, %v2865
  %v2967 = vpack.c.bf16 %v2868, %v2867
  %v2968 = vpack.c.bf16 %v2870, %v2869
  %v2969 = vpack.c.bf16 %v2872, %v2871
  %v2970 = vpack.c.bf16 %v2874, %v2873
  %v2971 = vpack.c.bf16 %v2876, %v2875
  %v2972 = vpack.c.bf16 %v2878, %v2877
  %v2973 = vpack.c.bf16 %v2880, %v2879
  %v2974 = vpack.c.bf16 %v2882, %v2881
  %v2975 = vpack.c.bf16 %v2884, %v2883
  %v2976 = vpack.c.bf16 %v2886, %v2885
  %v2977 = vpack.c.bf16 %v2888, %v2887
  %v2978 = vpack.c.bf16 %v2890, %v2889
  %v2979 = vpack.c.bf16 %v2892, %v2891
  %v2980 = vpack.c.bf16 %v2894, %v2893
  %v2981 = vpack.c.bf16 %v2896, %v2895
  %v2982 = vpack.c.bf16 %v2898, %v2897
  %v2983 = vpack.c.bf16 %v2900, %v2899
  %v2984 = vpack.c.bf16 %v2902, %v2901
  %v2985 = vpack.c.bf16 %v2904, %v2903
  %v2986 = vpack.c.bf16 %v2906, %v2905
  %v2987 = vpack.c.bf16 %v2908, %v2907
  %v2988 = vpack.c.bf16 %v2910, %v2909
  %v2989 = vpack.c.bf16 %v2912, %v2911
  %v2990 = vpack.c.bf16 %v2914, %v2913
  %v2991 = vpack.c.bf16 %v2916, %v2915
  %v2992 = vpack.c.bf16 %v2918, %v2917
  %v2993 = vpack.c.bf16 %v2920, %v2919
  %v2994 = vpack.c.bf16 %v2921, %v2921
  %v2995 = vld [vmem:[%s5] sm:$0xf]
  %v2996 = vld [vmem:[%s5 + $0x4] sm:$0xf]
  %v2997 = vld [vmem:[%s5 + $0x8] sm:$0xf]
  %v2998 = vld [vmem:[%s5 + $0xc] sm:$0xf]
  %v2999 = vld [vmem:[%s5 + $0x10] sm:$0xf]
  %v3000 = vld [vmem:[%s5 + $0x14] sm:$0xf]
  %v3001 = vld [vmem:[%s5 + $0x18] sm:$0xf]
  %v3002 = vld [vmem:[%s5 + $0x1c] sm:$0xf]
  %v3003 = vld [vmem:[%s5 + $0x20] sm:$0xf]
  %v3004 = vld [vmem:[%s5 + $0x24] sm:$0xf]
  %v3005 = vld [vmem:[%s5 + $0x28] sm:$0xf]
  %v3006 = vld [vmem:[%s5 + $0x2c] sm:$0xf]
  %v3007 = vld [vmem:[%s5 + $0x30] sm:$0xf]
  %v3008 = vld [vmem:[%s5 + $0x34] sm:$0xf]
  %v3009 = vld [vmem:[%s5 + $0x38] sm:$0xf]
  %v3010 = vld [vmem:[%s5 + $0x3c] sm:$0xf]
  %v3027 = vunpack.c.l.b16 %v2995
  %v3028 = vunpack.c.l.b16 %v2996
  %v3029 = vunpack.c.l.b16 %v2997
  %v3030 = vunpack.c.l.b16 %v2998
  %v3031 = vunpack.c.l.b16 %v2999
  %v3032 = vunpack.c.l.b16 %v3000
  %v3033 = vunpack.c.l.b16 %v3001
  %v3034 = vunpack.c.l.b16 %v3002
  %v3035 = vunpack.c.l.b16 %v3003
  %v3036 = vunpack.c.l.b16 %v3004
  %v3037 = vunpack.c.l.b16 %v3005
  %v3038 = vunpack.c.l.b16 %v3006
  %v3039 = vunpack.c.l.b16 %v3007
  %v3040 = vunpack.c.l.b16 %v3008
  %v3041 = vunpack.c.l.b16 %v3009
  %v3042 = vunpack.c.l.b16 %v3010
  %v3043 = vpack.c.b16 %v3028, %v3027
  %v3044 = vpack.c.b16 %v3030, %v3029
  %v3045 = vpack.c.b16 %v3032, %v3031
  %v3046 = vpack.c.b16 %v3034, %v3033
  %v3047 = vpack.c.b16 %v3036, %v3035
  %v3048 = vpack.c.b16 %v3038, %v3037
  %v3049 = vpack.c.b16 %v3040, %v3039
  %v3050 = vpack.c.b16 %v3042, %v3041
  %3059 = vmatprep.subr.bf16.mxu0 0
  %3060 = vmatpush1.bf16.msra.mxu0 %v3043
  %3061 = vmatprep.subr.bf16.mxu0 0
  %3062 = vmatpush1.bf16.msra.mxu0 %v3044
  %3063 = vmatprep.subr.bf16.mxu0 0
  %3064 = vmatpush1.bf16.msra.mxu0 %v3045
  %3065 = vmatprep.subr.bf16.mxu0 0
  %3066 = vmatpush1.bf16.msra.mxu0 %v3046
  %3067 = vmatprep.subr.bf16.mxu0 0
  %3068 = vmatpush1.bf16.msra.mxu0 %v3047
  %3069 = vmatprep.subr.bf16.mxu0 0
  %3070 = vmatpush1.bf16.msra.mxu0 %v3048
  %3071 = vmatprep.subr.bf16.mxu0 0
  %3072 = vmatpush1.bf16.msra.mxu0 %v3049
  %3073 = vmatprep.subr.bf16.mxu0 0
  %3074 = vmatpush1.bf16.msra.mxu0 %v3050
  %3075 = vmatprep.subr.bf16.mxu0 0
  %3076 = vmatpush1.bf16.msra.mxu0 0
  %3077 = vmatprep.subr.bf16.mxu0 0
  %3078 = vmatpush1.bf16.msra.mxu0 0
  %3079 = vmatprep.subr.bf16.mxu0 0
  %3080 = vmatpush1.bf16.msra.mxu0 0
  %3081 = vmatprep.subr.bf16.mxu0 0
  %3082 = vmatpush1.bf16.msra.mxu0 0
  %3083 = vmatprep.subr.bf16.mxu0 0
  %3084 = vmatpush1.bf16.msra.mxu0 0
  %3085 = vmatprep.subr.bf16.mxu0 0
  %3086 = vmatpush1.bf16.msra.mxu0 0
  %3087 = vmatprep.subr.bf16.mxu0 0
  %3088 = vmatpush1.bf16.msra.mxu0 0
  %3089 = vmatprep.subr.bf16.mxu0 0
  %3090 = vmatpush1.bf16.msra.mxu0 0
  %3091 = vmatprep.mubr.bf16.mxu0 0
  %3092 = vmatmul.mubr.bf16.gmra.mrb[0].mxu0 %v2922
  %v3093 = vpop.f32.mrb[0].mxu0
  %v3094 = vadd.f32 0.0, %v3093
  %v3095 = vpop.f32.mrb[0].mxu0
  %v3096 = vpop.f32.mrb[0].mxu0
  %v3097 = vadd.f32 0.0, %v3096
  %v3098 = vpop.f32.mrb[0].mxu0
  %3099 = vmatprep.mubr.bf16.mxu0 0
  %3100 = vmatmul.mubr.bf16.gmra.mrb[0].mxu0 %v2923
  %v3101 = vpop.f32.mrb[0].mxu0
  %v3102 = vadd.f32 0.0, %v3101
  %v3103 = vpop.f32.mrb[0].mxu0
  %v3104 = vpop.f32.mrb[0].mxu0
  %v3105 = vadd.f32 0.0, %v3104
  %v3106 = vpop.f32.mrb[0].mxu0
  %3107 = vmatprep.mubr.bf16.mxu0 0
  %3108 = vmatmul.mubr.bf16.gmra.mrb[0].mxu0 %v2924
  %v3109 = vpop.f32.mrb[0].mxu0
  %v3110 = vadd.f32 0.0, %v3109
  %v3111 = vpop.f32.mrb[0].mxu0
  %v3112 = vpop.f32.mrb[0].mxu0
  %v3113 = vadd.f32 0.0, %v3112
  %v3114 = vpop.f32.mrb[0].mxu0
  %3115 = vmatprep.mubr.bf16.mxu0 0
  %3116 = vmatmul.mubr.bf16.gmra.mrb[0].mxu0 %v2925
  %v3117 = vpop.f32.mrb[0].mxu0
  %v3118 = vadd.f32 0.0, %v3117
  %v3119 = vpop.f32.mrb[0].mxu0
  %v3120 = vpop.f32.mrb[0].mxu0
  %v3121 = vadd.f32 0.0, %v3120
  %v3122 = vpop.f32.mrb[0].mxu0
  %3123 = vmatprep.mubr.bf16.mxu0 0
  %3124 = vmatmul.mubr.bf16.gmra.mrb[0].mxu0 %v2926
  %v3125 = vpop.f32.mrb[0].mxu0
  %v3126 = vadd.f32 0.0, %v3125
  %v3127 = vpop.f32.mrb[0].mxu0
  %v3128 = vpop.f32.mrb[0].mxu0
  %v3129 = vadd.f32 0.0, %v3128
  %v3130 = vpop.f32.mrb[0].mxu0
  %3131 = vmatprep.mubr.bf16.mxu0 0
  %3132 = vmatmul.mubr.bf16.gmra.mrb[0].mxu0 %v2927
  %v3133 = vpop.f32.mrb[0].mxu0
  %v3134 = vadd.f32 0.0, %v3133
  %v3135 = vpop.f32.mrb[0].mxu0
  %v3136 = vpop.f32.mrb[0].mxu0
  %v3137 = vadd.f32 0.0, %v3136
  %v3138 = vpop.f32.mrb[0].mxu0
  %3139 = vmatprep.mubr.bf16.mxu0 0
  %3140 = vmatmul.mubr.bf16.gmra.mrb[0].mxu0 %v2928
  %v3141 = vpop.f32.mrb[0].mxu0
  %v3142 = vadd.f32 0.0, %v3141
  %v3143 = vpop.f32.mrb[0].mxu0
  %v3144 = vpop.f32.mrb[0].mxu0
  %v3145 = vadd.f32 0.0, %v3144
  %v3146 = vpop.f32.mrb[0].mxu0
  %3147 = vmatprep.mubr.bf16.mxu0 0
  %3148 = vmatmul.mubr.bf16.gmra.mrb[0].mxu0 %v2929
  %v3149 = vpop.f32.mrb[0].mxu0
  %v3150 = vadd.f32 0.0, %v3149
  %v3151 = vpop.f32.mrb[0].mxu0
  %v3152 = vpop.f32.mrb[0].mxu0
  %v3153 = vadd.f32 0.0, %v3152
  %v3154 = vpop.f32.mrb[0].mxu0
  %3155 = vmatprep.mubr.bf16.mxu0 0
  %3156 = vmatmul.mubr.bf16.gmra.mrb[0].mxu0 %v2930
  %v3157 = vpop.f32.mrb[0].mxu0
  %v3158 = vadd.f32 0.0, %v3157
  %v3159 = vpop.f32.mrb[0].mxu0
  %v3160 = vpop.f32.mrb[0].mxu0
  %v3161 = vadd.f32 0.0, %v3160
  %v3162 = vpop.f32.mrb[0].mxu0
  %3163 = vmatprep.mubr.bf16.mxu0 0
  %3164 = vmatmul.mubr.bf16.gmra.mrb[0].mxu0 %v2931
  %v3165 = vpop.f32.mrb[0].mxu0
  %v3166 = vadd.f32 0.0, %v3165
  %v3167 = vpop.f32.mrb[0].mxu0
  %v3168 = vpop.f32.mrb[0].mxu0
  %v3169 = vadd.f32 0.0, %v3168
  %v3170 = vpop.f32.mrb[0].mxu0
  %3171 = vmatprep.mubr.bf16.mxu0 0
  %3172 = vmatmul.mubr.bf16.gmra.mrb[0].mxu0 %v2932
  %v3173 = vpop.f32.mrb[0].mxu0
  %v3174 = vadd.f32 0.0, %v3173
  %v3175 = vpop.f32.mrb[0].mxu0
  %v3176 = vpop.f32.mrb[0].mxu0
  %v3177 = vadd.f32 0.0, %v3176
  %v3178 = vpop.f32.mrb[0].mxu0
  %3179 = vmatprep.mubr.bf16.mxu0 0
  %3180 = vmatmul.mubr.bf16.gmra.mrb[0].mxu0 %v2933
  %v3181 = vpop.f32.mrb[0].mxu0
  %v3182 = vadd.f32 0.0, %v3181
  %v3183 = vpop.f32.mrb[0].mxu0
  %v3184 = vpop.f32.mrb[0].mxu0
  %v3185 = vadd.f32 0.0, %v3184
  %v3186 = vpop.f32.mrb[0].mxu0
  %3187 = vmatprep.mubr.bf16.mxu0 0
  %3188 = vmatmul.mubr.bf16.gmra.mrb[0].mxu0 %v2934
  %v3189 = vpop.f32.mrb[0].mxu0
  %v3190 = vadd.f32 0.0, %v3189
  %v3191 = vpop.f32.mrb[0].mxu0
  %v3192 = vpop.f32.mrb[0].mxu0
  %v3193 = vadd.f32 0.0, %v3192
  %v3194 = vpop.f32.mrb[0].mxu0
  %3195 = vmatprep.mubr.bf16.mxu0 0
  %3196 = vmatmul.mubr.bf16.gmra.mrb[0].mxu0 %v2935
  %v3197 = vpop.f32.mrb[0].mxu0
  %v3198 = vadd.f32 0.0, %v3197
  %v3199 = vpop.f32.mrb[0].mxu0
  %v3200 = vpop.f32.mrb[0].mxu0
  %v3201 = vadd.f32 0.0, %v3200
  %v3202 = vpop.f32.mrb[0].mxu0
  %3203 = vmatprep.mubr.bf16.mxu0 0
  %3204 = vmatmul.mubr.bf16.gmra.mrb[0].mxu0 %v2936
  %v3205 = vpop.f32.mrb[0].mxu0
  %v3206 = vadd.f32 0.0, %v3205
  %v3207 = vpop.f32.mrb[0].mxu0
  %v3208 = vpop.f32.mrb[0].mxu0
  %v3209 = vadd.f32 0.0, %v3208
  %v3210 = vpop.f32.mrb[0].mxu0
  %3211 = vmatprep.mubr.bf16.mxu0 0
  %3212 = vmatmul.mubr.bf16.gmra.mrb[0].mxu0 %v2937
  %v3213 = vpop.f32.mrb[0].mxu0
  %v3214 = vadd.f32 0.0, %v3213
  %v3215 = vpop.f32.mrb[0].mxu0
  %v3216 = vpop.f32.mrb[0].mxu0
  %v3217 = vadd.f32 0.0, %v3216
  %v3218 = vpop.f32.mrb[0].mxu0
  %3219 = vmatprep.mubr.bf16.mxu0 0
  %3220 = vmatmul.mubr.bf16.gmra.mrb[0].mxu0 %v2938
  %v3221 = vpop.f32.mrb[0].mxu0
  %v3222 = vadd.f32 0.0, %v3221
  %v3223 = vpop.f32.mrb[0].mxu0
  %v3224 = vpop.f32.mrb[0].mxu0
  %v3225 = vadd.f32 0.0, %v3224
  %v3226 = vpop.f32.mrb[0].mxu0
  %3227 = vmatprep.mubr.bf16.mxu0 0
  %3228 = vmatmul.mubr.bf16.gmra.mrb[0].mxu0 %v2939
  %v3229 = vpop.f32.mrb[0].mxu0
  %v3230 = vadd.f32 0.0, %v3229
  %v3231 = vpop.f32.mrb[0].mxu0
  %v3232 = vpop.f32.mrb[0].mxu0
  %v3233 = vadd.f32 0.0, %v3232
  %v3234 = vpop.f32.mrb[0].mxu0
  %3235 = vmatprep.mubr.bf16.mxu0 0
  %3236 = vmatmul.mubr.bf16.gmra.mrb[0].mxu0 %v2940
  %v3237 = vpop.f32.mrb[0].mxu0
  %v3238 = vadd.f32 0.0, %v3237
  %v3239 = vpop.f32.mrb[0].mxu0
  %v3240 = vpop.f32.mrb[0].mxu0
  %v3241 = vadd.f32 0.0, %v3240
  %v3242 = vpop.f32.mrb[0].mxu0
  %3243 = vmatprep.mubr.bf16.mxu0 0
  %3244 = vmatmul.mubr.bf16.gmra.mrb[0].mxu0 %v2941
  %v3245 = vpop.f32.mrb[0].mxu0
  %v3246 = vadd.f32 0.0, %v3245
  %v3247 = vpop.f32.mrb[0].mxu0
  %v3248 = vpop.f32.mrb[0].mxu0
  %v3249 = vadd.f32 0.0, %v3248
  %v3250 = vpop.f32.mrb[0].mxu0
  %3251 = vmatprep.mubr.bf16.mxu0 0
  %3252 = vmatmul.mubr.bf16.gmra.mrb[0].mxu0 %v2942
  %v3253 = vpop.f32.mrb[0].mxu0
  %v3254 = vadd.f32 0.0, %v3253
  %v3255 = vpop.f32.mrb[0].mxu0
  %v3256 = vpop.f32.mrb[0].mxu0
  %v3257 = vadd.f32 0.0, %v3256
  %v3258 = vpop.f32.mrb[0].mxu0
  %3259 = vmatprep.mubr.bf16.mxu0 0
  %3260 = vmatmul.mubr.bf16.gmra.mrb[0].mxu0 %v2943
  %v3261 = vpop.f32.mrb[0].mxu0
  %v3262 = vadd.f32 0.0, %v3261
  %v3263 = vpop.f32.mrb[0].mxu0
  %v3264 = vpop.f32.mrb[0].mxu0
  %v3265 = vadd.f32 0.0, %v3264
  %v3266 = vpop.f32.mrb[0].mxu0
  %3267 = vmatprep.mubr.bf16.mxu0 0
  %3268 = vmatmul.mubr.bf16.gmra.mrb[0].mxu0 %v2944
  %v3269 = vpop.f32.mrb[0].mxu0
  %v3270 = vadd.f32 0.0, %v3269
  %v3271 = vpop.f32.mrb[0].mxu0
  %v3272 = vpop.f32.mrb[0].mxu0
  %v3273 = vadd.f32 0.0, %v3272
  %v3274 = vpop.f32.mrb[0].mxu0
  %3275 = vmatprep.mubr.bf16.mxu0 0
  %3276 = vmatmul.mubr.bf16.gmra.mrb[0].mxu0 %v2945
  %v3277 = vpop.f32.mrb[0].mxu0
  %v3278 = vadd.f32 0.0, %v3277
  %v3279 = vpop.f32.mrb[0].mxu0
  %v3280 = vpop.f32.mrb[0].mxu0
  %v3281 = vadd.f32 0.0, %v3280
  %v3282 = vpop.f32.mrb[0].mxu0
  %3283 = vmatprep.mubr.bf16.mxu0 0
  %3284 = vmatmul.mubr.bf16.gmra.mrb[0].mxu0 %v2946
  %v3285 = vpop.f32.mrb[0].mxu0
  %v3286 = vadd.f32 0.0, %v3285
  %v3287 = vpop.f32.mrb[0].mxu0
  %v3288 = vpop.f32.mrb[0].mxu0
  %v3289 = vadd.f32 0.0, %v3288
  %v3290 = vpop.f32.mrb[0].mxu0
  %3291 = vmatprep.mubr.bf16.mxu0 0
  %3292 = vmatmul.mubr.bf16.gmra.mrb[0].mxu0 %v2947
  %v3293 = vpop.f32.mrb[0].mxu0
  %v3294 = vadd.f32 0.0, %v3293
  %v3295 = vpop.f32.mrb[0].mxu0
  %v3296 = vpop.f32.mrb[0].mxu0
  %v3297 = vadd.f32 0.0, %v3296
  %v3298 = vpop.f32.mrb[0].mxu0
  %3299 = vmatprep.mubr.bf16.mxu0 0
  %3300 = vmatmul.mubr.bf16.gmra.mrb[0].mxu0 %v2948
  %v3301 = vpop.f32.mrb[0].mxu0
  %v3302 = vadd.f32 0.0, %v3301
  %v3303 = vpop.f32.mrb[0].mxu0
  %v3304 = vpop.f32.mrb[0].mxu0
  %v3305 = vadd.f32 0.0, %v3304
  %v3306 = vpop.f32.mrb[0].mxu0
  %3307 = vmatprep.mubr.bf16.mxu0 0
  %3308 = vmatmul.mubr.bf16.gmra.mrb[0].mxu0 %v2949
  %v3309 = vpop.f32.mrb[0].mxu0
  %v3310 = vadd.f32 0.0, %v3309
  %v3311 = vpop.f32.mrb[0].mxu0
  %v3312 = vpop.f32.mrb[0].mxu0
  %v3313 = vadd.f32 0.0, %v3312
  %v3314 = vpop.f32.mrb[0].mxu0
  %3315 = vmatprep.mubr.bf16.mxu0 0
  %3316 = vmatmul.mubr.bf16.gmra.mrb[0].mxu0 %v2950
  %v3317 = vpop.f32.mrb[0].mxu0
  %v3318 = vadd.f32 0.0, %v3317
  %v3319 = vpop.f32.mrb[0].mxu0
  %v3320 = vpop.f32.mrb[0].mxu0
  %v3321 = vadd.f32 0.0, %v3320
  %v3322 = vpop.f32.mrb[0].mxu0
  %3323 = vmatprep.mubr.bf16.mxu0 0
  %3324 = vmatmul.mubr.bf16.gmra.mrb[0].mxu0 %v2951
  %v3325 = vpop.f32.mrb[0].mxu0
  %v3326 = vadd.f32 0.0, %v3325
  %v3327 = vpop.f32.mrb[0].mxu0
  %v3328 = vpop.f32.mrb[0].mxu0
  %v3329 = vadd.f32 0.0, %v3328
  %v3330 = vpop.f32.mrb[0].mxu0
  %3331 = vmatprep.mubr.bf16.mxu0 0
  %3332 = vmatmul.mubr.bf16.gmra.mrb[0].mxu0 %v2952
  %v3333 = vpop.f32.mrb[0].mxu0
  %v3334 = vadd.f32 0.0, %v3333
  %v3335 = vpop.f32.mrb[0].mxu0
  %v3336 = vpop.f32.mrb[0].mxu0
  %v3337 = vadd.f32 0.0, %v3336
  %v3338 = vpop.f32.mrb[0].mxu0
  %3339 = vmatprep.mubr.bf16.mxu0 0
  %3340 = vmatmul.mubr.bf16.gmra.mrb[0].mxu0 %v2953
  %v3341 = vpop.f32.mrb[0].mxu0
  %v3342 = vadd.f32 0.0, %v3341
  %v3343 = vpop.f32.mrb[0].mxu0
  %v3344 = vpop.f32.mrb[0].mxu0
  %v3345 = vadd.f32 0.0, %v3344
  %v3346 = vpop.f32.mrb[0].mxu0
  %3347 = vmatprep.mubr.bf16.mxu0 0
  %3348 = vmatmul.mubr.bf16.gmra.mrb[0].mxu0 %v2954
  %v3349 = vpop.f32.mrb[0].mxu0
  %v3350 = vadd.f32 0.0, %v3349
  %v3351 = vpop.f32.mrb[0].mxu0
  %v3352 = vpop.f32.mrb[0].mxu0
  %v3353 = vadd.f32 0.0, %v3352
  %v3354 = vpop.f32.mrb[0].mxu0
  %3355 = vmatprep.mubr.bf16.mxu0 0
  %3356 = vmatmul.mubr.bf16.gmra.mrb[0].mxu0 %v2955
  %v3357 = vpop.f32.mrb[0].mxu0
  %v3358 = vadd.f32 0.0, %v3357
  %v3359 = vpop.f32.mrb[0].mxu0
  %v3360 = vpop.f32.mrb[0].mxu0
  %v3361 = vadd.f32 0.0, %v3360
  %v3362 = vpop.f32.mrb[0].mxu0
  %3363 = vmatprep.mubr.bf16.mxu0 0
  %3364 = vmatmul.mubr.bf16.gmra.mrb[0].mxu0 %v2956
  %v3365 = vpop.f32.mrb[0].mxu0
  %v3366 = vadd.f32 0.0, %v3365
  %v3367 = vpop.f32.mrb[0].mxu0
  %v3368 = vpop.f32.mrb[0].mxu0
  %v3369 = vadd.f32 0.0, %v3368
  %v3370 = vpop.f32.mrb[0].mxu0
  %3371 = vmatprep.mubr.bf16.mxu0 0
  %3372 = vmatmul.mubr.bf16.gmra.mrb[0].mxu0 %v2957
  %v3373 = vpop.f32.mrb[0].mxu0
  %v3374 = vadd.f32 0.0, %v3373
  %v3375 = vpop.f32.mrb[0].mxu0
  %v3376 = vpop.f32.mrb[0].mxu0
  %v3377 = vadd.f32 0.0, %v3376
  %v3378 = vpop.f32.mrb[0].mxu0
  %3379 = vmatprep.mubr.bf16.mxu0 0
  %3380 = vmatmul.mubr.bf16.gmra.mrb[0].mxu0 %v2958
  %v3381 = vpop.f32.mrb[0].mxu0
  %v3382 = vadd.f32 0.0, %v3381
  %v3383 = vpop.f32.mrb[0].mxu0
  %v3384 = vpop.f32.mrb[0].mxu0
  %v3385 = vadd.f32 0.0, %v3384
  %v3386 = vpop.f32.mrb[0].mxu0
  %3387 = vmatprep.mubr.bf16.mxu0 0
  %3388 = vmatmul.mubr.bf16.gmra.mrb[0].mxu0 %v2959
  %v3389 = vpop.f32.mrb[0].mxu0
  %v3390 = vadd.f32 0.0, %v3389
  %v3391 = vpop.f32.mrb[0].mxu0
  %v3392 = vpop.f32.mrb[0].mxu0
  %v3393 = vadd.f32 0.0, %v3392
  %v3394 = vpop.f32.mrb[0].mxu0
  %3395 = vmatprep.mubr.bf16.mxu0 0
  %3396 = vmatmul.mubr.bf16.gmra.mrb[0].mxu0 %v2960
  %v3397 = vpop.f32.mrb[0].mxu0
  %v3398 = vadd.f32 0.0, %v3397
  %v3399 = vpop.f32.mrb[0].mxu0
  %v3400 = vpop.f32.mrb[0].mxu0
  %v3401 = vadd.f32 0.0, %v3400
  %v3402 = vpop.f32.mrb[0].mxu0
  %3403 = vmatprep.mubr.bf16.mxu0 0
  %3404 = vmatmul.mubr.bf16.gmra.mrb[0].mxu0 %v2961
  %v3405 = vpop.f32.mrb[0].mxu0
  %v3406 = vadd.f32 0.0, %v3405
  %v3407 = vpop.f32.mrb[0].mxu0
  %v3408 = vpop.f32.mrb[0].mxu0
  %v3409 = vadd.f32 0.0, %v3408
  %v3410 = vpop.f32.mrb[0].mxu0
  %3411 = vmatprep.mubr.bf16.mxu0 0
  %3412 = vmatmul.mubr.bf16.gmra.mrb[0].mxu0 %v2962
  %v3413 = vpop.f32.mrb[0].mxu0
  %v3414 = vadd.f32 0.0, %v3413
  %v3415 = vpop.f32.mrb[0].mxu0
  %v3416 = vpop.f32.mrb[0].mxu0
  %v3417 = vadd.f32 0.0, %v3416
  %v3418 = vpop.f32.mrb[0].mxu0
  %3419 = vmatprep.mubr.bf16.mxu0 0
  %3420 = vmatmul.mubr.bf16.gmra.mrb[0].mxu0 %v2963
  %v3421 = vpop.f32.mrb[0].mxu0
  %v3422 = vadd.f32 0.0, %v3421
  %v3423 = vpop.f32.mrb[0].mxu0
  %v3424 = vpop.f32.mrb[0].mxu0
  %v3425 = vadd.f32 0.0, %v3424
  %v3426 = vpop.f32.mrb[0].mxu0
  %3427 = vmatprep.mubr.bf16.mxu0 0
  %3428 = vmatmul.mubr.bf16.gmra.mrb[0].mxu0 %v2964
  %v3429 = vpop.f32.mrb[0].mxu0
  %v3430 = vadd.f32 0.0, %v3429
  %v3431 = vpop.f32.mrb[0].mxu0
  %v3432 = vpop.f32.mrb[0].mxu0
  %v3433 = vadd.f32 0.0, %v3432
  %v3434 = vpop.f32.mrb[0].mxu0
  %3435 = vmatprep.mubr.bf16.mxu0 0
  %3436 = vmatmul.mubr.bf16.gmra.mrb[0].mxu0 %v2965
  %v3437 = vpop.f32.mrb[0].mxu0
  %v3438 = vadd.f32 0.0, %v3437
  %v3439 = vpop.f32.mrb[0].mxu0
  %v3440 = vpop.f32.mrb[0].mxu0
  %v3441 = vadd.f32 0.0, %v3440
  %v3442 = vpop.f32.mrb[0].mxu0
  %3443 = vmatprep.mubr.bf16.mxu0 0
  %3444 = vmatmul.mubr.bf16.gmra.mrb[0].mxu0 %v2966
  %v3445 = vpop.f32.mrb[0].mxu0
  %v3446 = vadd.f32 0.0, %v3445
  %v3447 = vpop.f32.mrb[0].mxu0
  %v3448 = vpop.f32.mrb[0].mxu0
  %v3449 = vadd.f32 0.0, %v3448
  %v3450 = vpop.f32.mrb[0].mxu0
  %3451 = vmatprep.mubr.bf16.mxu0 0
  %3452 = vmatmul.mubr.bf16.gmra.mrb[0].mxu0 %v2967
  %v3453 = vpop.f32.mrb[0].mxu0
  %v3454 = vadd.f32 0.0, %v3453
  %v3455 = vpop.f32.mrb[0].mxu0
  %v3456 = vpop.f32.mrb[0].mxu0
  %v3457 = vadd.f32 0.0, %v3456
  %v3458 = vpop.f32.mrb[0].mxu0
  %3459 = vmatprep.mubr.bf16.mxu0 0
  %3460 = vmatmul.mubr.bf16.gmra.mrb[0].mxu0 %v2968
  %v3461 = vpop.f32.mrb[0].mxu0
  %v3462 = vadd.f32 0.0, %v3461
  %v3463 = vpop.f32.mrb[0].mxu0
  %v3464 = vpop.f32.mrb[0].mxu0
  %v3465 = vadd.f32 0.0, %v3464
  %v3466 = vpop.f32.mrb[0].mxu0
  %3467 = vmatprep.mubr.bf16.mxu0 0
  %3468 = vmatmul.mubr.bf16.gmra.mrb[0].mxu0 %v2969
  %v3469 = vpop.f32.mrb[0].mxu0
  %v3470 = vadd.f32 0.0, %v3469
  %v3471 = vpop.f32.mrb[0].mxu0
  %v3472 = vpop.f32.mrb[0].mxu0
  %v3473 = vadd.f32 0.0, %v3472
  %v3474 = vpop.f32.mrb[0].mxu0
  %3475 = vmatprep.mubr.bf16.mxu0 0
  %3476 = vmatmul.mubr.bf16.gmra.mrb[0].mxu0 %v2970
  %v3477 = vpop.f32.mrb[0].mxu0
  %v3478 = vadd.f32 0.0, %v3477
  %v3479 = vpop.f32.mrb[0].mxu0
  %v3480 = vpop.f32.mrb[0].mxu0
  %v3481 = vadd.f32 0.0, %v3480
  %v3482 = vpop.f32.mrb[0].mxu0
  %3483 = vmatprep.mubr.bf16.mxu0 0
  %3484 = vmatmul.mubr.bf16.gmra.mrb[0].mxu0 %v2971
  %v3485 = vpop.f32.mrb[0].mxu0
  %v3486 = vadd.f32 0.0, %v3485
  %v3487 = vpop.f32.mrb[0].mxu0
  %v3488 = vpop.f32.mrb[0].mxu0
  %v3489 = vadd.f32 0.0, %v3488
  %v3490 = vpop.f32.mrb[0].mxu0
  %3491 = vmatprep.mubr.bf16.mxu0 0
  %3492 = vmatmul.mubr.bf16.gmra.mrb[0].mxu0 %v2972
  %v3493 = vpop.f32.mrb[0].mxu0
  %v3494 = vadd.f32 0.0, %v3493
  %v3495 = vpop.f32.mrb[0].mxu0
  %v3496 = vpop.f32.mrb[0].mxu0
  %v3497 = vadd.f32 0.0, %v3496
  %v3498 = vpop.f32.mrb[0].mxu0
  %3499 = vmatprep.mubr.bf16.mxu0 0
  %3500 = vmatmul.mubr.bf16.gmra.mrb[0].mxu0 %v2973
  %v3501 = vpop.f32.mrb[0].mxu0
  %v3502 = vadd.f32 0.0, %v3501
  %v3503 = vpop.f32.mrb[0].mxu0
  %v3504 = vpop.f32.mrb[0].mxu0
  %v3505 = vadd.f32 0.0, %v3504
  %v3506 = vpop.f32.mrb[0].mxu0
  %3507 = vmatprep.mubr.bf16.mxu0 0
  %3508 = vmatmul.mubr.bf16.gmra.mrb[0].mxu0 %v2974
  %v3509 = vpop.f32.mrb[0].mxu0
  %v3510 = vadd.f32 0.0, %v3509
  %v3511 = vpop.f32.mrb[0].mxu0
  %v3512 = vpop.f32.mrb[0].mxu0
  %v3513 = vadd.f32 0.0, %v3512
  %v3514 = vpop.f32.mrb[0].mxu0
  %3515 = vmatprep.mubr.bf16.mxu0 0
  %3516 = vmatmul.mubr.bf16.gmra.mrb[0].mxu0 %v2975
  %v3517 = vpop.f32.mrb[0].mxu0
  %v3518 = vadd.f32 0.0, %v3517
  %v3519 = vpop.f32.mrb[0].mxu0
  %v3520 = vpop.f32.mrb[0].mxu0
  %v3521 = vadd.f32 0.0, %v3520
  %v3522 = vpop.f32.mrb[0].mxu0
  %3523 = vmatprep.mubr.bf16.mxu0 0
  %3524 = vmatmul.mubr.bf16.gmra.mrb[0].mxu0 %v2976
  %v3525 = vpop.f32.mrb[0].mxu0
  %v3526 = vadd.f32 0.0, %v3525
  %v3527 = vpop.f32.mrb[0].mxu0
  %v3528 = vpop.f32.mrb[0].mxu0
  %v3529 = vadd.f32 0.0, %v3528
  %v3530 = vpop.f32.mrb[0].mxu0
  %3531 = vmatprep.mubr.bf16.mxu0 0
  %3532 = vmatmul.mubr.bf16.gmra.mrb[0].mxu0 %v2977
  %v3533 = vpop.f32.mrb[0].mxu0
  %v3534 = vadd.f32 0.0, %v3533
  %v3535 = vpop.f32.mrb[0].mxu0
  %v3536 = vpop.f32.mrb[0].mxu0
  %v3537 = vadd.f32 0.0, %v3536
  %v3538 = vpop.f32.mrb[0].mxu0
  %3539 = vmatprep.mubr.bf16.mxu0 0
  %3540 = vmatmul.mubr.bf16.gmra.mrb[0].mxu0 %v2978
  %v3541 = vpop.f32.mrb[0].mxu0
  %v3542 = vadd.f32 0.0, %v3541
  %v3543 = vpop.f32.mrb[0].mxu0
  %v3544 = vpop.f32.mrb[0].mxu0
  %v3545 = vadd.f32 0.0, %v3544
  %v3546 = vpop.f32.mrb[0].mxu0
  %3547 = vmatprep.mubr.bf16.mxu0 0
  %3548 = vmatmul.mubr.bf16.gmra.mrb[0].mxu0 %v2979
  %v3549 = vpop.f32.mrb[0].mxu0
  %v3550 = vadd.f32 0.0, %v3549
  %v3551 = vpop.f32.mrb[0].mxu0
  %v3552 = vpop.f32.mrb[0].mxu0
  %v3553 = vadd.f32 0.0, %v3552
  %v3554 = vpop.f32.mrb[0].mxu0
  %3555 = vmatprep.mubr.bf16.mxu0 0
  %3556 = vmatmul.mubr.bf16.gmra.mrb[0].mxu0 %v2980
  %v3557 = vpop.f32.mrb[0].mxu0
  %v3558 = vadd.f32 0.0, %v3557
  %v3559 = vpop.f32.mrb[0].mxu0
  %v3560 = vpop.f32.mrb[0].mxu0
  %v3561 = vadd.f32 0.0, %v3560
  %v3562 = vpop.f32.mrb[0].mxu0
  %3563 = vmatprep.mubr.bf16.mxu0 0
  %3564 = vmatmul.mubr.bf16.gmra.mrb[0].mxu0 %v2981
  %v3565 = vpop.f32.mrb[0].mxu0
  %v3566 = vadd.f32 0.0, %v3565
  %v3567 = vpop.f32.mrb[0].mxu0
  %v3568 = vpop.f32.mrb[0].mxu0
  %v3569 = vadd.f32 0.0, %v3568
  %v3570 = vpop.f32.mrb[0].mxu0
  %3571 = vmatprep.mubr.bf16.mxu0 0
  %3572 = vmatmul.mubr.bf16.gmra.mrb[0].mxu0 %v2982
  %v3573 = vpop.f32.mrb[0].mxu0
  %v3574 = vadd.f32 0.0, %v3573
  %v3575 = vpop.f32.mrb[0].mxu0
  %v3576 = vpop.f32.mrb[0].mxu0
  %v3577 = vadd.f32 0.0, %v3576
  %v3578 = vpop.f32.mrb[0].mxu0
  %3579 = vmatprep.mubr.bf16.mxu0 0
  %3580 = vmatmul.mubr.bf16.gmra.mrb[0].mxu0 %v2983
  %v3581 = vpop.f32.mrb[0].mxu0
  %v3582 = vadd.f32 0.0, %v3581
  %v3583 = vpop.f32.mrb[0].mxu0
  %v3584 = vpop.f32.mrb[0].mxu0
  %v3585 = vadd.f32 0.0, %v3584
  %v3586 = vpop.f32.mrb[0].mxu0
  %3587 = vmatprep.mubr.bf16.mxu0 0
  %3588 = vmatmul.mubr.bf16.gmra.mrb[0].mxu0 %v2984
  %v3589 = vpop.f32.mrb[0].mxu0
  %v3590 = vadd.f32 0.0, %v3589
  %v3591 = vpop.f32.mrb[0].mxu0
  %v3592 = vpop.f32.mrb[0].mxu0
  %v3593 = vadd.f32 0.0, %v3592
  %v3594 = vpop.f32.mrb[0].mxu0
  %3595 = vmatprep.mubr.bf16.mxu0 0
  %3596 = vmatmul.mubr.bf16.gmra.mrb[0].mxu0 %v2985
  %v3597 = vpop.f32.mrb[0].mxu0
  %v3598 = vadd.f32 0.0, %v3597
  %v3599 = vpop.f32.mrb[0].mxu0
  %v3600 = vpop.f32.mrb[0].mxu0
  %v3601 = vadd.f32 0.0, %v3600
  %v3602 = vpop.f32.mrb[0].mxu0
  %3603 = vmatprep.mubr.bf16.mxu0 0
  %3604 = vmatmul.mubr.bf16.gmra.mrb[0].mxu0 %v2986
  %v3605 = vpop.f32.mrb[0].mxu0
  %v3606 = vadd.f32 0.0, %v3605
  %v3607 = vpop.f32.mrb[0].mxu0
  %v3608 = vpop.f32.mrb[0].mxu0
  %v3609 = vadd.f32 0.0, %v3608
  %v3610 = vpop.f32.mrb[0].mxu0
  %3611 = vmatprep.mubr.bf16.mxu0 0
  %3612 = vmatmul.mubr.bf16.gmra.mrb[0].mxu0 %v2987
  %v3613 = vpop.f32.mrb[0].mxu0
  %v3614 = vadd.f32 0.0, %v3613
  %v3615 = vpop.f32.mrb[0].mxu0
  %v3616 = vpop.f32.mrb[0].mxu0
  %v3617 = vadd.f32 0.0, %v3616
  %v3618 = vpop.f32.mrb[0].mxu0
  %3619 = vmatprep.mubr.bf16.mxu0 0
  %3620 = vmatmul.mubr.bf16.gmra.mrb[0].mxu0 %v2988
  %v3621 = vpop.f32.mrb[0].mxu0
  %v3622 = vadd.f32 0.0, %v3621
  %v3623 = vpop.f32.mrb[0].mxu0
  %v3624 = vpop.f32.mrb[0].mxu0
  %v3625 = vadd.f32 0.0, %v3624
  %v3626 = vpop.f32.mrb[0].mxu0
  %3627 = vmatprep.mubr.bf16.mxu0 0
  %3628 = vmatmul.mubr.bf16.gmra.mrb[0].mxu0 %v2989
  %v3629 = vpop.f32.mrb[0].mxu0
  %v3630 = vadd.f32 0.0, %v3629
  %v3631 = vpop.f32.mrb[0].mxu0
  %v3632 = vpop.f32.mrb[0].mxu0
  %v3633 = vadd.f32 0.0, %v3632
  %v3634 = vpop.f32.mrb[0].mxu0
  %3635 = vmatprep.mubr.bf16.mxu0 0
  %3636 = vmatmul.mubr.bf16.gmra.mrb[0].mxu0 %v2990
  %v3637 = vpop.f32.mrb[0].mxu0
  %v3638 = vadd.f32 0.0, %v3637
  %v3639 = vpop.f32.mrb[0].mxu0
  %v3640 = vpop.f32.mrb[0].mxu0
  %v3641 = vadd.f32 0.0, %v3640
  %v3642 = vpop.f32.mrb[0].mxu0
  %3643 = vmatprep.mubr.bf16.mxu0 0
  %3644 = vmatmul.mubr.bf16.gmra.mrb[0].mxu0 %v2991
  %v3645 = vpop.f32.mrb[0].mxu0
  %v3646 = vadd.f32 0.0, %v3645
  %v3647 = vpop.f32.mrb[0].mxu0
  %v3648 = vpop.f32.mrb[0].mxu0
  %v3649 = vadd.f32 0.0, %v3648
  %v3650 = vpop.f32.mrb[0].mxu0
  %3651 = vmatprep.mubr.bf16.mxu0 0
  %3652 = vmatmul.mubr.bf16.gmra.mrb[0].mxu0 %v2992
  %v3653 = vpop.f32.mrb[0].mxu0
  %v3654 = vadd.f32 0.0, %v3653
  %v3655 = vpop.f32.mrb[0].mxu0
  %v3656 = vpop.f32.mrb[0].mxu0
  %v3657 = vadd.f32 0.0, %v3656
  %v3658 = vpop.f32.mrb[0].mxu0
  %3659 = vmatprep.mubr.bf16.mxu0 0
  %3660 = vmatmul.mubr.bf16.gmra.mrb[0].mxu0 %v2993
  %v3661 = vpop.f32.mrb[0].mxu0
  %v3662 = vadd.f32 0.0, %v3661
  %v3663 = vpop.f32.mrb[0].mxu0
  %v3664 = vpop.f32.mrb[0].mxu0
  %v3665 = vadd.f32 0.0, %v3664
  %v3666 = vpop.f32.mrb[0].mxu0
  %3667 = vmatprep.mubr.bf16.mxu0 0
  %3668 = vmatmul.mubr.bf16.gmra.mrb[0].mxu0 %v2994
  %v3669 = vpop.f32.mrb[0].mxu0
  %v3670 = vadd.f32 0.0, %v3669
  %v3671 = vpop.f32.mrb[0].mxu0
  %v3672 = vpop.f32.mrb[0].mxu0
  %v3673 = vpop.f32.mrb[0].mxu0
  %3674 = vdwg.mxu0
  %v3675 = vtanh.pop %v3094
  %v3676 = vtanh.pop %v3097
  %v3677 = vtanh.pop %v3102
  %v3678 = vtanh.pop %v3105
  %v3679 = vtanh.pop %v3110
  %v3680 = vtanh.pop %v3113
  %v3681 = vtanh.pop %v3118
  %v3682 = vtanh.pop %v3121
  %v3683 = vtanh.pop %v3126
  %v3684 = vtanh.pop %v3129
  %v3685 = vtanh.pop %v3134
  %v3686 = vtanh.pop %v3137
  %v3687 = vtanh.pop %v3142
  %v3688 = vtanh.pop %v3145
  %v3689 = vtanh.pop %v3150
  %v3690 = vtanh.pop %v3153
  %v3691 = vtanh.pop %v3158
  %v3692 = vtanh.pop %v3161
  %v3693 = vtanh.pop %v3166
  %v3694 = vtanh.pop %v3169
  %v3695 = vtanh.pop %v3174
  %v3696 = vtanh.pop %v3177
  %v3697 = vtanh.pop %v3182
  %v3698 = vtanh.pop %v3185
  %v3699 = vtanh.pop %v3190
  %v3700 = vtanh.pop %v3193
  %v3701 = vtanh.pop %v3198
  %v3702 = vtanh.pop %v3201
  %v3703 = vtanh.pop %v3206
  %v3704 = vtanh.pop %v3209
  %v3705 = vtanh.pop %v3214
  %v3706 = vtanh.pop %v3217
  %v3707 = vtanh.pop %v3222
  %v3708 = vtanh.pop %v3225
  %v3709 = vtanh.pop %v3230
  %v3710 = vtanh.pop %v3233
  %v3711 = vtanh.pop %v3238
  %v3712 = vtanh.pop %v3241
  %v3713 = vtanh.pop %v3246
  %v3714 = vtanh.pop %v3249
  %v3715 = vtanh.pop %v3254
  %v3716 = vtanh.pop %v3257
  %v3717 = vtanh.pop %v3262
  %v3718 = vtanh.pop %v3265
  %v3719 = vtanh.pop %v3270
  %v3720 = vtanh.pop %v3273
  %v3721 = vtanh.pop %v3278
  %v3722 = vtanh.pop %v3281
  %v3723 = vtanh.pop %v3286
  %v3724 = vtanh.pop %v3289
  %v3725 = vtanh.pop %v3294
  %v3726 = vtanh.pop %v3297
  %v3727 = vtanh.pop %v3302
  %v3728 = vtanh.pop %v3305
  %v3729 = vtanh.pop %v3310
  %v3730 = vtanh.pop %v3313
  %v3731 = vtanh.pop %v3318
  %v3732 = vtanh.pop %v3321
  %v3733 = vtanh.pop %v3326
  %v3734 = vtanh.pop %v3329
  %v3735 = vtanh.pop %v3334
  %v3736 = vtanh.pop %v3337
  %v3737 = vtanh.pop %v3342
  %v3738 = vtanh.pop %v3345
  %v3739 = vtanh.pop %v3350
  %v3740 = vtanh.pop %v3353
  %v3741 = vtanh.pop %v3358
  %v3742 = vtanh.pop %v3361
  %v3743 = vtanh.pop %v3366
  %v3744 = vtanh.pop %v3369
  %v3745 = vtanh.pop %v3374
  %v3746 = vtanh.pop %v3377
  %v3747 = vtanh.pop %v3382
  %v3748 = vtanh.pop %v3385
  %v3749 = vtanh.pop %v3390
  %v3750 = vtanh.pop %v3393
  %v3751 = vtanh.pop %v3398
  %v3752 = vtanh.pop %v3401
  %v3753 = vtanh.pop %v3406
  %v3754 = vtanh.pop %v3409
  %v3755 = vtanh.pop %v3414
  %v3756 = vtanh.pop %v3417
  %v3757 = vtanh.pop %v3422
  %v3758 = vtanh.pop %v3425
  %v3759 = vtanh.pop %v3430
  %v3760 = vtanh.pop %v3433
  %v3761 = vtanh.pop %v3438
  %v3762 = vtanh.pop %v3441
  %v3763 = vtanh.pop %v3446
  %v3764 = vtanh.pop %v3449
  %v3765 = vtanh.pop %v3454
  %v3766 = vtanh.pop %v3457
  %v3767 = vtanh.pop %v3462
  %v3768 = vtanh.pop %v3465
  %v3769 = vtanh.pop %v3470
  %v3770 = vtanh.pop %v3473
  %v3771 = vtanh.pop %v3478
  %v3772 = vtanh.pop %v3481
  %v3773 = vtanh.pop %v3486
  %v3774 = vtanh.pop %v3489
  %v3775 = vtanh.pop %v3494
  %v3776 = vtanh.pop %v3497
  %v3777 = vtanh.pop %v3502
  %v3778 = vtanh.pop %v3505
  %v3779 = vtanh.pop %v3510
  %v3780 = vtanh.pop %v3513
  %v3781 = vtanh.pop %v3518
  %v3782 = vtanh.pop %v3521
  %v3783 = vtanh.pop %v3526
  %v3784 = vtanh.pop %v3529
  %v3785 = vtanh.pop %v3534
  %v3786 = vtanh.pop %v3537
  %v3787 = vtanh.pop %v3542
  %v3788 = vtanh.pop %v3545
  %v3789 = vtanh.pop %v3550
  %v3790 = vtanh.pop %v3553
  %v3791 = vtanh.pop %v3558
  %v3792 = vtanh.pop %v3561
  %v3793 = vtanh.pop %v3566
  %v3794 = vtanh.pop %v3569
  %v3795 = vtanh.pop %v3574
  %v3796 = vtanh.pop %v3577
  %v3797 = vtanh.pop %v3582
  %v3798 = vtanh.pop %v3585
  %v3799 = vtanh.pop %v3590
  %v3800 = vtanh.pop %v3593
  %v3801 = vtanh.pop %v3598
  %v3802 = vtanh.pop %v3601
  %v3803 = vtanh.pop %v3606
  %v3804 = vtanh.pop %v3609
  %v3805 = vtanh.pop %v3614
  %v3806 = vtanh.pop %v3617
  %v3807 = vtanh.pop %v3622
  %v3808 = vtanh.pop %v3625
  %v3809 = vtanh.pop %v3630
  %v3810 = vtanh.pop %v3633
  %v3811 = vtanh.pop %v3638
  %v3812 = vtanh.pop %v3641
  %v3813 = vtanh.pop %v3646
  %v3814 = vtanh.pop %v3649
  %v3815 = vtanh.pop %v3654
  %v3816 = vtanh.pop %v3657
  %v3817 = vtanh.pop %v3662
  %v3818 = vtanh.pop %v3665
  %v3819 = vtanh.pop %v3670
  %v3820 = vpack.c.bf16 %v3676, %v3675
  %v3821 = vpack.c.bf16 %v3678, %v3677
  %v3822 = vpack.c.bf16 %v3680, %v3679
  %v3823 = vpack.c.bf16 %v3682, %v3681
  %v3824 = vpack.c.bf16 %v3684, %v3683
  %v3825 = vpack.c.bf16 %v3686, %v3685
  %v3826 = vpack.c.bf16 %v3688, %v3687
  %v3827 = vpack.c.bf16 %v3690, %v3689
  %v3828 = vpack.c.bf16 %v3692, %v3691
  %v3829 = vpack.c.bf16 %v3694, %v3693
  %v3830 = vpack.c.bf16 %v3696, %v3695
  %v3831 = vpack.c.bf16 %v3698, %v3697
  %v3832 = vpack.c.bf16 %v3700, %v3699
  %v3833 = vpack.c.bf16 %v3702, %v3701
  %v3834 = vpack.c.bf16 %v3704, %v3703
  %v3835 = vpack.c.bf16 %v3706, %v3705
  %v3836 = vpack.c.bf16 %v3708, %v3707
  %v3837 = vpack.c.bf16 %v3710, %v3709
  %v3838 = vpack.c.bf16 %v3712, %v3711
  %v3839 = vpack.c.bf16 %v3714, %v3713
  %v3840 = vpack.c.bf16 %v3716, %v3715
  %v3841 = vpack.c.bf16 %v3718, %v3717
  %v3842 = vpack.c.bf16 %v3720, %v3719
  %v3843 = vpack.c.bf16 %v3722, %v3721
  %v3844 = vpack.c.bf16 %v3724, %v3723
  %v3845 = vpack.c.bf16 %v3726, %v3725
  %v3846 = vpack.c.bf16 %v3728, %v3727
  %v3847 = vpack.c.bf16 %v3730, %v3729
  %v3848 = vpack.c.bf16 %v3732, %v3731
  %v3849 = vpack.c.bf16 %v3734, %v3733
  %v3850 = vpack.c.bf16 %v3736, %v3735
  %v3851 = vpack.c.bf16 %v3738, %v3737
  %v3852 = vpack.c.bf16 %v3740, %v3739
  %v3853 = vpack.c.bf16 %v3742, %v3741
  %v3854 = vpack.c.bf16 %v3744, %v3743
  %v3855 = vpack.c.bf16 %v3746, %v3745
  %v3856 = vpack.c.bf16 %v3748, %v3747
  %v3857 = vpack.c.bf16 %v3750, %v3749
  %v3858 = vpack.c.bf16 %v3752, %v3751
  %v3859 = vpack.c.bf16 %v3754, %v3753
  %v3860 = vpack.c.bf16 %v3756, %v3755
  %v3861 = vpack.c.bf16 %v3758, %v3757
  %v3862 = vpack.c.bf16 %v3760, %v3759
  %v3863 = vpack.c.bf16 %v3762, %v3761
  %v3864 = vpack.c.bf16 %v3764, %v3763
  %v3865 = vpack.c.bf16 %v3766, %v3765
  %v3866 = vpack.c.bf16 %v3768, %v3767
  %v3867 = vpack.c.bf16 %v3770, %v3769
  %v3868 = vpack.c.bf16 %v3772, %v3771
  %v3869 = vpack.c.bf16 %v3774, %v3773
  %v3870 = vpack.c.bf16 %v3776, %v3775
  %v3871 = vpack.c.bf16 %v3778, %v3777
  %v3872 = vpack.c.bf16 %v3780, %v3779
  %v3873 = vpack.c.bf16 %v3782, %v3781
  %v3874 = vpack.c.bf16 %v3784, %v3783
  %v3875 = vpack.c.bf16 %v3786, %v3785
  %v3876 = vpack.c.bf16 %v3788, %v3787
  %v3877 = vpack.c.bf16 %v3790, %v3789
  %v3878 = vpack.c.bf16 %v3792, %v3791
  %v3879 = vpack.c.bf16 %v3794, %v3793
  %v3880 = vpack.c.bf16 %v3796, %v3795
  %v3881 = vpack.c.bf16 %v3798, %v3797
  %v3882 = vpack.c.bf16 %v3800, %v3799
  %v3883 = vpack.c.bf16 %v3802, %v3801
  %v3884 = vpack.c.bf16 %v3804, %v3803
  %v3885 = vpack.c.bf16 %v3806, %v3805
  %v3886 = vpack.c.bf16 %v3808, %v3807
  %v3887 = vpack.c.bf16 %v3810, %v3809
  %v3888 = vpack.c.bf16 %v3812, %v3811
  %v3889 = vpack.c.bf16 %v3814, %v3813
  %v3890 = vpack.c.bf16 %v3816, %v3815
  %v3891 = vpack.c.bf16 %v3818, %v3817
  %v3892 = vpack.c.bf16 %v3819, %v3819
  %v3966 = vunpack.c.l.b16 %v3820
  %v3967 = vunpack.c.h.b16 %v3820
  %v3968 = vunpack.c.l.b16 %v3821
  %v3969 = vunpack.c.h.b16 %v3821
  %v3970 = vunpack.c.l.b16 %v3822
  %v3971 = vunpack.c.h.b16 %v3822
  %v3972 = vunpack.c.l.b16 %v3823
  %v3973 = vunpack.c.h.b16 %v3823
  %v3974 = vunpack.c.l.b16 %v3824
  %v3975 = vunpack.c.h.b16 %v3824
  %v3976 = vunpack.c.l.b16 %v3825
  %v3977 = vunpack.c.h.b16 %v3825
  %v3978 = vunpack.c.l.b16 %v3826
  %v3979 = vunpack.c.h.b16 %v3826
  %v3980 = vunpack.c.l.b16 %v3827
  %v3981 = vunpack.c.h.b16 %v3827
  %v3982 = vunpack.c.l.b16 %v3828
  %v3983 = vunpack.c.h.b16 %v3828
  %v3984 = vunpack.c.l.b16 %v3829
  %v3985 = vunpack.c.h.b16 %v3829
  %v3986 = vunpack.c.l.b16 %v3830
  %v3987 = vunpack.c.h.b16 %v3830
  %v3988 = vunpack.c.l.b16 %v3831
  %v3989 = vunpack.c.h.b16 %v3831
  %v3990 = vunpack.c.l.b16 %v3832
  %v3991 = vunpack.c.h.b16 %v3832
  %v3992 = vunpack.c.l.b16 %v3833
  %v3993 = vunpack.c.h.b16 %v3833
  %v3994 = vunpack.c.l.b16 %v3834
  %v3995 = vunpack.c.h.b16 %v3834
  %v3996 = vunpack.c.l.b16 %v3835
  %v3997 = vunpack.c.h.b16 %v3835
  %v3998 = vunpack.c.l.b16 %v3836
  %v3999 = vunpack.c.h.b16 %v3836
  %v4000 = vunpack.c.l.b16 %v3837
  %v4001 = vunpack.c.h.b16 %v3837
  %v4002 = vunpack.c.l.b16 %v3838
  %v4003 = vunpack.c.h.b16 %v3838
  %v4004 = vunpack.c.l.b16 %v3839
  %v4005 = vunpack.c.h.b16 %v3839
  %v4006 = vunpack.c.l.b16 %v3840
  %v4007 = vunpack.c.h.b16 %v3840
  %v4008 = vunpack.c.l.b16 %v3841
  %v4009 = vunpack.c.h.b16 %v3841
  %v4010 = vunpack.c.l.b16 %v3842
  %v4011 = vunpack.c.h.b16 %v3842
  %v4012 = vunpack.c.l.b16 %v3843
  %v4013 = vunpack.c.h.b16 %v3843
  %v4014 = vunpack.c.l.b16 %v3844
  %v4015 = vunpack.c.h.b16 %v3844
  %v4016 = vunpack.c.l.b16 %v3845
  %v4017 = vunpack.c.h.b16 %v3845
  %v4018 = vunpack.c.l.b16 %v3846
  %v4019 = vunpack.c.h.b16 %v3846
  %v4020 = vunpack.c.l.b16 %v3847
  %v4021 = vunpack.c.h.b16 %v3847
  %v4022 = vunpack.c.l.b16 %v3848
  %v4023 = vunpack.c.h.b16 %v3848
  %v4024 = vunpack.c.l.b16 %v3849
  %v4025 = vunpack.c.h.b16 %v3849
  %v4026 = vunpack.c.l.b16 %v3850
  %v4027 = vunpack.c.h.b16 %v3850
  %v4028 = vunpack.c.l.b16 %v3851
  %v4029 = vunpack.c.h.b16 %v3851
  %v4030 = vunpack.c.l.b16 %v3852
  %v4031 = vunpack.c.h.b16 %v3852
  %v4032 = vunpack.c.l.b16 %v3853
  %v4033 = vunpack.c.h.b16 %v3853
  %v4034 = vunpack.c.l.b16 %v3854
  %v4035 = vunpack.c.h.b16 %v3854
  %v4036 = vunpack.c.l.b16 %v3855
  %v4037 = vunpack.c.h.b16 %v3855
  %v4038 = vunpack.c.l.b16 %v3856
  %v4039 = vunpack.c.h.b16 %v3856
  %v4040 = vunpack.c.l.b16 %v3857
  %v4041 = vunpack.c.h.b16 %v3857
  %v4042 = vunpack.c.l.b16 %v3858
  %v4043 = vunpack.c.h.b16 %v3858
  %v4044 = vunpack.c.l.b16 %v3859
  %v4045 = vunpack.c.h.b16 %v3859
  %v4046 = vunpack.c.l.b16 %v3860
  %v4047 = vunpack.c.h.b16 %v3860
  %v4048 = vunpack.c.l.b16 %v3861
  %v4049 = vunpack.c.h.b16 %v3861
  %v4050 = vunpack.c.l.b16 %v3862
  %v4051 = vunpack.c.h.b16 %v3862
  %v4052 = vunpack.c.l.b16 %v3863
  %v4053 = vunpack.c.h.b16 %v3863
  %v4054 = vunpack.c.l.b16 %v3864
  %v4055 = vunpack.c.h.b16 %v3864
  %v4056 = vunpack.c.l.b16 %v3865
  %v4057 = vunpack.c.h.b16 %v3865
  %v4058 = vunpack.c.l.b16 %v3866
  %v4059 = vunpack.c.h.b16 %v3866
  %v4060 = vunpack.c.l.b16 %v3867
  %v4061 = vunpack.c.h.b16 %v3867
  %v4062 = vunpack.c.l.b16 %v3868
  %v4063 = vunpack.c.h.b16 %v3868
  %v4064 = vunpack.c.l.b16 %v3869
  %v4065 = vunpack.c.h.b16 %v3869
  %v4066 = vunpack.c.l.b16 %v3870
  %v4067 = vunpack.c.h.b16 %v3870
  %v4068 = vunpack.c.l.b16 %v3871
  %v4069 = vunpack.c.h.b16 %v3871
  %v4070 = vunpack.c.l.b16 %v3872
  %v4071 = vunpack.c.h.b16 %v3872
  %v4072 = vunpack.c.l.b16 %v3873
  %v4073 = vunpack.c.h.b16 %v3873
  %v4074 = vunpack.c.l.b16 %v3874
  %v4075 = vunpack.c.h.b16 %v3874
  %v4076 = vunpack.c.l.b16 %v3875
  %v4077 = vunpack.c.h.b16 %v3875
  %v4078 = vunpack.c.l.b16 %v3876
  %v4079 = vunpack.c.h.b16 %v3876
  %v4080 = vunpack.c.l.b16 %v3877
  %v4081 = vunpack.c.h.b16 %v3877
  %v4082 = vunpack.c.l.b16 %v3878
  %v4083 = vunpack.c.h.b16 %v3878
  %v4084 = vunpack.c.l.b16 %v3879
  %v4085 = vunpack.c.h.b16 %v3879
  %v4086 = vunpack.c.l.b16 %v3880
  %v4087 = vunpack.c.h.b16 %v3880
  %v4088 = vunpack.c.l.b16 %v3881
  %v4089 = vunpack.c.h.b16 %v3881
  %v4090 = vunpack.c.l.b16 %v3882
  %v4091 = vunpack.c.h.b16 %v3882
  %v4092 = vunpack.c.l.b16 %v3883
  %v4093 = vunpack.c.h.b16 %v3883
  %v4094 = vunpack.c.l.b16 %v3884
  %v4095 = vunpack.c.h.b16 %v3884
  %v4096 = vunpack.c.l.b16 %v3885
  %v4097 = vunpack.c.h.b16 %v3885
  %v4098 = vunpack.c.l.b16 %v3886
  %v4099 = vunpack.c.h.b16 %v3886
  %v4100 = vunpack.c.l.b16 %v3887
  %v4101 = vunpack.c.h.b16 %v3887
  %v4102 = vunpack.c.l.b16 %v3888
  %v4103 = vunpack.c.h.b16 %v3888
  %v4104 = vunpack.c.l.b16 %v3889
  %v4105 = vunpack.c.h.b16 %v3889
  %v4106 = vunpack.c.l.b16 %v3890
  %v4107 = vunpack.c.h.b16 %v3890
  %v4108 = vunpack.c.l.b16 %v3891
  %v4109 = vunpack.c.h.b16 %v3891
  %v4110 = vunpack.c.l.b16 %v3892
  %v4111 = vpack.c.b16 %v3966, %v3966
  %v4112 = vpack.c.b16 %v3967, %v3967
  %v4113 = vpack.c.b16 %v3968, %v3968
  %v4114 = vpack.c.b16 %v3969, %v3969
  %v4115 = vpack.c.b16 %v3970, %v3970
  %v4116 = vpack.c.b16 %v3971, %v3971
  %v4117 = vpack.c.b16 %v3972, %v3972
  %v4118 = vpack.c.b16 %v3973, %v3973
  %v4119 = vpack.c.b16 %v3974, %v3974
  %v4120 = vpack.c.b16 %v3975, %v3975
  %v4121 = vpack.c.b16 %v3976, %v3976
  %v4122 = vpack.c.b16 %v3977, %v3977
  %v4123 = vpack.c.b16 %v3978, %v3978
  %v4124 = vpack.c.b16 %v3979, %v3979
  %v4125 = vpack.c.b16 %v3980, %v3980
  %v4126 = vpack.c.b16 %v3981, %v3981
  %v4127 = vpack.c.b16 %v3982, %v3982
  %v4128 = vpack.c.b16 %v3983, %v3983
  %v4129 = vpack.c.b16 %v3984, %v3984
  %v4130 = vpack.c.b16 %v3985, %v3985
  %v4131 = vpack.c.b16 %v3986, %v3986
  %v4132 = vpack.c.b16 %v3987, %v3987
  %v4133 = vpack.c.b16 %v3988, %v3988
  %v4134 = vpack.c.b16 %v3989, %v3989
  %v4135 = vpack.c.b16 %v3990, %v3990
  %v4136 = vpack.c.b16 %v3991, %v3991
  %v4137 = vpack.c.b16 %v3992, %v3992
  %v4138 = vpack.c.b16 %v3993, %v3993
  %v4139 = vpack.c.b16 %v3994, %v3994
  %v4140 = vpack.c.b16 %v3995, %v3995
  %v4141 = vpack.c.b16 %v3996, %v3996
  %v4142 = vpack.c.b16 %v3997, %v3997
  %v4143 = vpack.c.b16 %v3998, %v3998
  %v4144 = vpack.c.b16 %v3999, %v3999
  %v4145 = vpack.c.b16 %v4000, %v4000
  %v4146 = vpack.c.b16 %v4001, %v4001
  %v4147 = vpack.c.b16 %v4002, %v4002
  %v4148 = vpack.c.b16 %v4003, %v4003
  %v4149 = vpack.c.b16 %v4004, %v4004
  %v4150 = vpack.c.b16 %v4005, %v4005
  %v4151 = vpack.c.b16 %v4006, %v4006
  %v4152 = vpack.c.b16 %v4007, %v4007
  %v4153 = vpack.c.b16 %v4008, %v4008
  %v4154 = vpack.c.b16 %v4009, %v4009
  %v4155 = vpack.c.b16 %v4010, %v4010
  %v4156 = vpack.c.b16 %v4011, %v4011
  %v4157 = vpack.c.b16 %v4012, %v4012
  %v4158 = vpack.c.b16 %v4013, %v4013
  %v4159 = vpack.c.b16 %v4014, %v4014
  %v4160 = vpack.c.b16 %v4015, %v4015
  %v4161 = vpack.c.b16 %v4016, %v4016
  %v4162 = vpack.c.b16 %v4017, %v4017
  %v4163 = vpack.c.b16 %v4018, %v4018
  %v4164 = vpack.c.b16 %v4019, %v4019
  %v4165 = vpack.c.b16 %v4020, %v4020
  %v4166 = vpack.c.b16 %v4021, %v4021
  %v4167 = vpack.c.b16 %v4022, %v4022
  %v4168 = vpack.c.b16 %v4023, %v4023
  %v4169 = vpack.c.b16 %v4024, %v4024
  %v4170 = vpack.c.b16 %v4025, %v4025
  %v4171 = vpack.c.b16 %v4026, %v4026
  %v4172 = vpack.c.b16 %v4027, %v4027
  %v4173 = vpack.c.b16 %v4028, %v4028
  %v4174 = vpack.c.b16 %v4029, %v4029
  %v4175 = vpack.c.b16 %v4030, %v4030
  %v4176 = vpack.c.b16 %v4031, %v4031
  %v4177 = vpack.c.b16 %v4032, %v4032
  %v4178 = vpack.c.b16 %v4033, %v4033
  %v4179 = vpack.c.b16 %v4034, %v4034
  %v4180 = vpack.c.b16 %v4035, %v4035
  %v4181 = vpack.c.b16 %v4036, %v4036
  %v4182 = vpack.c.b16 %v4037, %v4037
  %v4183 = vpack.c.b16 %v4038, %v4038
  %v4184 = vpack.c.b16 %v4039, %v4039
  %v4185 = vpack.c.b16 %v4040, %v4040
  %v4186 = vpack.c.b16 %v4041, %v4041
  %v4187 = vpack.c.b16 %v4042, %v4042
  %v4188 = vpack.c.b16 %v4043, %v4043
  %v4189 = vpack.c.b16 %v4044, %v4044
  %v4190 = vpack.c.b16 %v4045, %v4045
  %v4191 = vpack.c.b16 %v4046, %v4046
  %v4192 = vpack.c.b16 %v4047, %v4047
  %v4193 = vpack.c.b16 %v4048, %v4048
  %v4194 = vpack.c.b16 %v4049, %v4049
  %v4195 = vpack.c.b16 %v4050, %v4050
  %v4196 = vpack.c.b16 %v4051, %v4051
  %v4197 = vpack.c.b16 %v4052, %v4052
  %v4198 = vpack.c.b16 %v4053, %v4053
  %v4199 = vpack.c.b16 %v4054, %v4054
  %v4200 = vpack.c.b16 %v4055, %v4055
  %v4201 = vpack.c.b16 %v4056, %v4056
  %v4202 = vpack.c.b16 %v4057, %v4057
  %v4203 = vpack.c.b16 %v4058, %v4058
  %v4204 = vpack.c.b16 %v4059, %v4059
  %v4205 = vpack.c.b16 %v4060, %v4060
  %v4206 = vpack.c.b16 %v4061, %v4061
  %v4207 = vpack.c.b16 %v4062, %v4062
  %v4208 = vpack.c.b16 %v4063, %v4063
  %v4209 = vpack.c.b16 %v4064, %v4064
  %v4210 = vpack.c.b16 %v4065, %v4065
  %v4211 = vpack.c.b16 %v4066, %v4066
  %v4212 = vpack.c.b16 %v4067, %v4067
  %v4213 = vpack.c.b16 %v4068, %v4068
  %v4214 = vpack.c.b16 %v4069, %v4069
  %v4215 = vpack.c.b16 %v4070, %v4070
  %v4216 = vpack.c.b16 %v4071, %v4071
  %v4217 = vpack.c.b16 %v4072, %v4072
  %v4218 = vpack.c.b16 %v4073, %v4073
  %v4219 = vpack.c.b16 %v4074, %v4074
  %v4220 = vpack.c.b16 %v4075, %v4075
  %v4221 = vpack.c.b16 %v4076, %v4076
  %v4222 = vpack.c.b16 %v4077, %v4077
  %v4223 = vpack.c.b16 %v4078, %v4078
  %v4224 = vpack.c.b16 %v4079, %v4079
  %v4225 = vpack.c.b16 %v4080, %v4080
  %v4226 = vpack.c.b16 %v4081, %v4081
  %v4227 = vpack.c.b16 %v4082, %v4082
  %v4228 = vpack.c.b16 %v4083, %v4083
  %v4229 = vpack.c.b16 %v4084, %v4084
  %v4230 = vpack.c.b16 %v4085, %v4085
  %v4231 = vpack.c.b16 %v4086, %v4086
  %v4232 = vpack.c.b16 %v4087, %v4087
  %v4233 = vpack.c.b16 %v4088, %v4088
  %v4234 = vpack.c.b16 %v4089, %v4089
  %v4235 = vpack.c.b16 %v4090, %v4090
  %v4236 = vpack.c.b16 %v4091, %v4091
  %v4237 = vpack.c.b16 %v4092, %v4092
  %v4238 = vpack.c.b16 %v4093, %v4093
  %v4239 = vpack.c.b16 %v4094, %v4094
  %v4240 = vpack.c.b16 %v4095, %v4095
  %v4241 = vpack.c.b16 %v4096, %v4096
  %v4242 = vpack.c.b16 %v4097, %v4097
  %v4243 = vpack.c.b16 %v4098, %v4098
  %v4244 = vpack.c.b16 %v4099, %v4099
  %v4245 = vpack.c.b16 %v4100, %v4100
  %v4246 = vpack.c.b16 %v4101, %v4101
  %v4247 = vpack.c.b16 %v4102, %v4102
  %v4248 = vpack.c.b16 %v4103, %v4103
  %v4249 = vpack.c.b16 %v4104, %v4104
  %v4250 = vpack.c.b16 %v4105, %v4105
  %v4251 = vpack.c.b16 %v4106, %v4106
  %v4252 = vpack.c.b16 %v4107, %v4107
  %v4253 = vpack.c.b16 %v4108, %v4108
  %v4254 = vpack.c.b16 %v4109, %v4109
  %v4255 = vpack.c.b16 %v4110, %v4110
  %4401 = vst [vmem:[%s6] sm:$0xf] %v4111
  %4402 = vst [vmem:[%s6 + $0x4] sm:$0xf] %v4112
  %4403 = vst [vmem:[%s6 + $0x8] sm:$0xf] %v4113
  %4404 = vst [vmem:[%s6 + $0xc] sm:$0xf] %v4114
  %4405 = vst [vmem:[%s6 + $0x10] sm:$0xf] %v4115
  %4406 = vst [vmem:[%s6 + $0x14] sm:$0xf] %v4116
  %4407 = vst [vmem:[%s6 + $0x18] sm:$0xf] %v4117
  %4408 = vst [vmem:[%s6 + $0x1c] sm:$0xf] %v4118
  %4409 = vst [vmem:[%s6 + $0x20] sm:$0xf] %v4119
  %4410 = vst [vmem:[%s6 + $0x24] sm:$0xf] %v4120
  %4411 = vst [vmem:[%s6 + $0x28] sm:$0xf] %v4121
  %4412 = vst [vmem:[%s6 + $0x2c] sm:$0xf] %v4122
  %4413 = vst [vmem:[%s6 + $0x30] sm:$0xf] %v4123
  %4414 = vst [vmem:[%s6 + $0x34] sm:$0xf] %v4124
  %4415 = vst [vmem:[%s6 + $0x38] sm:$0xf] %v4125
  %4416 = vst [vmem:[%s6 + $0x3c] sm:$0xf] %v4126
  %4417 = vst [vmem:[%s6 + $0x40] sm:$0xf] %v4127
  %4418 = vst [vmem:[%s6 + $0x44] sm:$0xf] %v4128
  %4419 = vst [vmem:[%s6 + $0x48] sm:$0xf] %v4129
  %4420 = vst [vmem:[%s6 + $0x4c] sm:$0xf] %v4130
  %4421 = vst [vmem:[%s6 + $0x50] sm:$0xf] %v4131
  %4422 = vst [vmem:[%s6 + $0x54] sm:$0xf] %v4132
  %4423 = vst [vmem:[%s6 + $0x58] sm:$0xf] %v4133
  %4424 = vst [vmem:[%s6 + $0x5c] sm:$0xf] %v4134
  %4425 = vst [vmem:[%s6 + $0x60] sm:$0xf] %v4135
  %4426 = vst [vmem:[%s6 + $0x64] sm:$0xf] %v4136
  %4427 = vst [vmem:[%s6 + $0x68] sm:$0xf] %v4137
  %4428 = vst [vmem:[%s6 + $0x6c] sm:$0xf] %v4138
  %4429 = vst [vmem:[%s6 + $0x70] sm:$0xf] %v4139
  %4430 = vst [vmem:[%s6 + $0x74] sm:$0xf] %v4140
  %4431 = vst [vmem:[%s6 + $0x78] sm:$0xf] %v4141
  %4432 = vst [vmem:[%s6 + $0x7c] sm:$0xf] %v4142
  %4433 = vst [vmem:[%s6 + $0x80] sm:$0xf] %v4143
  %4434 = vst [vmem:[%s6 + $0x84] sm:$0xf] %v4144
  %4435 = vst [vmem:[%s6 + $0x88] sm:$0xf] %v4145
  %4436 = vst [vmem:[%s6 + $0x8c] sm:$0xf] %v4146
  %4437 = vst [vmem:[%s6 + $0x90] sm:$0xf] %v4147
  %4438 = vst [vmem:[%s6 + $0x94] sm:$0xf] %v4148
  %4439 = vst [vmem:[%s6 + $0x98] sm:$0xf] %v4149
  %4440 = vst [vmem:[%s6 + $0x9c] sm:$0xf] %v4150
  %4441 = vst [vmem:[%s6 + $0xa0] sm:$0xf] %v4151
  %4442 = vst [vmem:[%s6 + $0xa4] sm:$0xf] %v4152
  %4443 = vst [vmem:[%s6 + $0xa8] sm:$0xf] %v4153
  %4444 = vst [vmem:[%s6 + $0xac] sm:$0xf] %v4154
  %4445 = vst [vmem:[%s6 + $0xb0] sm:$0xf] %v4155
  %4446 = vst [vmem:[%s6 + $0xb4] sm:$0xf] %v4156
  %4447 = vst [vmem:[%s6 + $0xb8] sm:$0xf] %v4157
  %4448 = vst [vmem:[%s6 + $0xbc] sm:$0xf] %v4158
  %4449 = vst [vmem:[%s6 + $0xc0] sm:$0xf] %v4159
  %4450 = vst [vmem:[%s6 + $0xc4] sm:$0xf] %v4160
  %4451 = vst [vmem:[%s6 + $0xc8] sm:$0xf] %v4161
  %4452 = vst [vmem:[%s6 + $0xcc] sm:$0xf] %v4162
  %4453 = vst [vmem:[%s6 + $0xd0] sm:$0xf] %v4163
  %4454 = vst [vmem:[%s6 + $0xd4] sm:$0xf] %v4164
  %4455 = vst [vmem:[%s6 + $0xd8] sm:$0xf] %v4165
  %4456 = vst [vmem:[%s6 + $0xdc] sm:$0xf] %v4166
  %4457 = vst [vmem:[%s6 + $0xe0] sm:$0xf] %v4167
  %4458 = vst [vmem:[%s6 + $0xe4] sm:$0xf] %v4168
  %4459 = vst [vmem:[%s6 + $0xe8] sm:$0xf] %v4169
  %4460 = vst [vmem:[%s6 + $0xec] sm:$0xf] %v4170
  %4461 = vst [vmem:[%s6 + $0xf0] sm:$0xf] %v4171
  %4462 = vst [vmem:[%s6 + $0xf4] sm:$0xf] %v4172
  %4463 = vst [vmem:[%s6 + $0xf8] sm:$0xf] %v4173
  %4464 = vst [vmem:[%s6 + $0xfc] sm:$0xf] %v4174
  %4465 = vst [vmem:[%s6 + $0x100] sm:$0xf] %v4175
  %4466 = vst [vmem:[%s6 + $0x104] sm:$0xf] %v4176
  %4467 = vst [vmem:[%s6 + $0x108] sm:$0xf] %v4177
  %4468 = vst [vmem:[%s6 + $0x10c] sm:$0xf] %v4178
  %4469 = vst [vmem:[%s6 + $0x110] sm:$0xf] %v4179
  %4470 = vst [vmem:[%s6 + $0x114] sm:$0xf] %v4180
  %4471 = vst [vmem:[%s6 + $0x118] sm:$0xf] %v4181
  %4472 = vst [vmem:[%s6 + $0x11c] sm:$0xf] %v4182
  %4473 = vst [vmem:[%s6 + $0x120] sm:$0xf] %v4183
  %4474 = vst [vmem:[%s6 + $0x124] sm:$0xf] %v4184
  %4475 = vst [vmem:[%s6 + $0x128] sm:$0xf] %v4185
  %4476 = vst [vmem:[%s6 + $0x12c] sm:$0xf] %v4186
  %4477 = vst [vmem:[%s6 + $0x130] sm:$0xf] %v4187
  %4478 = vst [vmem:[%s6 + $0x134] sm:$0xf] %v4188
  %4479 = vst [vmem:[%s6 + $0x138] sm:$0xf] %v4189
  %4480 = vst [vmem:[%s6 + $0x13c] sm:$0xf] %v4190
  %4481 = vst [vmem:[%s6 + $0x140] sm:$0xf] %v4191
  %4482 = vst [vmem:[%s6 + $0x144] sm:$0xf] %v4192
  %4483 = vst [vmem:[%s6 + $0x148] sm:$0xf] %v4193
  %4484 = vst [vmem:[%s6 + $0x14c] sm:$0xf] %v4194
  %4485 = vst [vmem:[%s6 + $0x150] sm:$0xf] %v4195
  %4486 = vst [vmem:[%s6 + $0x154] sm:$0xf] %v4196
  %4487 = vst [vmem:[%s6 + $0x158] sm:$0xf] %v4197
  %4488 = vst [vmem:[%s6 + $0x15c] sm:$0xf] %v4198
  %4489 = vst [vmem:[%s6 + $0x160] sm:$0xf] %v4199
  %4490 = vst [vmem:[%s6 + $0x164] sm:$0xf] %v4200
  %4491 = vst [vmem:[%s6 + $0x168] sm:$0xf] %v4201
  %4492 = vst [vmem:[%s6 + $0x16c] sm:$0xf] %v4202
  %4493 = vst [vmem:[%s6 + $0x170] sm:$0xf] %v4203
  %4494 = vst [vmem:[%s6 + $0x174] sm:$0xf] %v4204
  %4495 = vst [vmem:[%s6 + $0x178] sm:$0xf] %v4205
  %4496 = vst [vmem:[%s6 + $0x17c] sm:$0xf] %v4206
  %4497 = vst [vmem:[%s6 + $0x180] sm:$0xf] %v4207
  %4498 = vst [vmem:[%s6 + $0x184] sm:$0xf] %v4208
  %4499 = vst [vmem:[%s6 + $0x188] sm:$0xf] %v4209
  %4500 = vst [vmem:[%s6 + $0x18c] sm:$0xf] %v4210
  %4501 = vst [vmem:[%s6 + $0x190] sm:$0xf] %v4211
  %4502 = vst [vmem:[%s6 + $0x194] sm:$0xf] %v4212
  %4503 = vst [vmem:[%s6 + $0x198] sm:$0xf] %v4213
  %4504 = vst [vmem:[%s6 + $0x19c] sm:$0xf] %v4214
  %4505 = vst [vmem:[%s6 + $0x1a0] sm:$0xf] %v4215
  %4506 = vst [vmem:[%s6 + $0x1a4] sm:$0xf] %v4216
  %4507 = vst [vmem:[%s6 + $0x1a8] sm:$0xf] %v4217
  %4508 = vst [vmem:[%s6 + $0x1ac] sm:$0xf] %v4218
  %4509 = vst [vmem:[%s6 + $0x1b0] sm:$0xf] %v4219
  %4510 = vst [vmem:[%s6 + $0x1b4] sm:$0xf] %v4220
  %4511 = vst [vmem:[%s6 + $0x1b8] sm:$0xf] %v4221
  %4512 = vst [vmem:[%s6 + $0x1bc] sm:$0xf] %v4222
  %4513 = vst [vmem:[%s6 + $0x1c0] sm:$0xf] %v4223
  %4514 = vst [vmem:[%s6 + $0x1c4] sm:$0xf] %v4224
  %4515 = vst [vmem:[%s6 + $0x1c8] sm:$0xf] %v4225
  %4516 = vst [vmem:[%s6 + $0x1cc] sm:$0xf] %v4226
  %4517 = vst [vmem:[%s6 + $0x1d0] sm:$0xf] %v4227
  %4518 = vst [vmem:[%s6 + $0x1d4] sm:$0xf] %v4228
  %4519 = vst [vmem:[%s6 + $0x1d8] sm:$0xf] %v4229
  %4520 = vst [vmem:[%s6 + $0x1dc] sm:$0xf] %v4230
  %4521 = vst [vmem:[%s6 + $0x1e0] sm:$0xf] %v4231
  %4522 = vst [vmem:[%s6 + $0x1e4] sm:$0xf] %v4232
  %4523 = vst [vmem:[%s6 + $0x1e8] sm:$0xf] %v4233
  %4524 = vst [vmem:[%s6 + $0x1ec] sm:$0xf] %v4234
  %4525 = vst [vmem:[%s6 + $0x1f0] sm:$0xf] %v4235
  %4526 = vst [vmem:[%s6 + $0x1f4] sm:$0xf] %v4236
  %4527 = vst [vmem:[%s6 + $0x1f8] sm:$0xf] %v4237
  %4528 = vst [vmem:[%s6 + $0x1fc] sm:$0xf] %v4238
  %4529 = vst [vmem:[%s6 + $0x200] sm:$0xf] %v4239
  %4530 = vst [vmem:[%s6 + $0x204] sm:$0xf] %v4240
  %4531 = vst [vmem:[%s6 + $0x208] sm:$0xf] %v4241
  %4532 = vst [vmem:[%s6 + $0x20c] sm:$0xf] %v4242
  %4533 = vst [vmem:[%s6 + $0x210] sm:$0xf] %v4243
  %4534 = vst [vmem:[%s6 + $0x214] sm:$0xf] %v4244
  %4535 = vst [vmem:[%s6 + $0x218] sm:$0xf] %v4245
  %4536 = vst [vmem:[%s6 + $0x21c] sm:$0xf] %v4246
  %4537 = vst [vmem:[%s6 + $0x220] sm:$0xf] %v4247
  %4538 = vst [vmem:[%s6 + $0x224] sm:$0xf] %v4248
  %4539 = vst [vmem:[%s6 + $0x228] sm:$0xf] %v4249
  %4540 = vst [vmem:[%s6 + $0x22c] sm:$0xf] %v4250
  %4541 = vst [vmem:[%s6 + $0x230] sm:$0xf] %v4251
  %4542 = vst [vmem:[%s6 + $0x234] sm:$0xf] %v4252
  %4543 = vst [vmem:[%s6 + $0x238] sm:$0xf] %v4253
  %4544 = vst [vmem:[%s6 + $0x23c] sm:$0xf] %v4254
  %4545 = vst [vmem:[%s6 + $0x240] sm:$0x3] %v4255
  // Predicated region
  $region26: #{autoencoder_forward.7} parent=0 // pred_check
    _
  $region27: #{autoencoder_forward.7} parent=0 // pred_check_branch
    %4547 = sbr.rel (0) target = $region29
  $region28: #{autoencoder_forward.7} parent=0 // pred_region
    _
  $region29: #{autoencoder_forward.7} parent=0 // pred_fallthru
    _
  // Predicated region
  $region30: #{autoencoder_forward.7} parent=0 // pred_check
    _
  $region31: #{autoencoder_forward.7} parent=0 // pred_check_branch
    %4549 = sbr.rel (0) target = $region33
  $region32: #{autoencoder_forward.7} parent=0 // pred_region
    _
  $region33: #{autoencoder_forward.7} parent=0 // pred_fallthru
    _

</llo_original>
